<compile_context>
chip_gen: v6e
topology: v6e:2x2x1
jax: 0.10.0
libtpu: 0.0.40
codegen_flags: <defaults>
</compile_context>

<pallas_src>
import numpy as np
import jax
import jax.numpy as jnp
from jax import lax
from jax.experimental import pallas as pl
from jax.experimental.pallas import tpu as pltpu


# ----------------------------------------------------------------------------
# Host-side helpers: pooling / interpolation matrices, BN folding.
# ----------------------------------------------------------------------------
def adaptive_pool_matrix(out_size, in_size):
    """nn.AdaptiveAvgPool2d bin-averaging along one axis as an (out, in) matrix."""
    m = np.zeros((out_size, in_size), dtype=np.float32)
    for i in range(out_size):
        s = (i * in_size) // out_size
        e = -(-((i + 1) * in_size) // out_size)  # ceil
        m[i, s:e] = 1.0 / (e - s)
    return m


def bilinear_matrix(out_size, in_size):
    """F.interpolate(mode='bilinear', align_corners=False), one spatial axis."""
    m = np.zeros((out_size, in_size), dtype=np.float32)
    if in_size == 1:
        m[:, 0] = 1.0
        return m
    scale = in_size / out_size
    for o in range(out_size):
        src = max((o + 0.5) * scale - 0.5, 0.0)
        i0 = min(int(np.floor(src)), in_size - 1)
        i1 = min(i0 + 1, in_size - 1)
        lam = src - i0
        m[o, i0] += 1.0 - lam
        m[o, i1] += lam
    return m


def fold_bn(gamma, beta, mean, var, eps=1e-5):
    scale = gamma / jnp.sqrt(var + eps)
    return scale, beta - mean * scale


def _const_spec(arr):
    nd = arr.ndim
    # TODO(synk): pipeline_mode=pl.Buffered(1) would single-buffer these resident
    # constants (matters on v7x at real PSPNet sizes where w2 alone is tens of MiB).
    return pl.BlockSpec(arr.shape, lambda b, _nd=nd: (0,) * _nd)


# ----------------------------------------------------------------------------
# Fused Pallas kernel: branches + concat + 3x3 conv, one batch element per step.
# ----------------------------------------------------------------------------
def make_fused_ppm_kernel(pool_sizes, H, W, Cin, C4, Cout):
    nb = len(pool_sizes)
    HW = H * W
    Ho = H - 2
    HoW = Ho * W                       # "wide" output rows (columns w >= W-2 are junk)
    CB = nb * C4                       # concatenated branch channels
    C2 = Cin + CB                      # concat slab channels
    SP = sum(p * p for p in pool_sizes)
    PAD = 8                            # >= 2 zero rows for the largest tap shift
    CJ = 128 if Cout % 128 == 0 else Cout
    NJ = Cout // CJ

    def kernel(x_ref, pall_ref, ucat_ref, w1_ref, bi1_ref, mask_ref,
               w2_ref, bi2_ref, o_ref, xc_scr, xs1_scr, xs2_scr):
        x = x_ref[0]                                             # (HW, Cin) bf16

        # ---- concat slab xc = [x | branches]; rows >= HW are zero padding ----
        xc_scr[:HW, :Cin] = x
        xc_scr[HW:, :] = jnp.zeros((PAD, C2), dtype=xc_scr.dtype)

        # ---- all pyramid branches as three lane-dense matmuls ----------------
        # adaptive avg-pool (both spatial axes) for every branch, one matmul:
        pooled = jnp.dot(pall_ref[...], x,
                         preferred_element_type=jnp.float32)     # (SP, Cin) f32
        # all 1x1 convs at once (BN scale folded into w1); bias + ReLU + block mask:
        z = jnp.dot(pooled.astype(jnp.bfloat16), w1_ref[...],
                    preferred_element_type=jnp.float32)          # (SP, CB)
        z = jnp.maximum(z + bi1_ref[...], 0.0) * mask_ref[...]
        # all bilinear upsamples at once:
        up = jnp.dot(ucat_ref[...], z.astype(jnp.bfloat16),
                     preferred_element_type=jnp.float32)         # (HW, CB)
        xc_scr[:HW, Cin:Cin + CB] = up.astype(xc_scr.dtype)      # one contiguous store

        # ---- sublane-aligned row-shifted copies for the dx = 1, 2 taps -------
        xs1_scr[...] = xc_scr[1:1 + HW, :]
        xs2_scr[...] = xc_scr[2:2 + HW, :]
        srcs = (xc_scr, xs1_scr, xs2_scr)

        # ---- 3x3 VALID conv: 9 taps, register accumulation, Cout in 128-lane
        # column groups; BN scale folded into w2, bias + ReLU fused at the store.
        for j in range(NJ):
            c0 = j * CJ
            acc = None
            for dy in range(3):
                for dx in range(3):
                    slab = srcs[dx][dy * W:dy * W + HoW, :]      # aligned view (W % 8 == 0)
                    prod = jnp.dot(slab, w2_ref[dy * 3 + dx, :, c0:c0 + CJ],
                                   preferred_element_type=jnp.float32)
                    acc = prod if acc is None else acc + prod
            y = jnp.maximum(acc + bi2_ref[:, c0:c0 + CJ], 0.0)
            o_ref[0, :, c0:c0 + CJ] = y.astype(o_ref.dtype)

    return kernel, HoW, C2, SP, CB, PAD


# ----------------------------------------------------------------------------
# Module
# ----------------------------------------------------------------------------
class PyramidPoolingModule:
    def __init__(self, in_channels, out_channels=256, pool_sizes=(1, 2, 3, 6),
                 key=jax.random.PRNGKey(1234)):
        assert in_channels % 4 == 0
        self.in_channels = in_channels
        self.out_channels = out_channels
        self.pool_sizes = list(pool_sizes)
        c4 = in_channels // 4
        self.c4 = c4
        # NOTE: the torch spec declares final_conv with in_channels=in_channels, but the
        # concatenation produces in_channels + len(pool)*in_channels//4 channels; we use
        # the runnable interpretation (conv input channels = concatenated channel count).
        c2 = in_channels + c4 * len(self.pool_sizes)
        self.c2 = c2

        keys = jax.random.split(key, 2 * len(self.pool_sizes) + 2)
        self.branches = []
        for i, _p in enumerate(self.pool_sizes):
            kw, kb = keys[2 * i], keys[2 * i + 1]
            # torch Conv2d weight (C4, Cin, 1, 1) -> (Cin, C4) matmul weight
            w_t = 0.2 * jax.random.normal(kw, (c4, in_channels, 1, 1), jnp.float32)
            w = jnp.transpose(w_t[:, :, 0, 0], (1, 0))
            bp = jax.random.split(kb, 4)
            gamma = 0.5 + jax.random.uniform(bp[0], (c4,), jnp.float32)
            beta = 0.1 * jax.random.normal(bp[1], (c4,), jnp.float32)
            rmean = 0.1 * jax.random.normal(bp[2], (c4,), jnp.float32)
            rvar = 0.5 + jax.random.uniform(bp[3], (c4,), jnp.float32)
            scale, bias = fold_bn(gamma, beta, rmean, rvar)
            self.branches.append({"w": w, "scale": scale, "bias": bias})

        kw, kb = keys[-2], keys[-1]
        # torch Conv2d weight (Cout, C2, 3, 3) -> HWIO (3, 3, C2, Cout)
        w2_t = 0.1 * jax.random.normal(kw, (out_channels, c2, 3, 3), jnp.float32)
        self.final_w = jnp.transpose(w2_t, (2, 3, 1, 0))
        bp = jax.random.split(kb, 4)
        gamma = 0.5 + jax.random.uniform(bp[0], (out_channels,), jnp.float32)
        beta = 0.1 * jax.random.normal(bp[1], (out_channels,), jnp.float32)
        rmean = 0.1 * jax.random.normal(bp[2], (out_channels,), jnp.float32)
        rvar = 0.5 + jax.random.uniform(bp[3], (out_channels,), jnp.float32)
        self.final_scale, self.final_bias = fold_bn(gamma, beta, rmean, rvar)

        # ---- kernel-side parameter packing (done once, BN scales folded) -----
        nb = len(self.pool_sizes)
        # 1x1 conv weights with per-branch BN scale folded, concatenated on cols:
        self.w1_cat = jnp.concatenate(
            [b["w"] * b["scale"][None, :] for b in self.branches], axis=1
        ).astype(jnp.bfloat16)                                    # (Cin, nb*C4)
        self.bi1_cat = jnp.concatenate(
            [b["bias"] for b in self.branches])[None, :]          # (1, nb*C4) f32
        # block mask: row-block of branch b only feeds column-block of branch b
        SP = sum(p * p for p in self.pool_sizes)
        mask = np.zeros((SP, nb * c4), np.float32)
        off = 0
        for bi, p in enumerate(self.pool_sizes):
            mask[off:off + p * p, bi * c4:(bi + 1) * c4] = 1.0
            off += p * p
        self.z_mask = jnp.asarray(mask)
        # 3x3 conv weights with final BN scale folded, nine (C2, Cout) taps:
        w2_scaled = self.final_w * self.final_scale[None, None, None, :]
        self.w2_taps = w2_scaled.reshape(9, c2, out_channels).astype(jnp.bfloat16)
        self.bi2 = self.final_bias[None, :]                       # (1, Cout) f32

        self._spatial_cache = {}
        self._fwd_cache = {}

    # -- spatial constants (pool / bilinear matrices) cached per (H, W) --------
    def _spatial_constants(self, H, W):
        key = (H, W)
        if key not in self._spatial_cache:
            p_rows, u_cols = [], []
            for p in self.pool_sizes:
                ph = adaptive_pool_matrix(p, H)
                pw = adaptive_pool_matrix(p, W)
                a = bilinear_matrix(H, p)
                bm = bilinear_matrix(W, p)
                p_rows.append(np.kron(ph, pw))     # (p^2, H*W): pool both axes
                u_cols.append(np.kron(a, bm))      # (H*W, p^2): bilinear both axes
            p_all = jnp.asarray(np.concatenate(p_rows, axis=0), jnp.bfloat16)
            u_cat = jnp.asarray(np.concatenate(u_cols, axis=1), jnp.bfloat16)
            self._spatial_cache[key] = (p_all, u_cat)
        return self._spatial_cache[key]

    def _build_forward(self, B, H, W):
        Cin, C4, Cout = self.in_channels, self.c4, self.out_channels
        HW, Ho, Wo = H * W, H - 2, W - 2
        kernel, HoW, C2, SP, CB, PAD = make_fused_ppm_kernel(
            self.pool_sizes, H, W, Cin, C4, Cout)
        p_all, u_cat = self._spatial_constants(H, W)
        consts = [p_all, u_cat, self.w1_cat, self.bi1_cat, self.z_mask,
                  self.w2_taps, self.bi2]

        def nbytes(a):
            return int(a.size) * a.dtype.itemsize

        # VMEM working set: double-buffered x / out blocks, (double-buffered)
        # constants, three concat-slab scratches, margin.  Cap from HW info.
        scratch_bytes = (HW + PAD) * C2 * 2 + 2 * HW * C2 * 2
        est = (2 * HW * Cin * 2 + 2 * HoW * Cout * 4
               + 2 * sum(nbytes(a) for a in consts)
               + scratch_bytes + (4 << 20))
        try:
            cap = int(getattr(pltpu.get_tpu_info(), "vmem_capacity_bytes", 128 << 20))
        except Exception:
            cap = 64 << 20
        cap = max(cap - (16 << 20), 16 << 20)     # leave headroom for the compiler
        # TODO(synk): if est > cap (real PSPNet sizes on v7x) tile over Cout /
        # output-row blocks and stream w2 taps instead of clamping the limit.
        vmem_limit = int(min(max(est, 16 << 20), cap))

        flops = B * 2 * (SP * HW * Cin + SP * Cin * CB + HW * SP * CB
                         + 9 * HoW * C2 * Cout)
        bytes_accessed = (B * HW * Cin * 2 + B * HoW * Cout * 4
                          + sum(nbytes(a) for a in consts))
        cost = pl.CostEstimate(flops=flops, transcendentals=0,
                               bytes_accessed=bytes_accessed)

        in_specs = ([pl.BlockSpec((1, HW, Cin), lambda b: (b, 0, 0))]
                    + [_const_spec(a) for a in consts])

        call = pl.pallas_call(
            kernel,
            out_shape=jax.ShapeDtypeStruct((B, HoW, Cout), jnp.float32),
            grid=(B,),
            in_specs=in_specs,
            out_specs=pl.BlockSpec((1, HoW, Cout), lambda b: (b, 0, 0)),
            scratch_shapes=[pltpu.VMEM((HW + PAD, C2), jnp.bfloat16),   # concat slab
                            pltpu.VMEM((HW, C2), jnp.bfloat16),         # slab shifted by 1 row
                            pltpu.VMEM((HW, C2), jnp.bfloat16)],        # slab shifted by 2 rows
            compiler_params=pltpu.CompilerParams(
                dimension_semantics=("parallel",),
                vmem_limit_bytes=vmem_limit),
            cost_estimate=cost,
        )
        # TODO(synk): on v7x with B == 1 a second "parallel" grid axis (e.g. over
        # Cout tiles) would be needed to occupy both TensorCores; B >= 2 already does.

        def forward(x_nchw):
            x_flat = (jnp.transpose(x_nchw, (0, 2, 3, 1))
                      .reshape(B, HW, Cin).astype(jnp.bfloat16))
            y_wide = call(x_flat, *consts)                  # (B, Ho*W, Cout)
            # Columns w >= W-2 of the wide rows read wrapped pixels and are junk;
            # they MUST be sliced off here (keep this invariant if layout changes).
            y = y_wide.reshape(B, Ho, W, Cout)[:, :, :Wo, :]
            return jnp.transpose(y, (0, 3, 1, 2))           # NCHW

        return jax.jit(forward)

    def __call__(self, x_nchw):
        B, Cin, H, W = x_nchw.shape
        assert Cin == self.in_channels and H >= 3 and W >= 3
        key = (B, H, W)
        if key not in self._fwd_cache:
            self._fwd_cache[key] = self._build_forward(B, H, W)
        return self._fwd_cache[key](x_nchw)


# ----------------------------------------------------------------------------
# Pure-JAX f32 reference (same math, XLA ops) for a correctness cross-check.
# ----------------------------------------------------------------------------
def reference_forward(module, x_nchw):
    hp = lax.Precision.HIGHEST
    x = jnp.transpose(x_nchw, (0, 2, 3, 1)).astype(jnp.float32)
    B, H, W, Cin = x.shape
    outs = [x]
    for p, br in zip(module.pool_sizes, module.branches):
        ph = jnp.asarray(adaptive_pool_matrix(p, H))
        pw = jnp.asarray(adaptive_pool_matrix(p, W))
        a_m = jnp.asarray(bilinear_matrix(H, p))
        b_m = jnp.asarray(bilinear_matrix(W, p))
        pooled = jnp.einsum('ih,bhwc->biwc', ph, x, precision=hp)
        pooled = jnp.einsum('jw,biwc->bijc', pw, pooled, precision=hp)
        z = jnp.einsum('bijc,cd->bijd', pooled, br["w"], precision=hp)
        z = jnp.maximum(z * br["scale"] + br["bias"], 0.0)
        u = jnp.einsum('yi,bijd->byjd', a_m, z, precision=hp)
        u = jnp.einsum('xj,byjd->byxd', b_m, u, precision=hp)
        outs.append(u)
    xc = jnp.concatenate(outs, axis=-1)
    y = lax.conv_general_dilated(
        xc, module.final_w, (1, 1), 'VALID',
        dimension_numbers=('NHWC', 'HWIO', 'NHWC'), precision=hp)
    y = jnp.maximum(y * module.final_scale + module.final_bias, 0.0)
    return jnp.transpose(y, (0, 3, 1, 2))


if __name__ == "__main__":
    B, Cin, H, W = 2, 128, 16, 16
    Cout = 256                                  # module default out_channels
    x = jax.random.normal(jax.random.PRNGKey(0), (B, Cin, H, W), jnp.float32)

    module = PyramidPoolingModule(in_channels=Cin, out_channels=Cout)
    out = jax.block_until_ready(module(x))
    assert out.shape == (B, Cout, H - 2, W - 2), out.shape

    ref = jax.block_until_ready(reference_forward(module, x))
    scale = float(jnp.max(jnp.abs(ref))) + 1e-6
    err = float(jnp.max(jnp.abs(out - ref)))
    # bf16 operands with f32 accumulation over K up to 9*C2: allow a few % of the
    # output scale (structural bugs would produce O(scale) errors).
    if not np.isfinite(err) or err > 3e-2 * scale + 5e-2:
        raise AssertionError(
            f"mismatch vs reference: max abs err {err}, ref scale {scale}")
    print("KERNEL_OK")
</pallas_src>

<mosaic_0001>
module attributes {stable_mosaic.version = 11 : i64} {
  func.func @kernel(%arg0: i32, %arg1: memref<1x256x128xbf16, #tpu.memory_space<vmem>>, %arg2: memref<50x256xbf16, #tpu.memory_space<vmem>>, %arg3: memref<256x50xbf16, #tpu.memory_space<vmem>>, %arg4: memref<128x128xbf16, #tpu.memory_space<vmem>>, %arg5: memref<1x128xf32, #tpu.memory_space<vmem>>, %arg6: memref<50x128xf32, #tpu.memory_space<vmem>>, %arg7: memref<9x256x256xbf16, #tpu.memory_space<vmem>>, %arg8: memref<1x256xf32, #tpu.memory_space<vmem>>, %arg9: memref<1x224x256xf32, #tpu.memory_space<vmem>>, %arg10: memref<264x256xbf16, #tpu.memory_space<vmem>>, %arg11: memref<256x256xbf16, #tpu.memory_space<vmem>>, %arg12: memref<256x256xbf16, #tpu.memory_space<vmem>>) attributes {dimension_semantics = [#tpu.dimension_semantics<parallel>], iteration_bounds = array<i64: 2>, scalar_prefetch = 0 : i64, scratch_operands = 3 : i64, tpu.core_type = #tpu.core_type<tc>, window_params = [{transform_indices = @transform_0, window_bounds = array<i64: 1, 256, 128>}, {pipeline_mode = #tpu.pipeline_mode<synchronous>, transform_indices = @transform_1, window_bounds = array<i64: 50, 256>}, {pipeline_mode = #tpu.pipeline_mode<synchronous>, transform_indices = @transform_2, window_bounds = array<i64: 256, 50>}, {pipeline_mode = #tpu.pipeline_mode<synchronous>, transform_indices = @transform_3, window_bounds = array<i64: 128, 128>}, {pipeline_mode = #tpu.pipeline_mode<synchronous>, transform_indices = @transform_4, window_bounds = array<i64: 1, 128>}, {pipeline_mode = #tpu.pipeline_mode<synchronous>, transform_indices = @transform_5, window_bounds = array<i64: 50, 128>}, {pipeline_mode = #tpu.pipeline_mode<synchronous>, transform_indices = @transform_6, window_bounds = array<i64: 9, 256, 256>}, {pipeline_mode = #tpu.pipeline_mode<synchronous>, transform_indices = @transform_7, window_bounds = array<i64: 1, 256>}, {transform_indices = @transform_8, window_bounds = array<i64: 1, 224, 256>}]} {
    %c0 = arith.constant 0 : index
    %c0_0 = arith.constant 0 : index
    %c0_1 = arith.constant 0 : index
    %0 = vector.load %arg1[%c0, %c0_0, %c0_1] : memref<1x256x128xbf16, #tpu.memory_space<vmem>>, vector<1x256x128xbf16>
    %1 = vector.shape_cast %0 : vector<1x256x128xbf16> to vector<256x128xbf16>
    %c0_2 = arith.constant 0 : index
    %c0_3 = arith.constant 0 : index
    %2 = vector.load %arg10[%c0_2, %c0_3] : memref<264x256xbf16, #tpu.memory_space<vmem>>, vector<256x128xbf16>
    tpu.vector_store %arg10[%c0_2, %c0_3], %1 {strides = array<i32>} : memref<264x256xbf16, #tpu.memory_space<vmem>>, vector<256x128xbf16>,
    %cst = arith.constant 0.000000e+00 : bf16
    %3 = vector.broadcast %cst : bf16 to vector<8x256xbf16>
    %c256 = arith.constant 256 : index
    %c0_4 = arith.constant 0 : index
    %4 = vector.load %arg10[%c256, %c0_4] : memref<264x256xbf16, #tpu.memory_space<vmem>>, vector<8x256xbf16>
    tpu.vector_store %arg10[%c256, %c0_4], %3 {strides = array<i32>} : memref<264x256xbf16, #tpu.memory_space<vmem>>, vector<8x256xbf16>,
    %c0_5 = arith.constant 0 : index
    %c0_6 = arith.constant 0 : index
    %5 = vector.load %arg2[%c0_5, %c0_6] : memref<50x256xbf16, #tpu.memory_space<vmem>>, vector<50x256xbf16>
    %cst_7 = arith.constant dense<0.000000e+00> : vector<50x128xf32>
    %6 = tpu.matmul %5, %1, %cst_7 {dimension_numbers = #tpu.dot_dimension_numbers<[1], [0], [0], [1], [0, 0, 1, 1], [], []>} : vector<50x256xbf16>, vector<256x128xbf16>, vector<50x128xf32> -> vector<50x128xf32>
    %7 = arith.truncf %6 : vector<50x128xf32> to vector<50x128xbf16>
    %c0_8 = arith.constant 0 : index
    %c0_9 = arith.constant 0 : index
    %8 = vector.load %arg4[%c0_8, %c0_9] : memref<128x128xbf16, #tpu.memory_space<vmem>>, vector<128x128xbf16>
    %cst_10 = arith.constant dense<0.000000e+00> : vector<50x128xf32>
    %9 = tpu.matmul %7, %8, %cst_10 {dimension_numbers = #tpu.dot_dimension_numbers<[1], [0], [0], [1], [0, 0, 1, 1], [], []>} : vector<50x128xbf16>, vector<128x128xbf16>, vector<50x128xf32> -> vector<50x128xf32>
    %c0_11 = arith.constant 0 : index
    %c0_12 = arith.constant 0 : index
    %10 = vector.load %arg5[%c0_11, %c0_12] : memref<1x128xf32, #tpu.memory_space<vmem>>, vector<1x128xf32>
    %11 = vector.broadcast %10 : vector<1x128xf32> to vector<50x128xf32>
    %12 = arith.addf %9, %11 : vector<50x128xf32>
    %cst_13 = arith.constant 0.000000e+00 : f32
    %13 = vector.broadcast %cst_13 : f32 to vector<50x128xf32>
    %14 = arith.maximumf %12, %13 : vector<50x128xf32>
    %c0_14 = arith.constant 0 : index
    %c0_15 = arith.constant 0 : index
    %15 = vector.load %arg6[%c0_14, %c0_15] : memref<50x128xf32, #tpu.memory_space<vmem>>, vector<50x128xf32>
    %16 = arith.mulf %14, %15 : vector<50x128xf32>
    %c0_16 = arith.constant 0 : index
    %c0_17 = arith.constant 0 : index
    %17 = vector.load %arg3[%c0_16, %c0_17] : memref<256x50xbf16, #tpu.memory_space<vmem>>, vector<256x50xbf16>
    %18 = arith.truncf %16 : vector<50x128xf32> to vector<50x128xbf16>
    %cst_18 = arith.constant dense<0.000000e+00> : vector<256x128xf32>
    %19 = tpu.matmul %17, %18, %cst_18 {dimension_numbers = #tpu.dot_dimension_numbers<[1], [0], [0], [1], [0, 0, 1, 1], [], []>} : vector<256x50xbf16>, vector<50x128xbf16>, vector<256x128xf32> -> vector<256x128xf32>
    %20 = arith.truncf %19 : vector<256x128xf32> to vector<256x128xbf16>
    %c0_19 = arith.constant 0 : index
    %c128 = arith.constant 128 : index
    %21 = vector.load %arg10[%c0_19, %c128] : memref<264x256xbf16, #tpu.memory_space<vmem>>, vector<256x128xbf16>
    tpu.vector_store %arg10[%c0_19, %c128], %20 {strides = array<i32>} : memref<264x256xbf16, #tpu.memory_space<vmem>>, vector<256x128xbf16>,
    %c1 = arith.constant 1 : index
    %c0_20 = arith.constant 0 : index
    %22 = vector.load %arg10[%c1, %c0_20] : memref<264x256xbf16, #tpu.memory_space<vmem>>, vector<256x256xbf16>
    %c0_21 = arith.constant 0 : index
    %c0_22 = arith.constant 0 : index
    %23 = vector.load %arg11[%c0_21, %c0_22] : memref<256x256xbf16, #tpu.memory_space<vmem>>, vector<256x256xbf16>
    tpu.vector_store %arg11[%c0_21, %c0_22], %22 {strides = array<i32>} : memref<256x256xbf16, #tpu.memory_space<vmem>>, vector<256x256xbf16>,
    %c2 = arith.constant 2 : index
    %c0_23 = arith.constant 0 : index
    %24 = vector.load %arg10[%c2, %c0_23] : memref<264x256xbf16, #tpu.memory_space<vmem>>, vector<256x256xbf16>
    %c0_24 = arith.constant 0 : index
    %c0_25 = arith.constant 0 : index
    %25 = vector.load %arg12[%c0_24, %c0_25] : memref<256x256xbf16, #tpu.memory_space<vmem>>, vector<256x256xbf16>
    tpu.vector_store %arg12[%c0_24, %c0_25], %24 {strides = array<i32>} : memref<256x256xbf16, #tpu.memory_space<vmem>>, vector<256x256xbf16>,
    %c0_26 = arith.constant 0 : index
    %c0_27 = arith.constant 0 : index
    %26 = vector.load %arg10[%c0_26, %c0_27] : memref<264x256xbf16, #tpu.memory_space<vmem>>, vector<224x256xbf16>
    %c0_28 = arith.constant 0 : index
    %c0_29 = arith.constant 0 : index
    %c0_30 = arith.constant 0 : index
    %27 = vector.load %arg7[%c0_28, %c0_29, %c0_30] : memref<9x256x256xbf16, #tpu.memory_space<vmem>>, vector<1x256x128xbf16>
    %28 = vector.shape_cast %27 : vector<1x256x128xbf16> to vector<256x128xbf16>
    %cst_31 = arith.constant dense<0.000000e+00> : vector<224x128xf32>
    %29 = tpu.matmul %26, %28, %cst_31 {dimension_numbers = #tpu.dot_dimension_numbers<[1], [0], [0], [1], [0, 0, 1, 1], [], []>} : vector<224x256xbf16>, vector<256x128xbf16>, vector<224x128xf32> -> vector<224x128xf32>
    %c0_32 = arith.constant 0 : index
    %c0_33 = arith.constant 0 : index
    %30 = vector.load %arg11[%c0_32, %c0_33] : memref<256x256xbf16, #tpu.memory_space<vmem>>, vector<224x256xbf16>
    %c1_34 = arith.constant 1 : index
    %c0_35 = arith.constant 0 : index
    %c0_36 = arith.constant 0 : index
    %31 = vector.load %arg7[%c1_34, %c0_35, %c0_36] : memref<9x256x256xbf16, #tpu.memory_space<vmem>>, vector<1x256x128xbf16>
    %32 = vector.shape_cast %31 : vector<1x256x128xbf16> to vector<256x128xbf16>
    %cst_37 = arith.constant dense<0.000000e+00> : vector<224x128xf32>
    %33 = tpu.matmul %30, %32, %cst_37 {dimension_numbers = #tpu.dot_dimension_numbers<[1], [0], [0], [1], [0, 0, 1, 1], [], []>} : vector<224x256xbf16>, vector<256x128xbf16>, vector<224x128xf32> -> vector<224x128xf32>
    %34 = arith.addf %29, %33 : vector<224x128xf32>
    %c0_38 = arith.constant 0 : index
    %c0_39 = arith.constant 0 : index
    %35 = vector.load %arg12[%c0_38, %c0_39] : memref<256x256xbf16, #tpu.memory_space<vmem>>, vector<224x256xbf16>
    %c2_40 = arith.constant 2 : index
    %c0_41 = arith.constant 0 : index
    %c0_42 = arith.constant 0 : index
    %36 = vector.load %arg7[%c2_40, %c0_41, %c0_42] : memref<9x256x256xbf16, #tpu.memory_space<vmem>>, vector<1x256x128xbf16>
    %37 = vector.shape_cast %36 : vector<1x256x128xbf16> to vector<256x128xbf16>
    %cst_43 = arith.constant dense<0.000000e+00> : vector<224x128xf32>
    %38 = tpu.matmul %35, %37, %cst_43 {dimension_numbers = #tpu.dot_dimension_numbers<[1], [0], [0], [1], [0, 0, 1, 1], [], []>} : vector<224x256xbf16>, vector<256x128xbf16>, vector<224x128xf32> -> vector<224x128xf32>
    %39 = arith.addf %34, %38 : vector<224x128xf32>
    %c16 = arith.constant 16 : index
    %c0_44 = arith.constant 0 : index
    %40 = vector.load %arg10[%c16, %c0_44] : memref<264x256xbf16, #tpu.memory_space<vmem>>, vector<224x256xbf16>
    %c3 = arith.constant 3 : index
    %c0_45 = arith.constant 0 : index
    %c0_46 = arith.constant 0 : index
    %41 = vector.load %arg7[%c3, %c0_45, %c0_46] : memref<9x256x256xbf16, #tpu.memory_space<vmem>>, vector<1x256x128xbf16>
    %42 = vector.shape_cast %41 : vector<1x256x128xbf16> to vector<256x128xbf16>
    %cst_47 = arith.constant dense<0.000000e+00> : vector<224x128xf32>
    %43 = tpu.matmul %40, %42, %cst_47 {dimension_numbers = #tpu.dot_dimension_numbers<[1], [0], [0], [1], [0, 0, 1, 1], [], []>} : vector<224x256xbf16>, vector<256x128xbf16>, vector<224x128xf32> -> vector<224x128xf32>
    %44 = arith.addf %39, %43 : vector<224x128xf32>
    %c16_48 = arith.constant 16 : index
    %c0_49 = arith.constant 0 : index
    %45 = vector.load %arg11[%c16_48, %c0_49] : memref<256x256xbf16, #tpu.memory_space<vmem>>, vector<224x256xbf16>
    %c4 = arith.constant 4 : index
    %c0_50 = arith.constant 0 : index
    %c0_51 = arith.constant 0 : index
    %46 = vector.load %arg7[%c4, %c0_50, %c0_51] : memref<9x256x256xbf16, #tpu.memory_space<vmem>>, vector<1x256x128xbf16>
    %47 = vector.shape_cast %46 : vector<1x256x128xbf16> to vector<256x128xbf16>
    %cst_52 = arith.constant dense<0.000000e+00> : vector<224x128xf32>
    %48 = tpu.matmul %45, %47, %cst_52 {dimension_numbers = #tpu.dot_dimension_numbers<[1], [0], [0], [1], [0, 0, 1, 1], [], []>} : vector<224x256xbf16>, vector<256x128xbf16>, vector<224x128xf32> -> vector<224x128xf32>
    %49 = arith.addf %44, %48 : vector<224x128xf32>
    %c16_53 = arith.constant 16 : index
    %c0_54 = arith.constant 0 : index
    %50 = vector.load %arg12[%c16_53, %c0_54] : memref<256x256xbf16, #tpu.memory_space<vmem>>, vector<224x256xbf16>
    %c5 = arith.constant 5 : index
    %c0_55 = arith.constant 0 : index
    %c0_56 = arith.constant 0 : index
    %51 = vector.load %arg7[%c5, %c0_55, %c0_56] : memref<9x256x256xbf16, #tpu.memory_space<vmem>>, vector<1x256x128xbf16>
    %52 = vector.shape_cast %51 : vector<1x256x128xbf16> to vector<256x128xbf16>
    %cst_57 = arith.constant dense<0.000000e+00> : vector<224x128xf32>
    %53 = tpu.matmul %50, %52, %cst_57 {dimension_numbers = #tpu.dot_dimension_numbers<[1], [0], [0], [1], [0, 0, 1, 1], [], []>} : vector<224x256xbf16>, vector<256x128xbf16>, vector<224x128xf32> -> vector<224x128xf32>
    %54 = arith.addf %49, %53 : vector<224x128xf32>
    %c32 = arith.constant 32 : index
    %c0_58 = arith.constant 0 : index
    %55 = vector.load %arg10[%c32, %c0_58] : memref<264x256xbf16, #tpu.memory_space<vmem>>, vector<224x256xbf16>
    %c6 = arith.constant 6 : index
    %c0_59 = arith.constant 0 : index
    %c0_60 = arith.constant 0 : index
    %56 = vector.load %arg7[%c6, %c0_59, %c0_60] : memref<9x256x256xbf16, #tpu.memory_space<vmem>>, vector<1x256x128xbf16>
    %57 = vector.shape_cast %56 : vector<1x256x128xbf16> to vector<256x128xbf16>
    %cst_61 = arith.constant dense<0.000000e+00> : vector<224x128xf32>
    %58 = tpu.matmul %55, %57, %cst_61 {dimension_numbers = #tpu.dot_dimension_numbers<[1], [0], [0], [1], [0, 0, 1, 1], [], []>} : vector<224x256xbf16>, vector<256x128xbf16>, vector<224x128xf32> -> vector<224x128xf32>
    %59 = arith.addf %54, %58 : vector<224x128xf32>
    %c32_62 = arith.constant 32 : index
    %c0_63 = arith.constant 0 : index
    %60 = vector.load %arg11[%c32_62, %c0_63] : memref<256x256xbf16, #tpu.memory_space<vmem>>, vector<224x256xbf16>
    %c7 = arith.constant 7 : index
    %c0_64 = arith.constant 0 : index
    %c0_65 = arith.constant 0 : index
    %61 = vector.load %arg7[%c7, %c0_64, %c0_65] : memref<9x256x256xbf16, #tpu.memory_space<vmem>>, vector<1x256x128xbf16>
    %62 = vector.shape_cast %61 : vector<1x256x128xbf16> to vector<256x128xbf16>
    %cst_66 = arith.constant dense<0.000000e+00> : vector<224x128xf32>
    %63 = tpu.matmul %60, %62, %cst_66 {dimension_numbers = #tpu.dot_dimension_numbers<[1], [0], [0], [1], [0, 0, 1, 1], [], []>} : vector<224x256xbf16>, vector<256x128xbf16>, vector<224x128xf32> -> vector<224x128xf32>
    %64 = arith.addf %59, %63 : vector<224x128xf32>
    %c32_67 = arith.constant 32 : index
    %c0_68 = arith.constant 0 : index
    %65 = vector.load %arg12[%c32_67, %c0_68] : memref<256x256xbf16, #tpu.memory_space<vmem>>, vector<224x256xbf16>
    %c8 = arith.constant 8 : index
    %c0_69 = arith.constant 0 : index
    %c0_70 = arith.constant 0 : index
    %66 = vector.load %arg7[%c8, %c0_69, %c0_70] : memref<9x256x256xbf16, #tpu.memory_space<vmem>>, vector<1x256x128xbf16>
    %67 = vector.shape_cast %66 : vector<1x256x128xbf16> to vector<256x128xbf16>
    %cst_71 = arith.constant dense<0.000000e+00> : vector<224x128xf32>
    %68 = tpu.matmul %65, %67, %cst_71 {dimension_numbers = #tpu.dot_dimension_numbers<[1], [0], [0], [1], [0, 0, 1, 1], [], []>} : vector<224x256xbf16>, vector<256x128xbf16>, vector<224x128xf32> -> vector<224x128xf32>
    %69 = arith.addf %64, %68 : vector<224x128xf32>
    %c0_72 = arith.constant 0 : index
    %c0_73 = arith.constant 0 : index
    %70 = vector.load %arg8[%c0_72, %c0_73] : memref<1x256xf32, #tpu.memory_space<vmem>>, vector<1x128xf32>
    %71 = vector.broadcast %70 : vector<1x128xf32> to vector<224x128xf32>
    %72 = arith.addf %69, %71 : vector<224x128xf32>
    %cst_74 = arith.constant 0.000000e+00 : f32
    %73 = vector.broadcast %cst_74 : f32 to vector<224x128xf32>
    %74 = arith.maximumf %72, %73 : vector<224x128xf32>
    %c0_75 = arith.constant 0 : index
    %c0_76 = arith.constant 0 : index
    %c0_77 = arith.constant 0 : index
    %75 = vector.load %arg9[%c0_75, %c0_76, %c0_77] : memref<1x224x256xf32, #tpu.memory_space<vmem>>, vector<1x224x128xf32>
    %76 = vector.shape_cast %75 : vector<1x224x128xf32> to vector<224x128xf32>
    %77 = vector.shape_cast %74 : vector<224x128xf32> to vector<1x224x128xf32>
    tpu.vector_store %arg9[%c0_75, %c0_76, %c0_77], %77 {strides = array<i32>} : memref<1x224x256xf32, #tpu.memory_space<vmem>>, vector<1x224x128xf32>,
    %c0_78 = arith.constant 0 : index
    %c0_79 = arith.constant 0 : index
    %78 = vector.load %arg10[%c0_78, %c0_79] : memref<264x256xbf16, #tpu.memory_space<vmem>>, vector<224x256xbf16>
    %c0_80 = arith.constant 0 : index
    %c0_81 = arith.constant 0 : index
    %c128_82 = arith.constant 128 : index
    %79 = vector.load %arg7[%c0_80, %c0_81, %c128_82] : memref<9x256x256xbf16, #tpu.memory_space<vmem>>, vector<1x256x128xbf16>
    %80 = vector.shape_cast %79 : vector<1x256x128xbf16> to vector<256x128xbf16>
    %cst_83 = arith.constant dense<0.000000e+00> : vector<224x128xf32>
    %81 = tpu.matmul %78, %80, %cst_83 {dimension_numbers = #tpu.dot_dimension_numbers<[1], [0], [0], [1], [0, 0, 1, 1], [], []>} : vector<224x256xbf16>, vector<256x128xbf16>, vector<224x128xf32> -> vector<224x128xf32>
    %c0_84 = arith.constant 0 : index
    %c0_85 = arith.constant 0 : index
    %82 = vector.load %arg11[%c0_84, %c0_85] : memref<256x256xbf16, #tpu.memory_space<vmem>>, vector<224x256xbf16>
    %c1_86 = arith.constant 1 : index
    %c0_87 = arith.constant 0 : index
    %c128_88 = arith.constant 128 : index
    %83 = vector.load %arg7[%c1_86, %c0_87, %c128_88] : memref<9x256x256xbf16, #tpu.memory_space<vmem>>, vector<1x256x128xbf16>
    %84 = vector.shape_cast %83 : vector<1x256x128xbf16> to vector<256x128xbf16>
    %cst_89 = arith.constant dense<0.000000e+00> : vector<224x128xf32>
    %85 = tpu.matmul %82, %84, %cst_89 {dimension_numbers = #tpu.dot_dimension_numbers<[1], [0], [0], [1], [0, 0, 1, 1], [], []>} : vector<224x256xbf16>, vector<256x128xbf16>, vector<224x128xf32> -> vector<224x128xf32>
    %86 = arith.addf %81, %85 : vector<224x128xf32>
    %c0_90 = arith.constant 0 : index
    %c0_91 = arith.constant 0 : index
    %87 = vector.load %arg12[%c0_90, %c0_91] : memref<256x256xbf16, #tpu.memory_space<vmem>>, vector<224x256xbf16>
    %c2_92 = arith.constant 2 : index
    %c0_93 = arith.constant 0 : index
    %c128_94 = arith.constant 128 : index
    %88 = vector.load %arg7[%c2_92, %c0_93, %c128_94] : memref<9x256x256xbf16, #tpu.memory_space<vmem>>, vector<1x256x128xbf16>
    %89 = vector.shape_cast %88 : vector<1x256x128xbf16> to vector<256x128xbf16>
    %cst_95 = arith.constant dense<0.000000e+00> : vector<224x128xf32>
    %90 = tpu.matmul %87, %89, %cst_95 {dimension_numbers = #tpu.dot_dimension_numbers<[1], [0], [0], [1], [0, 0, 1, 1], [], []>} : vector<224x256xbf16>, vector<256x128xbf16>, vector<224x128xf32> -> vector<224x128xf32>
    %91 = arith.addf %86, %90 : vector<224x128xf32>
    %c16_96 = arith.constant 16 : index
    %c0_97 = arith.constant 0 : index
    %92 = vector.load %arg10[%c16_96, %c0_97] : memref<264x256xbf16, #tpu.memory_space<vmem>>, vector<224x256xbf16>
    %c3_98 = arith.constant 3 : index
    %c0_99 = arith.constant 0 : index
    %c128_100 = arith.constant 128 : index
    %93 = vector.load %arg7[%c3_98, %c0_99, %c128_100] : memref<9x256x256xbf16, #tpu.memory_space<vmem>>, vector<1x256x128xbf16>
    %94 = vector.shape_cast %93 : vector<1x256x128xbf16> to vector<256x128xbf16>
    %cst_101 = arith.constant dense<0.000000e+00> : vector<224x128xf32>
    %95 = tpu.matmul %92, %94, %cst_101 {dimension_numbers = #tpu.dot_dimension_numbers<[1], [0], [0], [1], [0, 0, 1, 1], [], []>} : vector<224x256xbf16>, vector<256x128xbf16>, vector<224x128xf32> -> vector<224x128xf32>
    %96 = arith.addf %91, %95 : vector<224x128xf32>
    %c16_102 = arith.constant 16 : index
    %c0_103 = arith.constant 0 : index
    %97 = vector.load %arg11[%c16_102, %c0_103] : memref<256x256xbf16, #tpu.memory_space<vmem>>, vector<224x256xbf16>
    %c4_104 = arith.constant 4 : index
    %c0_105 = arith.constant 0 : index
    %c128_106 = arith.constant 128 : index
    %98 = vector.load %arg7[%c4_104, %c0_105, %c128_106] : memref<9x256x256xbf16, #tpu.memory_space<vmem>>, vector<1x256x128xbf16>
    %99 = vector.shape_cast %98 : vector<1x256x128xbf16> to vector<256x128xbf16>
    %cst_107 = arith.constant dense<0.000000e+00> : vector<224x128xf32>
    %100 = tpu.matmul %97, %99, %cst_107 {dimension_numbers = #tpu.dot_dimension_numbers<[1], [0], [0], [1], [0, 0, 1, 1], [], []>} : vector<224x256xbf16>, vector<256x128xbf16>, vector<224x128xf32> -> vector<224x128xf32>
    %101 = arith.addf %96, %100 : vector<224x128xf32>
    %c16_108 = arith.constant 16 : index
    %c0_109 = arith.constant 0 : index
    %102 = vector.load %arg12[%c16_108, %c0_109] : memref<256x256xbf16, #tpu.memory_space<vmem>>, vector<224x256xbf16>
    %c5_110 = arith.constant 5 : index
    %c0_111 = arith.constant 0 : index
    %c128_112 = arith.constant 128 : index
    %103 = vector.load %arg7[%c5_110, %c0_111, %c128_112] : memref<9x256x256xbf16, #tpu.memory_space<vmem>>, vector<1x256x128xbf16>
    %104 = vector.shape_cast %103 : vector<1x256x128xbf16> to vector<256x128xbf16>
    %cst_113 = arith.constant dense<0.000000e+00> : vector<224x128xf32>
    %105 = tpu.matmul %102, %104, %cst_113 {dimension_numbers = #tpu.dot_dimension_numbers<[1], [0], [0], [1], [0, 0, 1, 1], [], []>} : vector<224x256xbf16>, vector<256x128xbf16>, vector<224x128xf32> -> vector<224x128xf32>
    %106 = arith.addf %101, %105 : vector<224x128xf32>
    %c32_114 = arith.constant 32 : index
    %c0_115 = arith.constant 0 : index
    %107 = vector.load %arg10[%c32_114, %c0_115] : memref<264x256xbf16, #tpu.memory_space<vmem>>, vector<224x256xbf16>
    %c6_116 = arith.constant 6 : index
    %c0_117 = arith.constant 0 : index
    %c128_118 = arith.constant 128 : index
    %108 = vector.load %arg7[%c6_116, %c0_117, %c128_118] : memref<9x256x256xbf16, #tpu.memory_space<vmem>>, vector<1x256x128xbf16>
    %109 = vector.shape_cast %108 : vector<1x256x128xbf16> to vector<256x128xbf16>
    %cst_119 = arith.constant dense<0.000000e+00> : vector<224x128xf32>
    %110 = tpu.matmul %107, %109, %cst_119 {dimension_numbers = #tpu.dot_dimension_numbers<[1], [0], [0], [1], [0, 0, 1, 1], [], []>} : vector<224x256xbf16>, vector<256x128xbf16>, vector<224x128xf32> -> vector<224x128xf32>
    %111 = arith.addf %106, %110 : vector<224x128xf32>
    %c32_120 = arith.constant 32 : index
    %c0_121 = arith.constant 0 : index
    %112 = vector.load %arg11[%c32_120, %c0_121] : memref<256x256xbf16, #tpu.memory_space<vmem>>, vector<224x256xbf16>
    %c7_122 = arith.constant 7 : index
    %c0_123 = arith.constant 0 : index
    %c128_124 = arith.constant 128 : index
    %113 = vector.load %arg7[%c7_122, %c0_123, %c128_124] : memref<9x256x256xbf16, #tpu.memory_space<vmem>>, vector<1x256x128xbf16>
    %114 = vector.shape_cast %113 : vector<1x256x128xbf16> to vector<256x128xbf16>
    %cst_125 = arith.constant dense<0.000000e+00> : vector<224x128xf32>
    %115 = tpu.matmul %112, %114, %cst_125 {dimension_numbers = #tpu.dot_dimension_numbers<[1], [0], [0], [1], [0, 0, 1, 1], [], []>} : vector<224x256xbf16>, vector<256x128xbf16>, vector<224x128xf32> -> vector<224x128xf32>
    %116 = arith.addf %111, %115 : vector<224x128xf32>
    %c32_126 = arith.constant 32 : index
    %c0_127 = arith.constant 0 : index
    %117 = vector.load %arg12[%c32_126, %c0_127] : memref<256x256xbf16, #tpu.memory_space<vmem>>, vector<224x256xbf16>
    %c8_128 = arith.constant 8 : index
    %c0_129 = arith.constant 0 : index
    %c128_130 = arith.constant 128 : index
    %118 = vector.load %arg7[%c8_128, %c0_129, %c128_130] : memref<9x256x256xbf16, #tpu.memory_space<vmem>>, vector<1x256x128xbf16>
    %119 = vector.shape_cast %118 : vector<1x256x128xbf16> to vector<256x128xbf16>
    %cst_131 = arith.constant dense<0.000000e+00> : vector<224x128xf32>
    %120 = tpu.matmul %117, %119, %cst_131 {dimension_numbers = #tpu.dot_dimension_numbers<[1], [0], [0], [1], [0, 0, 1, 1], [], []>} : vector<224x256xbf16>, vector<256x128xbf16>, vector<224x128xf32> -> vector<224x128xf32>
    %121 = arith.addf %116, %120 : vector<224x128xf32>
    %c0_132 = arith.constant 0 : index
    %c128_133 = arith.constant 128 : index
    %122 = vector.load %arg8[%c0_132, %c128_133] : memref<1x256xf32, #tpu.memory_space<vmem>>, vector<1x128xf32>
    %123 = vector.broadcast %122 : vector<1x128xf32> to vector<224x128xf32>
    %124 = arith.addf %121, %123 : vector<224x128xf32>
    %cst_134 = arith.constant 0.000000e+00 : f32
    %125 = vector.broadcast %cst_134 : f32 to vector<224x128xf32>
    %126 = arith.maximumf %124, %125 : vector<224x128xf32>
    %c0_135 = arith.constant 0 : index
    %c0_136 = arith.constant 0 : index
    %c128_137 = arith.constant 128 : index
    %127 = vector.load %arg9[%c0_135, %c0_136, %c128_137] : memref<1x224x256xf32, #tpu.memory_space<vmem>>, vector<1x224x128xf32>
    %128 = vector.shape_cast %127 : vector<1x224x128xf32> to vector<224x128xf32>
    %129 = vector.shape_cast %126 : vector<224x128xf32> to vector<1x224x128xf32>
    tpu.vector_store %arg9[%c0_135, %c0_136, %c128_137], %129 {strides = array<i32>} : memref<1x224x256xf32, #tpu.memory_space<vmem>>, vector<1x224x128xf32>,
    return
  }
  func.func @transform_0(%arg0: i32) -> (i32, i32, i32) {
    %c0_i32 = arith.constant 0 : i32
    %c0_i32_0 = arith.constant 0 : i32
    %c0_i32_1 = arith.constant 0 : i32
    return %arg0, %c0_i32, %c0_i32_0 : i32, i32, i32
  }
  func.func @transform_1(%arg0: i32) -> (i32, i32) {
    %c0_i32 = arith.constant 0 : i32
    %c0_i32_0 = arith.constant 0 : i32
    %c0_i32_1 = arith.constant 0 : i32
    return %c0_i32, %c0_i32_0 : i32, i32
  }
  func.func @transform_2(%arg0: i32) -> (i32, i32) {
    %c0_i32 = arith.constant 0 : i32
    %c0_i32_0 = arith.constant 0 : i32
    %c0_i32_1 = arith.constant 0 : i32
    return %c0_i32, %c0_i32_0 : i32, i32
  }
  func.func @transform_3(%arg0: i32) -> (i32, i32) {
    %c0_i32 = arith.constant 0 : i32
    %c0_i32_0 = arith.constant 0 : i32
    %c0_i32_1 = arith.constant 0 : i32
    return %c0_i32, %c0_i32_0 : i32, i32
  }
  func.func @transform_4(%arg0: i32) -> (i32, i32) {
    %c0_i32 = arith.constant 0 : i32
    %c0_i32_0 = arith.constant 0 : i32
    %c0_i32_1 = arith.constant 0 : i32
    return %c0_i32, %c0_i32_0 : i32, i32
  }
  func.func @transform_5(%arg0: i32) -> (i32, i32) {
    %c0_i32 = arith.constant 0 : i32
    %c0_i32_0 = arith.constant 0 : i32
    %c0_i32_1 = arith.constant 0 : i32
    return %c0_i32, %c0_i32_0 : i32, i32
  }
  func.func @transform_6(%arg0: i32) -> (i32, i32, i32) {
    %c0_i32 = arith.constant 0 : i32
    %c0_i32_0 = arith.constant 0 : i32
    %c0_i32_1 = arith.constant 0 : i32
    %c0_i32_2 = arith.constant 0 : i32
    return %c0_i32, %c0_i32_0, %c0_i32_1 : i32, i32, i32
  }
  func.func @transform_7(%arg0: i32) -> (i32, i32) {
    %c0_i32 = arith.constant 0 : i32
    %c0_i32_0 = arith.constant 0 : i32
    %c0_i32_1 = arith.constant 0 : i32
    return %c0_i32, %c0_i32_0 : i32, i32
  }
  func.func @transform_8(%arg0: i32) -> (i32, i32, i32) {
    %c0_i32 = arith.constant 0 : i32
    %c0_i32_0 = arith.constant 0 : i32
    %c0_i32_1 = arith.constant 0 : i32
    return %arg0, %c0_i32, %c0_i32_0 : i32, i32, i32
  }
}

</mosaic_0001>

<llo_original>
// kernel: forward.1
$region0: #{forward.1}
  #allocation0 [shape = 'u32[]', space=smem, size = 0x4, offset = 0x4, fixed_abs, tag = 'smem constant byte address 0x4 - core index']
  #allocation1 [shape = 'u32[144,128]{1,0:T(1,128)}', space=vmem, size = 0x12000, scoped, tag = 'internal scratch']
  #allocation2 [shape = 'bf16[264,256]{1,0:T(8,128)(2,1)}', space=vmem, size = 0x21000, scoped, tag = 'scratch operand']
  #allocation3 [shape = 'bf16[256,256]{1,0:T(8,128)(2,1)}', space=vmem, size = 0x20000, scoped, tag = 'scratch operand']
  #allocation4 [shape = 'bf16[256,256]{1,0:T(8,128)(2,1)}', space=vmem, size = 0x20000, scoped, tag = 'scratch operand']
  %s0 = inlined_call_operand.vmem [shape: bf16[2,256,128], index: 0, kind: input, shape index: {}]
  %s1 = inlined_call_operand.hbm [shape: bf16[50,256], index: 1, kind: input, shape index: {}]
  %s2 = inlined_call_operand.hbm [shape: bf16[256,50], index: 2, kind: input, shape index: {}]
  %s3 = inlined_call_operand.hbm [shape: bf16[128,128], index: 3, kind: input, shape index: {}]
  %s4 = inlined_call_operand.hbm [shape: f32[1,128], index: 4, kind: input, shape index: {}]
  %s5 = inlined_call_operand.hbm [shape: f32[50,128], index: 5, kind: input, shape index: {}]
  %s6 = inlined_call_operand.hbm [shape: bf16[9,256,256], index: 6, kind: input, shape index: {}]
  %s7 = inlined_call_operand.hbm [shape: f32[1,256], index: 7, kind: input, shape index: {}]
  %s8 = inlined_call_operand.vmem [shape: f32[2,224,256], index: 8, kind: output, shape index: {}]
  %s9 = sld [smem:[#allocation0]]
  $region93: #{forward.1} parent=0
    _
  %s11 = ssub.s32 1, %s9
  %s12 = scalar_select 0, %s11, %s9
  $region1: #{forward.1} parent=0
    #allocation5 [shape = 'u8[28672]{0}', space=vmem, size = 0x7000, scoped, tag = 'input window, operand 1, single buffered']
    #allocation6 [shape = 's32[2]{0}', space=sflag, size = 0x8, scoped, tag = 'scoped memory for forward.1']
    #allocation7 [shape = 'u8[65536]{0}', space=vmem, size = 0x10000, scoped, tag = 'input window, operand 2, single buffered']
    #allocation8 [shape = 's32[1]{0}', space=sflag, size = 0x4, scoped, tag = 'scoped memory for forward.1']
    #allocation9 [shape = 'u8[32768]{0}', space=vmem, size = 0x8000, scoped, tag = 'input window, operand 3, single buffered']
    #allocation10 [shape = 'u8[512]{0}', space=vmem, size = 0x400, scoped, tag = 'input window, operand 4, single buffered']
    #allocation11 [shape = 's32[1]{0}', space=sflag, size = 0x4, scoped, tag = 'scoped memory for forward.1']
    #allocation12 [shape = 'u8[28672]{0}', space=vmem, size = 0x7000, scoped, tag = 'input window, operand 5, single buffered']
    #allocation13 [shape = 'u8[1179648]{0}', space=vmem, size = 0x120000, scoped, tag = 'input window, operand 6, single buffered']
    #allocation14 [shape = 's32[1]{0}', space=sflag, size = 0x4, scoped, tag = 'scoped memory for forward.1']
    #allocation15 [shape = 'u8[1024]{0}', space=vmem, size = 0x400, scoped, tag = 'input window, operand 7, single buffered']
    %13 = vsyncpa [#allocation6], 0
    %14 = vsyncpa [#allocation8], 0
    %15 = vsyncpa [#allocation11], 0
    %16 = vsyncpa [#allocation14], 0
    loop: start=0, step=1, limit=4
    $region2: #{forward.1} parent=1 // loop_pre_header
      _
    $region3: #{forward.1} parent=1 // loop_header
      %s18 = sphi 0, %s22
      %p19 = scmp.ge.s32.totalorder %s18, 4
      %s28 = sphi 0, %s30
      %s31 = sphi 0, %s28
      %s32 = sphi 0, %s31
      %s48 = sphi 0, %s32
      %s52 = sphi 0, %s52
      %s54 = sphi 0, %s52
      %s55 = sphi 0, %s54
      %s69 = sphi 0, %s55
      %s73 = sphi 0, %s73
      %s75 = sphi 0, %s73
      %s76 = sphi 0, %s75
      %s90 = sphi 0, %s76
      %s94 = sphi 0, %s94
      %s96 = sphi 0, %s94
      %s97 = sphi 0, %s96
      %s111 = sphi 0, %s97
      %s115 = sphi 0, %s115
      %s117 = sphi 0, %s115
      %s118 = sphi 0, %s117
      %s132 = sphi 0, %s118
      %s136 = sphi 0, %s136
      %s138 = sphi 0, %s136
      %s139 = sphi 0, %s138
      %s153 = sphi 0, %s139
      %s157 = sphi 0, %s157
      %s159 = sphi 0, %s157
      %s160 = sphi 0, %s159
      %s174 = sphi 0, %s160
      %s178 = sphi 0, %s178
      %s180 = sphi 0, %s178
      %s181 = sphi 0, %s180
      %s195 = sphi 0, %s181
      %s201 = sphi 0, %s203
      %s204 = sphi 0, %s201
      %s205 = sphi 0, %s204
      %s221 = sphi 0, %s205
    $region4: #{forward.1} parent=1 // loop_header_branch
      %21 = sbr.rel (%p19) target = $region8
    $region5: #{forward.1} parent=1 // loop_body
      %s23 = ssub.s32 %s18, 1
      %s24 = ssub.s32 %s18, 2
      %s25 = sadd.s32 %s18, 1
      %s26 = ssub.s32 %s18, %s25
      %p27 = scmp.eq.s32.totalorder %s26, 0
      %s29 = sadd.s32 %s28, 1
      %s30 = scalar_select %p27, %s28, %s29
      %p33 = pneg %p27
      %p34 = scmp.eq.s32.totalorder %s18, 1
      %p35 = por %p33, %p34
      %p36 = scmp.ne.s32.totalorder %s28, %s31
      %p37 = scmp.eq.s32.totalorder %s18, 0
      %p38 = por %p36, %p37
      %p39 = scmp.ne.s32.totalorder %s28, %s31
      %p40 = scmp.eq.s32.totalorder %s23, 1
      %p41 = por %p39, %p40
      %p42 = scmp.ne.s32.totalorder %s31, %s32
      %p43 = scmp.eq.s32.totalorder %s23, 0
      %p44 = por %p42, %p43
      %p45 = scmp.ne.s32.totalorder %s31, %s32
      %p46 = scmp.eq.s32.totalorder %s24, 1
      %p47 = por %p45, %p46
      %p49 = scmp.ne.s32.totalorder %s32, %s48
      %p50 = scmp.eq.s32.totalorder %s24, 0
      %p51 = por %p49, %p50
      %s53 = sadd.s32 %s52, 1
      %p56 = scmp.eq.s32.totalorder %s18, 1
      %p57 = scmp.ne.s32.totalorder %s52, %s54
      %p58 = scmp.eq.s32.totalorder %s18, 0
      %p59 = por %p57, %p58
      %p60 = scmp.ne.s32.totalorder %s52, %s54
      %p61 = scmp.eq.s32.totalorder %s23, 1
      %p62 = por %p60, %p61
      %p63 = scmp.ne.s32.totalorder %s54, %s55
      %p64 = scmp.eq.s32.totalorder %s23, 0
      %p65 = por %p63, %p64
      %p66 = scmp.ne.s32.totalorder %s54, %s55
      %p67 = scmp.eq.s32.totalorder %s24, 1
      %p68 = por %p66, %p67
      %p70 = scmp.ne.s32.totalorder %s55, %s69
      %p71 = scmp.eq.s32.totalorder %s24, 0
      %p72 = por %p70, %p71
      %s74 = sadd.s32 %s73, 1
      %p77 = scmp.eq.s32.totalorder %s18, 1
      %p78 = scmp.ne.s32.totalorder %s73, %s75
      %p79 = scmp.eq.s32.totalorder %s18, 0
      %p80 = por %p78, %p79
      %p81 = scmp.ne.s32.totalorder %s73, %s75
      %p82 = scmp.eq.s32.totalorder %s23, 1
      %p83 = por %p81, %p82
      %p84 = scmp.ne.s32.totalorder %s75, %s76
      %p85 = scmp.eq.s32.totalorder %s23, 0
      %p86 = por %p84, %p85
      %p87 = scmp.ne.s32.totalorder %s75, %s76
      %p88 = scmp.eq.s32.totalorder %s24, 1
      %p89 = por %p87, %p88
      %p91 = scmp.ne.s32.totalorder %s76, %s90
      %p92 = scmp.eq.s32.totalorder %s24, 0
      %p93 = por %p91, %p92
      %s95 = sadd.s32 %s94, 1
      %p98 = scmp.eq.s32.totalorder %s18, 1
      %p99 = scmp.ne.s32.totalorder %s94, %s96
      %p100 = scmp.eq.s32.totalorder %s18, 0
      %p101 = por %p99, %p100
      %p102 = scmp.ne.s32.totalorder %s94, %s96
      %p103 = scmp.eq.s32.totalorder %s23, 1
      %p104 = por %p102, %p103
      %p105 = scmp.ne.s32.totalorder %s96, %s97
      %p106 = scmp.eq.s32.totalorder %s23, 0
      %p107 = por %p105, %p106
      %p108 = scmp.ne.s32.totalorder %s96, %s97
      %p109 = scmp.eq.s32.totalorder %s24, 1
      %p110 = por %p108, %p109
      %p112 = scmp.ne.s32.totalorder %s97, %s111
      %p113 = scmp.eq.s32.totalorder %s24, 0
      %p114 = por %p112, %p113
      %s116 = sadd.s32 %s115, 1
      %p119 = scmp.eq.s32.totalorder %s18, 1
      %p120 = scmp.ne.s32.totalorder %s115, %s117
      %p121 = scmp.eq.s32.totalorder %s18, 0
      %p122 = por %p120, %p121
      %p123 = scmp.ne.s32.totalorder %s115, %s117
      %p124 = scmp.eq.s32.totalorder %s23, 1
      %p125 = por %p123, %p124
      %p126 = scmp.ne.s32.totalorder %s117, %s118
      %p127 = scmp.eq.s32.totalorder %s23, 0
      %p128 = por %p126, %p127
      %p129 = scmp.ne.s32.totalorder %s117, %s118
      %p130 = scmp.eq.s32.totalorder %s24, 1
      %p131 = por %p129, %p130
      %p133 = scmp.ne.s32.totalorder %s118, %s132
      %p134 = scmp.eq.s32.totalorder %s24, 0
      %p135 = por %p133, %p134
      %s137 = sadd.s32 %s136, 1
      %p140 = scmp.eq.s32.totalorder %s18, 1
      %p141 = scmp.ne.s32.totalorder %s136, %s138
      %p142 = scmp.eq.s32.totalorder %s18, 0
      %p143 = por %p141, %p142
      %p144 = scmp.ne.s32.totalorder %s136, %s138
      %p145 = scmp.eq.s32.totalorder %s23, 1
      %p146 = por %p144, %p145
      %p147 = scmp.ne.s32.totalorder %s138, %s139
      %p148 = scmp.eq.s32.totalorder %s23, 0
      %p149 = por %p147, %p148
      %p150 = scmp.ne.s32.totalorder %s138, %s139
      %p151 = scmp.eq.s32.totalorder %s24, 1
      %p152 = por %p150, %p151
      %p154 = scmp.ne.s32.totalorder %s139, %s153
      %p155 = scmp.eq.s32.totalorder %s24, 0
      %p156 = por %p154, %p155
      %s158 = sadd.s32 %s157, 1
      %p161 = scmp.eq.s32.totalorder %s18, 1
      %p162 = scmp.ne.s32.totalorder %s157, %s159
      %p163 = scmp.eq.s32.totalorder %s18, 0
      %p164 = por %p162, %p163
      %p165 = scmp.ne.s32.totalorder %s157, %s159
      %p166 = scmp.eq.s32.totalorder %s23, 1
      %p167 = por %p165, %p166
      %p168 = scmp.ne.s32.totalorder %s159, %s160
      %p169 = scmp.eq.s32.totalorder %s23, 0
      %p170 = por %p168, %p169
      %p171 = scmp.ne.s32.totalorder %s159, %s160
      %p172 = scmp.eq.s32.totalorder %s24, 1
      %p173 = por %p171, %p172
      %p175 = scmp.ne.s32.totalorder %s160, %s174
      %p176 = scmp.eq.s32.totalorder %s24, 0
      %p177 = por %p175, %p176
      %s179 = sadd.s32 %s178, 1
      %p182 = scmp.eq.s32.totalorder %s18, 1
      %p183 = scmp.ne.s32.totalorder %s178, %s180
      %p184 = scmp.eq.s32.totalorder %s18, 0
      %p185 = por %p183, %p184
      %p186 = scmp.ne.s32.totalorder %s178, %s180
      %p187 = scmp.eq.s32.totalorder %s23, 1
      %p188 = por %p186, %p187
      %p189 = scmp.ne.s32.totalorder %s180, %s181
      %p190 = scmp.eq.s32.totalorder %s23, 0
      %p191 = por %p189, %p190
      %p192 = scmp.ne.s32.totalorder %s180, %s181
      %p193 = scmp.eq.s32.totalorder %s24, 1
      %p194 = por %p192, %p193
      %p196 = scmp.ne.s32.totalorder %s181, %s195
      %p197 = scmp.eq.s32.totalorder %s24, 0
      %p198 = por %p196, %p197
      %s199 = ssub.s32 %s18, %s25
      %p200 = scmp.eq.s32.totalorder %s199, 0
      %s202 = sadd.s32 %s201, 1
      %s203 = scalar_select %p200, %s201, %s202
      %p206 = pneg %p200
      %p207 = scmp.eq.s32.totalorder %s18, 1
      %p208 = por %p206, %p207
      %p209 = scmp.ne.s32.totalorder %s201, %s204
      %p210 = scmp.eq.s32.totalorder %s18, 0
      %p211 = por %p209, %p210
      %p212 = scmp.ne.s32.totalorder %s201, %s204
      %p213 = scmp.eq.s32.totalorder %s23, 1
      %p214 = por %p212, %p213
      %p215 = scmp.ne.s32.totalorder %s204, %s205
      %p216 = scmp.eq.s32.totalorder %s23, 0
      %p217 = por %p215, %p216
      %p218 = scmp.ne.s32.totalorder %s204, %s205
      %p219 = scmp.eq.s32.totalorder %s24, 1
      %p220 = por %p218, %p219
      %p222 = scmp.ne.s32.totalorder %s205, %s221
      %p223 = scmp.eq.s32.totalorder %s24, 0
      %p224 = por %p222, %p223
      %p225 = scmp.le.s32.totalorder 1, %s18
      %p226 = scmp.lt.s32.totalorder %s18, 3
      %p227 = pnand %p225, %p226
      %p228 = pneg %p227
      // Predicated region
      $region9: #{forward.1} parent=5 // pred_check
        _
      $region10: #{forward.1} parent=5 // pred_check_branch
        %230 = sbr.rel (%p227) target = $region12
      $region11: #{forward.1} parent=5 // pred_region
        %s231 = ssub.s32 %s18, 1
        // Predicated region
        $region13: #{forward.1} parent=11 // pred_check
          %p232 = pneg %p65
        $region14: #{forward.1} parent=11 // pred_check_branch
          %234 = sbr.rel (%p232) target = $region16
        $region15: #{forward.1} parent=11 // pred_region
          %s236 = ssub.s32 896, 896
          %237 = vsyncadd [#allocation6], %s236
          %s238 = sshll.u32 [#allocation5], 4
          %s239 = int_to_ptr.vmem [resolvable:$true] %s238
          %244 = dma.hbm_to_vmem [thread:$0]  %s1, 896, %s239, [#allocation6], 128, 128, 8
        $region16: #{forward.1} parent=11 // pred_fallthru
          _
        // Predicated region
        $region17: #{forward.1} parent=11 // pred_check
          %p245 = pneg %p86
        $region18: #{forward.1} parent=11 // pred_check_branch
          %247 = sbr.rel (%p245) target = $region20
        $region19: #{forward.1} parent=11 // pred_region
          %s249 = ssub.s32 2048, 2048
          %250 = vsyncadd [#allocation8], %s249
          %s251 = sshll.u32 [#allocation7], 4
          %s252 = int_to_ptr.vmem [resolvable:$true] %s251
          %257 = dma.hbm_to_vmem [thread:$0]  %s2, 2048, %s252, [#allocation8], 64, 64, 4
        $region20: #{forward.1} parent=11 // pred_fallthru
          _
        // Predicated region
        $region21: #{forward.1} parent=11 // pred_check
          %p258 = pneg %p107
        $region22: #{forward.1} parent=11 // pred_check_branch
          %260 = sbr.rel (%p258) target = $region24
        $region23: #{forward.1} parent=11 // pred_region
          %s262 = ssub.s32 1024, 1024
          %263 = vsyncadd [#allocation8], %s262
          %s264 = sshll.u32 [#allocation9], 4
          %s265 = int_to_ptr.vmem [resolvable:$true] %s264
          %270 = dma.hbm_to_vmem [thread:$0]  %s3, 1024, %s265, [#allocation8], 64, 64, 4
        $region24: #{forward.1} parent=11 // pred_fallthru
          _
        // Predicated region
        $region25: #{forward.1} parent=11 // pred_check
          %p271 = pneg %p128
        $region26: #{forward.1} parent=11 // pred_check_branch
          %273 = sbr.rel (%p271) target = $region28
        $region27: #{forward.1} parent=11 // pred_region
          %s275 = ssub.s32 16, 16
          %276 = vsyncadd [#allocation11], %s275
          %s278 = sshll.u32 [#allocation10], 4
          %s279 = int_to_ptr.vmem [resolvable:$true] %s278
          %281 = dma.hbm_to_vmem [thread:$0]  %s4, 16, %s279, [#allocation11]
        $region28: #{forward.1} parent=11 // pred_fallthru
          _
        // Predicated region
        $region29: #{forward.1} parent=11 // pred_check
          %p282 = pneg %p149
        $region30: #{forward.1} parent=11 // pred_check_branch
          %284 = sbr.rel (%p282) target = $region32
        $region31: #{forward.1} parent=11 // pred_region
          %s286 = ssub.s32 896, 896
          %287 = vsyncadd [#allocation11], %s286
          %s288 = sshll.u32 [#allocation12], 4
          %s289 = int_to_ptr.vmem [resolvable:$true] %s288
          %294 = dma.hbm_to_vmem [thread:$0]  %s5, 896, %s289, [#allocation11], 128, 128, 8
        $region32: #{forward.1} parent=11 // pred_fallthru
          _
        // Predicated region
        $region33: #{forward.1} parent=11 // pred_check
          %p295 = pneg %p170
        $region34: #{forward.1} parent=11 // pred_check_branch
          %297 = sbr.rel (%p295) target = $region36
        $region35: #{forward.1} parent=11 // pred_region
          %s299 = ssub.s32 36864, 36864
          %300 = vsyncadd [#allocation14], %s299
          %s301 = sshll.u32 [#allocation13], 4
          %s302 = int_to_ptr.vmem [resolvable:$true] %s301
          %307 = dma.hbm_to_vmem [thread:$0]  %s6, 36864, %s302, [#allocation14], 128, 128, 8
        $region36: #{forward.1} parent=11 // pred_fallthru
          _
        // Predicated region
        $region37: #{forward.1} parent=11 // pred_check
          %p308 = pneg %p191
        $region38: #{forward.1} parent=11 // pred_check_branch
          %310 = sbr.rel (%p308) target = $region40
        $region39: #{forward.1} parent=11 // pred_region
          %s312 = ssub.s32 32, 32
          %313 = vsyncadd [#allocation14], %s312
          %s315 = sshll.u32 [#allocation15], 4
          %s316 = int_to_ptr.vmem [resolvable:$true] %s315
          %318 = dma.hbm_to_vmem [thread:$0]  %s7, 32, %s316, [#allocation14]
        $region40: #{forward.1} parent=11 // pred_fallthru
          _
      $region12: #{forward.1} parent=5 // pred_fallthru
        _
      %p319 = scmp.lt.s32.totalorder %s18, 2
      // Predicated region
      $region41: #{forward.1} parent=5 // pred_check
        %p320 = pneg %p319
      $region42: #{forward.1} parent=5 // pred_check_branch
        %322 = sbr.rel (%p320) target = $region44
      $region43: #{forward.1} parent=5 // pred_region
        // Predicated region
        $region45: #{forward.1} parent=43 // pred_check
          %p323 = pneg %p38
        $region46: #{forward.1} parent=43 // pred_check_branch
          %325 = sbr.rel (%p323) target = $region48
        $region47: #{forward.1} parent=43 // pred_region
          %p326 = scmp.lt.s32.totalorder %s18, 1
          %s327 = scalar_select %p326, %s18, 1
          %s328 = smul.addr %s327, 32
          %s329 = smul.addr %s328, 4
          %s330 = scalar_lea.vmem %s0, %s329
        $region48: #{forward.1} parent=43 // pred_fallthru
          _
      $region44: #{forward.1} parent=5 // pred_fallthru
        _
      %p331 = scmp.le.s32.totalorder 1, %s18
      %p332 = scmp.lt.s32.totalorder %s18, 3
      %p333 = pnand %p331, %p332
      %p334 = pneg %p333
      // Predicated region
      $region49: #{forward.1} parent=5 // pred_check
        _
      $region50: #{forward.1} parent=5 // pred_check_branch
        %336 = sbr.rel (%p333) target = $region52
      $region51: #{forward.1} parent=5 // pred_region
        %s337 = ssub.s32 %s18, 1
        // Predicated region
        $region53: #{forward.1} parent=51 // pred_check
          %p338 = pneg %p65
        $region54: #{forward.1} parent=51 // pred_check_branch
          %340 = sbr.rel (%p338) target = $region56
        $region55: #{forward.1} parent=51 // pred_region
          %341 = dma.done [#allocation6], 896
        $region56: #{forward.1} parent=51 // pred_fallthru
          _
        // Predicated region
        $region57: #{forward.1} parent=51 // pred_check
          %p342 = pneg %p86
        $region58: #{forward.1} parent=51 // pred_check_branch
          %344 = sbr.rel (%p342) target = $region60
        $region59: #{forward.1} parent=51 // pred_region
          %345 = dma.done [#allocation8], 2048
        $region60: #{forward.1} parent=51 // pred_fallthru
          _
        // Predicated region
        $region61: #{forward.1} parent=51 // pred_check
          %p346 = pneg %p107
        $region62: #{forward.1} parent=51 // pred_check_branch
          %348 = sbr.rel (%p346) target = $region64
        $region63: #{forward.1} parent=51 // pred_region
          %349 = dma.done [#allocation8], 1024
        $region64: #{forward.1} parent=51 // pred_fallthru
          _
        // Predicated region
        $region65: #{forward.1} parent=51 // pred_check
          %p350 = pneg %p128
        $region66: #{forward.1} parent=51 // pred_check_branch
          %352 = sbr.rel (%p350) target = $region68
        $region67: #{forward.1} parent=51 // pred_region
          %353 = dma.done [#allocation11], 16
        $region68: #{forward.1} parent=51 // pred_fallthru
          _
        // Predicated region
        $region69: #{forward.1} parent=51 // pred_check
          %p354 = pneg %p149
        $region70: #{forward.1} parent=51 // pred_check_branch
          %356 = sbr.rel (%p354) target = $region72
        $region71: #{forward.1} parent=51 // pred_region
          %357 = dma.done [#allocation11], 896
        $region72: #{forward.1} parent=51 // pred_fallthru
          _
        // Predicated region
        $region73: #{forward.1} parent=51 // pred_check
          %p358 = pneg %p170
        $region74: #{forward.1} parent=51 // pred_check_branch
          %360 = sbr.rel (%p358) target = $region76
        $region75: #{forward.1} parent=51 // pred_region
          %361 = dma.done [#allocation14], 36864
        $region76: #{forward.1} parent=51 // pred_fallthru
          _
        // Predicated region
        $region77: #{forward.1} parent=51 // pred_check
          %p362 = pneg %p191
        $region78: #{forward.1} parent=51 // pred_check_branch
          %364 = sbr.rel (%p362) target = $region80
        $region79: #{forward.1} parent=51 // pred_region
          %365 = dma.done [#allocation14], 32
        $region80: #{forward.1} parent=51 // pred_fallthru
          _
        %p366 = scmp.lt.s32.totalorder %s23, 1
        %s367 = scalar_select %p366, %s23, 1
        %s368 = smul.addr %s367, 32
        %s369 = smul.addr %s368, 4
        %s370 = scalar_lea.vmem %s0, %s369
        %p371 = pneg %p44
        %p372 = pneg %p41
        %p373 = pneg %p65
        %p374 = pneg %p62
        %p375 = pneg %p86
        %p376 = pneg %p83
        %p377 = pneg %p107
        %p378 = pneg %p104
        %p379 = pneg %p128
        %p380 = pneg %p125
        %p381 = pneg %p149
        %p382 = pneg %p146
        %p383 = pneg %p170
        %p384 = pneg %p167
        %p385 = pneg %p191
        %p386 = pneg %p188
        %p387 = pneg %p217
        %p388 = pneg %p214
        %p389 = scmp.lt.s32.totalorder %s23, 1
        %s390 = scalar_select %p389, %s23, 1
        %s391 = smul.addr %s390, 56
        %s392 = smul.addr %s391, 8
        %s393 = scalar_lea.vmem %s8, %s392
        %p394 = scmp.lt.s32.totalorder %s23, 1
        %s395 = scalar_select %p394, %s23, 1
        %s396 = smul.addr %s395, 32
        %s397 = smul.addr %s396, 4
        %s398 = scalar_lea.vmem %s0, %s397
        %p399 = scmp.lt.s32.totalorder %s23, 1
        %s400 = scalar_select %p399, %s23, 1
        %s401 = smul.addr %s400, 56
        %s402 = smul.addr %s401, 8
        %s403 = scalar_lea.vmem %s8, %s402
        %v405 = vld [vmem:[%s398] sm:$0xf]
        %v406 = vld [vmem:[%s398 + $0x4] sm:$0xf]
        %v407 = vld [vmem:[%s398 + $0x8] sm:$0xf]
        %v408 = vld [vmem:[%s398 + $0xc] sm:$0xf]
        %v409 = vld [vmem:[%s398 + $0x10] sm:$0xf]
        %v410 = vld [vmem:[%s398 + $0x14] sm:$0xf]
        %v411 = vld [vmem:[%s398 + $0x18] sm:$0xf]
        %v412 = vld [vmem:[%s398 + $0x1c] sm:$0xf]
        %v413 = vld [vmem:[%s398 + $0x20] sm:$0xf]
        %v414 = vld [vmem:[%s398 + $0x24] sm:$0xf]
        %v415 = vld [vmem:[%s398 + $0x28] sm:$0xf]
        %v416 = vld [vmem:[%s398 + $0x2c] sm:$0xf]
        %v417 = vld [vmem:[%s398 + $0x30] sm:$0xf]
        %v418 = vld [vmem:[%s398 + $0x34] sm:$0xf]
        %v419 = vld [vmem:[%s398 + $0x38] sm:$0xf]
        %v420 = vld [vmem:[%s398 + $0x3c] sm:$0xf]
        %v421 = vld [vmem:[%s398 + $0x40] sm:$0xf]
        %v422 = vld [vmem:[%s398 + $0x44] sm:$0xf]
        %v423 = vld [vmem:[%s398 + $0x48] sm:$0xf]
        %v424 = vld [vmem:[%s398 + $0x4c] sm:$0xf]
        %v425 = vld [vmem:[%s398 + $0x50] sm:$0xf]
        %v426 = vld [vmem:[%s398 + $0x54] sm:$0xf]
        %v427 = vld [vmem:[%s398 + $0x58] sm:$0xf]
        %v428 = vld [vmem:[%s398 + $0x5c] sm:$0xf]
        %v429 = vld [vmem:[%s398 + $0x60] sm:$0xf]
        %v430 = vld [vmem:[%s398 + $0x64] sm:$0xf]
        %v431 = vld [vmem:[%s398 + $0x68] sm:$0xf]
        %v432 = vld [vmem:[%s398 + $0x6c] sm:$0xf]
        %v433 = vld [vmem:[%s398 + $0x70] sm:$0xf]
        %v434 = vld [vmem:[%s398 + $0x74] sm:$0xf]
        %v435 = vld [vmem:[%s398 + $0x78] sm:$0xf]
        %v436 = vld [vmem:[%s398 + $0x7c] sm:$0xf]
        %437 = vst [vmem:[#allocation2] sm:$0xf] %v405
        %438 = vst [vmem:[#allocation2 + $0x8] sm:$0xf] %v406
        %439 = vst [vmem:[#allocation2 + $0x10] sm:$0xf] %v407
        %440 = vst [vmem:[#allocation2 + $0x18] sm:$0xf] %v408
        %441 = vst [vmem:[#allocation2 + $0x20] sm:$0xf] %v409
        %442 = vst [vmem:[#allocation2 + $0x28] sm:$0xf] %v410
        %443 = vst [vmem:[#allocation2 + $0x30] sm:$0xf] %v411
        %444 = vst [vmem:[#allocation2 + $0x38] sm:$0xf] %v412
        %445 = vst [vmem:[#allocation2 + $0x40] sm:$0xf] %v413
        %446 = vst [vmem:[#allocation2 + $0x48] sm:$0xf] %v414
        %447 = vst [vmem:[#allocation2 + $0x50] sm:$0xf] %v415
        %448 = vst [vmem:[#allocation2 + $0x58] sm:$0xf] %v416
        %449 = vst [vmem:[#allocation2 + $0x60] sm:$0xf] %v417
        %450 = vst [vmem:[#allocation2 + $0x68] sm:$0xf] %v418
        %451 = vst [vmem:[#allocation2 + $0x70] sm:$0xf] %v419
        %452 = vst [vmem:[#allocation2 + $0x78] sm:$0xf] %v420
        %453 = vst [vmem:[#allocation2 + $0x80] sm:$0xf] %v421
        %454 = vst [vmem:[#allocation2 + $0x88] sm:$0xf] %v422
        %455 = vst [vmem:[#allocation2 + $0x90] sm:$0xf] %v423
        %456 = vst [vmem:[#allocation2 + $0x98] sm:$0xf] %v424
        %457 = vst [vmem:[#allocation2 + $0xa0] sm:$0xf] %v425
        %458 = vst [vmem:[#allocation2 + $0xa8] sm:$0xf] %v426
        %459 = vst [vmem:[#allocation2 + $0xb0] sm:$0xf] %v427
        %460 = vst [vmem:[#allocation2 + $0xb8] sm:$0xf] %v428
        %461 = vst [vmem:[#allocation2 + $0xc0] sm:$0xf] %v429
        %462 = vst [vmem:[#allocation2 + $0xc8] sm:$0xf] %v430
        %463 = vst [vmem:[#allocation2 + $0xd0] sm:$0xf] %v431
        %464 = vst [vmem:[#allocation2 + $0xd8] sm:$0xf] %v432
        %465 = vst [vmem:[#allocation2 + $0xe0] sm:$0xf] %v433
        %466 = vst [vmem:[#allocation2 + $0xe8] sm:$0xf] %v434
        %467 = vst [vmem:[#allocation2 + $0xf0] sm:$0xf] %v435
        %468 = vst [vmem:[#allocation2 + $0xf8] sm:$0xf] %v436
        %469 = vst [vmem:[#allocation2 + $0x100] sm:$0xff] 0
        %v470 = vld [vmem:[#allocation5] sm:$0xff]
        %v471 = vld [vmem:[#allocation5 + $0x8] sm:$0xff]
        %v472 = vld [vmem:[#allocation5 + $0x10] sm:$0xff]
        %v473 = vld [vmem:[#allocation5 + $0x18] sm:$0xff]
        %v474 = vld [vmem:[#allocation5 + $0x20] sm:$0xff]
        %v475 = vld [vmem:[#allocation5 + $0x28] sm:$0xff]
        %v476 = vld [vmem:[#allocation5 + $0x30] sm:$0x11]
        %v484 = vunpack.c.l.b16 %v470
        %v485 = vunpack.c.h.b16 %v470
        %v486 = vunpack.c.l.b16 %v471
        %v487 = vunpack.c.h.b16 %v471
        %v488 = vunpack.c.l.b16 %v472
        %v489 = vunpack.c.h.b16 %v472
        %v490 = vunpack.c.l.b16 %v473
        %v491 = vunpack.c.h.b16 %v473
        %v492 = vunpack.c.l.b16 %v474
        %v493 = vunpack.c.h.b16 %v474
        %v494 = vunpack.c.l.b16 %v475
        %v495 = vunpack.c.h.b16 %v475
        %v496 = vunpack.c.l.b16 %v476
        %v497 = vunpack.c.h.b16 %v476
        %v498 = vpack.c.b16 %v486, %v484
        %v499 = vpack.c.b16 %v487, %v485
        %v500 = vpack.c.b16 %v490, %v488
        %v501 = vpack.c.b16 %v491, %v489
        %v502 = vpack.c.b16 %v494, %v492
        %v503 = vpack.c.b16 %v495, %v493
        %v504 = vpack.c.b16 %v496, %v496
        %v505 = vpack.c.b16 %v497, %v497
        %v546 = vunpack.c.l.b16 %v405
        %v547 = vunpack.c.l.b16 %v406
        %v548 = vunpack.c.l.b16 %v407
        %v549 = vunpack.c.l.b16 %v408
        %v550 = vunpack.c.l.b16 %v409
        %v551 = vunpack.c.l.b16 %v410
        %v552 = vunpack.c.l.b16 %v411
        %v553 = vunpack.c.l.b16 %v412
        %v554 = vunpack.c.l.b16 %v413
        %v555 = vunpack.c.l.b16 %v414
        %v556 = vunpack.c.l.b16 %v415
        %v557 = vunpack.c.l.b16 %v416
        %v558 = vunpack.c.l.b16 %v417
        %v559 = vunpack.c.l.b16 %v418
        %v560 = vunpack.c.l.b16 %v419
        %v561 = vunpack.c.l.b16 %v420
        %v562 = vunpack.c.l.b16 %v421
        %v563 = vunpack.c.l.b16 %v422
        %v564 = vunpack.c.l.b16 %v423
        %v565 = vunpack.c.l.b16 %v424
        %v566 = vunpack.c.l.b16 %v425
        %v567 = vunpack.c.l.b16 %v426
        %v568 = vunpack.c.l.b16 %v427
        %v569 = vunpack.c.l.b16 %v428
        %v570 = vunpack.c.l.b16 %v429
        %v571 = vunpack.c.l.b16 %v430
        %v572 = vunpack.c.l.b16 %v431
        %v573 = vunpack.c.l.b16 %v432
        %v574 = vunpack.c.l.b16 %v433
        %v575 = vunpack.c.l.b16 %v434
        %v576 = vunpack.c.l.b16 %v435
        %v577 = vunpack.c.l.b16 %v436
        %v578 = vpack.c.b16 %v547, %v546
        %v579 = vpack.c.b16 %v549, %v548
        %v580 = vpack.c.b16 %v551, %v550
        %v581 = vpack.c.b16 %v553, %v552
        %v582 = vpack.c.b16 %v555, %v554
        %v583 = vpack.c.b16 %v557, %v556
        %v584 = vpack.c.b16 %v559, %v558
        %v585 = vpack.c.b16 %v561, %v560
        %v586 = vpack.c.b16 %v563, %v562
        %v587 = vpack.c.b16 %v565, %v564
        %v588 = vpack.c.b16 %v567, %v566
        %v589 = vpack.c.b16 %v569, %v568
        %v590 = vpack.c.b16 %v571, %v570
        %v591 = vpack.c.b16 %v573, %v572
        %v592 = vpack.c.b16 %v575, %v574
        %v593 = vpack.c.b16 %v577, %v576
        %610 = vmatprep.subr.bf16.mxu0 0
        %611 = vmatpush1.bf16.msra.mxu0 %v585
        %612 = vmatprep.subr.bf16.mxu0 0
        %613 = vmatpush1.bf16.msra.mxu0 %v584
        %614 = vmatprep.subr.bf16.mxu0 0
        %615 = vmatpush1.bf16.msra.mxu0 %v583
        %616 = vmatprep.subr.bf16.mxu0 0
        %617 = vmatpush1.bf16.msra.mxu0 %v582
        %618 = vmatprep.subr.bf16.mxu0 0
        %619 = vmatpush1.bf16.msra.mxu0 %v581
        %620 = vmatprep.subr.bf16.mxu0 0
        %621 = vmatpush1.bf16.msra.mxu0 %v580
        %622 = vmatprep.subr.bf16.mxu0 0
        %623 = vmatpush1.bf16.msra.mxu0 %v579
        %624 = vmatprep.subr.bf16.mxu0 0
        %625 = vmatpush1.bf16.msra.mxu0 %v578
        %626 = vmatprep.subr.bf16.mxu0 0
        %627 = vmatpush2.bf16.msra.mxu0 %v593
        %628 = vmatprep.subr.bf16.mxu0 0
        %629 = vmatpush2.bf16.msra.mxu0 %v592
        %630 = vmatprep.subr.bf16.mxu0 0
        %631 = vmatpush2.bf16.msra.mxu0 %v591
        %632 = vmatprep.subr.bf16.mxu0 0
        %633 = vmatpush2.bf16.msra.mxu0 %v590
        %634 = vmatprep.subr.bf16.mxu0 0
        %635 = vmatpush2.bf16.msra.mxu0 %v589
        %636 = vmatprep.subr.bf16.mxu0 0
        %637 = vmatpush2.bf16.msra.mxu0 %v588
        %638 = vmatprep.subr.bf16.mxu0 0
        %639 = vmatpush2.bf16.msra.mxu0 %v587
        %640 = vmatprep.subr.bf16.mxu0 0
        %641 = vmatpush2.bf16.msra.mxu0 %v586
        %642 = vmatprep.mubr.bf16.mxu0 %v499
        %643 = vmatmul.mubr.bf16.gmra.mxu0 %v498
        %v644 = vpop.f32.mrf.mxu0
        %v645 = vadd.f32 0.0, %v644
        %v646 = vpop.f32.mrf.mxu0
        %v647 = vpop.f32.mrf.mxu0
        %v648 = vadd.f32 0.0, %v647
        %v649 = vpop.f32.mrf.mxu0
        %650 = vmatprep.mubr.bf16.mxu0 %v501
        %651 = vmatmul.mubr.bf16.gmra.mxu0 %v500
        %v652 = vpop.f32.mrf.mxu0
        %v653 = vadd.f32 0.0, %v652
        %v654 = vpop.f32.mrf.mxu0
        %v655 = vpop.f32.mrf.mxu0
        %v656 = vadd.f32 0.0, %v655
        %v657 = vpop.f32.mrf.mxu0
        %658 = vmatprep.mubr.bf16.mxu0 %v503
        %659 = vmatmul.mubr.bf16.gmra.mxu0 %v502
        %v660 = vpop.f32.mrf.mxu0
        %v661 = vadd.f32 0.0, %v660
        %v662 = vpop.f32.mrf.mxu0
        %v663 = vpop.f32.mrf.mxu0
        %v664 = vadd.f32 0.0, %v663
        %v665 = vpop.f32.mrf.mxu0
        %666 = vmatprep.mubr.bf16.mxu0 %v505
        %667 = vmatmul.mubr.bf16.gmra.mxu0 %v504
        %v668 = vpop.f32.mrf.mxu0
        %v669 = vadd.f32 0.0, %v668
        %v670 = vpop.f32.mrf.mxu0
        %v671 = vpop.f32.mrf.mxu0
        %v672 = vpop.f32.mrf.mxu0
        %673 = vdwg.mxu0
        %v674 = vpack.c.bf16 %v648, %v645
        %v675 = vpack.c.bf16 %v656, %v653
        %v676 = vpack.c.bf16 %v664, %v661
        %v677 = vpack.c.bf16 %v669, %v669
        %v678 = vld [vmem:[#allocation9] sm:$0xf]
        %v679 = vld [vmem:[#allocation9 + $0x4] sm:$0xf]
        %v680 = vld [vmem:[#allocation9 + $0x8] sm:$0xf]
        %v681 = vld [vmem:[#allocation9 + $0xc] sm:$0xf]
        %v682 = vld [vmem:[#allocation9 + $0x10] sm:$0xf]
        %v683 = vld [vmem:[#allocation9 + $0x14] sm:$0xf]
        %v684 = vld [vmem:[#allocation9 + $0x18] sm:$0xf]
        %v685 = vld [vmem:[#allocation9 + $0x1c] sm:$0xf]
        %v686 = vld [vmem:[#allocation9 + $0x20] sm:$0xf]
        %v687 = vld [vmem:[#allocation9 + $0x24] sm:$0xf]
        %v688 = vld [vmem:[#allocation9 + $0x28] sm:$0xf]
        %v689 = vld [vmem:[#allocation9 + $0x2c] sm:$0xf]
        %v690 = vld [vmem:[#allocation9 + $0x30] sm:$0xf]
        %v691 = vld [vmem:[#allocation9 + $0x34] sm:$0xf]
        %v692 = vld [vmem:[#allocation9 + $0x38] sm:$0xf]
        %v693 = vld [vmem:[#allocation9 + $0x3c] sm:$0xf]
        %v694 = vld [vmem:[#allocation10] sm:$0x1]
        %v696 = vlaneseq
        %v697 = vshrl.u32 %v696, 7
        %v698 = vsub.s32 0, %v697
        %v699 = vrot.slane %v694, %v698
        %v717 = vunpack.c.l.b16 %v678
        %v718 = vunpack.c.l.b16 %v679
        %v719 = vunpack.c.l.b16 %v680
        %v720 = vunpack.c.l.b16 %v681
        %v721 = vunpack.c.l.b16 %v682
        %v722 = vunpack.c.l.b16 %v683
        %v723 = vunpack.c.l.b16 %v684
        %v724 = vunpack.c.l.b16 %v685
        %v725 = vunpack.c.l.b16 %v686
        %v726 = vunpack.c.l.b16 %v687
        %v727 = vunpack.c.l.b16 %v688
        %v728 = vunpack.c.l.b16 %v689
        %v729 = vunpack.c.l.b16 %v690
        %v730 = vunpack.c.l.b16 %v691
        %v731 = vunpack.c.l.b16 %v692
        %v732 = vunpack.c.l.b16 %v693
        %v733 = vpack.c.b16 %v718, %v717
        %v734 = vpack.c.b16 %v720, %v719
        %v735 = vpack.c.b16 %v722, %v721
        %v736 = vpack.c.b16 %v724, %v723
        %v737 = vpack.c.b16 %v726, %v725
        %v738 = vpack.c.b16 %v728, %v727
        %v739 = vpack.c.b16 %v730, %v729
        %v740 = vpack.c.b16 %v732, %v731
        %749 = vmatprep.subr.bf16.mxu0 0
        %750 = vmatpush1.bf16.msra.mxu0 %v740
        %751 = vmatprep.subr.bf16.mxu0 0
        %752 = vmatpush1.bf16.msra.mxu0 %v739
        %753 = vmatprep.subr.bf16.mxu0 0
        %754 = vmatpush1.bf16.msra.mxu0 %v738
        %755 = vmatprep.subr.bf16.mxu0 0
        %756 = vmatpush1.bf16.msra.mxu0 %v737
        %757 = vmatprep.subr.bf16.mxu0 0
        %758 = vmatpush1.bf16.msra.mxu0 %v736
        %759 = vmatprep.subr.bf16.mxu0 0
        %760 = vmatpush1.bf16.msra.mxu0 %v735
        %761 = vmatprep.subr.bf16.mxu0 0
        %762 = vmatpush1.bf16.msra.mxu0 %v734
        %763 = vmatprep.subr.bf16.mxu0 0
        %764 = vmatpush1.bf16.msra.mxu0 %v733
        %765 = vmatprep.subr.bf16.mxu0 0
        %766 = vmatpush2.bf16.msra.mxu0 0
        %767 = vmatprep.subr.bf16.mxu0 0
        %768 = vmatpush2.bf16.msra.mxu0 0
        %769 = vmatprep.subr.bf16.mxu0 0
        %770 = vmatpush2.bf16.msra.mxu0 0
        %771 = vmatprep.subr.bf16.mxu0 0
        %772 = vmatpush2.bf16.msra.mxu0 0
        %773 = vmatprep.subr.bf16.mxu0 0
        %774 = vmatpush2.bf16.msra.mxu0 0
        %775 = vmatprep.subr.bf16.mxu0 0
        %776 = vmatpush2.bf16.msra.mxu0 0
        %777 = vmatprep.subr.bf16.mxu0 0
        %778 = vmatpush2.bf16.msra.mxu0 0
        %779 = vmatprep.subr.bf16.mxu0 0
        %780 = vmatpush2.bf16.msra.mxu0 0
        %781 = vmatprep.mubr.bf16.mxu0 0
        %782 = vmatmul.mubr.bf16.gmra.mxu0 %v674
        %v783 = vpop.f32.mrf.mxu0
        %v784 = vadd.f32 %v699, %v783
        %v785 = vpop.f32.mrf.mxu0
        %v786 = vpop.f32.mrf.mxu0
        %v787 = vadd.f32 %v699, %v786
        %v788 = vpop.f32.mrf.mxu0
        %789 = vmatprep.mubr.bf16.mxu0 0
        %790 = vmatmul.mubr.bf16.gmra.mxu0 %v675
        %v791 = vpop.f32.mrf.mxu0
        %v792 = vadd.f32 %v699, %v791
        %v793 = vpop.f32.mrf.mxu0
        %v794 = vpop.f32.mrf.mxu0
        %v795 = vadd.f32 %v699, %v794
        %v796 = vpop.f32.mrf.mxu0
        %797 = vmatprep.mubr.bf16.mxu0 0
        %798 = vmatmul.mubr.bf16.gmra.mxu0 %v676
        %v799 = vpop.f32.mrf.mxu0
        %v800 = vadd.f32 %v699, %v799
        %v801 = vpop.f32.mrf.mxu0
        %v802 = vpop.f32.mrf.mxu0
        %v803 = vadd.f32 %v699, %v802
        %v804 = vpop.f32.mrf.mxu0
        %805 = vmatprep.mubr.bf16.mxu0 0
        %806 = vmatmul.mubr.bf16.gmra.mxu0 %v677
        %v807 = vpop.f32.mrf.mxu0
        %v808 = vadd.f32 %v699, %v807
        %v809 = vpop.f32.mrf.mxu0
        %v810 = vpop.f32.mrf.mxu0
        %v811 = vpop.f32.mrf.mxu0
        %812 = vdwg.mxu0
        %v813 = vmax.f32 %v784, 0.0
        %v814 = vmax.f32 %v787, 0.0
        %v815 = vmax.f32 %v792, 0.0
        %v816 = vmax.f32 %v795, 0.0
        %v817 = vmax.f32 %v800, 0.0
        %v818 = vmax.f32 %v803, 0.0
        %v819 = vmax.f32 %v808, 0.0
        %v820 = vld [vmem:[#allocation12] sm:$0xff]
        %v821 = vld [vmem:[#allocation12 + $0x8] sm:$0xff]
        %v822 = vld [vmem:[#allocation12 + $0x10] sm:$0xff]
        %v823 = vld [vmem:[#allocation12 + $0x18] sm:$0xff]
        %v824 = vld [vmem:[#allocation12 + $0x20] sm:$0xff]
        %v825 = vld [vmem:[#allocation12 + $0x28] sm:$0xff]
        %v826 = vld [vmem:[#allocation12 + $0x30] sm:$0x3]
        %v827 = vmul.f32 %v813, %v820
        %v828 = vmul.f32 %v814, %v821
        %v829 = vmul.f32 %v815, %v822
        %v830 = vmul.f32 %v816, %v823
        %v831 = vmul.f32 %v817, %v824
        %v832 = vmul.f32 %v818, %v825
        %v833 = vmul.f32 %v819, %v826
        %v834 = vld [vmem:[#allocation7] sm:$0xf]
        %v835 = vld [vmem:[#allocation7 + $0x4] sm:$0xf]
        %v836 = vld [vmem:[#allocation7 + $0x8] sm:$0xf]
        %v837 = vld [vmem:[#allocation7 + $0xc] sm:$0xf]
        %v838 = vld [vmem:[#allocation7 + $0x10] sm:$0xf]
        %v839 = vld [vmem:[#allocation7 + $0x14] sm:$0xf]
        %v840 = vld [vmem:[#allocation7 + $0x18] sm:$0xf]
        %v841 = vld [vmem:[#allocation7 + $0x1c] sm:$0xf]
        %v842 = vld [vmem:[#allocation7 + $0x20] sm:$0xf]
        %v843 = vld [vmem:[#allocation7 + $0x24] sm:$0xf]
        %v844 = vld [vmem:[#allocation7 + $0x28] sm:$0xf]
        %v845 = vld [vmem:[#allocation7 + $0x2c] sm:$0xf]
        %v846 = vld [vmem:[#allocation7 + $0x30] sm:$0xf]
        %v847 = vld [vmem:[#allocation7 + $0x34] sm:$0xf]
        %v848 = vld [vmem:[#allocation7 + $0x38] sm:$0xf]
        %v849 = vld [vmem:[#allocation7 + $0x3c] sm:$0xf]
        %v850 = vld [vmem:[#allocation7 + $0x40] sm:$0xf]
        %v851 = vld [vmem:[#allocation7 + $0x44] sm:$0xf]
        %v852 = vld [vmem:[#allocation7 + $0x48] sm:$0xf]
        %v853 = vld [vmem:[#allocation7 + $0x4c] sm:$0xf]
        %v854 = vld [vmem:[#allocation7 + $0x50] sm:$0xf]
        %v855 = vld [vmem:[#allocation7 + $0x54] sm:$0xf]
        %v856 = vld [vmem:[#allocation7 + $0x58] sm:$0xf]
        %v857 = vld [vmem:[#allocation7 + $0x5c] sm:$0xf]
        %v858 = vld [vmem:[#allocation7 + $0x60] sm:$0xf]
        %v859 = vld [vmem:[#allocation7 + $0x64] sm:$0xf]
        %v860 = vld [vmem:[#allocation7 + $0x68] sm:$0xf]
        %v861 = vld [vmem:[#allocation7 + $0x6c] sm:$0xf]
        %v862 = vld [vmem:[#allocation7 + $0x70] sm:$0xf]
        %v863 = vld [vmem:[#allocation7 + $0x74] sm:$0xf]
        %v864 = vld [vmem:[#allocation7 + $0x78] sm:$0xf]
        %v865 = vld [vmem:[#allocation7 + $0x7c] sm:$0xf]
        %v866 = vpack.c.bf16 %v828, %v827
        %v867 = vpack.c.bf16 %v830, %v829
        %v868 = vpack.c.bf16 %v832, %v831
        %v869 = vpack.c.bf16 %v833, %v833
        %v902 = vunpack.c.l.b16 %v834
        %v903 = vunpack.c.l.b16 %v835
        %v904 = vunpack.c.l.b16 %v836
        %v905 = vunpack.c.l.b16 %v837
        %v906 = vunpack.c.l.b16 %v838
        %v907 = vunpack.c.l.b16 %v839
        %v908 = vunpack.c.l.b16 %v840
        %v909 = vunpack.c.l.b16 %v841
        %v910 = vunpack.c.l.b16 %v842
        %v911 = vunpack.c.l.b16 %v843
        %v912 = vunpack.c.l.b16 %v844
        %v913 = vunpack.c.l.b16 %v845
        %v914 = vunpack.c.l.b16 %v846
        %v915 = vunpack.c.l.b16 %v847
        %v916 = vunpack.c.l.b16 %v848
        %v917 = vunpack.c.l.b16 %v849
        %v918 = vunpack.c.l.b16 %v850
        %v919 = vunpack.c.l.b16 %v851
        %v920 = vunpack.c.l.b16 %v852
        %v921 = vunpack.c.l.b16 %v853
        %v922 = vunpack.c.l.b16 %v854
        %v923 = vunpack.c.l.b16 %v855
        %v924 = vunpack.c.l.b16 %v856
        %v925 = vunpack.c.l.b16 %v857
        %v926 = vunpack.c.l.b16 %v858
        %v927 = vunpack.c.l.b16 %v859
        %v928 = vunpack.c.l.b16 %v860
        %v929 = vunpack.c.l.b16 %v861
        %v930 = vunpack.c.l.b16 %v862
        %v931 = vunpack.c.l.b16 %v863
        %v932 = vunpack.c.l.b16 %v864
        %v933 = vunpack.c.l.b16 %v865
        %v934 = vpack.c.b16 %v903, %v902
        %v935 = vpack.c.b16 %v905, %v904
        %v936 = vpack.c.b16 %v907, %v906
        %v937 = vpack.c.b16 %v909, %v908
        %v938 = vpack.c.b16 %v911, %v910
        %v939 = vpack.c.b16 %v913, %v912
        %v940 = vpack.c.b16 %v915, %v914
        %v941 = vpack.c.b16 %v917, %v916
        %v942 = vpack.c.b16 %v919, %v918
        %v943 = vpack.c.b16 %v921, %v920
        %v944 = vpack.c.b16 %v923, %v922
        %v945 = vpack.c.b16 %v925, %v924
        %v946 = vpack.c.b16 %v927, %v926
        %v947 = vpack.c.b16 %v929, %v928
        %v948 = vpack.c.b16 %v931, %v930
        %v949 = vpack.c.b16 %v933, %v932
        %vm950 = vcmask 408576
        %v952 = vsel %vm950, %v934, 0
        %v955 = vsel %vm950, %v935, 0
        %v958 = vsel %vm950, %v936, 0
        %v961 = vsel %vm950, %v937, 0
        %v964 = vsel %vm950, %v938, 0
        %v967 = vsel %vm950, %v939, 0
        %v970 = vsel %vm950, %v940, 0
        %v973 = vsel %vm950, %v941, 0
        %v976 = vsel %vm950, %v942, 0
        %v979 = vsel %vm950, %v943, 0
        %v982 = vsel %vm950, %v944, 0
        %v985 = vsel %vm950, %v945, 0
        %v988 = vsel %vm950, %v946, 0
        %v991 = vsel %vm950, %v947, 0
        %v994 = vsel %vm950, %v948, 0
        %v997 = vsel %vm950, %v949, 0
        %vm999 = vcmask 1040384
        %v1001 = vsel %vm999, %v869, 0
        %1003 = vmatprep.subr.bf16.mxu0 0
        %1004 = vmatpush1.bf16.msra.mxu0 0
        %1005 = vmatprep.subr.bf16.mxu0 0
        %1006 = vmatpush1.bf16.msra.mxu0 0
        %1007 = vmatprep.subr.bf16.mxu0 0
        %1008 = vmatpush1.bf16.msra.mxu0 0
        %1009 = vmatprep.subr.bf16.mxu0 0
        %1010 = vmatpush1.bf16.msra.mxu0 0
        %1011 = vmatprep.subr.bf16.mxu0 0
        %1012 = vmatpush1.bf16.msra.mxu0 %v1001
        %1013 = vmatprep.subr.bf16.mxu0 0
        %1014 = vmatpush1.bf16.msra.mxu0 %v868
        %1015 = vmatprep.subr.bf16.mxu0 0
        %1016 = vmatpush1.bf16.msra.mxu0 %v867
        %1017 = vmatprep.subr.bf16.mxu0 0
        %1018 = vmatpush1.bf16.msra.mxu0 %v866
        %1019 = vmatprep.subr.bf16.mxu0 0
        %1020 = vmatpush2.bf16.msra.mxu0 0
        %1021 = vmatprep.subr.bf16.mxu0 0
        %1022 = vmatpush2.bf16.msra.mxu0 0
        %1023 = vmatprep.subr.bf16.mxu0 0
        %1024 = vmatpush2.bf16.msra.mxu0 0
        %1025 = vmatprep.subr.bf16.mxu0 0
        %1026 = vmatpush2.bf16.msra.mxu0 0
        %1027 = vmatprep.subr.bf16.mxu0 0
        %1028 = vmatpush2.bf16.msra.mxu0 0
        %1029 = vmatprep.subr.bf16.mxu0 0
        %1030 = vmatpush2.bf16.msra.mxu0 0
        %1031 = vmatprep.subr.bf16.mxu0 0
        %1032 = vmatpush2.bf16.msra.mxu0 0
        %1033 = vmatprep.subr.bf16.mxu0 0
        %1034 = vmatpush2.bf16.msra.mxu0 0
        %1035 = vmatprep.mubr.bf16.mxu0 0
        %1036 = vmatmul.mubr.bf16.gmra.mxu0 %v952
        %v1037 = vpop.f32.mrf.mxu0
        %v1038 = vadd.f32 0.0, %v1037
        %v1039 = vpop.f32.mrf.mxu0
        %v1040 = vpop.f32.mrf.mxu0
        %v1041 = vadd.f32 0.0, %v1040
        %v1042 = vpop.f32.mrf.mxu0
        %1043 = vmatprep.mubr.bf16.mxu0 0
        %1044 = vmatmul.mubr.bf16.gmra.mxu0 %v955
        %v1045 = vpop.f32.mrf.mxu0
        %v1046 = vadd.f32 0.0, %v1045
        %v1047 = vpop.f32.mrf.mxu0
        %v1048 = vpop.f32.mrf.mxu0
        %v1049 = vadd.f32 0.0, %v1048
        %v1050 = vpop.f32.mrf.mxu0
        %1051 = vmatprep.mubr.bf16.mxu0 0
        %1052 = vmatmul.mubr.bf16.gmra.mxu0 %v958
        %v1053 = vpop.f32.mrf.mxu0
        %v1054 = vadd.f32 0.0, %v1053
        %v1055 = vpop.f32.mrf.mxu0
        %v1056 = vpop.f32.mrf.mxu0
        %v1057 = vadd.f32 0.0, %v1056
        %v1058 = vpop.f32.mrf.mxu0
        %1059 = vmatprep.mubr.bf16.mxu0 0
        %1060 = vmatmul.mubr.bf16.gmra.mxu0 %v961
        %v1061 = vpop.f32.mrf.mxu0
        %v1062 = vadd.f32 0.0, %v1061
        %v1063 = vpop.f32.mrf.mxu0
        %v1064 = vpop.f32.mrf.mxu0
        %v1065 = vadd.f32 0.0, %v1064
        %v1066 = vpop.f32.mrf.mxu0
        %1067 = vmatprep.mubr.bf16.mxu0 0
        %1068 = vmatmul.mubr.bf16.gmra.mxu0 %v964
        %v1069 = vpop.f32.mrf.mxu0
        %v1070 = vadd.f32 0.0, %v1069
        %v1071 = vpop.f32.mrf.mxu0
        %v1072 = vpop.f32.mrf.mxu0
        %v1073 = vadd.f32 0.0, %v1072
        %v1074 = vpop.f32.mrf.mxu0
        %1075 = vmatprep.mubr.bf16.mxu0 0
        %1076 = vmatmul.mubr.bf16.gmra.mxu0 %v967
        %v1077 = vpop.f32.mrf.mxu0
        %v1078 = vadd.f32 0.0, %v1077
        %v1079 = vpop.f32.mrf.mxu0
        %v1080 = vpop.f32.mrf.mxu0
        %v1081 = vadd.f32 0.0, %v1080
        %v1082 = vpop.f32.mrf.mxu0
        %1083 = vmatprep.mubr.bf16.mxu0 0
        %1084 = vmatmul.mubr.bf16.gmra.mxu0 %v970
        %v1085 = vpop.f32.mrf.mxu0
        %v1086 = vadd.f32 0.0, %v1085
        %v1087 = vpop.f32.mrf.mxu0
        %v1088 = vpop.f32.mrf.mxu0
        %v1089 = vadd.f32 0.0, %v1088
        %v1090 = vpop.f32.mrf.mxu0
        %1091 = vmatprep.mubr.bf16.mxu0 0
        %1092 = vmatmul.mubr.bf16.gmra.mxu0 %v973
        %v1093 = vpop.f32.mrf.mxu0
        %v1094 = vadd.f32 0.0, %v1093
        %v1095 = vpop.f32.mrf.mxu0
        %v1096 = vpop.f32.mrf.mxu0
        %v1097 = vadd.f32 0.0, %v1096
        %v1098 = vpop.f32.mrf.mxu0
        %1099 = vmatprep.mubr.bf16.mxu0 0
        %1100 = vmatmul.mubr.bf16.gmra.mxu0 %v976
        %v1101 = vpop.f32.mrf.mxu0
        %v1102 = vadd.f32 0.0, %v1101
        %v1103 = vpop.f32.mrf.mxu0
        %v1104 = vpop.f32.mrf.mxu0
        %v1105 = vadd.f32 0.0, %v1104
        %v1106 = vpop.f32.mrf.mxu0
        %1107 = vmatprep.mubr.bf16.mxu0 0
        %1108 = vmatmul.mubr.bf16.gmra.mxu0 %v979
        %v1109 = vpop.f32.mrf.mxu0
        %v1110 = vadd.f32 0.0, %v1109
        %v1111 = vpop.f32.mrf.mxu0
        %v1112 = vpop.f32.mrf.mxu0
        %v1113 = vadd.f32 0.0, %v1112
        %v1114 = vpop.f32.mrf.mxu0
        %1115 = vmatprep.mubr.bf16.mxu0 0
        %1116 = vmatmul.mubr.bf16.gmra.mxu0 %v982
        %v1117 = vpop.f32.mrf.mxu0
        %v1118 = vadd.f32 0.0, %v1117
        %v1119 = vpop.f32.mrf.mxu0
        %v1120 = vpop.f32.mrf.mxu0
        %v1121 = vadd.f32 0.0, %v1120
        %v1122 = vpop.f32.mrf.mxu0
        %1123 = vmatprep.mubr.bf16.mxu0 0
        %1124 = vmatmul.mubr.bf16.gmra.mxu0 %v985
        %v1125 = vpop.f32.mrf.mxu0
        %v1126 = vadd.f32 0.0, %v1125
        %v1127 = vpop.f32.mrf.mxu0
        %v1128 = vpop.f32.mrf.mxu0
        %v1129 = vadd.f32 0.0, %v1128
        %v1130 = vpop.f32.mrf.mxu0
        %1131 = vmatprep.mubr.bf16.mxu0 0
        %1132 = vmatmul.mubr.bf16.gmra.mxu0 %v988
        %v1133 = vpop.f32.mrf.mxu0
        %v1134 = vadd.f32 0.0, %v1133
        %v1135 = vpop.f32.mrf.mxu0
        %v1136 = vpop.f32.mrf.mxu0
        %v1137 = vadd.f32 0.0, %v1136
        %v1138 = vpop.f32.mrf.mxu0
        %1139 = vmatprep.mubr.bf16.mxu0 0
        %1140 = vmatmul.mubr.bf16.gmra.mxu0 %v991
        %v1141 = vpop.f32.mrf.mxu0
        %v1142 = vadd.f32 0.0, %v1141
        %v1143 = vpop.f32.mrf.mxu0
        %v1144 = vpop.f32.mrf.mxu0
        %v1145 = vadd.f32 0.0, %v1144
        %v1146 = vpop.f32.mrf.mxu0
        %1147 = vmatprep.mubr.bf16.mxu0 0
        %1148 = vmatmul.mubr.bf16.gmra.mxu0 %v994
        %v1149 = vpop.f32.mrf.mxu0
        %v1150 = vadd.f32 0.0, %v1149
        %v1151 = vpop.f32.mrf.mxu0
        %v1152 = vpop.f32.mrf.mxu0
        %v1153 = vadd.f32 0.0, %v1152
        %v1154 = vpop.f32.mrf.mxu0
        %1155 = vmatprep.mubr.bf16.mxu0 0
        %1156 = vmatmul.mubr.bf16.gmra.mxu0 %v997
        %v1157 = vpop.f32.mrf.mxu0
        %v1158 = vadd.f32 0.0, %v1157
        %v1159 = vpop.f32.mrf.mxu0
        %v1160 = vpop.f32.mrf.mxu0
        %v1161 = vadd.f32 0.0, %v1160
        %v1162 = vpop.f32.mrf.mxu0
        %1163 = vdwg.mxu0
        %v1164 = vpack.c.bf16 %v1041, %v1038
        %v1165 = vpack.c.bf16 %v1049, %v1046
        %v1166 = vpack.c.bf16 %v1057, %v1054
        %v1167 = vpack.c.bf16 %v1065, %v1062
        %v1168 = vpack.c.bf16 %v1073, %v1070
        %v1169 = vpack.c.bf16 %v1081, %v1078
        %v1170 = vpack.c.bf16 %v1089, %v1086
        %v1171 = vpack.c.bf16 %v1097, %v1094
        %v1172 = vpack.c.bf16 %v1105, %v1102
        %v1173 = vpack.c.bf16 %v1113, %v1110
        %v1174 = vpack.c.bf16 %v1121, %v1118
        %v1175 = vpack.c.bf16 %v1129, %v1126
        %v1176 = vpack.c.bf16 %v1137, %v1134
        %v1177 = vpack.c.bf16 %v1145, %v1142
        %v1178 = vpack.c.bf16 %v1153, %v1150
        %v1179 = vpack.c.bf16 %v1161, %v1158
        %v1196 = vunpack.c.l.b16 %v1164
        %v1197 = vunpack.c.h.b16 %v1164
        %v1198 = vunpack.c.l.b16 %v1165
        %v1199 = vunpack.c.h.b16 %v1165
        %v1200 = vunpack.c.l.b16 %v1166
        %v1201 = vunpack.c.h.b16 %v1166
        %v1202 = vunpack.c.l.b16 %v1167
        %v1203 = vunpack.c.h.b16 %v1167
        %v1204 = vunpack.c.l.b16 %v1168
        %v1205 = vunpack.c.h.b16 %v1168
        %v1206 = vunpack.c.l.b16 %v1169
        %v1207 = vunpack.c.h.b16 %v1169
        %v1208 = vunpack.c.l.b16 %v1170
        %v1209 = vunpack.c.h.b16 %v1170
        %v1210 = vunpack.c.l.b16 %v1171
        %v1211 = vunpack.c.h.b16 %v1171
        %v1212 = vunpack.c.l.b16 %v1172
        %v1213 = vunpack.c.h.b16 %v1172
        %v1214 = vunpack.c.l.b16 %v1173
        %v1215 = vunpack.c.h.b16 %v1173
        %v1216 = vunpack.c.l.b16 %v1174
        %v1217 = vunpack.c.h.b16 %v1174
        %v1218 = vunpack.c.l.b16 %v1175
        %v1219 = vunpack.c.h.b16 %v1175
        %v1220 = vunpack.c.l.b16 %v1176
        %v1221 = vunpack.c.h.b16 %v1176
        %v1222 = vunpack.c.l.b16 %v1177
        %v1223 = vunpack.c.h.b16 %v1177
        %v1224 = vunpack.c.l.b16 %v1178
        %v1225 = vunpack.c.h.b16 %v1178
        %v1226 = vunpack.c.l.b16 %v1179
        %v1227 = vunpack.c.h.b16 %v1179
        %v1228 = vpack.c.b16 %v1196, %v1196
        %v1229 = vpack.c.b16 %v1197, %v1197
        %v1230 = vpack.c.b16 %v1198, %v1198
        %v1231 = vpack.c.b16 %v1199, %v1199
        %v1232 = vpack.c.b16 %v1200, %v1200
        %v1233 = vpack.c.b16 %v1201, %v1201
        %v1234 = vpack.c.b16 %v1202, %v1202
        %v1235 = vpack.c.b16 %v1203, %v1203
        %v1236 = vpack.c.b16 %v1204, %v1204
        %v1237 = vpack.c.b16 %v1205, %v1205
        %v1238 = vpack.c.b16 %v1206, %v1206
        %v1239 = vpack.c.b16 %v1207, %v1207
        %v1240 = vpack.c.b16 %v1208, %v1208
        %v1241 = vpack.c.b16 %v1209, %v1209
        %v1242 = vpack.c.b16 %v1210, %v1210
        %v1243 = vpack.c.b16 %v1211, %v1211
        %v1244 = vpack.c.b16 %v1212, %v1212
        %v1245 = vpack.c.b16 %v1213, %v1213
        %v1246 = vpack.c.b16 %v1214, %v1214
        %v1247 = vpack.c.b16 %v1215, %v1215
        %v1248 = vpack.c.b16 %v1216, %v1216
        %v1249 = vpack.c.b16 %v1217, %v1217
        %v1250 = vpack.c.b16 %v1218, %v1218
        %v1251 = vpack.c.b16 %v1219, %v1219
        %v1252 = vpack.c.b16 %v1220, %v1220
        %v1253 = vpack.c.b16 %v1221, %v1221
        %v1254 = vpack.c.b16 %v1222, %v1222
        %v1255 = vpack.c.b16 %v1223, %v1223
        %v1256 = vpack.c.b16 %v1224, %v1224
        %v1257 = vpack.c.b16 %v1225, %v1225
        %v1258 = vpack.c.b16 %v1226, %v1226
        %v1259 = vpack.c.b16 %v1227, %v1227
        %1292 = vst [vmem:[#allocation2 + $0x4] sm:$0xf] %v1228
        %1293 = vst [vmem:[#allocation2 + $0xc] sm:$0xf] %v1229
        %1294 = vst [vmem:[#allocation2 + $0x14] sm:$0xf] %v1230
        %1295 = vst [vmem:[#allocation2 + $0x1c] sm:$0xf] %v1231
        %1296 = vst [vmem:[#allocation2 + $0x24] sm:$0xf] %v1232
        %1297 = vst [vmem:[#allocation2 + $0x2c] sm:$0xf] %v1233
        %1298 = vst [vmem:[#allocation2 + $0x34] sm:$0xf] %v1234
        %1299 = vst [vmem:[#allocation2 + $0x3c] sm:$0xf] %v1235
        %1300 = vst [vmem:[#allocation2 + $0x44] sm:$0xf] %v1236
        %1301 = vst [vmem:[#allocation2 + $0x4c] sm:$0xf] %v1237
        %1302 = vst [vmem:[#allocation2 + $0x54] sm:$0xf] %v1238
        %1303 = vst [vmem:[#allocation2 + $0x5c] sm:$0xf] %v1239
        %1304 = vst [vmem:[#allocation2 + $0x64] sm:$0xf] %v1240
        %1305 = vst [vmem:[#allocation2 + $0x6c] sm:$0xf] %v1241
        %1306 = vst [vmem:[#allocation2 + $0x74] sm:$0xf] %v1242
        %1307 = vst [vmem:[#allocation2 + $0x7c] sm:$0xf] %v1243
        %1308 = vst [vmem:[#allocation2 + $0x84] sm:$0xf] %v1244
        %1309 = vst [vmem:[#allocation2 + $0x8c] sm:$0xf] %v1245
        %1310 = vst [vmem:[#allocation2 + $0x94] sm:$0xf] %v1246
        %1311 = vst [vmem:[#allocation2 + $0x9c] sm:$0xf] %v1247
        %1312 = vst [vmem:[#allocation2 + $0xa4] sm:$0xf] %v1248
        %1313 = vst [vmem:[#allocation2 + $0xac] sm:$0xf] %v1249
        %1314 = vst [vmem:[#allocation2 + $0xb4] sm:$0xf] %v1250
        %1315 = vst [vmem:[#allocation2 + $0xbc] sm:$0xf] %v1251
        %1316 = vst [vmem:[#allocation2 + $0xc4] sm:$0xf] %v1252
        %1317 = vst [vmem:[#allocation2 + $0xcc] sm:$0xf] %v1253
        %1318 = vst [vmem:[#allocation2 + $0xd4] sm:$0xf] %v1254
        %1319 = vst [vmem:[#allocation2 + $0xdc] sm:$0xf] %v1255
        %1320 = vst [vmem:[#allocation2 + $0xe4] sm:$0xf] %v1256
        %1321 = vst [vmem:[#allocation2 + $0xec] sm:$0xf] %v1257
        %1322 = vst [vmem:[#allocation2 + $0xf4] sm:$0xf] %v1258
        %1323 = vst [vmem:[#allocation2 + $0xfc] sm:$0xf] %v1259
        %v1324 = vld [vmem:[#allocation2] sm:$0xff]
        %v1325 = vld [vmem:[#allocation2 + $0x8] sm:$0xff]
        %v1326 = vld [vmem:[#allocation2 + $0x10] sm:$0xff]
        %v1327 = vld [vmem:[#allocation2 + $0x18] sm:$0xff]
        %v1328 = vld [vmem:[#allocation2 + $0x20] sm:$0xff]
        %v1329 = vld [vmem:[#allocation2 + $0x28] sm:$0xff]
        %v1330 = vld [vmem:[#allocation2 + $0x30] sm:$0xff]
        %v1331 = vld [vmem:[#allocation2 + $0x38] sm:$0xff]
        %v1332 = vld [vmem:[#allocation2 + $0x40] sm:$0xff]
        %v1333 = vld [vmem:[#allocation2 + $0x48] sm:$0xff]
        %v1334 = vld [vmem:[#allocation2 + $0x50] sm:$0xff]
        %v1335 = vld [vmem:[#allocation2 + $0x58] sm:$0xff]
        %v1336 = vld [vmem:[#allocation2 + $0x60] sm:$0xff]
        %v1337 = vld [vmem:[#allocation2 + $0x68] sm:$0xff]
        %v1338 = vld [vmem:[#allocation2 + $0x70] sm:$0xff]
        %v1339 = vld [vmem:[#allocation2 + $0x78] sm:$0xff]
        %v1340 = vld [vmem:[#allocation2 + $0x80] sm:$0xff]
        %v1341 = vld [vmem:[#allocation2 + $0x88] sm:$0xff]
        %v1342 = vld [vmem:[#allocation2 + $0x90] sm:$0xff]
        %v1343 = vld [vmem:[#allocation2 + $0x98] sm:$0xff]
        %v1344 = vld [vmem:[#allocation2 + $0xa0] sm:$0xff]
        %v1345 = vld [vmem:[#allocation2 + $0xa8] sm:$0xff]
        %v1346 = vld [vmem:[#allocation2 + $0xb0] sm:$0xff]
        %v1347 = vld [vmem:[#allocation2 + $0xb8] sm:$0xff]
        %v1348 = vld [vmem:[#allocation2 + $0xc0] sm:$0xff]
        %v1349 = vld [vmem:[#allocation2 + $0xc8] sm:$0xff]
        %v1350 = vld [vmem:[#allocation2 + $0xd0] sm:$0xff]
        %v1351 = vld [vmem:[#allocation2 + $0xd8] sm:$0xff]
        %v1352 = vld [vmem:[#allocation2 + $0xe0] sm:$0xff]
        %v1353 = vld [vmem:[#allocation2 + $0xe8] sm:$0xff]
        %v1354 = vld [vmem:[#allocation2 + $0xf0] sm:$0xff]
        %v1355 = vld [vmem:[#allocation2 + $0xf8] sm:$0xff]
        %v1356 = vld [vmem:[#allocation2 + $0x100] sm:$0x11]
        %vm1357 = vsmask.f32 3328
        %vm1358 = vsmask.f32 7440
        %vm1359 = vmor %vm1357, %vm1358
        %v1361 = vshrl.u32 %v1324, 16
        %v1363 = vrot.slane %v1361, 4
        %v1364 = vshll.u32 %v1324, 16
        %v1366 = vrot.slane %v1364, 5
        %v1367 = vor.u32 %v1363, %v1366
        %v1368 = vrot.slane %v1367, 4
        %v1370 = vshll.u32 %v1325, 16
        %v1372 = vrot.slane %v1370, 5
        %v1373 = vsel %vm1359, %v1368, %v1372
        %v1374 = vshrl.u32 %v1325, 16
        %v1376 = vrot.slane %v1374, 4
        %v1377 = vor.u32 %v1376, %v1372
        %v1378 = vrot.slane %v1377, 4
        %v1380 = vshll.u32 %v1326, 16
        %v1382 = vrot.slane %v1380, 5
        %v1383 = vsel %vm1359, %v1378, %v1382
        %v1384 = vshrl.u32 %v1326, 16
        %v1386 = vrot.slane %v1384, 4
        %v1387 = vor.u32 %v1386, %v1382
        %v1388 = vrot.slane %v1387, 4
        %v1390 = vshll.u32 %v1327, 16
        %v1392 = vrot.slane %v1390, 5
        %v1393 = vsel %vm1359, %v1388, %v1392
        %v1394 = vshrl.u32 %v1327, 16
        %v1396 = vrot.slane %v1394, 4
        %v1397 = vor.u32 %v1396, %v1392
        %v1398 = vrot.slane %v1397, 4
        %v1400 = vshll.u32 %v1328, 16
        %v1402 = vrot.slane %v1400, 5
        %v1403 = vsel %vm1359, %v1398, %v1402
        %v1404 = vshrl.u32 %v1328, 16
        %v1406 = vrot.slane %v1404, 4
        %v1407 = vor.u32 %v1406, %v1402
        %v1408 = vrot.slane %v1407, 4
        %v1410 = vshll.u32 %v1329, 16
        %v1412 = vrot.slane %v1410, 5
        %v1413 = vsel %vm1359, %v1408, %v1412
        %v1414 = vshrl.u32 %v1329, 16
        %v1416 = vrot.slane %v1414, 4
        %v1417 = vor.u32 %v1416, %v1412
        %v1418 = vrot.slane %v1417, 4
        %v1420 = vshll.u32 %v1330, 16
        %v1422 = vrot.slane %v1420, 5
        %v1423 = vsel %vm1359, %v1418, %v1422
        %v1424 = vshrl.u32 %v1330, 16
        %v1426 = vrot.slane %v1424, 4
        %v1427 = vor.u32 %v1426, %v1422
        %v1428 = vrot.slane %v1427, 4
        %v1430 = vshll.u32 %v1331, 16
        %v1432 = vrot.slane %v1430, 5
        %v1433 = vsel %vm1359, %v1428, %v1432
        %v1434 = vshrl.u32 %v1331, 16
        %v1436 = vrot.slane %v1434, 4
        %v1437 = vor.u32 %v1436, %v1432
        %v1438 = vrot.slane %v1437, 4
        %v1440 = vshll.u32 %v1332, 16
        %v1442 = vrot.slane %v1440, 5
        %v1443 = vsel %vm1359, %v1438, %v1442
        %v1444 = vshrl.u32 %v1332, 16
        %v1446 = vrot.slane %v1444, 4
        %v1447 = vor.u32 %v1446, %v1442
        %v1448 = vrot.slane %v1447, 4
        %v1450 = vshll.u32 %v1333, 16
        %v1452 = vrot.slane %v1450, 5
        %v1453 = vsel %vm1359, %v1448, %v1452
        %v1454 = vshrl.u32 %v1333, 16
        %v1456 = vrot.slane %v1454, 4
        %v1457 = vor.u32 %v1456, %v1452
        %v1458 = vrot.slane %v1457, 4
        %v1460 = vshll.u32 %v1334, 16
        %v1462 = vrot.slane %v1460, 5
        %v1463 = vsel %vm1359, %v1458, %v1462
        %v1464 = vshrl.u32 %v1334, 16
        %v1466 = vrot.slane %v1464, 4
        %v1467 = vor.u32 %v1466, %v1462
        %v1468 = vrot.slane %v1467, 4
        %v1470 = vshll.u32 %v1335, 16
        %v1472 = vrot.slane %v1470, 5
        %v1473 = vsel %vm1359, %v1468, %v1472
        %v1474 = vshrl.u32 %v1335, 16
        %v1476 = vrot.slane %v1474, 4
        %v1477 = vor.u32 %v1476, %v1472
        %v1478 = vrot.slane %v1477, 4
        %v1480 = vshll.u32 %v1336, 16
        %v1482 = vrot.slane %v1480, 5
        %v1483 = vsel %vm1359, %v1478, %v1482
        %v1484 = vshrl.u32 %v1336, 16
        %v1486 = vrot.slane %v1484, 4
        %v1487 = vor.u32 %v1486, %v1482
        %v1488 = vrot.slane %v1487, 4
        %v1490 = vshll.u32 %v1337, 16
        %v1492 = vrot.slane %v1490, 5
        %v1493 = vsel %vm1359, %v1488, %v1492
        %v1494 = vshrl.u32 %v1337, 16
        %v1496 = vrot.slane %v1494, 4
        %v1497 = vor.u32 %v1496, %v1492
        %v1498 = vrot.slane %v1497, 4
        %v1500 = vshll.u32 %v1338, 16
        %v1502 = vrot.slane %v1500, 5
        %v1503 = vsel %vm1359, %v1498, %v1502
        %v1504 = vshrl.u32 %v1338, 16
        %v1506 = vrot.slane %v1504, 4
        %v1507 = vor.u32 %v1506, %v1502
        %v1508 = vrot.slane %v1507, 4
        %v1510 = vshll.u32 %v1339, 16
        %v1512 = vrot.slane %v1510, 5
        %v1513 = vsel %vm1359, %v1508, %v1512
        %v1514 = vshrl.u32 %v1339, 16
        %v1516 = vrot.slane %v1514, 4
        %v1517 = vor.u32 %v1516, %v1512
        %v1518 = vrot.slane %v1517, 4
        %v1520 = vshll.u32 %v1340, 16
        %v1522 = vrot.slane %v1520, 5
        %v1523 = vsel %vm1359, %v1518, %v1522
        %v1524 = vshrl.u32 %v1340, 16
        %v1526 = vrot.slane %v1524, 4
        %v1527 = vor.u32 %v1526, %v1522
        %v1528 = vrot.slane %v1527, 4
        %v1530 = vshll.u32 %v1341, 16
        %v1532 = vrot.slane %v1530, 5
        %v1533 = vsel %vm1359, %v1528, %v1532
        %v1534 = vshrl.u32 %v1341, 16
        %v1536 = vrot.slane %v1534, 4
        %v1537 = vor.u32 %v1536, %v1532
        %v1538 = vrot.slane %v1537, 4
        %v1540 = vshll.u32 %v1342, 16
        %v1542 = vrot.slane %v1540, 5
        %v1543 = vsel %vm1359, %v1538, %v1542
        %v1544 = vshrl.u32 %v1342, 16
        %v1546 = vrot.slane %v1544, 4
        %v1547 = vor.u32 %v1546, %v1542
        %v1548 = vrot.slane %v1547, 4
        %v1550 = vshll.u32 %v1343, 16
        %v1552 = vrot.slane %v1550, 5
        %v1553 = vsel %vm1359, %v1548, %v1552
        %v1554 = vshrl.u32 %v1343, 16
        %v1556 = vrot.slane %v1554, 4
        %v1557 = vor.u32 %v1556, %v1552
        %v1558 = vrot.slane %v1557, 4
        %v1560 = vshll.u32 %v1344, 16
        %v1562 = vrot.slane %v1560, 5
        %v1563 = vsel %vm1359, %v1558, %v1562
        %v1564 = vshrl.u32 %v1344, 16
        %v1566 = vrot.slane %v1564, 4
        %v1567 = vor.u32 %v1566, %v1562
        %v1568 = vrot.slane %v1567, 4
        %v1570 = vshll.u32 %v1345, 16
        %v1572 = vrot.slane %v1570, 5
        %v1573 = vsel %vm1359, %v1568, %v1572
        %v1574 = vshrl.u32 %v1345, 16
        %v1576 = vrot.slane %v1574, 4
        %v1577 = vor.u32 %v1576, %v1572
        %v1578 = vrot.slane %v1577, 4
        %v1580 = vshll.u32 %v1346, 16
        %v1582 = vrot.slane %v1580, 5
        %v1583 = vsel %vm1359, %v1578, %v1582
        %v1584 = vshrl.u32 %v1346, 16
        %v1586 = vrot.slane %v1584, 4
        %v1587 = vor.u32 %v1586, %v1582
        %v1588 = vrot.slane %v1587, 4
        %v1590 = vshll.u32 %v1347, 16
        %v1592 = vrot.slane %v1590, 5
        %v1593 = vsel %vm1359, %v1588, %v1592
        %v1594 = vshrl.u32 %v1347, 16
        %v1596 = vrot.slane %v1594, 4
        %v1597 = vor.u32 %v1596, %v1592
        %v1598 = vrot.slane %v1597, 4
        %v1600 = vshll.u32 %v1348, 16
        %v1602 = vrot.slane %v1600, 5
        %v1603 = vsel %vm1359, %v1598, %v1602
        %v1604 = vshrl.u32 %v1348, 16
        %v1606 = vrot.slane %v1604, 4
        %v1607 = vor.u32 %v1606, %v1602
        %v1608 = vrot.slane %v1607, 4
        %v1610 = vshll.u32 %v1349, 16
        %v1612 = vrot.slane %v1610, 5
        %v1613 = vsel %vm1359, %v1608, %v1612
        %v1614 = vshrl.u32 %v1349, 16
        %v1616 = vrot.slane %v1614, 4
        %v1617 = vor.u32 %v1616, %v1612
        %v1618 = vrot.slane %v1617, 4
        %v1620 = vshll.u32 %v1350, 16
        %v1622 = vrot.slane %v1620, 5
        %v1623 = vsel %vm1359, %v1618, %v1622
        %v1624 = vshrl.u32 %v1350, 16
        %v1626 = vrot.slane %v1624, 4
        %v1627 = vor.u32 %v1626, %v1622
        %v1628 = vrot.slane %v1627, 4
        %v1630 = vshll.u32 %v1351, 16
        %v1632 = vrot.slane %v1630, 5
        %v1633 = vsel %vm1359, %v1628, %v1632
        %v1634 = vshrl.u32 %v1351, 16
        %v1636 = vrot.slane %v1634, 4
        %v1637 = vor.u32 %v1636, %v1632
        %v1638 = vrot.slane %v1637, 4
        %v1640 = vshll.u32 %v1352, 16
        %v1642 = vrot.slane %v1640, 5
        %v1643 = vsel %vm1359, %v1638, %v1642
        %v1644 = vshrl.u32 %v1352, 16
        %v1646 = vrot.slane %v1644, 4
        %v1647 = vor.u32 %v1646, %v1642
        %v1648 = vrot.slane %v1647, 4
        %v1650 = vshll.u32 %v1353, 16
        %v1652 = vrot.slane %v1650, 5
        %v1653 = vsel %vm1359, %v1648, %v1652
        %v1654 = vshrl.u32 %v1353, 16
        %v1656 = vrot.slane %v1654, 4
        %v1657 = vor.u32 %v1656, %v1652
        %v1658 = vrot.slane %v1657, 4
        %v1660 = vshll.u32 %v1354, 16
        %v1662 = vrot.slane %v1660, 5
        %v1663 = vsel %vm1359, %v1658, %v1662
        %v1664 = vshrl.u32 %v1354, 16
        %v1666 = vrot.slane %v1664, 4
        %v1667 = vor.u32 %v1666, %v1662
        %v1668 = vrot.slane %v1667, 4
        %v1670 = vshll.u32 %v1355, 16
        %v1672 = vrot.slane %v1670, 5
        %v1673 = vsel %vm1359, %v1668, %v1672
        %v1674 = vshrl.u32 %v1355, 16
        %v1676 = vrot.slane %v1674, 4
        %v1677 = vor.u32 %v1676, %v1672
        %v1678 = vrot.slane %v1677, 4
        %v1680 = vshll.u32 %v1356, 16
        %v1682 = vrot.slane %v1680, 5
        %v1683 = vsel %vm1359, %v1678, %v1682
        %1716 = vst [vmem:[#allocation3] sm:$0xff] %v1373
        %1717 = vst [vmem:[#allocation3 + $0x8] sm:$0xff] %v1383
        %1718 = vst [vmem:[#allocation3 + $0x10] sm:$0xff] %v1393
        %1719 = vst [vmem:[#allocation3 + $0x18] sm:$0xff] %v1403
        %1720 = vst [vmem:[#allocation3 + $0x20] sm:$0xff] %v1413
        %1721 = vst [vmem:[#allocation3 + $0x28] sm:$0xff] %v1423
        %1722 = vst [vmem:[#allocation3 + $0x30] sm:$0xff] %v1433
        %1723 = vst [vmem:[#allocation3 + $0x38] sm:$0xff] %v1443
        %1724 = vst [vmem:[#allocation3 + $0x40] sm:$0xff] %v1453
        %1725 = vst [vmem:[#allocation3 + $0x48] sm:$0xff] %v1463
        %1726 = vst [vmem:[#allocation3 + $0x50] sm:$0xff] %v1473
        %1727 = vst [vmem:[#allocation3 + $0x58] sm:$0xff] %v1483
        %1728 = vst [vmem:[#allocation3 + $0x60] sm:$0xff] %v1493
        %1729 = vst [vmem:[#allocation3 + $0x68] sm:$0xff] %v1503
        %1730 = vst [vmem:[#allocation3 + $0x70] sm:$0xff] %v1513
        %1731 = vst [vmem:[#allocation3 + $0x78] sm:$0xff] %v1523
        %1732 = vst [vmem:[#allocation3 + $0x80] sm:$0xff] %v1533
        %1733 = vst [vmem:[#allocation3 + $0x88] sm:$0xff] %v1543
        %1734 = vst [vmem:[#allocation3 + $0x90] sm:$0xff] %v1553
        %1735 = vst [vmem:[#allocation3 + $0x98] sm:$0xff] %v1563
        %1736 = vst [vmem:[#allocation3 + $0xa0] sm:$0xff] %v1573
        %1737 = vst [vmem:[#allocation3 + $0xa8] sm:$0xff] %v1583
        %1738 = vst [vmem:[#allocation3 + $0xb0] sm:$0xff] %v1593
        %1739 = vst [vmem:[#allocation3 + $0xb8] sm:$0xff] %v1603
        %1740 = vst [vmem:[#allocation3 + $0xc0] sm:$0xff] %v1613
        %1741 = vst [vmem:[#allocation3 + $0xc8] sm:$0xff] %v1623
        %1742 = vst [vmem:[#allocation3 + $0xd0] sm:$0xff] %v1633
        %1743 = vst [vmem:[#allocation3 + $0xd8] sm:$0xff] %v1643
        %1744 = vst [vmem:[#allocation3 + $0xe0] sm:$0xff] %v1653
        %1745 = vst [vmem:[#allocation3 + $0xe8] sm:$0xff] %v1663
        %1746 = vst [vmem:[#allocation3 + $0xf0] sm:$0xff] %v1673
        %1747 = vst [vmem:[#allocation3 + $0xf8] sm:$0xff] %v1683
        %v1748 = vld [vmem:[#allocation2] sm:$0xee]
        %v1749 = vld [vmem:[#allocation2 + $0x8] sm:$0xff]
        %v1750 = vld [vmem:[#allocation2 + $0x10] sm:$0xff]
        %v1751 = vld [vmem:[#allocation2 + $0x18] sm:$0xff]
        %v1752 = vld [vmem:[#allocation2 + $0x20] sm:$0xff]
        %v1753 = vld [vmem:[#allocation2 + $0x28] sm:$0xff]
        %v1754 = vld [vmem:[#allocation2 + $0x30] sm:$0xff]
        %v1755 = vld [vmem:[#allocation2 + $0x38] sm:$0xff]
        %v1756 = vld [vmem:[#allocation2 + $0x40] sm:$0xff]
        %v1757 = vld [vmem:[#allocation2 + $0x48] sm:$0xff]
        %v1758 = vld [vmem:[#allocation2 + $0x50] sm:$0xff]
        %v1759 = vld [vmem:[#allocation2 + $0x58] sm:$0xff]
        %v1760 = vld [vmem:[#allocation2 + $0x60] sm:$0xff]
        %v1761 = vld [vmem:[#allocation2 + $0x68] sm:$0xff]
        %v1762 = vld [vmem:[#allocation2 + $0x70] sm:$0xff]
        %v1763 = vld [vmem:[#allocation2 + $0x78] sm:$0xff]
        %v1764 = vld [vmem:[#allocation2 + $0x80] sm:$0xff]
        %v1765 = vld [vmem:[#allocation2 + $0x88] sm:$0xff]
        %v1766 = vld [vmem:[#allocation2 + $0x90] sm:$0xff]
        %v1767 = vld [vmem:[#allocation2 + $0x98] sm:$0xff]
        %v1768 = vld [vmem:[#allocation2 + $0xa0] sm:$0xff]
        %v1769 = vld [vmem:[#allocation2 + $0xa8] sm:$0xff]
        %v1770 = vld [vmem:[#allocation2 + $0xb0] sm:$0xff]
        %v1771 = vld [vmem:[#allocation2 + $0xb8] sm:$0xff]
        %v1772 = vld [vmem:[#allocation2 + $0xc0] sm:$0xff]
        %v1773 = vld [vmem:[#allocation2 + $0xc8] sm:$0xff]
        %v1774 = vld [vmem:[#allocation2 + $0xd0] sm:$0xff]
        %v1775 = vld [vmem:[#allocation2 + $0xd8] sm:$0xff]
        %v1776 = vld [vmem:[#allocation2 + $0xe0] sm:$0xff]
        %v1777 = vld [vmem:[#allocation2 + $0xe8] sm:$0xff]
        %v1778 = vld [vmem:[#allocation2 + $0xf0] sm:$0xff]
        %v1779 = vld [vmem:[#allocation2 + $0xf8] sm:$0xff]
        %v1780 = vld [vmem:[#allocation2 + $0x100] sm:$0x11]
        %vm1814 = vcmask 1042432
        %vm1815 = vcmask 1046532
        %vm1816 = vmor %vm1814, %vm1815
        %v1817 = vrot.slane %v1748, 5
        %v1818 = vrot.slane %v1817, 4
        %v1819 = vrot.slane %v1749, 5
        %v1820 = vsel %vm1816, %v1818, %v1819
        %v1821 = vrot.slane %v1819, 4
        %v1822 = vrot.slane %v1750, 5
        %v1823 = vsel %vm1816, %v1821, %v1822
        %v1824 = vrot.slane %v1822, 4
        %v1825 = vrot.slane %v1751, 5
        %v1826 = vsel %vm1816, %v1824, %v1825
        %v1827 = vrot.slane %v1825, 4
        %v1828 = vrot.slane %v1752, 5
        %v1829 = vsel %vm1816, %v1827, %v1828
        %v1830 = vrot.slane %v1828, 4
        %v1831 = vrot.slane %v1753, 5
        %v1832 = vsel %vm1816, %v1830, %v1831
        %v1833 = vrot.slane %v1831, 4
        %v1834 = vrot.slane %v1754, 5
        %v1835 = vsel %vm1816, %v1833, %v1834
        %v1836 = vrot.slane %v1834, 4
        %v1837 = vrot.slane %v1755, 5
        %v1838 = vsel %vm1816, %v1836, %v1837
        %v1839 = vrot.slane %v1837, 4
        %v1840 = vrot.slane %v1756, 5
        %v1841 = vsel %vm1816, %v1839, %v1840
        %v1842 = vrot.slane %v1840, 4
        %v1843 = vrot.slane %v1757, 5
        %v1844 = vsel %vm1816, %v1842, %v1843
        %v1845 = vrot.slane %v1843, 4
        %v1846 = vrot.slane %v1758, 5
        %v1847 = vsel %vm1816, %v1845, %v1846
        %v1848 = vrot.slane %v1846, 4
        %v1849 = vrot.slane %v1759, 5
        %v1850 = vsel %vm1816, %v1848, %v1849
        %v1851 = vrot.slane %v1849, 4
        %v1852 = vrot.slane %v1760, 5
        %v1853 = vsel %vm1816, %v1851, %v1852
        %v1854 = vrot.slane %v1852, 4
        %v1855 = vrot.slane %v1761, 5
        %v1856 = vsel %vm1816, %v1854, %v1855
        %v1857 = vrot.slane %v1855, 4
        %v1858 = vrot.slane %v1762, 5
        %v1859 = vsel %vm1816, %v1857, %v1858
        %v1860 = vrot.slane %v1858, 4
        %v1861 = vrot.slane %v1763, 5
        %v1862 = vsel %vm1816, %v1860, %v1861
        %v1863 = vrot.slane %v1861, 4
        %v1864 = vrot.slane %v1764, 5
        %v1865 = vsel %vm1816, %v1863, %v1864
        %v1866 = vrot.slane %v1864, 4
        %v1867 = vrot.slane %v1765, 5
        %v1868 = vsel %vm1816, %v1866, %v1867
        %v1869 = vrot.slane %v1867, 4
        %v1870 = vrot.slane %v1766, 5
        %v1871 = vsel %vm1816, %v1869, %v1870
        %v1872 = vrot.slane %v1870, 4
        %v1873 = vrot.slane %v1767, 5
        %v1874 = vsel %vm1816, %v1872, %v1873
        %v1875 = vrot.slane %v1873, 4
        %v1876 = vrot.slane %v1768, 5
        %v1877 = vsel %vm1816, %v1875, %v1876
        %v1878 = vrot.slane %v1876, 4
        %v1879 = vrot.slane %v1769, 5
        %v1880 = vsel %vm1816, %v1878, %v1879
        %v1881 = vrot.slane %v1879, 4
        %v1882 = vrot.slane %v1770, 5
        %v1883 = vsel %vm1816, %v1881, %v1882
        %v1884 = vrot.slane %v1882, 4
        %v1885 = vrot.slane %v1771, 5
        %v1886 = vsel %vm1816, %v1884, %v1885
        %v1887 = vrot.slane %v1885, 4
        %v1888 = vrot.slane %v1772, 5
        %v1889 = vsel %vm1816, %v1887, %v1888
        %v1890 = vrot.slane %v1888, 4
        %v1891 = vrot.slane %v1773, 5
        %v1892 = vsel %vm1816, %v1890, %v1891
        %v1893 = vrot.slane %v1891, 4
        %v1894 = vrot.slane %v1774, 5
        %v1895 = vsel %vm1816, %v1893, %v1894
        %v1896 = vrot.slane %v1894, 4
        %v1897 = vrot.slane %v1775, 5
        %v1898 = vsel %vm1816, %v1896, %v1897
        %v1899 = vrot.slane %v1897, 4
        %v1900 = vrot.slane %v1776, 5
        %v1901 = vsel %vm1816, %v1899, %v1900
        %v1902 = vrot.slane %v1900, 4
        %v1903 = vrot.slane %v1777, 5
        %v1904 = vsel %vm1816, %v1902, %v1903
        %v1905 = vrot.slane %v1903, 4
        %v1906 = vrot.slane %v1778, 5
        %v1907 = vsel %vm1816, %v1905, %v1906
        %v1908 = vrot.slane %v1906, 4
        %v1909 = vrot.slane %v1779, 5
        %v1910 = vsel %vm1816, %v1908, %v1909
        %v1911 = vrot.slane %v1909, 4
        %v1912 = vrot.slane %v1780, 5
        %v1913 = vsel %vm1816, %v1911, %v1912
        %1946 = vst [vmem:[#allocation4] sm:$0xff] %v1820
        %1947 = vst [vmem:[#allocation4 + $0x8] sm:$0xff] %v1823
        %1948 = vst [vmem:[#allocation4 + $0x10] sm:$0xff] %v1826
        %1949 = vst [vmem:[#allocation4 + $0x18] sm:$0xff] %v1829
        %1950 = vst [vmem:[#allocation4 + $0x20] sm:$0xff] %v1832
        %1951 = vst [vmem:[#allocation4 + $0x28] sm:$0xff] %v1835
        %1952 = vst [vmem:[#allocation4 + $0x30] sm:$0xff] %v1838
        %1953 = vst [vmem:[#allocation4 + $0x38] sm:$0xff] %v1841
        %1954 = vst [vmem:[#allocation4 + $0x40] sm:$0xff] %v1844
        %1955 = vst [vmem:[#allocation4 + $0x48] sm:$0xff] %v1847
        %1956 = vst [vmem:[#allocation4 + $0x50] sm:$0xff] %v1850
        %1957 = vst [vmem:[#allocation4 + $0x58] sm:$0xff] %v1853
        %1958 = vst [vmem:[#allocation4 + $0x60] sm:$0xff] %v1856
        %1959 = vst [vmem:[#allocation4 + $0x68] sm:$0xff] %v1859
        %1960 = vst [vmem:[#allocation4 + $0x70] sm:$0xff] %v1862
        %1961 = vst [vmem:[#allocation4 + $0x78] sm:$0xff] %v1865
        %1962 = vst [vmem:[#allocation4 + $0x80] sm:$0xff] %v1868
        %1963 = vst [vmem:[#allocation4 + $0x88] sm:$0xff] %v1871
        %1964 = vst [vmem:[#allocation4 + $0x90] sm:$0xff] %v1874
        %1965 = vst [vmem:[#allocation4 + $0x98] sm:$0xff] %v1877
        %1966 = vst [vmem:[#allocation4 + $0xa0] sm:$0xff] %v1880
        %1967 = vst [vmem:[#allocation4 + $0xa8] sm:$0xff] %v1883
        %1968 = vst [vmem:[#allocation4 + $0xb0] sm:$0xff] %v1886
        %1969 = vst [vmem:[#allocation4 + $0xb8] sm:$0xff] %v1889
        %1970 = vst [vmem:[#allocation4 + $0xc0] sm:$0xff] %v1892
        %1971 = vst [vmem:[#allocation4 + $0xc8] sm:$0xff] %v1895
        %1972 = vst [vmem:[#allocation4 + $0xd0] sm:$0xff] %v1898
        %1973 = vst [vmem:[#allocation4 + $0xd8] sm:$0xff] %v1901
        %1974 = vst [vmem:[#allocation4 + $0xe0] sm:$0xff] %v1904
        %1975 = vst [vmem:[#allocation4 + $0xe8] sm:$0xff] %v1907
        %1976 = vst [vmem:[#allocation4 + $0xf0] sm:$0xff] %v1910
        %1977 = vst [vmem:[#allocation4 + $0xf8] sm:$0xff] %v1913
        %v1978 = vld [vmem:[#allocation2] sm:$0xff]
        %v1979 = vld [vmem:[#allocation2 + $0x8] sm:$0xff]
        %v1980 = vld [vmem:[#allocation2 + $0x10] sm:$0xff]
        %v1981 = vld [vmem:[#allocation2 + $0x18] sm:$0xff]
        %v1982 = vld [vmem:[#allocation2 + $0x20] sm:$0xff]
        %v1983 = vld [vmem:[#allocation2 + $0x28] sm:$0xff]
        %v1984 = vld [vmem:[#allocation2 + $0x30] sm:$0xff]
        %v1985 = vld [vmem:[#allocation2 + $0x38] sm:$0xff]
        %v1986 = vld [vmem:[#allocation2 + $0x40] sm:$0xff]
        %v1987 = vld [vmem:[#allocation2 + $0x48] sm:$0xff]
        %v1988 = vld [vmem:[#allocation2 + $0x50] sm:$0xff]
        %v1989 = vld [vmem:[#allocation2 + $0x58] sm:$0xff]
        %v1990 = vld [vmem:[#allocation2 + $0x60] sm:$0xff]
        %v1991 = vld [vmem:[#allocation2 + $0x68] sm:$0xff]
        %v1992 = vld [vmem:[#allocation2 + $0x70] sm:$0xff]
        %v1993 = vld [vmem:[#allocation2 + $0x78] sm:$0xff]
        %v1994 = vld [vmem:[#allocation2 + $0x80] sm:$0xff]
        %v1995 = vld [vmem:[#allocation2 + $0x88] sm:$0xff]
        %v1996 = vld [vmem:[#allocation2 + $0x90] sm:$0xff]
        %v1997 = vld [vmem:[#allocation2 + $0x98] sm:$0xff]
        %v1998 = vld [vmem:[#allocation2 + $0xa0] sm:$0xff]
        %v1999 = vld [vmem:[#allocation2 + $0xa8] sm:$0xff]
        %v2000 = vld [vmem:[#allocation2 + $0xb0] sm:$0xff]
        %v2001 = vld [vmem:[#allocation2 + $0xb8] sm:$0xff]
        %v2002 = vld [vmem:[#allocation2 + $0xc0] sm:$0xff]
        %v2003 = vld [vmem:[#allocation2 + $0xc8] sm:$0xff]
        %v2004 = vld [vmem:[#allocation2 + $0xd0] sm:$0xff]
        %v2005 = vld [vmem:[#allocation2 + $0xd8] sm:$0xff]
        %v2006 = vld [vmem:[#allocation13] sm:$0xf]
        %v2007 = vld [vmem:[#allocation13 + $0x8] sm:$0xf]
        %v2008 = vld [vmem:[#allocation13 + $0x10] sm:$0xf]
        %v2009 = vld [vmem:[#allocation13 + $0x18] sm:$0xf]
        %v2010 = vld [vmem:[#allocation13 + $0x20] sm:$0xf]
        %v2011 = vld [vmem:[#allocation13 + $0x28] sm:$0xf]
        %v2012 = vld [vmem:[#allocation13 + $0x30] sm:$0xf]
        %v2013 = vld [vmem:[#allocation13 + $0x38] sm:$0xf]
        %v2014 = vld [vmem:[#allocation13 + $0x40] sm:$0xf]
        %v2015 = vld [vmem:[#allocation13 + $0x48] sm:$0xf]
        %v2016 = vld [vmem:[#allocation13 + $0x50] sm:$0xf]
        %v2017 = vld [vmem:[#allocation13 + $0x58] sm:$0xf]
        %v2018 = vld [vmem:[#allocation13 + $0x60] sm:$0xf]
        %v2019 = vld [vmem:[#allocation13 + $0x68] sm:$0xf]
        %v2020 = vld [vmem:[#allocation13 + $0x70] sm:$0xf]
        %v2021 = vld [vmem:[#allocation13 + $0x78] sm:$0xf]
        %v2022 = vld [vmem:[#allocation13 + $0x80] sm:$0xf]
        %v2023 = vld [vmem:[#allocation13 + $0x88] sm:$0xf]
        %v2024 = vld [vmem:[#allocation13 + $0x90] sm:$0xf]
        %v2025 = vld [vmem:[#allocation13 + $0x98] sm:$0xf]
        %v2026 = vld [vmem:[#allocation13 + $0xa0] sm:$0xf]
        %v2027 = vld [vmem:[#allocation13 + $0xa8] sm:$0xf]
        %v2028 = vld [vmem:[#allocation13 + $0xb0] sm:$0xf]
        %v2029 = vld [vmem:[#allocation13 + $0xb8] sm:$0xf]
        %v2030 = vld [vmem:[#allocation13 + $0xc0] sm:$0xf]
        %v2031 = vld [vmem:[#allocation13 + $0xc8] sm:$0xf]
        %v2032 = vld [vmem:[#allocation13 + $0xd0] sm:$0xf]
        %v2033 = vld [vmem:[#allocation13 + $0xd8] sm:$0xf]
        %v2034 = vld [vmem:[#allocation13 + $0xe0] sm:$0xf]
        %v2035 = vld [vmem:[#allocation13 + $0xe8] sm:$0xf]
        %v2036 = vld [vmem:[#allocation13 + $0xf0] sm:$0xf]
        %v2037 = vld [vmem:[#allocation13 + $0xf8] sm:$0xf]
        %v2038 = vld [vmem:[#allocation3] sm:$0xff]
        %v2039 = vld [vmem:[#allocation3 + $0x8] sm:$0xff]
        %v2040 = vld [vmem:[#allocation3 + $0x10] sm:$0xff]
        %v2041 = vld [vmem:[#allocation3 + $0x18] sm:$0xff]
        %v2042 = vld [vmem:[#allocation3 + $0x20] sm:$0xff]
        %v2043 = vld [vmem:[#allocation3 + $0x28] sm:$0xff]
        %v2044 = vld [vmem:[#allocation3 + $0x30] sm:$0xff]
        %v2045 = vld [vmem:[#allocation3 + $0x38] sm:$0xff]
        %v2046 = vld [vmem:[#allocation3 + $0x40] sm:$0xff]
        %v2047 = vld [vmem:[#allocation3 + $0x48] sm:$0xff]
        %v2048 = vld [vmem:[#allocation3 + $0x50] sm:$0xff]
        %v2049 = vld [vmem:[#allocation3 + $0x58] sm:$0xff]
        %v2050 = vld [vmem:[#allocation3 + $0x60] sm:$0xff]
        %v2051 = vld [vmem:[#allocation3 + $0x68] sm:$0xff]
        %v2052 = vld [vmem:[#allocation3 + $0x70] sm:$0xff]
        %v2053 = vld [vmem:[#allocation3 + $0x78] sm:$0xff]
        %v2054 = vld [vmem:[#allocation3 + $0x80] sm:$0xff]
        %v2055 = vld [vmem:[#allocation3 + $0x88] sm:$0xff]
        %v2056 = vld [vmem:[#allocation3 + $0x90] sm:$0xff]
        %v2057 = vld [vmem:[#allocation3 + $0x98] sm:$0xff]
        %v2058 = vld [vmem:[#allocation3 + $0xa0] sm:$0xff]
        %v2059 = vld [vmem:[#allocation3 + $0xa8] sm:$0xff]
        %v2060 = vld [vmem:[#allocation3 + $0xb0] sm:$0xff]
        %v2061 = vld [vmem:[#allocation3 + $0xb8] sm:$0xff]
        %v2062 = vld [vmem:[#allocation3 + $0xc0] sm:$0xff]
        %v2063 = vld [vmem:[#allocation3 + $0xc8] sm:$0xff]
        %v2064 = vld [vmem:[#allocation3 + $0xd0] sm:$0xff]
        %v2065 = vld [vmem:[#allocation3 + $0xd8] sm:$0xff]
        %s2066 = scalar_lea.vmem [#allocation13], 256
        %v2067 = vld [vmem:[%s2066] sm:$0xf]
        %v2068 = vld [vmem:[%s2066 + $0x8] sm:$0xf]
        %v2069 = vld [vmem:[%s2066 + $0x10] sm:$0xf]
        %v2070 = vld [vmem:[%s2066 + $0x18] sm:$0xf]
        %v2071 = vld [vmem:[%s2066 + $0x20] sm:$0xf]
        %v2072 = vld [vmem:[%s2066 + $0x28] sm:$0xf]
        %v2073 = vld [vmem:[%s2066 + $0x30] sm:$0xf]
        %v2074 = vld [vmem:[%s2066 + $0x38] sm:$0xf]
        %v2075 = vld [vmem:[%s2066 + $0x40] sm:$0xf]
        %v2076 = vld [vmem:[%s2066 + $0x48] sm:$0xf]
        %v2077 = vld [vmem:[%s2066 + $0x50] sm:$0xf]
        %v2078 = vld [vmem:[%s2066 + $0x58] sm:$0xf]
        %v2079 = vld [vmem:[%s2066 + $0x60] sm:$0xf]
        %v2080 = vld [vmem:[%s2066 + $0x68] sm:$0xf]
        %v2081 = vld [vmem:[%s2066 + $0x70] sm:$0xf]
        %v2082 = vld [vmem:[%s2066 + $0x78] sm:$0xf]
        %v2083 = vld [vmem:[%s2066 + $0x80] sm:$0xf]
        %v2084 = vld [vmem:[%s2066 + $0x88] sm:$0xf]
        %v2085 = vld [vmem:[%s2066 + $0x90] sm:$0xf]
        %v2086 = vld [vmem:[%s2066 + $0x98] sm:$0xf]
        %v2087 = vld [vmem:[%s2066 + $0xa0] sm:$0xf]
        %v2088 = vld [vmem:[%s2066 + $0xa8] sm:$0xf]
        %v2089 = vld [vmem:[%s2066 + $0xb0] sm:$0xf]
        %v2090 = vld [vmem:[%s2066 + $0xb8] sm:$0xf]
        %v2091 = vld [vmem:[%s2066 + $0xc0] sm:$0xf]
        %v2092 = vld [vmem:[%s2066 + $0xc8] sm:$0xf]
        %v2093 = vld [vmem:[%s2066 + $0xd0] sm:$0xf]
        %v2094 = vld [vmem:[%s2066 + $0xd8] sm:$0xf]
        %v2095 = vld [vmem:[%s2066 + $0xe0] sm:$0xf]
        %v2096 = vld [vmem:[%s2066 + $0xe8] sm:$0xf]
        %v2097 = vld [vmem:[%s2066 + $0xf0] sm:$0xf]
        %v2098 = vld [vmem:[%s2066 + $0xf8] sm:$0xf]
        %v2127 = vunpack.c.l.b16 %v2038
        %v2128 = vunpack.c.h.b16 %v2038
        %v2129 = vunpack.c.l.b16 %v2039
        %v2130 = vunpack.c.h.b16 %v2039
        %v2131 = vunpack.c.l.b16 %v2040
        %v2132 = vunpack.c.h.b16 %v2040
        %v2133 = vunpack.c.l.b16 %v2041
        %v2134 = vunpack.c.h.b16 %v2041
        %v2135 = vunpack.c.l.b16 %v2042
        %v2136 = vunpack.c.h.b16 %v2042
        %v2137 = vunpack.c.l.b16 %v2043
        %v2138 = vunpack.c.h.b16 %v2043
        %v2139 = vunpack.c.l.b16 %v2044
        %v2140 = vunpack.c.h.b16 %v2044
        %v2141 = vunpack.c.l.b16 %v2045
        %v2142 = vunpack.c.h.b16 %v2045
        %v2143 = vunpack.c.l.b16 %v2046
        %v2144 = vunpack.c.h.b16 %v2046
        %v2145 = vunpack.c.l.b16 %v2047
        %v2146 = vunpack.c.h.b16 %v2047
        %v2147 = vunpack.c.l.b16 %v2048
        %v2148 = vunpack.c.h.b16 %v2048
        %v2149 = vunpack.c.l.b16 %v2049
        %v2150 = vunpack.c.h.b16 %v2049
        %v2151 = vunpack.c.l.b16 %v2050
        %v2152 = vunpack.c.h.b16 %v2050
        %v2153 = vunpack.c.l.b16 %v2051
        %v2154 = vunpack.c.h.b16 %v2051
        %v2155 = vunpack.c.l.b16 %v2052
        %v2156 = vunpack.c.h.b16 %v2052
        %v2157 = vunpack.c.l.b16 %v2053
        %v2158 = vunpack.c.h.b16 %v2053
        %v2159 = vunpack.c.l.b16 %v2054
        %v2160 = vunpack.c.h.b16 %v2054
        %v2161 = vunpack.c.l.b16 %v2055
        %v2162 = vunpack.c.h.b16 %v2055
        %v2163 = vunpack.c.l.b16 %v2056
        %v2164 = vunpack.c.h.b16 %v2056
        %v2165 = vunpack.c.l.b16 %v2057
        %v2166 = vunpack.c.h.b16 %v2057
        %v2167 = vunpack.c.l.b16 %v2058
        %v2168 = vunpack.c.h.b16 %v2058
        %v2169 = vunpack.c.l.b16 %v2059
        %v2170 = vunpack.c.h.b16 %v2059
        %v2171 = vunpack.c.l.b16 %v2060
        %v2172 = vunpack.c.h.b16 %v2060
        %v2173 = vunpack.c.l.b16 %v2061
        %v2174 = vunpack.c.h.b16 %v2061
        %v2175 = vunpack.c.l.b16 %v2062
        %v2176 = vunpack.c.h.b16 %v2062
        %v2177 = vunpack.c.l.b16 %v2063
        %v2178 = vunpack.c.h.b16 %v2063
        %v2179 = vunpack.c.l.b16 %v2064
        %v2180 = vunpack.c.h.b16 %v2064
        %v2181 = vunpack.c.l.b16 %v2065
        %v2182 = vunpack.c.h.b16 %v2065
        %v2183 = vpack.c.b16 %v2129, %v2127
        %v2184 = vpack.c.b16 %v2130, %v2128
        %v2185 = vpack.c.b16 %v2133, %v2131
        %v2186 = vpack.c.b16 %v2134, %v2132
        %v2187 = vpack.c.b16 %v2137, %v2135
        %v2188 = vpack.c.b16 %v2138, %v2136
        %v2189 = vpack.c.b16 %v2141, %v2139
        %v2190 = vpack.c.b16 %v2142, %v2140
        %v2191 = vpack.c.b16 %v2145, %v2143
        %v2192 = vpack.c.b16 %v2146, %v2144
        %v2193 = vpack.c.b16 %v2149, %v2147
        %v2194 = vpack.c.b16 %v2150, %v2148
        %v2195 = vpack.c.b16 %v2153, %v2151
        %v2196 = vpack.c.b16 %v2154, %v2152
        %v2197 = vpack.c.b16 %v2157, %v2155
        %v2198 = vpack.c.b16 %v2158, %v2156
        %v2199 = vpack.c.b16 %v2161, %v2159
        %v2200 = vpack.c.b16 %v2162, %v2160
        %v2201 = vpack.c.b16 %v2165, %v2163
        %v2202 = vpack.c.b16 %v2166, %v2164
        %v2203 = vpack.c.b16 %v2169, %v2167
        %v2204 = vpack.c.b16 %v2170, %v2168
        %v2205 = vpack.c.b16 %v2173, %v2171
        %v2206 = vpack.c.b16 %v2174, %v2172
        %v2207 = vpack.c.b16 %v2177, %v2175
        %v2208 = vpack.c.b16 %v2178, %v2176
        %v2209 = vpack.c.b16 %v2181, %v2179
        %v2210 = vpack.c.b16 %v2182, %v2180
        %v2271 = vunpack.c.l.b16 %v2067
        %v2272 = vunpack.c.l.b16 %v2068
        %v2273 = vunpack.c.l.b16 %v2069
        %v2274 = vunpack.c.l.b16 %v2070
        %v2275 = vunpack.c.l.b16 %v2071
        %v2276 = vunpack.c.l.b16 %v2072
        %v2277 = vunpack.c.l.b16 %v2073
        %v2278 = vunpack.c.l.b16 %v2074
        %v2279 = vunpack.c.l.b16 %v2075
        %v2280 = vunpack.c.l.b16 %v2076
        %v2281 = vunpack.c.l.b16 %v2077
        %v2282 = vunpack.c.l.b16 %v2078
        %v2283 = vunpack.c.l.b16 %v2079
        %v2284 = vunpack.c.l.b16 %v2080
        %v2285 = vunpack.c.l.b16 %v2081
        %v2286 = vunpack.c.l.b16 %v2082
        %v2287 = vunpack.c.l.b16 %v2083
        %v2288 = vunpack.c.l.b16 %v2084
        %v2289 = vunpack.c.l.b16 %v2085
        %v2290 = vunpack.c.l.b16 %v2086
        %v2291 = vunpack.c.l.b16 %v2087
        %v2292 = vunpack.c.l.b16 %v2088
        %v2293 = vunpack.c.l.b16 %v2089
        %v2294 = vunpack.c.l.b16 %v2090
        %v2295 = vunpack.c.l.b16 %v2091
        %v2296 = vunpack.c.l.b16 %v2092
        %v2297 = vunpack.c.l.b16 %v2093
        %v2298 = vunpack.c.l.b16 %v2094
        %v2299 = vunpack.c.l.b16 %v2095
        %v2300 = vunpack.c.l.b16 %v2096
        %v2301 = vunpack.c.l.b16 %v2097
        %v2302 = vunpack.c.l.b16 %v2098
        %v2303 = vpack.c.b16 %v2272, %v2271
        %v2304 = vpack.c.b16 %v2274, %v2273
        %v2305 = vpack.c.b16 %v2276, %v2275
        %v2306 = vpack.c.b16 %v2278, %v2277
        %v2307 = vpack.c.b16 %v2280, %v2279
        %v2308 = vpack.c.b16 %v2282, %v2281
        %v2309 = vpack.c.b16 %v2284, %v2283
        %v2310 = vpack.c.b16 %v2286, %v2285
        %v2311 = vpack.c.b16 %v2288, %v2287
        %v2312 = vpack.c.b16 %v2290, %v2289
        %v2313 = vpack.c.b16 %v2292, %v2291
        %v2314 = vpack.c.b16 %v2294, %v2293
        %v2315 = vpack.c.b16 %v2296, %v2295
        %v2316 = vpack.c.b16 %v2298, %v2297
        %v2317 = vpack.c.b16 %v2300, %v2299
        %v2318 = vpack.c.b16 %v2302, %v2301
        %2335 = vmatprep.subr.bf16.mxu0 0
        %2336 = vmatpush1.bf16.msra.mxu0 %v2310
        %2337 = vmatprep.subr.bf16.mxu0 0
        %2338 = vmatpush1.bf16.msra.mxu0 %v2309
        %2339 = vmatprep.subr.bf16.mxu0 0
        %2340 = vmatpush1.bf16.msra.mxu0 %v2308
        %2341 = vmatprep.subr.bf16.mxu0 0
        %2342 = vmatpush1.bf16.msra.mxu0 %v2307
        %2343 = vmatprep.subr.bf16.mxu0 0
        %2344 = vmatpush1.bf16.msra.mxu0 %v2306
        %2345 = vmatprep.subr.bf16.mxu0 0
        %2346 = vmatpush1.bf16.msra.mxu0 %v2305
        %2347 = vmatprep.subr.bf16.mxu0 0
        %2348 = vmatpush1.bf16.msra.mxu0 %v2304
        %2349 = vmatprep.subr.bf16.mxu0 0
        %2350 = vmatpush1.bf16.msra.mxu0 %v2303
        %2351 = vmatprep.subr.bf16.mxu0 0
        %2352 = vmatpush2.bf16.msra.mxu0 %v2318
        %2353 = vmatprep.subr.bf16.mxu0 0
        %2354 = vmatpush2.bf16.msra.mxu0 %v2317
        %2355 = vmatprep.subr.bf16.mxu0 0
        %2356 = vmatpush2.bf16.msra.mxu0 %v2316
        %2357 = vmatprep.subr.bf16.mxu0 0
        %2358 = vmatpush2.bf16.msra.mxu0 %v2315
        %2359 = vmatprep.subr.bf16.mxu0 0
        %2360 = vmatpush2.bf16.msra.mxu0 %v2314
        %2361 = vmatprep.subr.bf16.mxu0 0
        %2362 = vmatpush2.bf16.msra.mxu0 %v2313
        %2363 = vmatprep.subr.bf16.mxu0 0
        %2364 = vmatpush2.bf16.msra.mxu0 %v2312
        %2365 = vmatprep.subr.bf16.mxu0 0
        %2366 = vmatpush2.bf16.msra.mxu0 %v2311
        %2367 = vmatprep.mubr.bf16.mxu0 %v2184
        %2368 = vmatmul.mubr.bf16.gmra.mxu0 %v2183
        %v2369 = vpop.f32.mrf.mxu0
        %v2370 = vadd.f32 0.0, %v2369
        %v2371 = vpop.f32.mrf.mxu0
        %v2372 = vpop.f32.mrf.mxu0
        %v2373 = vadd.f32 0.0, %v2372
        %v2374 = vpop.f32.mrf.mxu0
        %2375 = vmatprep.mubr.bf16.mxu0 %v2186
        %2376 = vmatmul.mubr.bf16.gmra.mxu0 %v2185
        %v2377 = vpop.f32.mrf.mxu0
        %v2378 = vadd.f32 0.0, %v2377
        %v2379 = vpop.f32.mrf.mxu0
        %v2380 = vpop.f32.mrf.mxu0
        %v2381 = vadd.f32 0.0, %v2380
        %v2382 = vpop.f32.mrf.mxu0
        %2383 = vmatprep.mubr.bf16.mxu0 %v2188
        %2384 = vmatmul.mubr.bf16.gmra.mxu0 %v2187
        %v2385 = vpop.f32.mrf.mxu0
        %v2386 = vadd.f32 0.0, %v2385
        %v2387 = vpop.f32.mrf.mxu0
        %v2388 = vpop.f32.mrf.mxu0
        %v2389 = vadd.f32 0.0, %v2388
        %v2390 = vpop.f32.mrf.mxu0
        %2391 = vmatprep.mubr.bf16.mxu0 %v2190
        %2392 = vmatmul.mubr.bf16.gmra.mxu0 %v2189
        %v2393 = vpop.f32.mrf.mxu0
        %v2394 = vadd.f32 0.0, %v2393
        %v2395 = vpop.f32.mrf.mxu0
        %v2396 = vpop.f32.mrf.mxu0
        %v2397 = vadd.f32 0.0, %v2396
        %v2398 = vpop.f32.mrf.mxu0
        %2399 = vmatprep.mubr.bf16.mxu0 %v2192
        %2400 = vmatmul.mubr.bf16.gmra.mxu0 %v2191
        %v2401 = vpop.f32.mrf.mxu0
        %v2402 = vadd.f32 0.0, %v2401
        %v2403 = vpop.f32.mrf.mxu0
        %v2404 = vpop.f32.mrf.mxu0
        %v2405 = vadd.f32 0.0, %v2404
        %v2406 = vpop.f32.mrf.mxu0
        %2407 = vmatprep.mubr.bf16.mxu0 %v2194
        %2408 = vmatmul.mubr.bf16.gmra.mxu0 %v2193
        %v2409 = vpop.f32.mrf.mxu0
        %v2410 = vadd.f32 0.0, %v2409
        %v2411 = vpop.f32.mrf.mxu0
        %v2412 = vpop.f32.mrf.mxu0
        %v2413 = vadd.f32 0.0, %v2412
        %v2414 = vpop.f32.mrf.mxu0
        %2415 = vmatprep.mubr.bf16.mxu0 %v2196
        %2416 = vmatmul.mubr.bf16.gmra.mxu0 %v2195
        %v2417 = vpop.f32.mrf.mxu0
        %v2418 = vadd.f32 0.0, %v2417
        %v2419 = vpop.f32.mrf.mxu0
        %v2420 = vpop.f32.mrf.mxu0
        %v2421 = vadd.f32 0.0, %v2420
        %v2422 = vpop.f32.mrf.mxu0
        %2423 = vmatprep.mubr.bf16.mxu0 %v2198
        %2424 = vmatmul.mubr.bf16.gmra.mxu0 %v2197
        %v2425 = vpop.f32.mrf.mxu0
        %v2426 = vadd.f32 0.0, %v2425
        %v2427 = vpop.f32.mrf.mxu0
        %v2428 = vpop.f32.mrf.mxu0
        %v2429 = vadd.f32 0.0, %v2428
        %v2430 = vpop.f32.mrf.mxu0
        %2431 = vmatprep.mubr.bf16.mxu0 %v2200
        %2432 = vmatmul.mubr.bf16.gmra.mxu0 %v2199
        %v2433 = vpop.f32.mrf.mxu0
        %v2434 = vadd.f32 0.0, %v2433
        %v2435 = vpop.f32.mrf.mxu0
        %v2436 = vpop.f32.mrf.mxu0
        %v2437 = vadd.f32 0.0, %v2436
        %v2438 = vpop.f32.mrf.mxu0
        %2439 = vmatprep.mubr.bf16.mxu0 %v2202
        %2440 = vmatmul.mubr.bf16.gmra.mxu0 %v2201
        %v2441 = vpop.f32.mrf.mxu0
        %v2442 = vadd.f32 0.0, %v2441
        %v2443 = vpop.f32.mrf.mxu0
        %v2444 = vpop.f32.mrf.mxu0
        %v2445 = vadd.f32 0.0, %v2444
        %v2446 = vpop.f32.mrf.mxu0
        %2447 = vmatprep.mubr.bf16.mxu0 %v2204
        %2448 = vmatmul.mubr.bf16.gmra.mxu0 %v2203
        %v2449 = vpop.f32.mrf.mxu0
        %v2450 = vadd.f32 0.0, %v2449
        %v2451 = vpop.f32.mrf.mxu0
        %v2452 = vpop.f32.mrf.mxu0
        %v2453 = vadd.f32 0.0, %v2452
        %v2454 = vpop.f32.mrf.mxu0
        %2455 = vmatprep.mubr.bf16.mxu0 %v2206
        %2456 = vmatmul.mubr.bf16.gmra.mxu0 %v2205
        %v2457 = vpop.f32.mrf.mxu0
        %v2458 = vadd.f32 0.0, %v2457
        %v2459 = vpop.f32.mrf.mxu0
        %v2460 = vpop.f32.mrf.mxu0
        %v2461 = vadd.f32 0.0, %v2460
        %v2462 = vpop.f32.mrf.mxu0
        %2463 = vmatprep.mubr.bf16.mxu0 %v2208
        %2464 = vmatmul.mubr.bf16.gmra.mxu0 %v2207
        %v2465 = vpop.f32.mrf.mxu0
        %v2466 = vadd.f32 0.0, %v2465
        %v2467 = vpop.f32.mrf.mxu0
        %v2468 = vpop.f32.mrf.mxu0
        %v2469 = vadd.f32 0.0, %v2468
        %v2470 = vpop.f32.mrf.mxu0
        %2471 = vmatprep.mubr.bf16.mxu0 %v2210
        %2472 = vmatmul.mubr.bf16.gmra.mxu0 %v2209
        %v2473 = vpop.f32.mrf.mxu0
        %v2474 = vadd.f32 0.0, %v2473
        %v2475 = vpop.f32.mrf.mxu0
        %v2476 = vpop.f32.mrf.mxu0
        %v2477 = vadd.f32 0.0, %v2476
        %v2478 = vpop.f32.mrf.mxu0
        %2479 = vdwg.mxu0
        %v2508 = vunpack.c.l.b16 %v1978
        %v2509 = vunpack.c.h.b16 %v1978
        %v2510 = vunpack.c.l.b16 %v1979
        %v2511 = vunpack.c.h.b16 %v1979
        %v2512 = vunpack.c.l.b16 %v1980
        %v2513 = vunpack.c.h.b16 %v1980
        %v2514 = vunpack.c.l.b16 %v1981
        %v2515 = vunpack.c.h.b16 %v1981
        %v2516 = vunpack.c.l.b16 %v1982
        %v2517 = vunpack.c.h.b16 %v1982
        %v2518 = vunpack.c.l.b16 %v1983
        %v2519 = vunpack.c.h.b16 %v1983
        %v2520 = vunpack.c.l.b16 %v1984
        %v2521 = vunpack.c.h.b16 %v1984
        %v2522 = vunpack.c.l.b16 %v1985
        %v2523 = vunpack.c.h.b16 %v1985
        %v2524 = vunpack.c.l.b16 %v1986
        %v2525 = vunpack.c.h.b16 %v1986
        %v2526 = vunpack.c.l.b16 %v1987
        %v2527 = vunpack.c.h.b16 %v1987
        %v2528 = vunpack.c.l.b16 %v1988
        %v2529 = vunpack.c.h.b16 %v1988
        %v2530 = vunpack.c.l.b16 %v1989
        %v2531 = vunpack.c.h.b16 %v1989
        %v2532 = vunpack.c.l.b16 %v1990
        %v2533 = vunpack.c.h.b16 %v1990
        %v2534 = vunpack.c.l.b16 %v1991
        %v2535 = vunpack.c.h.b16 %v1991
        %v2536 = vunpack.c.l.b16 %v1992
        %v2537 = vunpack.c.h.b16 %v1992
        %v2538 = vunpack.c.l.b16 %v1993
        %v2539 = vunpack.c.h.b16 %v1993
        %v2540 = vunpack.c.l.b16 %v1994
        %v2541 = vunpack.c.h.b16 %v1994
        %v2542 = vunpack.c.l.b16 %v1995
        %v2543 = vunpack.c.h.b16 %v1995
        %v2544 = vunpack.c.l.b16 %v1996
        %v2545 = vunpack.c.h.b16 %v1996
        %v2546 = vunpack.c.l.b16 %v1997
        %v2547 = vunpack.c.h.b16 %v1997
        %v2548 = vunpack.c.l.b16 %v1998
        %v2549 = vunpack.c.h.b16 %v1998
        %v2550 = vunpack.c.l.b16 %v1999
        %v2551 = vunpack.c.h.b16 %v1999
        %v2552 = vunpack.c.l.b16 %v2000
        %v2553 = vunpack.c.h.b16 %v2000
        %v2554 = vunpack.c.l.b16 %v2001
        %v2555 = vunpack.c.h.b16 %v2001
        %v2556 = vunpack.c.l.b16 %v2002
        %v2557 = vunpack.c.h.b16 %v2002
        %v2558 = vunpack.c.l.b16 %v2003
        %v2559 = vunpack.c.h.b16 %v2003
        %v2560 = vunpack.c.l.b16 %v2004
        %v2561 = vunpack.c.h.b16 %v2004
        %v2562 = vunpack.c.l.b16 %v2005
        %v2563 = vunpack.c.h.b16 %v2005
        %v2564 = vpack.c.b16 %v2510, %v2508
        %v2565 = vpack.c.b16 %v2511, %v2509
        %v2566 = vpack.c.b16 %v2514, %v2512
        %v2567 = vpack.c.b16 %v2515, %v2513
        %v2568 = vpack.c.b16 %v2518, %v2516
        %v2569 = vpack.c.b16 %v2519, %v2517
        %v2570 = vpack.c.b16 %v2522, %v2520
        %v2571 = vpack.c.b16 %v2523, %v2521
        %v2572 = vpack.c.b16 %v2526, %v2524
        %v2573 = vpack.c.b16 %v2527, %v2525
        %v2574 = vpack.c.b16 %v2530, %v2528
        %v2575 = vpack.c.b16 %v2531, %v2529
        %v2576 = vpack.c.b16 %v2534, %v2532
        %v2577 = vpack.c.b16 %v2535, %v2533
        %v2578 = vpack.c.b16 %v2538, %v2536
        %v2579 = vpack.c.b16 %v2539, %v2537
        %v2580 = vpack.c.b16 %v2542, %v2540
        %v2581 = vpack.c.b16 %v2543, %v2541
        %v2582 = vpack.c.b16 %v2546, %v2544
        %v2583 = vpack.c.b16 %v2547, %v2545
        %v2584 = vpack.c.b16 %v2550, %v2548
        %v2585 = vpack.c.b16 %v2551, %v2549
        %v2586 = vpack.c.b16 %v2554, %v2552
        %v2587 = vpack.c.b16 %v2555, %v2553
        %v2588 = vpack.c.b16 %v2558, %v2556
        %v2589 = vpack.c.b16 %v2559, %v2557
        %v2590 = vpack.c.b16 %v2562, %v2560
        %v2591 = vpack.c.b16 %v2563, %v2561
        %v2652 = vunpack.c.l.b16 %v2006
        %v2653 = vunpack.c.l.b16 %v2007
        %v2654 = vunpack.c.l.b16 %v2008
        %v2655 = vunpack.c.l.b16 %v2009
        %v2656 = vunpack.c.l.b16 %v2010
        %v2657 = vunpack.c.l.b16 %v2011
        %v2658 = vunpack.c.l.b16 %v2012
        %v2659 = vunpack.c.l.b16 %v2013
        %v2660 = vunpack.c.l.b16 %v2014
        %v2661 = vunpack.c.l.b16 %v2015
        %v2662 = vunpack.c.l.b16 %v2016
        %v2663 = vunpack.c.l.b16 %v2017
        %v2664 = vunpack.c.l.b16 %v2018
        %v2665 = vunpack.c.l.b16 %v2019
        %v2666 = vunpack.c.l.b16 %v2020
        %v2667 = vunpack.c.l.b16 %v2021
        %v2668 = vunpack.c.l.b16 %v2022
        %v2669 = vunpack.c.l.b16 %v2023
        %v2670 = vunpack.c.l.b16 %v2024
        %v2671 = vunpack.c.l.b16 %v2025
        %v2672 = vunpack.c.l.b16 %v2026
        %v2673 = vunpack.c.l.b16 %v2027
        %v2674 = vunpack.c.l.b16 %v2028
        %v2675 = vunpack.c.l.b16 %v2029
        %v2676 = vunpack.c.l.b16 %v2030
        %v2677 = vunpack.c.l.b16 %v2031
        %v2678 = vunpack.c.l.b16 %v2032
        %v2679 = vunpack.c.l.b16 %v2033
        %v2680 = vunpack.c.l.b16 %v2034
        %v2681 = vunpack.c.l.b16 %v2035
        %v2682 = vunpack.c.l.b16 %v2036
        %v2683 = vunpack.c.l.b16 %v2037
        %v2684 = vpack.c.b16 %v2653, %v2652
        %v2685 = vpack.c.b16 %v2655, %v2654
        %v2686 = vpack.c.b16 %v2657, %v2656
        %v2687 = vpack.c.b16 %v2659, %v2658
        %v2688 = vpack.c.b16 %v2661, %v2660
        %v2689 = vpack.c.b16 %v2663, %v2662
        %v2690 = vpack.c.b16 %v2665, %v2664
        %v2691 = vpack.c.b16 %v2667, %v2666
        %v2692 = vpack.c.b16 %v2669, %v2668
        %v2693 = vpack.c.b16 %v2671, %v2670
        %v2694 = vpack.c.b16 %v2673, %v2672
        %v2695 = vpack.c.b16 %v2675, %v2674
        %v2696 = vpack.c.b16 %v2677, %v2676
        %v2697 = vpack.c.b16 %v2679, %v2678
        %v2698 = vpack.c.b16 %v2681, %v2680
        %v2699 = vpack.c.b16 %v2683, %v2682
        %2716 = vmatprep.subr.bf16.mxu0 0
        %2717 = vmatpush1.bf16.msra.mxu0 %v2691
        %2718 = vmatprep.subr.bf16.mxu0 0
        %2719 = vmatpush1.bf16.msra.mxu0 %v2690
        %2720 = vmatprep.subr.bf16.mxu0 0
        %2721 = vmatpush1.bf16.msra.mxu0 %v2689
        %2722 = vmatprep.subr.bf16.mxu0 0
        %2723 = vmatpush1.bf16.msra.mxu0 %v2688
        %2724 = vmatprep.subr.bf16.mxu0 0
        %2725 = vmatpush1.bf16.msra.mxu0 %v2687
        %2726 = vmatprep.subr.bf16.mxu0 0
        %2727 = vmatpush1.bf16.msra.mxu0 %v2686
        %2728 = vmatprep.subr.bf16.mxu0 0
        %2729 = vmatpush1.bf16.msra.mxu0 %v2685
        %2730 = vmatprep.subr.bf16.mxu0 0
        %2731 = vmatpush1.bf16.msra.mxu0 %v2684
        %2732 = vmatprep.subr.bf16.mxu0 0
        %2733 = vmatpush2.bf16.msra.mxu0 %v2699
        %2734 = vmatprep.subr.bf16.mxu0 0
        %2735 = vmatpush2.bf16.msra.mxu0 %v2698
        %2736 = vmatprep.subr.bf16.mxu0 0
        %2737 = vmatpush2.bf16.msra.mxu0 %v2697
        %2738 = vmatprep.subr.bf16.mxu0 0
        %2739 = vmatpush2.bf16.msra.mxu0 %v2696
        %2740 = vmatprep.subr.bf16.mxu0 0
        %2741 = vmatpush2.bf16.msra.mxu0 %v2695
        %2742 = vmatprep.subr.bf16.mxu0 0
        %2743 = vmatpush2.bf16.msra.mxu0 %v2694
        %2744 = vmatprep.subr.bf16.mxu0 0
        %2745 = vmatpush2.bf16.msra.mxu0 %v2693
        %2746 = vmatprep.subr.bf16.mxu0 0
        %2747 = vmatpush2.bf16.msra.mxu0 %v2692
        %2748 = vmatprep.mubr.bf16.mxu0 %v2565
        %2749 = vmatmul.mubr.bf16.gmra.mxu0 %v2564
        %v2750 = vpop.f32.mrf.mxu0
        %v2751 = vadd.f32 %v2370, %v2750
        %v2752 = vpop.f32.mrf.mxu0
        %v2753 = vpop.f32.mrf.mxu0
        %v2754 = vadd.f32 %v2373, %v2753
        %v2755 = vpop.f32.mrf.mxu0
        %2756 = vmatprep.mubr.bf16.mxu0 %v2567
        %2757 = vmatmul.mubr.bf16.gmra.mxu0 %v2566
        %v2758 = vpop.f32.mrf.mxu0
        %v2759 = vadd.f32 %v2378, %v2758
        %v2760 = vpop.f32.mrf.mxu0
        %v2761 = vpop.f32.mrf.mxu0
        %v2762 = vadd.f32 %v2381, %v2761
        %v2763 = vpop.f32.mrf.mxu0
        %2764 = vmatprep.mubr.bf16.mxu0 %v2569
        %2765 = vmatmul.mubr.bf16.gmra.mxu0 %v2568
        %v2766 = vpop.f32.mrf.mxu0
        %v2767 = vadd.f32 %v2386, %v2766
        %v2768 = vpop.f32.mrf.mxu0
        %v2769 = vpop.f32.mrf.mxu0
        %v2770 = vadd.f32 %v2389, %v2769
        %v2771 = vpop.f32.mrf.mxu0
        %2772 = vmatprep.mubr.bf16.mxu0 %v2571
        %2773 = vmatmul.mubr.bf16.gmra.mxu0 %v2570
        %v2774 = vpop.f32.mrf.mxu0
        %v2775 = vadd.f32 %v2394, %v2774
        %v2776 = vpop.f32.mrf.mxu0
        %v2777 = vpop.f32.mrf.mxu0
        %v2778 = vadd.f32 %v2397, %v2777
        %v2779 = vpop.f32.mrf.mxu0
        %2780 = vmatprep.mubr.bf16.mxu0 %v2573
        %2781 = vmatmul.mubr.bf16.gmra.mxu0 %v2572
        %v2782 = vpop.f32.mrf.mxu0
        %v2783 = vadd.f32 %v2402, %v2782
        %v2784 = vpop.f32.mrf.mxu0
        %v2785 = vpop.f32.mrf.mxu0
        %v2786 = vadd.f32 %v2405, %v2785
        %v2787 = vpop.f32.mrf.mxu0
        %2788 = vmatprep.mubr.bf16.mxu0 %v2575
        %2789 = vmatmul.mubr.bf16.gmra.mxu0 %v2574
        %v2790 = vpop.f32.mrf.mxu0
        %v2791 = vadd.f32 %v2410, %v2790
        %v2792 = vpop.f32.mrf.mxu0
        %v2793 = vpop.f32.mrf.mxu0
        %v2794 = vadd.f32 %v2413, %v2793
        %v2795 = vpop.f32.mrf.mxu0
        %2796 = vmatprep.mubr.bf16.mxu0 %v2577
        %2797 = vmatmul.mubr.bf16.gmra.mxu0 %v2576
        %v2798 = vpop.f32.mrf.mxu0
        %v2799 = vadd.f32 %v2418, %v2798
        %v2800 = vpop.f32.mrf.mxu0
        %v2801 = vpop.f32.mrf.mxu0
        %v2802 = vadd.f32 %v2421, %v2801
        %v2803 = vpop.f32.mrf.mxu0
        %2804 = vmatprep.mubr.bf16.mxu0 %v2579
        %2805 = vmatmul.mubr.bf16.gmra.mxu0 %v2578
        %v2806 = vpop.f32.mrf.mxu0
        %v2807 = vadd.f32 %v2426, %v2806
        %v2808 = vpop.f32.mrf.mxu0
        %v2809 = vpop.f32.mrf.mxu0
        %v2810 = vadd.f32 %v2429, %v2809
        %v2811 = vpop.f32.mrf.mxu0
        %2812 = vmatprep.mubr.bf16.mxu0 %v2581
        %2813 = vmatmul.mubr.bf16.gmra.mxu0 %v2580
        %v2814 = vpop.f32.mrf.mxu0
        %v2815 = vadd.f32 %v2434, %v2814
        %v2816 = vpop.f32.mrf.mxu0
        %v2817 = vpop.f32.mrf.mxu0
        %v2818 = vadd.f32 %v2437, %v2817
        %v2819 = vpop.f32.mrf.mxu0
        %2820 = vmatprep.mubr.bf16.mxu0 %v2583
        %2821 = vmatmul.mubr.bf16.gmra.mxu0 %v2582
        %v2822 = vpop.f32.mrf.mxu0
        %v2823 = vadd.f32 %v2442, %v2822
        %v2824 = vpop.f32.mrf.mxu0
        %v2825 = vpop.f32.mrf.mxu0
        %v2826 = vadd.f32 %v2445, %v2825
        %v2827 = vpop.f32.mrf.mxu0
        %2828 = vmatprep.mubr.bf16.mxu0 %v2585
        %2829 = vmatmul.mubr.bf16.gmra.mxu0 %v2584
        %v2830 = vpop.f32.mrf.mxu0
        %v2831 = vadd.f32 %v2450, %v2830
        %v2832 = vpop.f32.mrf.mxu0
        %v2833 = vpop.f32.mrf.mxu0
        %v2834 = vadd.f32 %v2453, %v2833
        %v2835 = vpop.f32.mrf.mxu0
        %2836 = vmatprep.mubr.bf16.mxu0 %v2587
        %2837 = vmatmul.mubr.bf16.gmra.mxu0 %v2586
        %v2838 = vpop.f32.mrf.mxu0
        %v2839 = vadd.f32 %v2458, %v2838
        %v2840 = vpop.f32.mrf.mxu0
        %v2841 = vpop.f32.mrf.mxu0
        %v2842 = vadd.f32 %v2461, %v2841
        %v2843 = vpop.f32.mrf.mxu0
        %2844 = vmatprep.mubr.bf16.mxu0 %v2589
        %2845 = vmatmul.mubr.bf16.gmra.mxu0 %v2588
        %v2846 = vpop.f32.mrf.mxu0
        %v2847 = vadd.f32 %v2466, %v2846
        %v2848 = vpop.f32.mrf.mxu0
        %v2849 = vpop.f32.mrf.mxu0
        %v2850 = vadd.f32 %v2469, %v2849
        %v2851 = vpop.f32.mrf.mxu0
        %2852 = vmatprep.mubr.bf16.mxu0 %v2591
        %2853 = vmatmul.mubr.bf16.gmra.mxu0 %v2590
        %v2854 = vpop.f32.mrf.mxu0
        %v2855 = vadd.f32 %v2474, %v2854
        %v2856 = vpop.f32.mrf.mxu0
        %v2857 = vpop.f32.mrf.mxu0
        %v2858 = vadd.f32 %v2477, %v2857
        %v2859 = vpop.f32.mrf.mxu0
        %2860 = vdwg.mxu0
        %v2861 = vld [vmem:[#allocation4] sm:$0xff]
        %v2862 = vld [vmem:[#allocation4 + $0x8] sm:$0xff]
        %v2863 = vld [vmem:[#allocation4 + $0x10] sm:$0xff]
        %v2864 = vld [vmem:[#allocation4 + $0x18] sm:$0xff]
        %v2865 = vld [vmem:[#allocation4 + $0x20] sm:$0xff]
        %v2866 = vld [vmem:[#allocation4 + $0x28] sm:$0xff]
        %v2867 = vld [vmem:[#allocation4 + $0x30] sm:$0xff]
        %v2868 = vld [vmem:[#allocation4 + $0x38] sm:$0xff]
        %v2869 = vld [vmem:[#allocation4 + $0x40] sm:$0xff]
        %v2870 = vld [vmem:[#allocation4 + $0x48] sm:$0xff]
        %v2871 = vld [vmem:[#allocation4 + $0x50] sm:$0xff]
        %v2872 = vld [vmem:[#allocation4 + $0x58] sm:$0xff]
        %v2873 = vld [vmem:[#allocation4 + $0x60] sm:$0xff]
        %v2874 = vld [vmem:[#allocation4 + $0x68] sm:$0xff]
        %v2875 = vld [vmem:[#allocation4 + $0x70] sm:$0xff]
        %v2876 = vld [vmem:[#allocation4 + $0x78] sm:$0xff]
        %v2877 = vld [vmem:[#allocation4 + $0x80] sm:$0xff]
        %v2878 = vld [vmem:[#allocation4 + $0x88] sm:$0xff]
        %v2879 = vld [vmem:[#allocation4 + $0x90] sm:$0xff]
        %v2880 = vld [vmem:[#allocation4 + $0x98] sm:$0xff]
        %v2881 = vld [vmem:[#allocation4 + $0xa0] sm:$0xff]
        %v2882 = vld [vmem:[#allocation4 + $0xa8] sm:$0xff]
        %v2883 = vld [vmem:[#allocation4 + $0xb0] sm:$0xff]
        %v2884 = vld [vmem:[#allocation4 + $0xb8] sm:$0xff]
        %v2885 = vld [vmem:[#allocation4 + $0xc0] sm:$0xff]
        %v2886 = vld [vmem:[#allocation4 + $0xc8] sm:$0xff]
        %v2887 = vld [vmem:[#allocation4 + $0xd0] sm:$0xff]
        %v2888 = vld [vmem:[#allocation4 + $0xd8] sm:$0xff]
        %s2889 = scalar_lea.vmem [#allocation13], 512
        %v2890 = vld [vmem:[%s2889] sm:$0xf]
        %v2891 = vld [vmem:[%s2889 + $0x8] sm:$0xf]
        %v2892 = vld [vmem:[%s2889 + $0x10] sm:$0xf]
        %v2893 = vld [vmem:[%s2889 + $0x18] sm:$0xf]
        %v2894 = vld [vmem:[%s2889 + $0x20] sm:$0xf]
        %v2895 = vld [vmem:[%s2889 + $0x28] sm:$0xf]
        %v2896 = vld [vmem:[%s2889 + $0x30] sm:$0xf]
        %v2897 = vld [vmem:[%s2889 + $0x38] sm:$0xf]
        %v2898 = vld [vmem:[%s2889 + $0x40] sm:$0xf]
        %v2899 = vld [vmem:[%s2889 + $0x48] sm:$0xf]
        %v2900 = vld [vmem:[%s2889 + $0x50] sm:$0xf]
        %v2901 = vld [vmem:[%s2889 + $0x58] sm:$0xf]
        %v2902 = vld [vmem:[%s2889 + $0x60] sm:$0xf]
        %v2903 = vld [vmem:[%s2889 + $0x68] sm:$0xf]
        %v2904 = vld [vmem:[%s2889 + $0x70] sm:$0xf]
        %v2905 = vld [vmem:[%s2889 + $0x78] sm:$0xf]
        %v2906 = vld [vmem:[%s2889 + $0x80] sm:$0xf]
        %v2907 = vld [vmem:[%s2889 + $0x88] sm:$0xf]
        %v2908 = vld [vmem:[%s2889 + $0x90] sm:$0xf]
        %v2909 = vld [vmem:[%s2889 + $0x98] sm:$0xf]
        %v2910 = vld [vmem:[%s2889 + $0xa0] sm:$0xf]
        %v2911 = vld [vmem:[%s2889 + $0xa8] sm:$0xf]
        %v2912 = vld [vmem:[%s2889 + $0xb0] sm:$0xf]
        %v2913 = vld [vmem:[%s2889 + $0xb8] sm:$0xf]
        %v2914 = vld [vmem:[%s2889 + $0xc0] sm:$0xf]
        %v2915 = vld [vmem:[%s2889 + $0xc8] sm:$0xf]
        %v2916 = vld [vmem:[%s2889 + $0xd0] sm:$0xf]
        %v2917 = vld [vmem:[%s2889 + $0xd8] sm:$0xf]
        %v2918 = vld [vmem:[%s2889 + $0xe0] sm:$0xf]
        %v2919 = vld [vmem:[%s2889 + $0xe8] sm:$0xf]
        %v2920 = vld [vmem:[%s2889 + $0xf0] sm:$0xf]
        %v2921 = vld [vmem:[%s2889 + $0xf8] sm:$0xf]
        %v2950 = vunpack.c.l.b16 %v2861
        %v2951 = vunpack.c.h.b16 %v2861
        %v2952 = vunpack.c.l.b16 %v2862
        %v2953 = vunpack.c.h.b16 %v2862
        %v2954 = vunpack.c.l.b16 %v2863
        %v2955 = vunpack.c.h.b16 %v2863
        %v2956 = vunpack.c.l.b16 %v2864
        %v2957 = vunpack.c.h.b16 %v2864
        %v2958 = vunpack.c.l.b16 %v2865
        %v2959 = vunpack.c.h.b16 %v2865
        %v2960 = vunpack.c.l.b16 %v2866
        %v2961 = vunpack.c.h.b16 %v2866
        %v2962 = vunpack.c.l.b16 %v2867
        %v2963 = vunpack.c.h.b16 %v2867
        %v2964 = vunpack.c.l.b16 %v2868
        %v2965 = vunpack.c.h.b16 %v2868
        %v2966 = vunpack.c.l.b16 %v2869
        %v2967 = vunpack.c.h.b16 %v2869
        %v2968 = vunpack.c.l.b16 %v2870
        %v2969 = vunpack.c.h.b16 %v2870
        %v2970 = vunpack.c.l.b16 %v2871
        %v2971 = vunpack.c.h.b16 %v2871
        %v2972 = vunpack.c.l.b16 %v2872
        %v2973 = vunpack.c.h.b16 %v2872
        %v2974 = vunpack.c.l.b16 %v2873
        %v2975 = vunpack.c.h.b16 %v2873
        %v2976 = vunpack.c.l.b16 %v2874
        %v2977 = vunpack.c.h.b16 %v2874
        %v2978 = vunpack.c.l.b16 %v2875
        %v2979 = vunpack.c.h.b16 %v2875
        %v2980 = vunpack.c.l.b16 %v2876
        %v2981 = vunpack.c.h.b16 %v2876
        %v2982 = vunpack.c.l.b16 %v2877
        %v2983 = vunpack.c.h.b16 %v2877
        %v2984 = vunpack.c.l.b16 %v2878
        %v2985 = vunpack.c.h.b16 %v2878
        %v2986 = vunpack.c.l.b16 %v2879
        %v2987 = vunpack.c.h.b16 %v2879
        %v2988 = vunpack.c.l.b16 %v2880
        %v2989 = vunpack.c.h.b16 %v2880
        %v2990 = vunpack.c.l.b16 %v2881
        %v2991 = vunpack.c.h.b16 %v2881
        %v2992 = vunpack.c.l.b16 %v2882
        %v2993 = vunpack.c.h.b16 %v2882
        %v2994 = vunpack.c.l.b16 %v2883
        %v2995 = vunpack.c.h.b16 %v2883
        %v2996 = vunpack.c.l.b16 %v2884
        %v2997 = vunpack.c.h.b16 %v2884
        %v2998 = vunpack.c.l.b16 %v2885
        %v2999 = vunpack.c.h.b16 %v2885
        %v3000 = vunpack.c.l.b16 %v2886
        %v3001 = vunpack.c.h.b16 %v2886
        %v3002 = vunpack.c.l.b16 %v2887
        %v3003 = vunpack.c.h.b16 %v2887
        %v3004 = vunpack.c.l.b16 %v2888
        %v3005 = vunpack.c.h.b16 %v2888
        %v3006 = vpack.c.b16 %v2952, %v2950
        %v3007 = vpack.c.b16 %v2953, %v2951
        %v3008 = vpack.c.b16 %v2956, %v2954
        %v3009 = vpack.c.b16 %v2957, %v2955
        %v3010 = vpack.c.b16 %v2960, %v2958
        %v3011 = vpack.c.b16 %v2961, %v2959
        %v3012 = vpack.c.b16 %v2964, %v2962
        %v3013 = vpack.c.b16 %v2965, %v2963
        %v3014 = vpack.c.b16 %v2968, %v2966
        %v3015 = vpack.c.b16 %v2969, %v2967
        %v3016 = vpack.c.b16 %v2972, %v2970
        %v3017 = vpack.c.b16 %v2973, %v2971
        %v3018 = vpack.c.b16 %v2976, %v2974
        %v3019 = vpack.c.b16 %v2977, %v2975
        %v3020 = vpack.c.b16 %v2980, %v2978
        %v3021 = vpack.c.b16 %v2981, %v2979
        %v3022 = vpack.c.b16 %v2984, %v2982
        %v3023 = vpack.c.b16 %v2985, %v2983
        %v3024 = vpack.c.b16 %v2988, %v2986
        %v3025 = vpack.c.b16 %v2989, %v2987
        %v3026 = vpack.c.b16 %v2992, %v2990
        %v3027 = vpack.c.b16 %v2993, %v2991
        %v3028 = vpack.c.b16 %v2996, %v2994
        %v3029 = vpack.c.b16 %v2997, %v2995
        %v3030 = vpack.c.b16 %v3000, %v2998
        %v3031 = vpack.c.b16 %v3001, %v2999
        %v3032 = vpack.c.b16 %v3004, %v3002
        %v3033 = vpack.c.b16 %v3005, %v3003
        %v3094 = vunpack.c.l.b16 %v2890
        %v3095 = vunpack.c.l.b16 %v2891
        %v3096 = vunpack.c.l.b16 %v2892
        %v3097 = vunpack.c.l.b16 %v2893
        %v3098 = vunpack.c.l.b16 %v2894
        %v3099 = vunpack.c.l.b16 %v2895
        %v3100 = vunpack.c.l.b16 %v2896
        %v3101 = vunpack.c.l.b16 %v2897
        %v3102 = vunpack.c.l.b16 %v2898
        %v3103 = vunpack.c.l.b16 %v2899
        %v3104 = vunpack.c.l.b16 %v2900
        %v3105 = vunpack.c.l.b16 %v2901
        %v3106 = vunpack.c.l.b16 %v2902
        %v3107 = vunpack.c.l.b16 %v2903
        %v3108 = vunpack.c.l.b16 %v2904
        %v3109 = vunpack.c.l.b16 %v2905
        %v3110 = vunpack.c.l.b16 %v2906
        %v3111 = vunpack.c.l.b16 %v2907
        %v3112 = vunpack.c.l.b16 %v2908
        %v3113 = vunpack.c.l.b16 %v2909
        %v3114 = vunpack.c.l.b16 %v2910
        %v3115 = vunpack.c.l.b16 %v2911
        %v3116 = vunpack.c.l.b16 %v2912
        %v3117 = vunpack.c.l.b16 %v2913
        %v3118 = vunpack.c.l.b16 %v2914
        %v3119 = vunpack.c.l.b16 %v2915
        %v3120 = vunpack.c.l.b16 %v2916
        %v3121 = vunpack.c.l.b16 %v2917
        %v3122 = vunpack.c.l.b16 %v2918
        %v3123 = vunpack.c.l.b16 %v2919
        %v3124 = vunpack.c.l.b16 %v2920
        %v3125 = vunpack.c.l.b16 %v2921
        %v3126 = vpack.c.b16 %v3095, %v3094
        %v3127 = vpack.c.b16 %v3097, %v3096
        %v3128 = vpack.c.b16 %v3099, %v3098
        %v3129 = vpack.c.b16 %v3101, %v3100
        %v3130 = vpack.c.b16 %v3103, %v3102
        %v3131 = vpack.c.b16 %v3105, %v3104
        %v3132 = vpack.c.b16 %v3107, %v3106
        %v3133 = vpack.c.b16 %v3109, %v3108
        %v3134 = vpack.c.b16 %v3111, %v3110
        %v3135 = vpack.c.b16 %v3113, %v3112
        %v3136 = vpack.c.b16 %v3115, %v3114
        %v3137 = vpack.c.b16 %v3117, %v3116
        %v3138 = vpack.c.b16 %v3119, %v3118
        %v3139 = vpack.c.b16 %v3121, %v3120
        %v3140 = vpack.c.b16 %v3123, %v3122
        %v3141 = vpack.c.b16 %v3125, %v3124
        %3158 = vmatprep.subr.bf16.mxu0 0
        %3159 = vmatpush1.bf16.msra.mxu0 %v3133
        %3160 = vmatprep.subr.bf16.mxu0 0
        %3161 = vmatpush1.bf16.msra.mxu0 %v3132
        %3162 = vmatprep.subr.bf16.mxu0 0
        %3163 = vmatpush1.bf16.msra.mxu0 %v3131
        %3164 = vmatprep.subr.bf16.mxu0 0
        %3165 = vmatpush1.bf16.msra.mxu0 %v3130
        %3166 = vmatprep.subr.bf16.mxu0 0
        %3167 = vmatpush1.bf16.msra.mxu0 %v3129
        %3168 = vmatprep.subr.bf16.mxu0 0
        %3169 = vmatpush1.bf16.msra.mxu0 %v3128
        %3170 = vmatprep.subr.bf16.mxu0 0
        %3171 = vmatpush1.bf16.msra.mxu0 %v3127
        %3172 = vmatprep.subr.bf16.mxu0 0
        %3173 = vmatpush1.bf16.msra.mxu0 %v3126
        %3174 = vmatprep.subr.bf16.mxu0 0
        %3175 = vmatpush2.bf16.msra.mxu0 %v3141
        %3176 = vmatprep.subr.bf16.mxu0 0
        %3177 = vmatpush2.bf16.msra.mxu0 %v3140
        %3178 = vmatprep.subr.bf16.mxu0 0
        %3179 = vmatpush2.bf16.msra.mxu0 %v3139
        %3180 = vmatprep.subr.bf16.mxu0 0
        %3181 = vmatpush2.bf16.msra.mxu0 %v3138
        %3182 = vmatprep.subr.bf16.mxu0 0
        %3183 = vmatpush2.bf16.msra.mxu0 %v3137
        %3184 = vmatprep.subr.bf16.mxu0 0
        %3185 = vmatpush2.bf16.msra.mxu0 %v3136
        %3186 = vmatprep.subr.bf16.mxu0 0
        %3187 = vmatpush2.bf16.msra.mxu0 %v3135
        %3188 = vmatprep.subr.bf16.mxu0 0
        %3189 = vmatpush2.bf16.msra.mxu0 %v3134
        %3190 = vmatprep.mubr.bf16.mxu0 %v3007
        %3191 = vmatmul.mubr.bf16.gmra.mxu0 %v3006
        %v3192 = vpop.f32.mrf.mxu0
        %v3193 = vadd.f32 0.0, %v3192
        %v3194 = vpop.f32.mrf.mxu0
        %v3195 = vpop.f32.mrf.mxu0
        %v3196 = vadd.f32 0.0, %v3195
        %v3197 = vpop.f32.mrf.mxu0
        %3198 = vmatprep.mubr.bf16.mxu0 %v3009
        %3199 = vmatmul.mubr.bf16.gmra.mxu0 %v3008
        %v3200 = vpop.f32.mrf.mxu0
        %v3201 = vadd.f32 0.0, %v3200
        %v3202 = vpop.f32.mrf.mxu0
        %v3203 = vpop.f32.mrf.mxu0
        %v3204 = vadd.f32 0.0, %v3203
        %v3205 = vpop.f32.mrf.mxu0
        %3206 = vmatprep.mubr.bf16.mxu0 %v3011
        %3207 = vmatmul.mubr.bf16.gmra.mxu0 %v3010
        %v3208 = vpop.f32.mrf.mxu0
        %v3209 = vadd.f32 0.0, %v3208
        %v3210 = vpop.f32.mrf.mxu0
        %v3211 = vpop.f32.mrf.mxu0
        %v3212 = vadd.f32 0.0, %v3211
        %v3213 = vpop.f32.mrf.mxu0
        %3214 = vmatprep.mubr.bf16.mxu0 %v3013
        %3215 = vmatmul.mubr.bf16.gmra.mxu0 %v3012
        %v3216 = vpop.f32.mrf.mxu0
        %v3217 = vadd.f32 0.0, %v3216
        %v3218 = vpop.f32.mrf.mxu0
        %v3219 = vpop.f32.mrf.mxu0
        %v3220 = vadd.f32 0.0, %v3219
        %v3221 = vpop.f32.mrf.mxu0
        %3222 = vmatprep.mubr.bf16.mxu0 %v3015
        %3223 = vmatmul.mubr.bf16.gmra.mxu0 %v3014
        %v3224 = vpop.f32.mrf.mxu0
        %v3225 = vadd.f32 0.0, %v3224
        %v3226 = vpop.f32.mrf.mxu0
        %v3227 = vpop.f32.mrf.mxu0
        %v3228 = vadd.f32 0.0, %v3227
        %v3229 = vpop.f32.mrf.mxu0
        %3230 = vmatprep.mubr.bf16.mxu0 %v3017
        %3231 = vmatmul.mubr.bf16.gmra.mxu0 %v3016
        %v3232 = vpop.f32.mrf.mxu0
        %v3233 = vadd.f32 0.0, %v3232
        %v3234 = vpop.f32.mrf.mxu0
        %v3235 = vpop.f32.mrf.mxu0
        %v3236 = vadd.f32 0.0, %v3235
        %v3237 = vpop.f32.mrf.mxu0
        %3238 = vmatprep.mubr.bf16.mxu0 %v3019
        %3239 = vmatmul.mubr.bf16.gmra.mxu0 %v3018
        %v3240 = vpop.f32.mrf.mxu0
        %v3241 = vadd.f32 0.0, %v3240
        %v3242 = vpop.f32.mrf.mxu0
        %v3243 = vpop.f32.mrf.mxu0
        %v3244 = vadd.f32 0.0, %v3243
        %v3245 = vpop.f32.mrf.mxu0
        %3246 = vmatprep.mubr.bf16.mxu0 %v3021
        %3247 = vmatmul.mubr.bf16.gmra.mxu0 %v3020
        %v3248 = vpop.f32.mrf.mxu0
        %v3249 = vadd.f32 0.0, %v3248
        %v3250 = vpop.f32.mrf.mxu0
        %v3251 = vpop.f32.mrf.mxu0
        %v3252 = vadd.f32 0.0, %v3251
        %v3253 = vpop.f32.mrf.mxu0
        %3254 = vmatprep.mubr.bf16.mxu0 %v3023
        %3255 = vmatmul.mubr.bf16.gmra.mxu0 %v3022
        %v3256 = vpop.f32.mrf.mxu0
        %v3257 = vadd.f32 0.0, %v3256
        %v3258 = vpop.f32.mrf.mxu0
        %v3259 = vpop.f32.mrf.mxu0
        %v3260 = vadd.f32 0.0, %v3259
        %v3261 = vpop.f32.mrf.mxu0
        %3262 = vmatprep.mubr.bf16.mxu0 %v3025
        %3263 = vmatmul.mubr.bf16.gmra.mxu0 %v3024
        %v3264 = vpop.f32.mrf.mxu0
        %v3265 = vadd.f32 0.0, %v3264
        %v3266 = vpop.f32.mrf.mxu0
        %v3267 = vpop.f32.mrf.mxu0
        %v3268 = vadd.f32 0.0, %v3267
        %v3269 = vpop.f32.mrf.mxu0
        %3270 = vmatprep.mubr.bf16.mxu0 %v3027
        %3271 = vmatmul.mubr.bf16.gmra.mxu0 %v3026
        %v3272 = vpop.f32.mrf.mxu0
        %v3273 = vadd.f32 0.0, %v3272
        %v3274 = vpop.f32.mrf.mxu0
        %v3275 = vpop.f32.mrf.mxu0
        %v3276 = vadd.f32 0.0, %v3275
        %v3277 = vpop.f32.mrf.mxu0
        %3278 = vmatprep.mubr.bf16.mxu0 %v3029
        %3279 = vmatmul.mubr.bf16.gmra.mxu0 %v3028
        %v3280 = vpop.f32.mrf.mxu0
        %v3281 = vadd.f32 0.0, %v3280
        %v3282 = vpop.f32.mrf.mxu0
        %v3283 = vpop.f32.mrf.mxu0
        %v3284 = vadd.f32 0.0, %v3283
        %v3285 = vpop.f32.mrf.mxu0
        %3286 = vmatprep.mubr.bf16.mxu0 %v3031
        %3287 = vmatmul.mubr.bf16.gmra.mxu0 %v3030
        %v3288 = vpop.f32.mrf.mxu0
        %v3289 = vadd.f32 0.0, %v3288
        %v3290 = vpop.f32.mrf.mxu0
        %v3291 = vpop.f32.mrf.mxu0
        %v3292 = vadd.f32 0.0, %v3291
        %v3293 = vpop.f32.mrf.mxu0
        %3294 = vmatprep.mubr.bf16.mxu0 %v3033
        %3295 = vmatmul.mubr.bf16.gmra.mxu0 %v3032
        %v3296 = vpop.f32.mrf.mxu0
        %v3297 = vadd.f32 0.0, %v3296
        %v3298 = vpop.f32.mrf.mxu0
        %v3299 = vpop.f32.mrf.mxu0
        %v3300 = vadd.f32 0.0, %v3299
        %v3301 = vpop.f32.mrf.mxu0
        %3302 = vdwg.mxu0
        %v3303 = vadd.f32 %v2751, %v3193
        %v3304 = vadd.f32 %v2754, %v3196
        %v3305 = vadd.f32 %v2759, %v3201
        %v3306 = vadd.f32 %v2762, %v3204
        %v3307 = vadd.f32 %v2767, %v3209
        %v3308 = vadd.f32 %v2770, %v3212
        %v3309 = vadd.f32 %v2775, %v3217
        %v3310 = vadd.f32 %v2778, %v3220
        %v3311 = vadd.f32 %v2783, %v3225
        %v3312 = vadd.f32 %v2786, %v3228
        %v3313 = vadd.f32 %v2791, %v3233
        %v3314 = vadd.f32 %v2794, %v3236
        %v3315 = vadd.f32 %v2799, %v3241
        %v3316 = vadd.f32 %v2802, %v3244
        %v3317 = vadd.f32 %v2807, %v3249
        %v3318 = vadd.f32 %v2810, %v3252
        %v3319 = vadd.f32 %v2815, %v3257
        %v3320 = vadd.f32 %v2818, %v3260
        %v3321 = vadd.f32 %v2823, %v3265
        %v3322 = vadd.f32 %v2826, %v3268
        %v3323 = vadd.f32 %v2831, %v3273
        %v3324 = vadd.f32 %v2834, %v3276
        %v3325 = vadd.f32 %v2839, %v3281
        %v3326 = vadd.f32 %v2842, %v3284
        %v3327 = vadd.f32 %v2847, %v3289
        %v3328 = vadd.f32 %v2850, %v3292
        %v3329 = vadd.f32 %v2855, %v3297
        %v3330 = vadd.f32 %v2858, %v3300
        %v3331 = vld [vmem:[#allocation2 + $0x10] sm:$0xff]
        %v3332 = vld [vmem:[#allocation2 + $0x18] sm:$0xff]
        %v3333 = vld [vmem:[#allocation2 + $0x20] sm:$0xff]
        %v3334 = vld [vmem:[#allocation2 + $0x28] sm:$0xff]
        %v3335 = vld [vmem:[#allocation2 + $0x30] sm:$0xff]
        %v3336 = vld [vmem:[#allocation2 + $0x38] sm:$0xff]
        %v3337 = vld [vmem:[#allocation2 + $0x40] sm:$0xff]
        %v3338 = vld [vmem:[#allocation2 + $0x48] sm:$0xff]
        %v3339 = vld [vmem:[#allocation2 + $0x50] sm:$0xff]
        %v3340 = vld [vmem:[#allocation2 + $0x58] sm:$0xff]
        %v3341 = vld [vmem:[#allocation2 + $0x60] sm:$0xff]
        %v3342 = vld [vmem:[#allocation2 + $0x68] sm:$0xff]
        %v3343 = vld [vmem:[#allocation2 + $0x70] sm:$0xff]
        %v3344 = vld [vmem:[#allocation2 + $0x78] sm:$0xff]
        %v3345 = vld [vmem:[#allocation2 + $0x80] sm:$0xff]
        %v3346 = vld [vmem:[#allocation2 + $0x88] sm:$0xff]
        %v3347 = vld [vmem:[#allocation2 + $0x90] sm:$0xff]
        %v3348 = vld [vmem:[#allocation2 + $0x98] sm:$0xff]
        %v3349 = vld [vmem:[#allocation2 + $0xa0] sm:$0xff]
        %v3350 = vld [vmem:[#allocation2 + $0xa8] sm:$0xff]
        %v3351 = vld [vmem:[#allocation2 + $0xb0] sm:$0xff]
        %v3352 = vld [vmem:[#allocation2 + $0xb8] sm:$0xff]
        %v3353 = vld [vmem:[#allocation2 + $0xc0] sm:$0xff]
        %v3354 = vld [vmem:[#allocation2 + $0xc8] sm:$0xff]
        %v3355 = vld [vmem:[#allocation2 + $0xd0] sm:$0xff]
        %v3356 = vld [vmem:[#allocation2 + $0xd8] sm:$0xff]
        %v3357 = vld [vmem:[#allocation2 + $0xe0] sm:$0xff]
        %v3358 = vld [vmem:[#allocation2 + $0xe8] sm:$0xff]
        %s3359 = scalar_lea.vmem [#allocation13], 768
        %v3360 = vld [vmem:[%s3359] sm:$0xf]
        %v3361 = vld [vmem:[%s3359 + $0x8] sm:$0xf]
        %v3362 = vld [vmem:[%s3359 + $0x10] sm:$0xf]
        %v3363 = vld [vmem:[%s3359 + $0x18] sm:$0xf]
        %v3364 = vld [vmem:[%s3359 + $0x20] sm:$0xf]
        %v3365 = vld [vmem:[%s3359 + $0x28] sm:$0xf]
        %v3366 = vld [vmem:[%s3359 + $0x30] sm:$0xf]
        %v3367 = vld [vmem:[%s3359 + $0x38] sm:$0xf]
        %v3368 = vld [vmem:[%s3359 + $0x40] sm:$0xf]
        %v3369 = vld [vmem:[%s3359 + $0x48] sm:$0xf]
        %v3370 = vld [vmem:[%s3359 + $0x50] sm:$0xf]
        %v3371 = vld [vmem:[%s3359 + $0x58] sm:$0xf]
        %v3372 = vld [vmem:[%s3359 + $0x60] sm:$0xf]
        %v3373 = vld [vmem:[%s3359 + $0x68] sm:$0xf]
        %v3374 = vld [vmem:[%s3359 + $0x70] sm:$0xf]
        %v3375 = vld [vmem:[%s3359 + $0x78] sm:$0xf]
        %v3376 = vld [vmem:[%s3359 + $0x80] sm:$0xf]
        %v3377 = vld [vmem:[%s3359 + $0x88] sm:$0xf]
        %v3378 = vld [vmem:[%s3359 + $0x90] sm:$0xf]
        %v3379 = vld [vmem:[%s3359 + $0x98] sm:$0xf]
        %v3380 = vld [vmem:[%s3359 + $0xa0] sm:$0xf]
        %v3381 = vld [vmem:[%s3359 + $0xa8] sm:$0xf]
        %v3382 = vld [vmem:[%s3359 + $0xb0] sm:$0xf]
        %v3383 = vld [vmem:[%s3359 + $0xb8] sm:$0xf]
        %v3384 = vld [vmem:[%s3359 + $0xc0] sm:$0xf]
        %v3385 = vld [vmem:[%s3359 + $0xc8] sm:$0xf]
        %v3386 = vld [vmem:[%s3359 + $0xd0] sm:$0xf]
        %v3387 = vld [vmem:[%s3359 + $0xd8] sm:$0xf]
        %v3388 = vld [vmem:[%s3359 + $0xe0] sm:$0xf]
        %v3389 = vld [vmem:[%s3359 + $0xe8] sm:$0xf]
        %v3390 = vld [vmem:[%s3359 + $0xf0] sm:$0xf]
        %v3391 = vld [vmem:[%s3359 + $0xf8] sm:$0xf]
        %v3420 = vunpack.c.l.b16 %v3331
        %v3421 = vunpack.c.h.b16 %v3331
        %v3422 = vunpack.c.l.b16 %v3332
        %v3423 = vunpack.c.h.b16 %v3332
        %v3424 = vunpack.c.l.b16 %v3333
        %v3425 = vunpack.c.h.b16 %v3333
        %v3426 = vunpack.c.l.b16 %v3334
        %v3427 = vunpack.c.h.b16 %v3334
        %v3428 = vunpack.c.l.b16 %v3335
        %v3429 = vunpack.c.h.b16 %v3335
        %v3430 = vunpack.c.l.b16 %v3336
        %v3431 = vunpack.c.h.b16 %v3336
        %v3432 = vunpack.c.l.b16 %v3337
        %v3433 = vunpack.c.h.b16 %v3337
        %v3434 = vunpack.c.l.b16 %v3338
        %v3435 = vunpack.c.h.b16 %v3338
        %v3436 = vunpack.c.l.b16 %v3339
        %v3437 = vunpack.c.h.b16 %v3339
        %v3438 = vunpack.c.l.b16 %v3340
        %v3439 = vunpack.c.h.b16 %v3340
        %v3440 = vunpack.c.l.b16 %v3341
        %v3441 = vunpack.c.h.b16 %v3341
        %v3442 = vunpack.c.l.b16 %v3342
        %v3443 = vunpack.c.h.b16 %v3342
        %v3444 = vunpack.c.l.b16 %v3343
        %v3445 = vunpack.c.h.b16 %v3343
        %v3446 = vunpack.c.l.b16 %v3344
        %v3447 = vunpack.c.h.b16 %v3344
        %v3448 = vunpack.c.l.b16 %v3345
        %v3449 = vunpack.c.h.b16 %v3345
        %v3450 = vunpack.c.l.b16 %v3346
        %v3451 = vunpack.c.h.b16 %v3346
        %v3452 = vunpack.c.l.b16 %v3347
        %v3453 = vunpack.c.h.b16 %v3347
        %v3454 = vunpack.c.l.b16 %v3348
        %v3455 = vunpack.c.h.b16 %v3348
        %v3456 = vunpack.c.l.b16 %v3349
        %v3457 = vunpack.c.h.b16 %v3349
        %v3458 = vunpack.c.l.b16 %v3350
        %v3459 = vunpack.c.h.b16 %v3350
        %v3460 = vunpack.c.l.b16 %v3351
        %v3461 = vunpack.c.h.b16 %v3351
        %v3462 = vunpack.c.l.b16 %v3352
        %v3463 = vunpack.c.h.b16 %v3352
        %v3464 = vunpack.c.l.b16 %v3353
        %v3465 = vunpack.c.h.b16 %v3353
        %v3466 = vunpack.c.l.b16 %v3354
        %v3467 = vunpack.c.h.b16 %v3354
        %v3468 = vunpack.c.l.b16 %v3355
        %v3469 = vunpack.c.h.b16 %v3355
        %v3470 = vunpack.c.l.b16 %v3356
        %v3471 = vunpack.c.h.b16 %v3356
        %v3472 = vunpack.c.l.b16 %v3357
        %v3473 = vunpack.c.h.b16 %v3357
        %v3474 = vunpack.c.l.b16 %v3358
        %v3475 = vunpack.c.h.b16 %v3358
        %v3476 = vpack.c.b16 %v3422, %v3420
        %v3477 = vpack.c.b16 %v3423, %v3421
        %v3478 = vpack.c.b16 %v3426, %v3424
        %v3479 = vpack.c.b16 %v3427, %v3425
        %v3480 = vpack.c.b16 %v3430, %v3428
        %v3481 = vpack.c.b16 %v3431, %v3429
        %v3482 = vpack.c.b16 %v3434, %v3432
        %v3483 = vpack.c.b16 %v3435, %v3433
        %v3484 = vpack.c.b16 %v3438, %v3436
        %v3485 = vpack.c.b16 %v3439, %v3437
        %v3486 = vpack.c.b16 %v3442, %v3440
        %v3487 = vpack.c.b16 %v3443, %v3441
        %v3488 = vpack.c.b16 %v3446, %v3444
        %v3489 = vpack.c.b16 %v3447, %v3445
        %v3490 = vpack.c.b16 %v3450, %v3448
        %v3491 = vpack.c.b16 %v3451, %v3449
        %v3492 = vpack.c.b16 %v3454, %v3452
        %v3493 = vpack.c.b16 %v3455, %v3453
        %v3494 = vpack.c.b16 %v3458, %v3456
        %v3495 = vpack.c.b16 %v3459, %v3457
        %v3496 = vpack.c.b16 %v3462, %v3460
        %v3497 = vpack.c.b16 %v3463, %v3461
        %v3498 = vpack.c.b16 %v3466, %v3464
        %v3499 = vpack.c.b16 %v3467, %v3465
        %v3500 = vpack.c.b16 %v3470, %v3468
        %v3501 = vpack.c.b16 %v3471, %v3469
        %v3502 = vpack.c.b16 %v3474, %v3472
        %v3503 = vpack.c.b16 %v3475, %v3473
        %v3564 = vunpack.c.l.b16 %v3360
        %v3565 = vunpack.c.l.b16 %v3361
        %v3566 = vunpack.c.l.b16 %v3362
        %v3567 = vunpack.c.l.b16 %v3363
        %v3568 = vunpack.c.l.b16 %v3364
        %v3569 = vunpack.c.l.b16 %v3365
        %v3570 = vunpack.c.l.b16 %v3366
        %v3571 = vunpack.c.l.b16 %v3367
        %v3572 = vunpack.c.l.b16 %v3368
        %v3573 = vunpack.c.l.b16 %v3369
        %v3574 = vunpack.c.l.b16 %v3370
        %v3575 = vunpack.c.l.b16 %v3371
        %v3576 = vunpack.c.l.b16 %v3372
        %v3577 = vunpack.c.l.b16 %v3373
        %v3578 = vunpack.c.l.b16 %v3374
        %v3579 = vunpack.c.l.b16 %v3375
        %v3580 = vunpack.c.l.b16 %v3376
        %v3581 = vunpack.c.l.b16 %v3377
        %v3582 = vunpack.c.l.b16 %v3378
        %v3583 = vunpack.c.l.b16 %v3379
        %v3584 = vunpack.c.l.b16 %v3380
        %v3585 = vunpack.c.l.b16 %v3381
        %v3586 = vunpack.c.l.b16 %v3382
        %v3587 = vunpack.c.l.b16 %v3383
        %v3588 = vunpack.c.l.b16 %v3384
        %v3589 = vunpack.c.l.b16 %v3385
        %v3590 = vunpack.c.l.b16 %v3386
        %v3591 = vunpack.c.l.b16 %v3387
        %v3592 = vunpack.c.l.b16 %v3388
        %v3593 = vunpack.c.l.b16 %v3389
        %v3594 = vunpack.c.l.b16 %v3390
        %v3595 = vunpack.c.l.b16 %v3391
        %v3596 = vpack.c.b16 %v3565, %v3564
        %v3597 = vpack.c.b16 %v3567, %v3566
        %v3598 = vpack.c.b16 %v3569, %v3568
        %v3599 = vpack.c.b16 %v3571, %v3570
        %v3600 = vpack.c.b16 %v3573, %v3572
        %v3601 = vpack.c.b16 %v3575, %v3574
        %v3602 = vpack.c.b16 %v3577, %v3576
        %v3603 = vpack.c.b16 %v3579, %v3578
        %v3604 = vpack.c.b16 %v3581, %v3580
        %v3605 = vpack.c.b16 %v3583, %v3582
        %v3606 = vpack.c.b16 %v3585, %v3584
        %v3607 = vpack.c.b16 %v3587, %v3586
        %v3608 = vpack.c.b16 %v3589, %v3588
        %v3609 = vpack.c.b16 %v3591, %v3590
        %v3610 = vpack.c.b16 %v3593, %v3592
        %v3611 = vpack.c.b16 %v3595, %v3594
        %3628 = vmatprep.subr.bf16.mxu0 0
        %3629 = vmatpush1.bf16.msra.mxu0 %v3603
        %3630 = vmatprep.subr.bf16.mxu0 0
        %3631 = vmatpush1.bf16.msra.mxu0 %v3602
        %3632 = vmatprep.subr.bf16.mxu0 0
        %3633 = vmatpush1.bf16.msra.mxu0 %v3601
        %3634 = vmatprep.subr.bf16.mxu0 0
        %3635 = vmatpush1.bf16.msra.mxu0 %v3600
        %3636 = vmatprep.subr.bf16.mxu0 0
        %3637 = vmatpush1.bf16.msra.mxu0 %v3599
        %3638 = vmatprep.subr.bf16.mxu0 0
        %3639 = vmatpush1.bf16.msra.mxu0 %v3598
        %3640 = vmatprep.subr.bf16.mxu0 0
        %3641 = vmatpush1.bf16.msra.mxu0 %v3597
        %3642 = vmatprep.subr.bf16.mxu0 0
        %3643 = vmatpush1.bf16.msra.mxu0 %v3596
        %3644 = vmatprep.subr.bf16.mxu0 0
        %3645 = vmatpush2.bf16.msra.mxu0 %v3611
        %3646 = vmatprep.subr.bf16.mxu0 0
        %3647 = vmatpush2.bf16.msra.mxu0 %v3610
        %3648 = vmatprep.subr.bf16.mxu0 0
        %3649 = vmatpush2.bf16.msra.mxu0 %v3609
        %3650 = vmatprep.subr.bf16.mxu0 0
        %3651 = vmatpush2.bf16.msra.mxu0 %v3608
        %3652 = vmatprep.subr.bf16.mxu0 0
        %3653 = vmatpush2.bf16.msra.mxu0 %v3607
        %3654 = vmatprep.subr.bf16.mxu0 0
        %3655 = vmatpush2.bf16.msra.mxu0 %v3606
        %3656 = vmatprep.subr.bf16.mxu0 0
        %3657 = vmatpush2.bf16.msra.mxu0 %v3605
        %3658 = vmatprep.subr.bf16.mxu0 0
        %3659 = vmatpush2.bf16.msra.mxu0 %v3604
        %3660 = vmatprep.mubr.bf16.mxu0 %v3477
        %3661 = vmatmul.mubr.bf16.gmra.mxu0 %v3476
        %v3662 = vpop.f32.mrf.mxu0
        %v3663 = vadd.f32 0.0, %v3662
        %v3664 = vpop.f32.mrf.mxu0
        %v3665 = vpop.f32.mrf.mxu0
        %v3666 = vadd.f32 0.0, %v3665
        %v3667 = vpop.f32.mrf.mxu0
        %3668 = vmatprep.mubr.bf16.mxu0 %v3479
        %3669 = vmatmul.mubr.bf16.gmra.mxu0 %v3478
        %v3670 = vpop.f32.mrf.mxu0
        %v3671 = vadd.f32 0.0, %v3670
        %v3672 = vpop.f32.mrf.mxu0
        %v3673 = vpop.f32.mrf.mxu0
        %v3674 = vadd.f32 0.0, %v3673
        %v3675 = vpop.f32.mrf.mxu0
        %3676 = vmatprep.mubr.bf16.mxu0 %v3481
        %3677 = vmatmul.mubr.bf16.gmra.mxu0 %v3480
        %v3678 = vpop.f32.mrf.mxu0
        %v3679 = vadd.f32 0.0, %v3678
        %v3680 = vpop.f32.mrf.mxu0
        %v3681 = vpop.f32.mrf.mxu0
        %v3682 = vadd.f32 0.0, %v3681
        %v3683 = vpop.f32.mrf.mxu0
        %3684 = vmatprep.mubr.bf16.mxu0 %v3483
        %3685 = vmatmul.mubr.bf16.gmra.mxu0 %v3482
        %v3686 = vpop.f32.mrf.mxu0
        %v3687 = vadd.f32 0.0, %v3686
        %v3688 = vpop.f32.mrf.mxu0
        %v3689 = vpop.f32.mrf.mxu0
        %v3690 = vadd.f32 0.0, %v3689
        %v3691 = vpop.f32.mrf.mxu0
        %3692 = vmatprep.mubr.bf16.mxu0 %v3485
        %3693 = vmatmul.mubr.bf16.gmra.mxu0 %v3484
        %v3694 = vpop.f32.mrf.mxu0
        %v3695 = vadd.f32 0.0, %v3694
        %v3696 = vpop.f32.mrf.mxu0
        %v3697 = vpop.f32.mrf.mxu0
        %v3698 = vadd.f32 0.0, %v3697
        %v3699 = vpop.f32.mrf.mxu0
        %3700 = vmatprep.mubr.bf16.mxu0 %v3487
        %3701 = vmatmul.mubr.bf16.gmra.mxu0 %v3486
        %v3702 = vpop.f32.mrf.mxu0
        %v3703 = vadd.f32 0.0, %v3702
        %v3704 = vpop.f32.mrf.mxu0
        %v3705 = vpop.f32.mrf.mxu0
        %v3706 = vadd.f32 0.0, %v3705
        %v3707 = vpop.f32.mrf.mxu0
        %3708 = vmatprep.mubr.bf16.mxu0 %v3489
        %3709 = vmatmul.mubr.bf16.gmra.mxu0 %v3488
        %v3710 = vpop.f32.mrf.mxu0
        %v3711 = vadd.f32 0.0, %v3710
        %v3712 = vpop.f32.mrf.mxu0
        %v3713 = vpop.f32.mrf.mxu0
        %v3714 = vadd.f32 0.0, %v3713
        %v3715 = vpop.f32.mrf.mxu0
        %3716 = vmatprep.mubr.bf16.mxu0 %v3491
        %3717 = vmatmul.mubr.bf16.gmra.mxu0 %v3490
        %v3718 = vpop.f32.mrf.mxu0
        %v3719 = vadd.f32 0.0, %v3718
        %v3720 = vpop.f32.mrf.mxu0
        %v3721 = vpop.f32.mrf.mxu0
        %v3722 = vadd.f32 0.0, %v3721
        %v3723 = vpop.f32.mrf.mxu0
        %3724 = vmatprep.mubr.bf16.mxu0 %v3493
        %3725 = vmatmul.mubr.bf16.gmra.mxu0 %v3492
        %v3726 = vpop.f32.mrf.mxu0
        %v3727 = vadd.f32 0.0, %v3726
        %v3728 = vpop.f32.mrf.mxu0
        %v3729 = vpop.f32.mrf.mxu0
        %v3730 = vadd.f32 0.0, %v3729
        %v3731 = vpop.f32.mrf.mxu0
        %3732 = vmatprep.mubr.bf16.mxu0 %v3495
        %3733 = vmatmul.mubr.bf16.gmra.mxu0 %v3494
        %v3734 = vpop.f32.mrf.mxu0
        %v3735 = vadd.f32 0.0, %v3734
        %v3736 = vpop.f32.mrf.mxu0
        %v3737 = vpop.f32.mrf.mxu0
        %v3738 = vadd.f32 0.0, %v3737
        %v3739 = vpop.f32.mrf.mxu0
        %3740 = vmatprep.mubr.bf16.mxu0 %v3497
        %3741 = vmatmul.mubr.bf16.gmra.mxu0 %v3496
        %v3742 = vpop.f32.mrf.mxu0
        %v3743 = vadd.f32 0.0, %v3742
        %v3744 = vpop.f32.mrf.mxu0
        %v3745 = vpop.f32.mrf.mxu0
        %v3746 = vadd.f32 0.0, %v3745
        %v3747 = vpop.f32.mrf.mxu0
        %3748 = vmatprep.mubr.bf16.mxu0 %v3499
        %3749 = vmatmul.mubr.bf16.gmra.mxu0 %v3498
        %v3750 = vpop.f32.mrf.mxu0
        %v3751 = vadd.f32 0.0, %v3750
        %v3752 = vpop.f32.mrf.mxu0
        %v3753 = vpop.f32.mrf.mxu0
        %v3754 = vadd.f32 0.0, %v3753
        %v3755 = vpop.f32.mrf.mxu0
        %3756 = vmatprep.mubr.bf16.mxu0 %v3501
        %3757 = vmatmul.mubr.bf16.gmra.mxu0 %v3500
        %v3758 = vpop.f32.mrf.mxu0
        %v3759 = vadd.f32 0.0, %v3758
        %v3760 = vpop.f32.mrf.mxu0
        %v3761 = vpop.f32.mrf.mxu0
        %v3762 = vadd.f32 0.0, %v3761
        %v3763 = vpop.f32.mrf.mxu0
        %3764 = vmatprep.mubr.bf16.mxu0 %v3503
        %3765 = vmatmul.mubr.bf16.gmra.mxu0 %v3502
        %v3766 = vpop.f32.mrf.mxu0
        %v3767 = vadd.f32 0.0, %v3766
        %v3768 = vpop.f32.mrf.mxu0
        %v3769 = vpop.f32.mrf.mxu0
        %v3770 = vadd.f32 0.0, %v3769
        %v3771 = vpop.f32.mrf.mxu0
        %3772 = vdwg.mxu0
        %v3773 = vadd.f32 %v3303, %v3663
        %v3774 = vadd.f32 %v3304, %v3666
        %v3775 = vadd.f32 %v3305, %v3671
        %v3776 = vadd.f32 %v3306, %v3674
        %v3777 = vadd.f32 %v3307, %v3679
        %v3778 = vadd.f32 %v3308, %v3682
        %v3779 = vadd.f32 %v3309, %v3687
        %v3780 = vadd.f32 %v3310, %v3690
        %v3781 = vadd.f32 %v3311, %v3695
        %v3782 = vadd.f32 %v3312, %v3698
        %v3783 = vadd.f32 %v3313, %v3703
        %v3784 = vadd.f32 %v3314, %v3706
        %v3785 = vadd.f32 %v3315, %v3711
        %v3786 = vadd.f32 %v3316, %v3714
        %v3787 = vadd.f32 %v3317, %v3719
        %v3788 = vadd.f32 %v3318, %v3722
        %v3789 = vadd.f32 %v3319, %v3727
        %v3790 = vadd.f32 %v3320, %v3730
        %v3791 = vadd.f32 %v3321, %v3735
        %v3792 = vadd.f32 %v3322, %v3738
        %v3793 = vadd.f32 %v3323, %v3743
        %v3794 = vadd.f32 %v3324, %v3746
        %v3795 = vadd.f32 %v3325, %v3751
        %v3796 = vadd.f32 %v3326, %v3754
        %v3797 = vadd.f32 %v3327, %v3759
        %v3798 = vadd.f32 %v3328, %v3762
        %v3799 = vadd.f32 %v3329, %v3767
        %v3800 = vadd.f32 %v3330, %v3770
        %v3801 = vld [vmem:[#allocation3 + $0x10] sm:$0xff]
        %v3802 = vld [vmem:[#allocation3 + $0x18] sm:$0xff]
        %v3803 = vld [vmem:[#allocation3 + $0x20] sm:$0xff]
        %v3804 = vld [vmem:[#allocation3 + $0x28] sm:$0xff]
        %v3805 = vld [vmem:[#allocation3 + $0x30] sm:$0xff]
        %v3806 = vld [vmem:[#allocation3 + $0x38] sm:$0xff]
        %v3807 = vld [vmem:[#allocation3 + $0x40] sm:$0xff]
        %v3808 = vld [vmem:[#allocation3 + $0x48] sm:$0xff]
        %v3809 = vld [vmem:[#allocation3 + $0x50] sm:$0xff]
        %v3810 = vld [vmem:[#allocation3 + $0x58] sm:$0xff]
        %v3811 = vld [vmem:[#allocation3 + $0x60] sm:$0xff]
        %v3812 = vld [vmem:[#allocation3 + $0x68] sm:$0xff]
        %v3813 = vld [vmem:[#allocation3 + $0x70] sm:$0xff]
        %v3814 = vld [vmem:[#allocation3 + $0x78] sm:$0xff]
        %v3815 = vld [vmem:[#allocation3 + $0x80] sm:$0xff]
        %v3816 = vld [vmem:[#allocation3 + $0x88] sm:$0xff]
        %v3817 = vld [vmem:[#allocation3 + $0x90] sm:$0xff]
        %v3818 = vld [vmem:[#allocation3 + $0x98] sm:$0xff]
        %v3819 = vld [vmem:[#allocation3 + $0xa0] sm:$0xff]
        %v3820 = vld [vmem:[#allocation3 + $0xa8] sm:$0xff]
        %v3821 = vld [vmem:[#allocation3 + $0xb0] sm:$0xff]
        %v3822 = vld [vmem:[#allocation3 + $0xb8] sm:$0xff]
        %v3823 = vld [vmem:[#allocation3 + $0xc0] sm:$0xff]
        %v3824 = vld [vmem:[#allocation3 + $0xc8] sm:$0xff]
        %v3825 = vld [vmem:[#allocation3 + $0xd0] sm:$0xff]
        %v3826 = vld [vmem:[#allocation3 + $0xd8] sm:$0xff]
        %v3827 = vld [vmem:[#allocation3 + $0xe0] sm:$0xff]
        %v3828 = vld [vmem:[#allocation3 + $0xe8] sm:$0xff]
        %s3829 = scalar_lea.vmem [#allocation13], 1024
        %v3830 = vld [vmem:[%s3829] sm:$0xf]
        %v3831 = vld [vmem:[%s3829 + $0x8] sm:$0xf]
        %v3832 = vld [vmem:[%s3829 + $0x10] sm:$0xf]
        %v3833 = vld [vmem:[%s3829 + $0x18] sm:$0xf]
        %v3834 = vld [vmem:[%s3829 + $0x20] sm:$0xf]
        %v3835 = vld [vmem:[%s3829 + $0x28] sm:$0xf]
        %v3836 = vld [vmem:[%s3829 + $0x30] sm:$0xf]
        %v3837 = vld [vmem:[%s3829 + $0x38] sm:$0xf]
        %v3838 = vld [vmem:[%s3829 + $0x40] sm:$0xf]
        %v3839 = vld [vmem:[%s3829 + $0x48] sm:$0xf]
        %v3840 = vld [vmem:[%s3829 + $0x50] sm:$0xf]
        %v3841 = vld [vmem:[%s3829 + $0x58] sm:$0xf]
        %v3842 = vld [vmem:[%s3829 + $0x60] sm:$0xf]
        %v3843 = vld [vmem:[%s3829 + $0x68] sm:$0xf]
        %v3844 = vld [vmem:[%s3829 + $0x70] sm:$0xf]
        %v3845 = vld [vmem:[%s3829 + $0x78] sm:$0xf]
        %v3846 = vld [vmem:[%s3829 + $0x80] sm:$0xf]
        %v3847 = vld [vmem:[%s3829 + $0x88] sm:$0xf]
        %v3848 = vld [vmem:[%s3829 + $0x90] sm:$0xf]
        %v3849 = vld [vmem:[%s3829 + $0x98] sm:$0xf]
        %v3850 = vld [vmem:[%s3829 + $0xa0] sm:$0xf]
        %v3851 = vld [vmem:[%s3829 + $0xa8] sm:$0xf]
        %v3852 = vld [vmem:[%s3829 + $0xb0] sm:$0xf]
        %v3853 = vld [vmem:[%s3829 + $0xb8] sm:$0xf]
        %v3854 = vld [vmem:[%s3829 + $0xc0] sm:$0xf]
        %v3855 = vld [vmem:[%s3829 + $0xc8] sm:$0xf]
        %v3856 = vld [vmem:[%s3829 + $0xd0] sm:$0xf]
        %v3857 = vld [vmem:[%s3829 + $0xd8] sm:$0xf]
        %v3858 = vld [vmem:[%s3829 + $0xe0] sm:$0xf]
        %v3859 = vld [vmem:[%s3829 + $0xe8] sm:$0xf]
        %v3860 = vld [vmem:[%s3829 + $0xf0] sm:$0xf]
        %v3861 = vld [vmem:[%s3829 + $0xf8] sm:$0xf]
        %v3890 = vunpack.c.l.b16 %v3801
        %v3891 = vunpack.c.h.b16 %v3801
        %v3892 = vunpack.c.l.b16 %v3802
        %v3893 = vunpack.c.h.b16 %v3802
        %v3894 = vunpack.c.l.b16 %v3803
        %v3895 = vunpack.c.h.b16 %v3803
        %v3896 = vunpack.c.l.b16 %v3804
        %v3897 = vunpack.c.h.b16 %v3804
        %v3898 = vunpack.c.l.b16 %v3805
        %v3899 = vunpack.c.h.b16 %v3805
        %v3900 = vunpack.c.l.b16 %v3806
        %v3901 = vunpack.c.h.b16 %v3806
        %v3902 = vunpack.c.l.b16 %v3807
        %v3903 = vunpack.c.h.b16 %v3807
        %v3904 = vunpack.c.l.b16 %v3808
        %v3905 = vunpack.c.h.b16 %v3808
        %v3906 = vunpack.c.l.b16 %v3809
        %v3907 = vunpack.c.h.b16 %v3809
        %v3908 = vunpack.c.l.b16 %v3810
        %v3909 = vunpack.c.h.b16 %v3810
        %v3910 = vunpack.c.l.b16 %v3811
        %v3911 = vunpack.c.h.b16 %v3811
        %v3912 = vunpack.c.l.b16 %v3812
        %v3913 = vunpack.c.h.b16 %v3812
        %v3914 = vunpack.c.l.b16 %v3813
        %v3915 = vunpack.c.h.b16 %v3813
        %v3916 = vunpack.c.l.b16 %v3814
        %v3917 = vunpack.c.h.b16 %v3814
        %v3918 = vunpack.c.l.b16 %v3815
        %v3919 = vunpack.c.h.b16 %v3815
        %v3920 = vunpack.c.l.b16 %v3816
        %v3921 = vunpack.c.h.b16 %v3816
        %v3922 = vunpack.c.l.b16 %v3817
        %v3923 = vunpack.c.h.b16 %v3817
        %v3924 = vunpack.c.l.b16 %v3818
        %v3925 = vunpack.c.h.b16 %v3818
        %v3926 = vunpack.c.l.b16 %v3819
        %v3927 = vunpack.c.h.b16 %v3819
        %v3928 = vunpack.c.l.b16 %v3820
        %v3929 = vunpack.c.h.b16 %v3820
        %v3930 = vunpack.c.l.b16 %v3821
        %v3931 = vunpack.c.h.b16 %v3821
        %v3932 = vunpack.c.l.b16 %v3822
        %v3933 = vunpack.c.h.b16 %v3822
        %v3934 = vunpack.c.l.b16 %v3823
        %v3935 = vunpack.c.h.b16 %v3823
        %v3936 = vunpack.c.l.b16 %v3824
        %v3937 = vunpack.c.h.b16 %v3824
        %v3938 = vunpack.c.l.b16 %v3825
        %v3939 = vunpack.c.h.b16 %v3825
        %v3940 = vunpack.c.l.b16 %v3826
        %v3941 = vunpack.c.h.b16 %v3826
        %v3942 = vunpack.c.l.b16 %v3827
        %v3943 = vunpack.c.h.b16 %v3827
        %v3944 = vunpack.c.l.b16 %v3828
        %v3945 = vunpack.c.h.b16 %v3828
        %v3946 = vpack.c.b16 %v3892, %v3890
        %v3947 = vpack.c.b16 %v3893, %v3891
        %v3948 = vpack.c.b16 %v3896, %v3894
        %v3949 = vpack.c.b16 %v3897, %v3895
        %v3950 = vpack.c.b16 %v3900, %v3898
        %v3951 = vpack.c.b16 %v3901, %v3899
        %v3952 = vpack.c.b16 %v3904, %v3902
        %v3953 = vpack.c.b16 %v3905, %v3903
        %v3954 = vpack.c.b16 %v3908, %v3906
        %v3955 = vpack.c.b16 %v3909, %v3907
        %v3956 = vpack.c.b16 %v3912, %v3910
        %v3957 = vpack.c.b16 %v3913, %v3911
        %v3958 = vpack.c.b16 %v3916, %v3914
        %v3959 = vpack.c.b16 %v3917, %v3915
        %v3960 = vpack.c.b16 %v3920, %v3918
        %v3961 = vpack.c.b16 %v3921, %v3919
        %v3962 = vpack.c.b16 %v3924, %v3922
        %v3963 = vpack.c.b16 %v3925, %v3923
        %v3964 = vpack.c.b16 %v3928, %v3926
        %v3965 = vpack.c.b16 %v3929, %v3927
        %v3966 = vpack.c.b16 %v3932, %v3930
        %v3967 = vpack.c.b16 %v3933, %v3931
        %v3968 = vpack.c.b16 %v3936, %v3934
        %v3969 = vpack.c.b16 %v3937, %v3935
        %v3970 = vpack.c.b16 %v3940, %v3938
        %v3971 = vpack.c.b16 %v3941, %v3939
        %v3972 = vpack.c.b16 %v3944, %v3942
        %v3973 = vpack.c.b16 %v3945, %v3943
        %v4034 = vunpack.c.l.b16 %v3830
        %v4035 = vunpack.c.l.b16 %v3831
        %v4036 = vunpack.c.l.b16 %v3832
        %v4037 = vunpack.c.l.b16 %v3833
        %v4038 = vunpack.c.l.b16 %v3834
        %v4039 = vunpack.c.l.b16 %v3835
        %v4040 = vunpack.c.l.b16 %v3836
        %v4041 = vunpack.c.l.b16 %v3837
        %v4042 = vunpack.c.l.b16 %v3838
        %v4043 = vunpack.c.l.b16 %v3839
        %v4044 = vunpack.c.l.b16 %v3840
        %v4045 = vunpack.c.l.b16 %v3841
        %v4046 = vunpack.c.l.b16 %v3842
        %v4047 = vunpack.c.l.b16 %v3843
        %v4048 = vunpack.c.l.b16 %v3844
        %v4049 = vunpack.c.l.b16 %v3845
        %v4050 = vunpack.c.l.b16 %v3846
        %v4051 = vunpack.c.l.b16 %v3847
        %v4052 = vunpack.c.l.b16 %v3848
        %v4053 = vunpack.c.l.b16 %v3849
        %v4054 = vunpack.c.l.b16 %v3850
        %v4055 = vunpack.c.l.b16 %v3851
        %v4056 = vunpack.c.l.b16 %v3852
        %v4057 = vunpack.c.l.b16 %v3853
        %v4058 = vunpack.c.l.b16 %v3854
        %v4059 = vunpack.c.l.b16 %v3855
        %v4060 = vunpack.c.l.b16 %v3856
        %v4061 = vunpack.c.l.b16 %v3857
        %v4062 = vunpack.c.l.b16 %v3858
        %v4063 = vunpack.c.l.b16 %v3859
        %v4064 = vunpack.c.l.b16 %v3860
        %v4065 = vunpack.c.l.b16 %v3861
        %v4066 = vpack.c.b16 %v4035, %v4034
        %v4067 = vpack.c.b16 %v4037, %v4036
        %v4068 = vpack.c.b16 %v4039, %v4038
        %v4069 = vpack.c.b16 %v4041, %v4040
        %v4070 = vpack.c.b16 %v4043, %v4042
        %v4071 = vpack.c.b16 %v4045, %v4044
        %v4072 = vpack.c.b16 %v4047, %v4046
        %v4073 = vpack.c.b16 %v4049, %v4048
        %v4074 = vpack.c.b16 %v4051, %v4050
        %v4075 = vpack.c.b16 %v4053, %v4052
        %v4076 = vpack.c.b16 %v4055, %v4054
        %v4077 = vpack.c.b16 %v4057, %v4056
        %v4078 = vpack.c.b16 %v4059, %v4058
        %v4079 = vpack.c.b16 %v4061, %v4060
        %v4080 = vpack.c.b16 %v4063, %v4062
        %v4081 = vpack.c.b16 %v4065, %v4064
        %4098 = vmatprep.subr.bf16.mxu0 0
        %4099 = vmatpush1.bf16.msra.mxu0 %v4073
        %4100 = vmatprep.subr.bf16.mxu0 0
        %4101 = vmatpush1.bf16.msra.mxu0 %v4072
        %4102 = vmatprep.subr.bf16.mxu0 0
        %4103 = vmatpush1.bf16.msra.mxu0 %v4071
        %4104 = vmatprep.subr.bf16.mxu0 0
        %4105 = vmatpush1.bf16.msra.mxu0 %v4070
        %4106 = vmatprep.subr.bf16.mxu0 0
        %4107 = vmatpush1.bf16.msra.mxu0 %v4069
        %4108 = vmatprep.subr.bf16.mxu0 0
        %4109 = vmatpush1.bf16.msra.mxu0 %v4068
        %4110 = vmatprep.subr.bf16.mxu0 0
        %4111 = vmatpush1.bf16.msra.mxu0 %v4067
        %4112 = vmatprep.subr.bf16.mxu0 0
        %4113 = vmatpush1.bf16.msra.mxu0 %v4066
        %4114 = vmatprep.subr.bf16.mxu0 0
        %4115 = vmatpush2.bf16.msra.mxu0 %v4081
        %4116 = vmatprep.subr.bf16.mxu0 0
        %4117 = vmatpush2.bf16.msra.mxu0 %v4080
        %4118 = vmatprep.subr.bf16.mxu0 0
        %4119 = vmatpush2.bf16.msra.mxu0 %v4079
        %4120 = vmatprep.subr.bf16.mxu0 0
        %4121 = vmatpush2.bf16.msra.mxu0 %v4078
        %4122 = vmatprep.subr.bf16.mxu0 0
        %4123 = vmatpush2.bf16.msra.mxu0 %v4077
        %4124 = vmatprep.subr.bf16.mxu0 0
        %4125 = vmatpush2.bf16.msra.mxu0 %v4076
        %4126 = vmatprep.subr.bf16.mxu0 0
        %4127 = vmatpush2.bf16.msra.mxu0 %v4075
        %4128 = vmatprep.subr.bf16.mxu0 0
        %4129 = vmatpush2.bf16.msra.mxu0 %v4074
        %4130 = vmatprep.mubr.bf16.mxu0 %v3947
        %4131 = vmatmul.mubr.bf16.gmra.mxu0 %v3946
        %v4132 = vpop.f32.mrf.mxu0
        %v4133 = vadd.f32 0.0, %v4132
        %v4134 = vpop.f32.mrf.mxu0
        %v4135 = vpop.f32.mrf.mxu0
        %v4136 = vadd.f32 0.0, %v4135
        %v4137 = vpop.f32.mrf.mxu0
        %4138 = vmatprep.mubr.bf16.mxu0 %v3949
        %4139 = vmatmul.mubr.bf16.gmra.mxu0 %v3948
        %v4140 = vpop.f32.mrf.mxu0
        %v4141 = vadd.f32 0.0, %v4140
        %v4142 = vpop.f32.mrf.mxu0
        %v4143 = vpop.f32.mrf.mxu0
        %v4144 = vadd.f32 0.0, %v4143
        %v4145 = vpop.f32.mrf.mxu0
        %4146 = vmatprep.mubr.bf16.mxu0 %v3951
        %4147 = vmatmul.mubr.bf16.gmra.mxu0 %v3950
        %v4148 = vpop.f32.mrf.mxu0
        %v4149 = vadd.f32 0.0, %v4148
        %v4150 = vpop.f32.mrf.mxu0
        %v4151 = vpop.f32.mrf.mxu0
        %v4152 = vadd.f32 0.0, %v4151
        %v4153 = vpop.f32.mrf.mxu0
        %4154 = vmatprep.mubr.bf16.mxu0 %v3953
        %4155 = vmatmul.mubr.bf16.gmra.mxu0 %v3952
        %v4156 = vpop.f32.mrf.mxu0
        %v4157 = vadd.f32 0.0, %v4156
        %v4158 = vpop.f32.mrf.mxu0
        %v4159 = vpop.f32.mrf.mxu0
        %v4160 = vadd.f32 0.0, %v4159
        %v4161 = vpop.f32.mrf.mxu0
        %4162 = vmatprep.mubr.bf16.mxu0 %v3955
        %4163 = vmatmul.mubr.bf16.gmra.mxu0 %v3954
        %v4164 = vpop.f32.mrf.mxu0
        %v4165 = vadd.f32 0.0, %v4164
        %v4166 = vpop.f32.mrf.mxu0
        %v4167 = vpop.f32.mrf.mxu0
        %v4168 = vadd.f32 0.0, %v4167
        %v4169 = vpop.f32.mrf.mxu0
        %4170 = vmatprep.mubr.bf16.mxu0 %v3957
        %4171 = vmatmul.mubr.bf16.gmra.mxu0 %v3956
        %v4172 = vpop.f32.mrf.mxu0
        %v4173 = vadd.f32 0.0, %v4172
        %v4174 = vpop.f32.mrf.mxu0
        %v4175 = vpop.f32.mrf.mxu0
        %v4176 = vadd.f32 0.0, %v4175
        %v4177 = vpop.f32.mrf.mxu0
        %4178 = vmatprep.mubr.bf16.mxu0 %v3959
        %4179 = vmatmul.mubr.bf16.gmra.mxu0 %v3958
        %v4180 = vpop.f32.mrf.mxu0
        %v4181 = vadd.f32 0.0, %v4180
        %v4182 = vpop.f32.mrf.mxu0
        %v4183 = vpop.f32.mrf.mxu0
        %v4184 = vadd.f32 0.0, %v4183
        %v4185 = vpop.f32.mrf.mxu0
        %4186 = vmatprep.mubr.bf16.mxu0 %v3961
        %4187 = vmatmul.mubr.bf16.gmra.mxu0 %v3960
        %v4188 = vpop.f32.mrf.mxu0
        %v4189 = vadd.f32 0.0, %v4188
        %v4190 = vpop.f32.mrf.mxu0
        %v4191 = vpop.f32.mrf.mxu0
        %v4192 = vadd.f32 0.0, %v4191
        %v4193 = vpop.f32.mrf.mxu0
        %4194 = vmatprep.mubr.bf16.mxu0 %v3963
        %4195 = vmatmul.mubr.bf16.gmra.mxu0 %v3962
        %v4196 = vpop.f32.mrf.mxu0
        %v4197 = vadd.f32 0.0, %v4196
        %v4198 = vpop.f32.mrf.mxu0
        %v4199 = vpop.f32.mrf.mxu0
        %v4200 = vadd.f32 0.0, %v4199
        %v4201 = vpop.f32.mrf.mxu0
        %4202 = vmatprep.mubr.bf16.mxu0 %v3965
        %4203 = vmatmul.mubr.bf16.gmra.mxu0 %v3964
        %v4204 = vpop.f32.mrf.mxu0
        %v4205 = vadd.f32 0.0, %v4204
        %v4206 = vpop.f32.mrf.mxu0
        %v4207 = vpop.f32.mrf.mxu0
        %v4208 = vadd.f32 0.0, %v4207
        %v4209 = vpop.f32.mrf.mxu0
        %4210 = vmatprep.mubr.bf16.mxu0 %v3967
        %4211 = vmatmul.mubr.bf16.gmra.mxu0 %v3966
        %v4212 = vpop.f32.mrf.mxu0
        %v4213 = vadd.f32 0.0, %v4212
        %v4214 = vpop.f32.mrf.mxu0
        %v4215 = vpop.f32.mrf.mxu0
        %v4216 = vadd.f32 0.0, %v4215
        %v4217 = vpop.f32.mrf.mxu0
        %4218 = vmatprep.mubr.bf16.mxu0 %v3969
        %4219 = vmatmul.mubr.bf16.gmra.mxu0 %v3968
        %v4220 = vpop.f32.mrf.mxu0
        %v4221 = vadd.f32 0.0, %v4220
        %v4222 = vpop.f32.mrf.mxu0
        %v4223 = vpop.f32.mrf.mxu0
        %v4224 = vadd.f32 0.0, %v4223
        %v4225 = vpop.f32.mrf.mxu0
        %4226 = vmatprep.mubr.bf16.mxu0 %v3971
        %4227 = vmatmul.mubr.bf16.gmra.mxu0 %v3970
        %v4228 = vpop.f32.mrf.mxu0
        %v4229 = vadd.f32 0.0, %v4228
        %v4230 = vpop.f32.mrf.mxu0
        %v4231 = vpop.f32.mrf.mxu0
        %v4232 = vadd.f32 0.0, %v4231
        %v4233 = vpop.f32.mrf.mxu0
        %4234 = vmatprep.mubr.bf16.mxu0 %v3973
        %4235 = vmatmul.mubr.bf16.gmra.mxu0 %v3972
        %v4236 = vpop.f32.mrf.mxu0
        %v4237 = vadd.f32 0.0, %v4236
        %v4238 = vpop.f32.mrf.mxu0
        %v4239 = vpop.f32.mrf.mxu0
        %v4240 = vadd.f32 0.0, %v4239
        %v4241 = vpop.f32.mrf.mxu0
        %4242 = vdwg.mxu0
        %v4243 = vadd.f32 %v3773, %v4133
        %v4244 = vadd.f32 %v3774, %v4136
        %v4245 = vadd.f32 %v3775, %v4141
        %v4246 = vadd.f32 %v3776, %v4144
        %v4247 = vadd.f32 %v3777, %v4149
        %v4248 = vadd.f32 %v3778, %v4152
        %v4249 = vadd.f32 %v3779, %v4157
        %v4250 = vadd.f32 %v3780, %v4160
        %v4251 = vadd.f32 %v3781, %v4165
        %v4252 = vadd.f32 %v3782, %v4168
        %v4253 = vadd.f32 %v3783, %v4173
        %v4254 = vadd.f32 %v3784, %v4176
        %v4255 = vadd.f32 %v3785, %v4181
        %v4256 = vadd.f32 %v3786, %v4184
        %v4257 = vadd.f32 %v3787, %v4189
        %v4258 = vadd.f32 %v3788, %v4192
        %v4259 = vadd.f32 %v3789, %v4197
        %v4260 = vadd.f32 %v3790, %v4200
        %v4261 = vadd.f32 %v3791, %v4205
        %v4262 = vadd.f32 %v3792, %v4208
        %v4263 = vadd.f32 %v3793, %v4213
        %v4264 = vadd.f32 %v3794, %v4216
        %v4265 = vadd.f32 %v3795, %v4221
        %v4266 = vadd.f32 %v3796, %v4224
        %v4267 = vadd.f32 %v3797, %v4229
        %v4268 = vadd.f32 %v3798, %v4232
        %v4269 = vadd.f32 %v3799, %v4237
        %v4270 = vadd.f32 %v3800, %v4240
        %v4271 = vld [vmem:[#allocation4 + $0x10] sm:$0xff]
        %v4272 = vld [vmem:[#allocation4 + $0x18] sm:$0xff]
        %v4273 = vld [vmem:[#allocation4 + $0x20] sm:$0xff]
        %v4274 = vld [vmem:[#allocation4 + $0x28] sm:$0xff]
        %v4275 = vld [vmem:[#allocation4 + $0x30] sm:$0xff]
        %v4276 = vld [vmem:[#allocation4 + $0x38] sm:$0xff]
        %v4277 = vld [vmem:[#allocation4 + $0x40] sm:$0xff]
        %v4278 = vld [vmem:[#allocation4 + $0x48] sm:$0xff]
        %v4279 = vld [vmem:[#allocation4 + $0x50] sm:$0xff]
        %v4280 = vld [vmem:[#allocation4 + $0x58] sm:$0xff]
        %v4281 = vld [vmem:[#allocation4 + $0x60] sm:$0xff]
        %v4282 = vld [vmem:[#allocation4 + $0x68] sm:$0xff]
        %v4283 = vld [vmem:[#allocation4 + $0x70] sm:$0xff]
        %v4284 = vld [vmem:[#allocation4 + $0x78] sm:$0xff]
        %v4285 = vld [vmem:[#allocation4 + $0x80] sm:$0xff]
        %v4286 = vld [vmem:[#allocation4 + $0x88] sm:$0xff]
        %v4287 = vld [vmem:[#allocation4 + $0x90] sm:$0xff]
        %v4288 = vld [vmem:[#allocation4 + $0x98] sm:$0xff]
        %v4289 = vld [vmem:[#allocation4 + $0xa0] sm:$0xff]
        %v4290 = vld [vmem:[#allocation4 + $0xa8] sm:$0xff]
        %v4291 = vld [vmem:[#allocation4 + $0xb0] sm:$0xff]
        %v4292 = vld [vmem:[#allocation4 + $0xb8] sm:$0xff]
        %v4293 = vld [vmem:[#allocation4 + $0xc0] sm:$0xff]
        %v4294 = vld [vmem:[#allocation4 + $0xc8] sm:$0xff]
        %v4295 = vld [vmem:[#allocation4 + $0xd0] sm:$0xff]
        %v4296 = vld [vmem:[#allocation4 + $0xd8] sm:$0xff]
        %v4297 = vld [vmem:[#allocation4 + $0xe0] sm:$0xff]
        %v4298 = vld [vmem:[#allocation4 + $0xe8] sm:$0xff]
        %s4299 = scalar_lea.vmem [#allocation13], 1280
        %v4300 = vld [vmem:[%s4299] sm:$0xf]
        %v4301 = vld [vmem:[%s4299 + $0x8] sm:$0xf]
        %v4302 = vld [vmem:[%s4299 + $0x10] sm:$0xf]
        %v4303 = vld [vmem:[%s4299 + $0x18] sm:$0xf]
        %v4304 = vld [vmem:[%s4299 + $0x20] sm:$0xf]
        %v4305 = vld [vmem:[%s4299 + $0x28] sm:$0xf]
        %v4306 = vld [vmem:[%s4299 + $0x30] sm:$0xf]
        %v4307 = vld [vmem:[%s4299 + $0x38] sm:$0xf]
        %v4308 = vld [vmem:[%s4299 + $0x40] sm:$0xf]
        %v4309 = vld [vmem:[%s4299 + $0x48] sm:$0xf]
        %v4310 = vld [vmem:[%s4299 + $0x50] sm:$0xf]
        %v4311 = vld [vmem:[%s4299 + $0x58] sm:$0xf]
        %v4312 = vld [vmem:[%s4299 + $0x60] sm:$0xf]
        %v4313 = vld [vmem:[%s4299 + $0x68] sm:$0xf]
        %v4314 = vld [vmem:[%s4299 + $0x70] sm:$0xf]
        %v4315 = vld [vmem:[%s4299 + $0x78] sm:$0xf]
        %v4316 = vld [vmem:[%s4299 + $0x80] sm:$0xf]
        %v4317 = vld [vmem:[%s4299 + $0x88] sm:$0xf]
        %v4318 = vld [vmem:[%s4299 + $0x90] sm:$0xf]
        %v4319 = vld [vmem:[%s4299 + $0x98] sm:$0xf]
        %v4320 = vld [vmem:[%s4299 + $0xa0] sm:$0xf]
        %v4321 = vld [vmem:[%s4299 + $0xa8] sm:$0xf]
        %v4322 = vld [vmem:[%s4299 + $0xb0] sm:$0xf]
        %v4323 = vld [vmem:[%s4299 + $0xb8] sm:$0xf]
        %v4324 = vld [vmem:[%s4299 + $0xc0] sm:$0xf]
        %v4325 = vld [vmem:[%s4299 + $0xc8] sm:$0xf]
        %v4326 = vld [vmem:[%s4299 + $0xd0] sm:$0xf]
        %v4327 = vld [vmem:[%s4299 + $0xd8] sm:$0xf]
        %v4328 = vld [vmem:[%s4299 + $0xe0] sm:$0xf]
        %v4329 = vld [vmem:[%s4299 + $0xe8] sm:$0xf]
        %v4330 = vld [vmem:[%s4299 + $0xf0] sm:$0xf]
        %v4331 = vld [vmem:[%s4299 + $0xf8] sm:$0xf]
        %v4360 = vunpack.c.l.b16 %v4271
        %v4361 = vunpack.c.h.b16 %v4271
        %v4362 = vunpack.c.l.b16 %v4272
        %v4363 = vunpack.c.h.b16 %v4272
        %v4364 = vunpack.c.l.b16 %v4273
        %v4365 = vunpack.c.h.b16 %v4273
        %v4366 = vunpack.c.l.b16 %v4274
        %v4367 = vunpack.c.h.b16 %v4274
        %v4368 = vunpack.c.l.b16 %v4275
        %v4369 = vunpack.c.h.b16 %v4275
        %v4370 = vunpack.c.l.b16 %v4276
        %v4371 = vunpack.c.h.b16 %v4276
        %v4372 = vunpack.c.l.b16 %v4277
        %v4373 = vunpack.c.h.b16 %v4277
        %v4374 = vunpack.c.l.b16 %v4278
        %v4375 = vunpack.c.h.b16 %v4278
        %v4376 = vunpack.c.l.b16 %v4279
        %v4377 = vunpack.c.h.b16 %v4279
        %v4378 = vunpack.c.l.b16 %v4280
        %v4379 = vunpack.c.h.b16 %v4280
        %v4380 = vunpack.c.l.b16 %v4281
        %v4381 = vunpack.c.h.b16 %v4281
        %v4382 = vunpack.c.l.b16 %v4282
        %v4383 = vunpack.c.h.b16 %v4282
        %v4384 = vunpack.c.l.b16 %v4283
        %v4385 = vunpack.c.h.b16 %v4283
        %v4386 = vunpack.c.l.b16 %v4284
        %v4387 = vunpack.c.h.b16 %v4284
        %v4388 = vunpack.c.l.b16 %v4285
        %v4389 = vunpack.c.h.b16 %v4285
        %v4390 = vunpack.c.l.b16 %v4286
        %v4391 = vunpack.c.h.b16 %v4286
        %v4392 = vunpack.c.l.b16 %v4287
        %v4393 = vunpack.c.h.b16 %v4287
        %v4394 = vunpack.c.l.b16 %v4288
        %v4395 = vunpack.c.h.b16 %v4288
        %v4396 = vunpack.c.l.b16 %v4289
        %v4397 = vunpack.c.h.b16 %v4289
        %v4398 = vunpack.c.l.b16 %v4290
        %v4399 = vunpack.c.h.b16 %v4290
        %v4400 = vunpack.c.l.b16 %v4291
        %v4401 = vunpack.c.h.b16 %v4291
        %v4402 = vunpack.c.l.b16 %v4292
        %v4403 = vunpack.c.h.b16 %v4292
        %v4404 = vunpack.c.l.b16 %v4293
        %v4405 = vunpack.c.h.b16 %v4293
        %v4406 = vunpack.c.l.b16 %v4294
        %v4407 = vunpack.c.h.b16 %v4294
        %v4408 = vunpack.c.l.b16 %v4295
        %v4409 = vunpack.c.h.b16 %v4295
        %v4410 = vunpack.c.l.b16 %v4296
        %v4411 = vunpack.c.h.b16 %v4296
        %v4412 = vunpack.c.l.b16 %v4297
        %v4413 = vunpack.c.h.b16 %v4297
        %v4414 = vunpack.c.l.b16 %v4298
        %v4415 = vunpack.c.h.b16 %v4298
        %v4416 = vpack.c.b16 %v4362, %v4360
        %v4417 = vpack.c.b16 %v4363, %v4361
        %v4418 = vpack.c.b16 %v4366, %v4364
        %v4419 = vpack.c.b16 %v4367, %v4365
        %v4420 = vpack.c.b16 %v4370, %v4368
        %v4421 = vpack.c.b16 %v4371, %v4369
        %v4422 = vpack.c.b16 %v4374, %v4372
        %v4423 = vpack.c.b16 %v4375, %v4373
        %v4424 = vpack.c.b16 %v4378, %v4376
        %v4425 = vpack.c.b16 %v4379, %v4377
        %v4426 = vpack.c.b16 %v4382, %v4380
        %v4427 = vpack.c.b16 %v4383, %v4381
        %v4428 = vpack.c.b16 %v4386, %v4384
        %v4429 = vpack.c.b16 %v4387, %v4385
        %v4430 = vpack.c.b16 %v4390, %v4388
        %v4431 = vpack.c.b16 %v4391, %v4389
        %v4432 = vpack.c.b16 %v4394, %v4392
        %v4433 = vpack.c.b16 %v4395, %v4393
        %v4434 = vpack.c.b16 %v4398, %v4396
        %v4435 = vpack.c.b16 %v4399, %v4397
        %v4436 = vpack.c.b16 %v4402, %v4400
        %v4437 = vpack.c.b16 %v4403, %v4401
        %v4438 = vpack.c.b16 %v4406, %v4404
        %v4439 = vpack.c.b16 %v4407, %v4405
        %v4440 = vpack.c.b16 %v4410, %v4408
        %v4441 = vpack.c.b16 %v4411, %v4409
        %v4442 = vpack.c.b16 %v4414, %v4412
        %v4443 = vpack.c.b16 %v4415, %v4413
        %v4504 = vunpack.c.l.b16 %v4300
        %v4505 = vunpack.c.l.b16 %v4301
        %v4506 = vunpack.c.l.b16 %v4302
        %v4507 = vunpack.c.l.b16 %v4303
        %v4508 = vunpack.c.l.b16 %v4304
        %v4509 = vunpack.c.l.b16 %v4305
        %v4510 = vunpack.c.l.b16 %v4306
        %v4511 = vunpack.c.l.b16 %v4307
        %v4512 = vunpack.c.l.b16 %v4308
        %v4513 = vunpack.c.l.b16 %v4309
        %v4514 = vunpack.c.l.b16 %v4310
        %v4515 = vunpack.c.l.b16 %v4311
        %v4516 = vunpack.c.l.b16 %v4312
        %v4517 = vunpack.c.l.b16 %v4313
        %v4518 = vunpack.c.l.b16 %v4314
        %v4519 = vunpack.c.l.b16 %v4315
        %v4520 = vunpack.c.l.b16 %v4316
        %v4521 = vunpack.c.l.b16 %v4317
        %v4522 = vunpack.c.l.b16 %v4318
        %v4523 = vunpack.c.l.b16 %v4319
        %v4524 = vunpack.c.l.b16 %v4320
        %v4525 = vunpack.c.l.b16 %v4321
        %v4526 = vunpack.c.l.b16 %v4322
        %v4527 = vunpack.c.l.b16 %v4323
        %v4528 = vunpack.c.l.b16 %v4324
        %v4529 = vunpack.c.l.b16 %v4325
        %v4530 = vunpack.c.l.b16 %v4326
        %v4531 = vunpack.c.l.b16 %v4327
        %v4532 = vunpack.c.l.b16 %v4328
        %v4533 = vunpack.c.l.b16 %v4329
        %v4534 = vunpack.c.l.b16 %v4330
        %v4535 = vunpack.c.l.b16 %v4331
        %v4536 = vpack.c.b16 %v4505, %v4504
        %v4537 = vpack.c.b16 %v4507, %v4506
        %v4538 = vpack.c.b16 %v4509, %v4508
        %v4539 = vpack.c.b16 %v4511, %v4510
        %v4540 = vpack.c.b16 %v4513, %v4512
        %v4541 = vpack.c.b16 %v4515, %v4514
        %v4542 = vpack.c.b16 %v4517, %v4516
        %v4543 = vpack.c.b16 %v4519, %v4518
        %v4544 = vpack.c.b16 %v4521, %v4520
        %v4545 = vpack.c.b16 %v4523, %v4522
        %v4546 = vpack.c.b16 %v4525, %v4524
        %v4547 = vpack.c.b16 %v4527, %v4526
        %v4548 = vpack.c.b16 %v4529, %v4528
        %v4549 = vpack.c.b16 %v4531, %v4530
        %v4550 = vpack.c.b16 %v4533, %v4532
        %v4551 = vpack.c.b16 %v4535, %v4534
        %4568 = vmatprep.subr.bf16.mxu0 0
        %4569 = vmatpush1.bf16.msra.mxu0 %v4543
        %4570 = vmatprep.subr.bf16.mxu0 0
        %4571 = vmatpush1.bf16.msra.mxu0 %v4542
        %4572 = vmatprep.subr.bf16.mxu0 0
        %4573 = vmatpush1.bf16.msra.mxu0 %v4541
        %4574 = vmatprep.subr.bf16.mxu0 0
        %4575 = vmatpush1.bf16.msra.mxu0 %v4540
        %4576 = vmatprep.subr.bf16.mxu0 0
        %4577 = vmatpush1.bf16.msra.mxu0 %v4539
        %4578 = vmatprep.subr.bf16.mxu0 0
        %4579 = vmatpush1.bf16.msra.mxu0 %v4538
        %4580 = vmatprep.subr.bf16.mxu0 0
        %4581 = vmatpush1.bf16.msra.mxu0 %v4537
        %4582 = vmatprep.subr.bf16.mxu0 0
        %4583 = vmatpush1.bf16.msra.mxu0 %v4536
        %4584 = vmatprep.subr.bf16.mxu0 0
        %4585 = vmatpush2.bf16.msra.mxu0 %v4551
        %4586 = vmatprep.subr.bf16.mxu0 0
        %4587 = vmatpush2.bf16.msra.mxu0 %v4550
        %4588 = vmatprep.subr.bf16.mxu0 0
        %4589 = vmatpush2.bf16.msra.mxu0 %v4549
        %4590 = vmatprep.subr.bf16.mxu0 0
        %4591 = vmatpush2.bf16.msra.mxu0 %v4548
        %4592 = vmatprep.subr.bf16.mxu0 0
        %4593 = vmatpush2.bf16.msra.mxu0 %v4547
        %4594 = vmatprep.subr.bf16.mxu0 0
        %4595 = vmatpush2.bf16.msra.mxu0 %v4546
        %4596 = vmatprep.subr.bf16.mxu0 0
        %4597 = vmatpush2.bf16.msra.mxu0 %v4545
        %4598 = vmatprep.subr.bf16.mxu0 0
        %4599 = vmatpush2.bf16.msra.mxu0 %v4544
        %4600 = vmatprep.mubr.bf16.mxu0 %v4417
        %4601 = vmatmul.mubr.bf16.gmra.mxu0 %v4416
        %v4602 = vpop.f32.mrf.mxu0
        %v4603 = vadd.f32 0.0, %v4602
        %v4604 = vpop.f32.mrf.mxu0
        %v4605 = vpop.f32.mrf.mxu0
        %v4606 = vadd.f32 0.0, %v4605
        %v4607 = vpop.f32.mrf.mxu0
        %4608 = vmatprep.mubr.bf16.mxu0 %v4419
        %4609 = vmatmul.mubr.bf16.gmra.mxu0 %v4418
        %v4610 = vpop.f32.mrf.mxu0
        %v4611 = vadd.f32 0.0, %v4610
        %v4612 = vpop.f32.mrf.mxu0
        %v4613 = vpop.f32.mrf.mxu0
        %v4614 = vadd.f32 0.0, %v4613
        %v4615 = vpop.f32.mrf.mxu0
        %4616 = vmatprep.mubr.bf16.mxu0 %v4421
        %4617 = vmatmul.mubr.bf16.gmra.mxu0 %v4420
        %v4618 = vpop.f32.mrf.mxu0
        %v4619 = vadd.f32 0.0, %v4618
        %v4620 = vpop.f32.mrf.mxu0
        %v4621 = vpop.f32.mrf.mxu0
        %v4622 = vadd.f32 0.0, %v4621
        %v4623 = vpop.f32.mrf.mxu0
        %4624 = vmatprep.mubr.bf16.mxu0 %v4423
        %4625 = vmatmul.mubr.bf16.gmra.mxu0 %v4422
        %v4626 = vpop.f32.mrf.mxu0
        %v4627 = vadd.f32 0.0, %v4626
        %v4628 = vpop.f32.mrf.mxu0
        %v4629 = vpop.f32.mrf.mxu0
        %v4630 = vadd.f32 0.0, %v4629
        %v4631 = vpop.f32.mrf.mxu0
        %4632 = vmatprep.mubr.bf16.mxu0 %v4425
        %4633 = vmatmul.mubr.bf16.gmra.mxu0 %v4424
        %v4634 = vpop.f32.mrf.mxu0
        %v4635 = vadd.f32 0.0, %v4634
        %v4636 = vpop.f32.mrf.mxu0
        %v4637 = vpop.f32.mrf.mxu0
        %v4638 = vadd.f32 0.0, %v4637
        %v4639 = vpop.f32.mrf.mxu0
        %4640 = vmatprep.mubr.bf16.mxu0 %v4427
        %4641 = vmatmul.mubr.bf16.gmra.mxu0 %v4426
        %v4642 = vpop.f32.mrf.mxu0
        %v4643 = vadd.f32 0.0, %v4642
        %v4644 = vpop.f32.mrf.mxu0
        %v4645 = vpop.f32.mrf.mxu0
        %v4646 = vadd.f32 0.0, %v4645
        %v4647 = vpop.f32.mrf.mxu0
        %4648 = vmatprep.mubr.bf16.mxu0 %v4429
        %4649 = vmatmul.mubr.bf16.gmra.mxu0 %v4428
        %v4650 = vpop.f32.mrf.mxu0
        %v4651 = vadd.f32 0.0, %v4650
        %v4652 = vpop.f32.mrf.mxu0
        %v4653 = vpop.f32.mrf.mxu0
        %v4654 = vadd.f32 0.0, %v4653
        %v4655 = vpop.f32.mrf.mxu0
        %4656 = vmatprep.mubr.bf16.mxu0 %v4431
        %4657 = vmatmul.mubr.bf16.gmra.mxu0 %v4430
        %v4658 = vpop.f32.mrf.mxu0
        %v4659 = vadd.f32 0.0, %v4658
        %v4660 = vpop.f32.mrf.mxu0
        %v4661 = vpop.f32.mrf.mxu0
        %v4662 = vadd.f32 0.0, %v4661
        %v4663 = vpop.f32.mrf.mxu0
        %4664 = vmatprep.mubr.bf16.mxu0 %v4433
        %4665 = vmatmul.mubr.bf16.gmra.mxu0 %v4432
        %v4666 = vpop.f32.mrf.mxu0
        %v4667 = vadd.f32 0.0, %v4666
        %v4668 = vpop.f32.mrf.mxu0
        %v4669 = vpop.f32.mrf.mxu0
        %v4670 = vadd.f32 0.0, %v4669
        %v4671 = vpop.f32.mrf.mxu0
        %4672 = vmatprep.mubr.bf16.mxu0 %v4435
        %4673 = vmatmul.mubr.bf16.gmra.mxu0 %v4434
        %v4674 = vpop.f32.mrf.mxu0
        %v4675 = vadd.f32 0.0, %v4674
        %v4676 = vpop.f32.mrf.mxu0
        %v4677 = vpop.f32.mrf.mxu0
        %v4678 = vadd.f32 0.0, %v4677
        %v4679 = vpop.f32.mrf.mxu0
        %4680 = vmatprep.mubr.bf16.mxu0 %v4437
        %4681 = vmatmul.mubr.bf16.gmra.mxu0 %v4436
        %v4682 = vpop.f32.mrf.mxu0
        %v4683 = vadd.f32 0.0, %v4682
        %v4684 = vpop.f32.mrf.mxu0
        %v4685 = vpop.f32.mrf.mxu0
        %v4686 = vadd.f32 0.0, %v4685
        %v4687 = vpop.f32.mrf.mxu0
        %4688 = vmatprep.mubr.bf16.mxu0 %v4439
        %4689 = vmatmul.mubr.bf16.gmra.mxu0 %v4438
        %v4690 = vpop.f32.mrf.mxu0
        %v4691 = vadd.f32 0.0, %v4690
        %v4692 = vpop.f32.mrf.mxu0
        %v4693 = vpop.f32.mrf.mxu0
        %v4694 = vadd.f32 0.0, %v4693
        %v4695 = vpop.f32.mrf.mxu0
        %4696 = vmatprep.mubr.bf16.mxu0 %v4441
        %4697 = vmatmul.mubr.bf16.gmra.mxu0 %v4440
        %v4698 = vpop.f32.mrf.mxu0
        %v4699 = vadd.f32 0.0, %v4698
        %v4700 = vpop.f32.mrf.mxu0
        %v4701 = vpop.f32.mrf.mxu0
        %v4702 = vadd.f32 0.0, %v4701
        %v4703 = vpop.f32.mrf.mxu0
        %4704 = vmatprep.mubr.bf16.mxu0 %v4443
        %4705 = vmatmul.mubr.bf16.gmra.mxu0 %v4442
        %v4706 = vpop.f32.mrf.mxu0
        %v4707 = vadd.f32 0.0, %v4706
        %v4708 = vpop.f32.mrf.mxu0
        %v4709 = vpop.f32.mrf.mxu0
        %v4710 = vadd.f32 0.0, %v4709
        %v4711 = vpop.f32.mrf.mxu0
        %4712 = vdwg.mxu0
        %v4713 = vadd.f32 %v4243, %v4603
        %v4714 = vadd.f32 %v4244, %v4606
        %v4715 = vadd.f32 %v4245, %v4611
        %v4716 = vadd.f32 %v4246, %v4614
        %v4717 = vadd.f32 %v4247, %v4619
        %v4718 = vadd.f32 %v4248, %v4622
        %v4719 = vadd.f32 %v4249, %v4627
        %v4720 = vadd.f32 %v4250, %v4630
        %v4721 = vadd.f32 %v4251, %v4635
        %v4722 = vadd.f32 %v4252, %v4638
        %v4723 = vadd.f32 %v4253, %v4643
        %v4724 = vadd.f32 %v4254, %v4646
        %v4725 = vadd.f32 %v4255, %v4651
        %v4726 = vadd.f32 %v4256, %v4654
        %v4727 = vadd.f32 %v4257, %v4659
        %v4728 = vadd.f32 %v4258, %v4662
        %v4729 = vadd.f32 %v4259, %v4667
        %v4730 = vadd.f32 %v4260, %v4670
        %v4731 = vadd.f32 %v4261, %v4675
        %v4732 = vadd.f32 %v4262, %v4678
        %v4733 = vadd.f32 %v4263, %v4683
        %v4734 = vadd.f32 %v4264, %v4686
        %v4735 = vadd.f32 %v4265, %v4691
        %v4736 = vadd.f32 %v4266, %v4694
        %v4737 = vadd.f32 %v4267, %v4699
        %v4738 = vadd.f32 %v4268, %v4702
        %v4739 = vadd.f32 %v4269, %v4707
        %v4740 = vadd.f32 %v4270, %v4710
        %v4741 = vld [vmem:[#allocation2 + $0x20] sm:$0xff]
        %v4742 = vld [vmem:[#allocation2 + $0x28] sm:$0xff]
        %v4743 = vld [vmem:[#allocation2 + $0x30] sm:$0xff]
        %v4744 = vld [vmem:[#allocation2 + $0x38] sm:$0xff]
        %v4745 = vld [vmem:[#allocation2 + $0x40] sm:$0xff]
        %v4746 = vld [vmem:[#allocation2 + $0x48] sm:$0xff]
        %v4747 = vld [vmem:[#allocation2 + $0x50] sm:$0xff]
        %v4748 = vld [vmem:[#allocation2 + $0x58] sm:$0xff]
        %v4749 = vld [vmem:[#allocation2 + $0x60] sm:$0xff]
        %v4750 = vld [vmem:[#allocation2 + $0x68] sm:$0xff]
        %v4751 = vld [vmem:[#allocation2 + $0x70] sm:$0xff]
        %v4752 = vld [vmem:[#allocation2 + $0x78] sm:$0xff]
        %v4753 = vld [vmem:[#allocation2 + $0x80] sm:$0xff]
        %v4754 = vld [vmem:[#allocation2 + $0x88] sm:$0xff]
        %v4755 = vld [vmem:[#allocation2 + $0x90] sm:$0xff]
        %v4756 = vld [vmem:[#allocation2 + $0x98] sm:$0xff]
        %v4757 = vld [vmem:[#allocation2 + $0xa0] sm:$0xff]
        %v4758 = vld [vmem:[#allocation2 + $0xa8] sm:$0xff]
        %v4759 = vld [vmem:[#allocation2 + $0xb0] sm:$0xff]
        %v4760 = vld [vmem:[#allocation2 + $0xb8] sm:$0xff]
        %v4761 = vld [vmem:[#allocation2 + $0xc0] sm:$0xff]
        %v4762 = vld [vmem:[#allocation2 + $0xc8] sm:$0xff]
        %v4763 = vld [vmem:[#allocation2 + $0xd0] sm:$0xff]
        %v4764 = vld [vmem:[#allocation2 + $0xd8] sm:$0xff]
        %v4765 = vld [vmem:[#allocation2 + $0xe0] sm:$0xff]
        %v4766 = vld [vmem:[#allocation2 + $0xe8] sm:$0xff]
        %v4767 = vld [vmem:[#allocation2 + $0xf0] sm:$0xff]
        %v4768 = vld [vmem:[#allocation2 + $0xf8] sm:$0xff]
        %s4769 = scalar_lea.vmem [#allocation13], 1536
        %v4770 = vld [vmem:[%s4769] sm:$0xf]
        %v4771 = vld [vmem:[%s4769 + $0x8] sm:$0xf]
        %v4772 = vld [vmem:[%s4769 + $0x10] sm:$0xf]
        %v4773 = vld [vmem:[%s4769 + $0x18] sm:$0xf]
        %v4774 = vld [vmem:[%s4769 + $0x20] sm:$0xf]
        %v4775 = vld [vmem:[%s4769 + $0x28] sm:$0xf]
        %v4776 = vld [vmem:[%s4769 + $0x30] sm:$0xf]
        %v4777 = vld [vmem:[%s4769 + $0x38] sm:$0xf]
        %v4778 = vld [vmem:[%s4769 + $0x40] sm:$0xf]
        %v4779 = vld [vmem:[%s4769 + $0x48] sm:$0xf]
        %v4780 = vld [vmem:[%s4769 + $0x50] sm:$0xf]
        %v4781 = vld [vmem:[%s4769 + $0x58] sm:$0xf]
        %v4782 = vld [vmem:[%s4769 + $0x60] sm:$0xf]
        %v4783 = vld [vmem:[%s4769 + $0x68] sm:$0xf]
        %v4784 = vld [vmem:[%s4769 + $0x70] sm:$0xf]
        %v4785 = vld [vmem:[%s4769 + $0x78] sm:$0xf]
        %v4786 = vld [vmem:[%s4769 + $0x80] sm:$0xf]
        %v4787 = vld [vmem:[%s4769 + $0x88] sm:$0xf]
        %v4788 = vld [vmem:[%s4769 + $0x90] sm:$0xf]
        %v4789 = vld [vmem:[%s4769 + $0x98] sm:$0xf]
        %v4790 = vld [vmem:[%s4769 + $0xa0] sm:$0xf]
        %v4791 = vld [vmem:[%s4769 + $0xa8] sm:$0xf]
        %v4792 = vld [vmem:[%s4769 + $0xb0] sm:$0xf]
        %v4793 = vld [vmem:[%s4769 + $0xb8] sm:$0xf]
        %v4794 = vld [vmem:[%s4769 + $0xc0] sm:$0xf]
        %v4795 = vld [vmem:[%s4769 + $0xc8] sm:$0xf]
        %v4796 = vld [vmem:[%s4769 + $0xd0] sm:$0xf]
        %v4797 = vld [vmem:[%s4769 + $0xd8] sm:$0xf]
        %v4798 = vld [vmem:[%s4769 + $0xe0] sm:$0xf]
        %v4799 = vld [vmem:[%s4769 + $0xe8] sm:$0xf]
        %v4800 = vld [vmem:[%s4769 + $0xf0] sm:$0xf]
        %v4801 = vld [vmem:[%s4769 + $0xf8] sm:$0xf]
        %v4830 = vunpack.c.l.b16 %v4741
        %v4831 = vunpack.c.h.b16 %v4741
        %v4832 = vunpack.c.l.b16 %v4742
        %v4833 = vunpack.c.h.b16 %v4742
        %v4834 = vunpack.c.l.b16 %v4743
        %v4835 = vunpack.c.h.b16 %v4743
        %v4836 = vunpack.c.l.b16 %v4744
        %v4837 = vunpack.c.h.b16 %v4744
        %v4838 = vunpack.c.l.b16 %v4745
        %v4839 = vunpack.c.h.b16 %v4745
        %v4840 = vunpack.c.l.b16 %v4746
        %v4841 = vunpack.c.h.b16 %v4746
        %v4842 = vunpack.c.l.b16 %v4747
        %v4843 = vunpack.c.h.b16 %v4747
        %v4844 = vunpack.c.l.b16 %v4748
        %v4845 = vunpack.c.h.b16 %v4748
        %v4846 = vunpack.c.l.b16 %v4749
        %v4847 = vunpack.c.h.b16 %v4749
        %v4848 = vunpack.c.l.b16 %v4750
        %v4849 = vunpack.c.h.b16 %v4750
        %v4850 = vunpack.c.l.b16 %v4751
        %v4851 = vunpack.c.h.b16 %v4751
        %v4852 = vunpack.c.l.b16 %v4752
        %v4853 = vunpack.c.h.b16 %v4752
        %v4854 = vunpack.c.l.b16 %v4753
        %v4855 = vunpack.c.h.b16 %v4753
        %v4856 = vunpack.c.l.b16 %v4754
        %v4857 = vunpack.c.h.b16 %v4754
        %v4858 = vunpack.c.l.b16 %v4755
        %v4859 = vunpack.c.h.b16 %v4755
        %v4860 = vunpack.c.l.b16 %v4756
        %v4861 = vunpack.c.h.b16 %v4756
        %v4862 = vunpack.c.l.b16 %v4757
        %v4863 = vunpack.c.h.b16 %v4757
        %v4864 = vunpack.c.l.b16 %v4758
        %v4865 = vunpack.c.h.b16 %v4758
        %v4866 = vunpack.c.l.b16 %v4759
        %v4867 = vunpack.c.h.b16 %v4759
        %v4868 = vunpack.c.l.b16 %v4760
        %v4869 = vunpack.c.h.b16 %v4760
        %v4870 = vunpack.c.l.b16 %v4761
        %v4871 = vunpack.c.h.b16 %v4761
        %v4872 = vunpack.c.l.b16 %v4762
        %v4873 = vunpack.c.h.b16 %v4762
        %v4874 = vunpack.c.l.b16 %v4763
        %v4875 = vunpack.c.h.b16 %v4763
        %v4876 = vunpack.c.l.b16 %v4764
        %v4877 = vunpack.c.h.b16 %v4764
        %v4878 = vunpack.c.l.b16 %v4765
        %v4879 = vunpack.c.h.b16 %v4765
        %v4880 = vunpack.c.l.b16 %v4766
        %v4881 = vunpack.c.h.b16 %v4766
        %v4882 = vunpack.c.l.b16 %v4767
        %v4883 = vunpack.c.h.b16 %v4767
        %v4884 = vunpack.c.l.b16 %v4768
        %v4885 = vunpack.c.h.b16 %v4768
        %v4886 = vpack.c.b16 %v4832, %v4830
        %v4887 = vpack.c.b16 %v4833, %v4831
        %v4888 = vpack.c.b16 %v4836, %v4834
        %v4889 = vpack.c.b16 %v4837, %v4835
        %v4890 = vpack.c.b16 %v4840, %v4838
        %v4891 = vpack.c.b16 %v4841, %v4839
        %v4892 = vpack.c.b16 %v4844, %v4842
        %v4893 = vpack.c.b16 %v4845, %v4843
        %v4894 = vpack.c.b16 %v4848, %v4846
        %v4895 = vpack.c.b16 %v4849, %v4847
        %v4896 = vpack.c.b16 %v4852, %v4850
        %v4897 = vpack.c.b16 %v4853, %v4851
        %v4898 = vpack.c.b16 %v4856, %v4854
        %v4899 = vpack.c.b16 %v4857, %v4855
        %v4900 = vpack.c.b16 %v4860, %v4858
        %v4901 = vpack.c.b16 %v4861, %v4859
        %v4902 = vpack.c.b16 %v4864, %v4862
        %v4903 = vpack.c.b16 %v4865, %v4863
        %v4904 = vpack.c.b16 %v4868, %v4866
        %v4905 = vpack.c.b16 %v4869, %v4867
        %v4906 = vpack.c.b16 %v4872, %v4870
        %v4907 = vpack.c.b16 %v4873, %v4871
        %v4908 = vpack.c.b16 %v4876, %v4874
        %v4909 = vpack.c.b16 %v4877, %v4875
        %v4910 = vpack.c.b16 %v4880, %v4878
        %v4911 = vpack.c.b16 %v4881, %v4879
        %v4912 = vpack.c.b16 %v4884, %v4882
        %v4913 = vpack.c.b16 %v4885, %v4883
        %v4974 = vunpack.c.l.b16 %v4770
        %v4975 = vunpack.c.l.b16 %v4771
        %v4976 = vunpack.c.l.b16 %v4772
        %v4977 = vunpack.c.l.b16 %v4773
        %v4978 = vunpack.c.l.b16 %v4774
        %v4979 = vunpack.c.l.b16 %v4775
        %v4980 = vunpack.c.l.b16 %v4776
        %v4981 = vunpack.c.l.b16 %v4777
        %v4982 = vunpack.c.l.b16 %v4778
        %v4983 = vunpack.c.l.b16 %v4779
        %v4984 = vunpack.c.l.b16 %v4780
        %v4985 = vunpack.c.l.b16 %v4781
        %v4986 = vunpack.c.l.b16 %v4782
        %v4987 = vunpack.c.l.b16 %v4783
        %v4988 = vunpack.c.l.b16 %v4784
        %v4989 = vunpack.c.l.b16 %v4785
        %v4990 = vunpack.c.l.b16 %v4786
        %v4991 = vunpack.c.l.b16 %v4787
        %v4992 = vunpack.c.l.b16 %v4788
        %v4993 = vunpack.c.l.b16 %v4789
        %v4994 = vunpack.c.l.b16 %v4790
        %v4995 = vunpack.c.l.b16 %v4791
        %v4996 = vunpack.c.l.b16 %v4792
        %v4997 = vunpack.c.l.b16 %v4793
        %v4998 = vunpack.c.l.b16 %v4794
        %v4999 = vunpack.c.l.b16 %v4795
        %v5000 = vunpack.c.l.b16 %v4796
        %v5001 = vunpack.c.l.b16 %v4797
        %v5002 = vunpack.c.l.b16 %v4798
        %v5003 = vunpack.c.l.b16 %v4799
        %v5004 = vunpack.c.l.b16 %v4800
        %v5005 = vunpack.c.l.b16 %v4801
        %v5006 = vpack.c.b16 %v4975, %v4974
        %v5007 = vpack.c.b16 %v4977, %v4976
        %v5008 = vpack.c.b16 %v4979, %v4978
        %v5009 = vpack.c.b16 %v4981, %v4980
        %v5010 = vpack.c.b16 %v4983, %v4982
        %v5011 = vpack.c.b16 %v4985, %v4984
        %v5012 = vpack.c.b16 %v4987, %v4986
        %v5013 = vpack.c.b16 %v4989, %v4988
        %v5014 = vpack.c.b16 %v4991, %v4990
        %v5015 = vpack.c.b16 %v4993, %v4992
        %v5016 = vpack.c.b16 %v4995, %v4994
        %v5017 = vpack.c.b16 %v4997, %v4996
        %v5018 = vpack.c.b16 %v4999, %v4998
        %v5019 = vpack.c.b16 %v5001, %v5000
        %v5020 = vpack.c.b16 %v5003, %v5002
        %v5021 = vpack.c.b16 %v5005, %v5004
        %5038 = vmatprep.subr.bf16.mxu0 0
        %5039 = vmatpush1.bf16.msra.mxu0 %v5013
        %5040 = vmatprep.subr.bf16.mxu0 0
        %5041 = vmatpush1.bf16.msra.mxu0 %v5012
        %5042 = vmatprep.subr.bf16.mxu0 0
        %5043 = vmatpush1.bf16.msra.mxu0 %v5011
        %5044 = vmatprep.subr.bf16.mxu0 0
        %5045 = vmatpush1.bf16.msra.mxu0 %v5010
        %5046 = vmatprep.subr.bf16.mxu0 0
        %5047 = vmatpush1.bf16.msra.mxu0 %v5009
        %5048 = vmatprep.subr.bf16.mxu0 0
        %5049 = vmatpush1.bf16.msra.mxu0 %v5008
        %5050 = vmatprep.subr.bf16.mxu0 0
        %5051 = vmatpush1.bf16.msra.mxu0 %v5007
        %5052 = vmatprep.subr.bf16.mxu0 0
        %5053 = vmatpush1.bf16.msra.mxu0 %v5006
        %5054 = vmatprep.subr.bf16.mxu0 0
        %5055 = vmatpush2.bf16.msra.mxu0 %v5021
        %5056 = vmatprep.subr.bf16.mxu0 0
        %5057 = vmatpush2.bf16.msra.mxu0 %v5020
        %5058 = vmatprep.subr.bf16.mxu0 0
        %5059 = vmatpush2.bf16.msra.mxu0 %v5019
        %5060 = vmatprep.subr.bf16.mxu0 0
        %5061 = vmatpush2.bf16.msra.mxu0 %v5018
        %5062 = vmatprep.subr.bf16.mxu0 0
        %5063 = vmatpush2.bf16.msra.mxu0 %v5017
        %5064 = vmatprep.subr.bf16.mxu0 0
        %5065 = vmatpush2.bf16.msra.mxu0 %v5016
        %5066 = vmatprep.subr.bf16.mxu0 0
        %5067 = vmatpush2.bf16.msra.mxu0 %v5015
        %5068 = vmatprep.subr.bf16.mxu0 0
        %5069 = vmatpush2.bf16.msra.mxu0 %v5014
        %5070 = vmatprep.mubr.bf16.mxu0 %v4887
        %5071 = vmatmul.mubr.bf16.gmra.mxu0 %v4886
        %v5072 = vpop.f32.mrf.mxu0
        %v5073 = vadd.f32 0.0, %v5072
        %v5074 = vpop.f32.mrf.mxu0
        %v5075 = vpop.f32.mrf.mxu0
        %v5076 = vadd.f32 0.0, %v5075
        %v5077 = vpop.f32.mrf.mxu0
        %5078 = vmatprep.mubr.bf16.mxu0 %v4889
        %5079 = vmatmul.mubr.bf16.gmra.mxu0 %v4888
        %v5080 = vpop.f32.mrf.mxu0
        %v5081 = vadd.f32 0.0, %v5080
        %v5082 = vpop.f32.mrf.mxu0
        %v5083 = vpop.f32.mrf.mxu0
        %v5084 = vadd.f32 0.0, %v5083
        %v5085 = vpop.f32.mrf.mxu0
        %5086 = vmatprep.mubr.bf16.mxu0 %v4891
        %5087 = vmatmul.mubr.bf16.gmra.mxu0 %v4890
        %v5088 = vpop.f32.mrf.mxu0
        %v5089 = vadd.f32 0.0, %v5088
        %v5090 = vpop.f32.mrf.mxu0
        %v5091 = vpop.f32.mrf.mxu0
        %v5092 = vadd.f32 0.0, %v5091
        %v5093 = vpop.f32.mrf.mxu0
        %5094 = vmatprep.mubr.bf16.mxu0 %v4893
        %5095 = vmatmul.mubr.bf16.gmra.mxu0 %v4892
        %v5096 = vpop.f32.mrf.mxu0
        %v5097 = vadd.f32 0.0, %v5096
        %v5098 = vpop.f32.mrf.mxu0
        %v5099 = vpop.f32.mrf.mxu0
        %v5100 = vadd.f32 0.0, %v5099
        %v5101 = vpop.f32.mrf.mxu0
        %5102 = vmatprep.mubr.bf16.mxu0 %v4895
        %5103 = vmatmul.mubr.bf16.gmra.mxu0 %v4894
        %v5104 = vpop.f32.mrf.mxu0
        %v5105 = vadd.f32 0.0, %v5104
        %v5106 = vpop.f32.mrf.mxu0
        %v5107 = vpop.f32.mrf.mxu0
        %v5108 = vadd.f32 0.0, %v5107
        %v5109 = vpop.f32.mrf.mxu0
        %5110 = vmatprep.mubr.bf16.mxu0 %v4897
        %5111 = vmatmul.mubr.bf16.gmra.mxu0 %v4896
        %v5112 = vpop.f32.mrf.mxu0
        %v5113 = vadd.f32 0.0, %v5112
        %v5114 = vpop.f32.mrf.mxu0
        %v5115 = vpop.f32.mrf.mxu0
        %v5116 = vadd.f32 0.0, %v5115
        %v5117 = vpop.f32.mrf.mxu0
        %5118 = vmatprep.mubr.bf16.mxu0 %v4899
        %5119 = vmatmul.mubr.bf16.gmra.mxu0 %v4898
        %v5120 = vpop.f32.mrf.mxu0
        %v5121 = vadd.f32 0.0, %v5120
        %v5122 = vpop.f32.mrf.mxu0
        %v5123 = vpop.f32.mrf.mxu0
        %v5124 = vadd.f32 0.0, %v5123
        %v5125 = vpop.f32.mrf.mxu0
        %5126 = vmatprep.mubr.bf16.mxu0 %v4901
        %5127 = vmatmul.mubr.bf16.gmra.mxu0 %v4900
        %v5128 = vpop.f32.mrf.mxu0
        %v5129 = vadd.f32 0.0, %v5128
        %v5130 = vpop.f32.mrf.mxu0
        %v5131 = vpop.f32.mrf.mxu0
        %v5132 = vadd.f32 0.0, %v5131
        %v5133 = vpop.f32.mrf.mxu0
        %5134 = vmatprep.mubr.bf16.mxu0 %v4903
        %5135 = vmatmul.mubr.bf16.gmra.mxu0 %v4902
        %v5136 = vpop.f32.mrf.mxu0
        %v5137 = vadd.f32 0.0, %v5136
        %v5138 = vpop.f32.mrf.mxu0
        %v5139 = vpop.f32.mrf.mxu0
        %v5140 = vadd.f32 0.0, %v5139
        %v5141 = vpop.f32.mrf.mxu0
        %5142 = vmatprep.mubr.bf16.mxu0 %v4905
        %5143 = vmatmul.mubr.bf16.gmra.mxu0 %v4904
        %v5144 = vpop.f32.mrf.mxu0
        %v5145 = vadd.f32 0.0, %v5144
        %v5146 = vpop.f32.mrf.mxu0
        %v5147 = vpop.f32.mrf.mxu0
        %v5148 = vadd.f32 0.0, %v5147
        %v5149 = vpop.f32.mrf.mxu0
        %5150 = vmatprep.mubr.bf16.mxu0 %v4907
        %5151 = vmatmul.mubr.bf16.gmra.mxu0 %v4906
        %v5152 = vpop.f32.mrf.mxu0
        %v5153 = vadd.f32 0.0, %v5152
        %v5154 = vpop.f32.mrf.mxu0
        %v5155 = vpop.f32.mrf.mxu0
        %v5156 = vadd.f32 0.0, %v5155
        %v5157 = vpop.f32.mrf.mxu0
        %5158 = vmatprep.mubr.bf16.mxu0 %v4909
        %5159 = vmatmul.mubr.bf16.gmra.mxu0 %v4908
        %v5160 = vpop.f32.mrf.mxu0
        %v5161 = vadd.f32 0.0, %v5160
        %v5162 = vpop.f32.mrf.mxu0
        %v5163 = vpop.f32.mrf.mxu0
        %v5164 = vadd.f32 0.0, %v5163
        %v5165 = vpop.f32.mrf.mxu0
        %5166 = vmatprep.mubr.bf16.mxu0 %v4911
        %5167 = vmatmul.mubr.bf16.gmra.mxu0 %v4910
        %v5168 = vpop.f32.mrf.mxu0
        %v5169 = vadd.f32 0.0, %v5168
        %v5170 = vpop.f32.mrf.mxu0
        %v5171 = vpop.f32.mrf.mxu0
        %v5172 = vadd.f32 0.0, %v5171
        %v5173 = vpop.f32.mrf.mxu0
        %5174 = vmatprep.mubr.bf16.mxu0 %v4913
        %5175 = vmatmul.mubr.bf16.gmra.mxu0 %v4912
        %v5176 = vpop.f32.mrf.mxu0
        %v5177 = vadd.f32 0.0, %v5176
        %v5178 = vpop.f32.mrf.mxu0
        %v5179 = vpop.f32.mrf.mxu0
        %v5180 = vadd.f32 0.0, %v5179
        %v5181 = vpop.f32.mrf.mxu0
        %5182 = vdwg.mxu0
        %v5183 = vadd.f32 %v4713, %v5073
        %v5184 = vadd.f32 %v4714, %v5076
        %v5185 = vadd.f32 %v4715, %v5081
        %v5186 = vadd.f32 %v4716, %v5084
        %v5187 = vadd.f32 %v4717, %v5089
        %v5188 = vadd.f32 %v4718, %v5092
        %v5189 = vadd.f32 %v4719, %v5097
        %v5190 = vadd.f32 %v4720, %v5100
        %v5191 = vadd.f32 %v4721, %v5105
        %v5192 = vadd.f32 %v4722, %v5108
        %v5193 = vadd.f32 %v4723, %v5113
        %v5194 = vadd.f32 %v4724, %v5116
        %v5195 = vadd.f32 %v4725, %v5121
        %v5196 = vadd.f32 %v4726, %v5124
        %v5197 = vadd.f32 %v4727, %v5129
        %v5198 = vadd.f32 %v4728, %v5132
        %v5199 = vadd.f32 %v4729, %v5137
        %v5200 = vadd.f32 %v4730, %v5140
        %v5201 = vadd.f32 %v4731, %v5145
        %v5202 = vadd.f32 %v4732, %v5148
        %v5203 = vadd.f32 %v4733, %v5153
        %v5204 = vadd.f32 %v4734, %v5156
        %v5205 = vadd.f32 %v4735, %v5161
        %v5206 = vadd.f32 %v4736, %v5164
        %v5207 = vadd.f32 %v4737, %v5169
        %v5208 = vadd.f32 %v4738, %v5172
        %v5209 = vadd.f32 %v4739, %v5177
        %v5210 = vadd.f32 %v4740, %v5180
        %v5211 = vld [vmem:[#allocation3 + $0x20] sm:$0xff]
        %v5212 = vld [vmem:[#allocation3 + $0x28] sm:$0xff]
        %v5213 = vld [vmem:[#allocation3 + $0x30] sm:$0xff]
        %v5214 = vld [vmem:[#allocation3 + $0x38] sm:$0xff]
        %v5215 = vld [vmem:[#allocation3 + $0x40] sm:$0xff]
        %v5216 = vld [vmem:[#allocation3 + $0x48] sm:$0xff]
        %v5217 = vld [vmem:[#allocation3 + $0x50] sm:$0xff]
        %v5218 = vld [vmem:[#allocation3 + $0x58] sm:$0xff]
        %v5219 = vld [vmem:[#allocation3 + $0x60] sm:$0xff]
        %v5220 = vld [vmem:[#allocation3 + $0x68] sm:$0xff]
        %v5221 = vld [vmem:[#allocation3 + $0x70] sm:$0xff]
        %v5222 = vld [vmem:[#allocation3 + $0x78] sm:$0xff]
        %v5223 = vld [vmem:[#allocation3 + $0x80] sm:$0xff]
        %v5224 = vld [vmem:[#allocation3 + $0x88] sm:$0xff]
        %v5225 = vld [vmem:[#allocation3 + $0x90] sm:$0xff]
        %v5226 = vld [vmem:[#allocation3 + $0x98] sm:$0xff]
        %v5227 = vld [vmem:[#allocation3 + $0xa0] sm:$0xff]
        %v5228 = vld [vmem:[#allocation3 + $0xa8] sm:$0xff]
        %v5229 = vld [vmem:[#allocation3 + $0xb0] sm:$0xff]
        %v5230 = vld [vmem:[#allocation3 + $0xb8] sm:$0xff]
        %v5231 = vld [vmem:[#allocation3 + $0xc0] sm:$0xff]
        %v5232 = vld [vmem:[#allocation3 + $0xc8] sm:$0xff]
        %v5233 = vld [vmem:[#allocation3 + $0xd0] sm:$0xff]
        %v5234 = vld [vmem:[#allocation3 + $0xd8] sm:$0xff]
        %v5235 = vld [vmem:[#allocation3 + $0xe0] sm:$0xff]
        %v5236 = vld [vmem:[#allocation3 + $0xe8] sm:$0xff]
        %v5237 = vld [vmem:[#allocation3 + $0xf0] sm:$0xff]
        %v5238 = vld [vmem:[#allocation3 + $0xf8] sm:$0xff]
        %s5239 = scalar_lea.vmem [#allocation13], 1792
        %v5240 = vld [vmem:[%s5239] sm:$0xf]
        %v5241 = vld [vmem:[%s5239 + $0x8] sm:$0xf]
        %v5242 = vld [vmem:[%s5239 + $0x10] sm:$0xf]
        %v5243 = vld [vmem:[%s5239 + $0x18] sm:$0xf]
        %v5244 = vld [vmem:[%s5239 + $0x20] sm:$0xf]
        %v5245 = vld [vmem:[%s5239 + $0x28] sm:$0xf]
        %v5246 = vld [vmem:[%s5239 + $0x30] sm:$0xf]
        %v5247 = vld [vmem:[%s5239 + $0x38] sm:$0xf]
        %v5248 = vld [vmem:[%s5239 + $0x40] sm:$0xf]
        %v5249 = vld [vmem:[%s5239 + $0x48] sm:$0xf]
        %v5250 = vld [vmem:[%s5239 + $0x50] sm:$0xf]
        %v5251 = vld [vmem:[%s5239 + $0x58] sm:$0xf]
        %v5252 = vld [vmem:[%s5239 + $0x60] sm:$0xf]
        %v5253 = vld [vmem:[%s5239 + $0x68] sm:$0xf]
        %v5254 = vld [vmem:[%s5239 + $0x70] sm:$0xf]
        %v5255 = vld [vmem:[%s5239 + $0x78] sm:$0xf]
        %v5256 = vld [vmem:[%s5239 + $0x80] sm:$0xf]
        %v5257 = vld [vmem:[%s5239 + $0x88] sm:$0xf]
        %v5258 = vld [vmem:[%s5239 + $0x90] sm:$0xf]
        %v5259 = vld [vmem:[%s5239 + $0x98] sm:$0xf]
        %v5260 = vld [vmem:[%s5239 + $0xa0] sm:$0xf]
        %v5261 = vld [vmem:[%s5239 + $0xa8] sm:$0xf]
        %v5262 = vld [vmem:[%s5239 + $0xb0] sm:$0xf]
        %v5263 = vld [vmem:[%s5239 + $0xb8] sm:$0xf]
        %v5264 = vld [vmem:[%s5239 + $0xc0] sm:$0xf]
        %v5265 = vld [vmem:[%s5239 + $0xc8] sm:$0xf]
        %v5266 = vld [vmem:[%s5239 + $0xd0] sm:$0xf]
        %v5267 = vld [vmem:[%s5239 + $0xd8] sm:$0xf]
        %v5268 = vld [vmem:[%s5239 + $0xe0] sm:$0xf]
        %v5269 = vld [vmem:[%s5239 + $0xe8] sm:$0xf]
        %v5270 = vld [vmem:[%s5239 + $0xf0] sm:$0xf]
        %v5271 = vld [vmem:[%s5239 + $0xf8] sm:$0xf]
        %v5300 = vunpack.c.l.b16 %v5211
        %v5301 = vunpack.c.h.b16 %v5211
        %v5302 = vunpack.c.l.b16 %v5212
        %v5303 = vunpack.c.h.b16 %v5212
        %v5304 = vunpack.c.l.b16 %v5213
        %v5305 = vunpack.c.h.b16 %v5213
        %v5306 = vunpack.c.l.b16 %v5214
        %v5307 = vunpack.c.h.b16 %v5214
        %v5308 = vunpack.c.l.b16 %v5215
        %v5309 = vunpack.c.h.b16 %v5215
        %v5310 = vunpack.c.l.b16 %v5216
        %v5311 = vunpack.c.h.b16 %v5216
        %v5312 = vunpack.c.l.b16 %v5217
        %v5313 = vunpack.c.h.b16 %v5217
        %v5314 = vunpack.c.l.b16 %v5218
        %v5315 = vunpack.c.h.b16 %v5218
        %v5316 = vunpack.c.l.b16 %v5219
        %v5317 = vunpack.c.h.b16 %v5219
        %v5318 = vunpack.c.l.b16 %v5220
        %v5319 = vunpack.c.h.b16 %v5220
        %v5320 = vunpack.c.l.b16 %v5221
        %v5321 = vunpack.c.h.b16 %v5221
        %v5322 = vunpack.c.l.b16 %v5222
        %v5323 = vunpack.c.h.b16 %v5222
        %v5324 = vunpack.c.l.b16 %v5223
        %v5325 = vunpack.c.h.b16 %v5223
        %v5326 = vunpack.c.l.b16 %v5224
        %v5327 = vunpack.c.h.b16 %v5224
        %v5328 = vunpack.c.l.b16 %v5225
        %v5329 = vunpack.c.h.b16 %v5225
        %v5330 = vunpack.c.l.b16 %v5226
        %v5331 = vunpack.c.h.b16 %v5226
        %v5332 = vunpack.c.l.b16 %v5227
        %v5333 = vunpack.c.h.b16 %v5227
        %v5334 = vunpack.c.l.b16 %v5228
        %v5335 = vunpack.c.h.b16 %v5228
        %v5336 = vunpack.c.l.b16 %v5229
        %v5337 = vunpack.c.h.b16 %v5229
        %v5338 = vunpack.c.l.b16 %v5230
        %v5339 = vunpack.c.h.b16 %v5230
        %v5340 = vunpack.c.l.b16 %v5231
        %v5341 = vunpack.c.h.b16 %v5231
        %v5342 = vunpack.c.l.b16 %v5232
        %v5343 = vunpack.c.h.b16 %v5232
        %v5344 = vunpack.c.l.b16 %v5233
        %v5345 = vunpack.c.h.b16 %v5233
        %v5346 = vunpack.c.l.b16 %v5234
        %v5347 = vunpack.c.h.b16 %v5234
        %v5348 = vunpack.c.l.b16 %v5235
        %v5349 = vunpack.c.h.b16 %v5235
        %v5350 = vunpack.c.l.b16 %v5236
        %v5351 = vunpack.c.h.b16 %v5236
        %v5352 = vunpack.c.l.b16 %v5237
        %v5353 = vunpack.c.h.b16 %v5237
        %v5354 = vunpack.c.l.b16 %v5238
        %v5355 = vunpack.c.h.b16 %v5238
        %v5356 = vpack.c.b16 %v5302, %v5300
        %v5357 = vpack.c.b16 %v5303, %v5301
        %v5358 = vpack.c.b16 %v5306, %v5304
        %v5359 = vpack.c.b16 %v5307, %v5305
        %v5360 = vpack.c.b16 %v5310, %v5308
        %v5361 = vpack.c.b16 %v5311, %v5309
        %v5362 = vpack.c.b16 %v5314, %v5312
        %v5363 = vpack.c.b16 %v5315, %v5313
        %v5364 = vpack.c.b16 %v5318, %v5316
        %v5365 = vpack.c.b16 %v5319, %v5317
        %v5366 = vpack.c.b16 %v5322, %v5320
        %v5367 = vpack.c.b16 %v5323, %v5321
        %v5368 = vpack.c.b16 %v5326, %v5324
        %v5369 = vpack.c.b16 %v5327, %v5325
        %v5370 = vpack.c.b16 %v5330, %v5328
        %v5371 = vpack.c.b16 %v5331, %v5329
        %v5372 = vpack.c.b16 %v5334, %v5332
        %v5373 = vpack.c.b16 %v5335, %v5333
        %v5374 = vpack.c.b16 %v5338, %v5336
        %v5375 = vpack.c.b16 %v5339, %v5337
        %v5376 = vpack.c.b16 %v5342, %v5340
        %v5377 = vpack.c.b16 %v5343, %v5341
        %v5378 = vpack.c.b16 %v5346, %v5344
        %v5379 = vpack.c.b16 %v5347, %v5345
        %v5380 = vpack.c.b16 %v5350, %v5348
        %v5381 = vpack.c.b16 %v5351, %v5349
        %v5382 = vpack.c.b16 %v5354, %v5352
        %v5383 = vpack.c.b16 %v5355, %v5353
        %v5444 = vunpack.c.l.b16 %v5240
        %v5445 = vunpack.c.l.b16 %v5241
        %v5446 = vunpack.c.l.b16 %v5242
        %v5447 = vunpack.c.l.b16 %v5243
        %v5448 = vunpack.c.l.b16 %v5244
        %v5449 = vunpack.c.l.b16 %v5245
        %v5450 = vunpack.c.l.b16 %v5246
        %v5451 = vunpack.c.l.b16 %v5247
        %v5452 = vunpack.c.l.b16 %v5248
        %v5453 = vunpack.c.l.b16 %v5249
        %v5454 = vunpack.c.l.b16 %v5250
        %v5455 = vunpack.c.l.b16 %v5251
        %v5456 = vunpack.c.l.b16 %v5252
        %v5457 = vunpack.c.l.b16 %v5253
        %v5458 = vunpack.c.l.b16 %v5254
        %v5459 = vunpack.c.l.b16 %v5255
        %v5460 = vunpack.c.l.b16 %v5256
        %v5461 = vunpack.c.l.b16 %v5257
        %v5462 = vunpack.c.l.b16 %v5258
        %v5463 = vunpack.c.l.b16 %v5259
        %v5464 = vunpack.c.l.b16 %v5260
        %v5465 = vunpack.c.l.b16 %v5261
        %v5466 = vunpack.c.l.b16 %v5262
        %v5467 = vunpack.c.l.b16 %v5263
        %v5468 = vunpack.c.l.b16 %v5264
        %v5469 = vunpack.c.l.b16 %v5265
        %v5470 = vunpack.c.l.b16 %v5266
        %v5471 = vunpack.c.l.b16 %v5267
        %v5472 = vunpack.c.l.b16 %v5268
        %v5473 = vunpack.c.l.b16 %v5269
        %v5474 = vunpack.c.l.b16 %v5270
        %v5475 = vunpack.c.l.b16 %v5271
        %v5476 = vpack.c.b16 %v5445, %v5444
        %v5477 = vpack.c.b16 %v5447, %v5446
        %v5478 = vpack.c.b16 %v5449, %v5448
        %v5479 = vpack.c.b16 %v5451, %v5450
        %v5480 = vpack.c.b16 %v5453, %v5452
        %v5481 = vpack.c.b16 %v5455, %v5454
        %v5482 = vpack.c.b16 %v5457, %v5456
        %v5483 = vpack.c.b16 %v5459, %v5458
        %v5484 = vpack.c.b16 %v5461, %v5460
        %v5485 = vpack.c.b16 %v5463, %v5462
        %v5486 = vpack.c.b16 %v5465, %v5464
        %v5487 = vpack.c.b16 %v5467, %v5466
        %v5488 = vpack.c.b16 %v5469, %v5468
        %v5489 = vpack.c.b16 %v5471, %v5470
        %v5490 = vpack.c.b16 %v5473, %v5472
        %v5491 = vpack.c.b16 %v5475, %v5474
        %5508 = vmatprep.subr.bf16.mxu0 0
        %5509 = vmatpush1.bf16.msra.mxu0 %v5483
        %5510 = vmatprep.subr.bf16.mxu0 0
        %5511 = vmatpush1.bf16.msra.mxu0 %v5482
        %5512 = vmatprep.subr.bf16.mxu0 0
        %5513 = vmatpush1.bf16.msra.mxu0 %v5481
        %5514 = vmatprep.subr.bf16.mxu0 0
        %5515 = vmatpush1.bf16.msra.mxu0 %v5480
        %5516 = vmatprep.subr.bf16.mxu0 0
        %5517 = vmatpush1.bf16.msra.mxu0 %v5479
        %5518 = vmatprep.subr.bf16.mxu0 0
        %5519 = vmatpush1.bf16.msra.mxu0 %v5478
        %5520 = vmatprep.subr.bf16.mxu0 0
        %5521 = vmatpush1.bf16.msra.mxu0 %v5477
        %5522 = vmatprep.subr.bf16.mxu0 0
        %5523 = vmatpush1.bf16.msra.mxu0 %v5476
        %5524 = vmatprep.subr.bf16.mxu0 0
        %5525 = vmatpush2.bf16.msra.mxu0 %v5491
        %5526 = vmatprep.subr.bf16.mxu0 0
        %5527 = vmatpush2.bf16.msra.mxu0 %v5490
        %5528 = vmatprep.subr.bf16.mxu0 0
        %5529 = vmatpush2.bf16.msra.mxu0 %v5489
        %5530 = vmatprep.subr.bf16.mxu0 0
        %5531 = vmatpush2.bf16.msra.mxu0 %v5488
        %5532 = vmatprep.subr.bf16.mxu0 0
        %5533 = vmatpush2.bf16.msra.mxu0 %v5487
        %5534 = vmatprep.subr.bf16.mxu0 0
        %5535 = vmatpush2.bf16.msra.mxu0 %v5486
        %5536 = vmatprep.subr.bf16.mxu0 0
        %5537 = vmatpush2.bf16.msra.mxu0 %v5485
        %5538 = vmatprep.subr.bf16.mxu0 0
        %5539 = vmatpush2.bf16.msra.mxu0 %v5484
        %5540 = vmatprep.mubr.bf16.mxu0 %v5357
        %5541 = vmatmul.mubr.bf16.gmra.mxu0 %v5356
        %v5542 = vpop.f32.mrf.mxu0
        %v5543 = vadd.f32 0.0, %v5542
        %v5544 = vpop.f32.mrf.mxu0
        %v5545 = vpop.f32.mrf.mxu0
        %v5546 = vadd.f32 0.0, %v5545
        %v5547 = vpop.f32.mrf.mxu0
        %5548 = vmatprep.mubr.bf16.mxu0 %v5359
        %5549 = vmatmul.mubr.bf16.gmra.mxu0 %v5358
        %v5550 = vpop.f32.mrf.mxu0
        %v5551 = vadd.f32 0.0, %v5550
        %v5552 = vpop.f32.mrf.mxu0
        %v5553 = vpop.f32.mrf.mxu0
        %v5554 = vadd.f32 0.0, %v5553
        %v5555 = vpop.f32.mrf.mxu0
        %5556 = vmatprep.mubr.bf16.mxu0 %v5361
        %5557 = vmatmul.mubr.bf16.gmra.mxu0 %v5360
        %v5558 = vpop.f32.mrf.mxu0
        %v5559 = vadd.f32 0.0, %v5558
        %v5560 = vpop.f32.mrf.mxu0
        %v5561 = vpop.f32.mrf.mxu0
        %v5562 = vadd.f32 0.0, %v5561
        %v5563 = vpop.f32.mrf.mxu0
        %5564 = vmatprep.mubr.bf16.mxu0 %v5363
        %5565 = vmatmul.mubr.bf16.gmra.mxu0 %v5362
        %v5566 = vpop.f32.mrf.mxu0
        %v5567 = vadd.f32 0.0, %v5566
        %v5568 = vpop.f32.mrf.mxu0
        %v5569 = vpop.f32.mrf.mxu0
        %v5570 = vadd.f32 0.0, %v5569
        %v5571 = vpop.f32.mrf.mxu0
        %5572 = vmatprep.mubr.bf16.mxu0 %v5365
        %5573 = vmatmul.mubr.bf16.gmra.mxu0 %v5364
        %v5574 = vpop.f32.mrf.mxu0
        %v5575 = vadd.f32 0.0, %v5574
        %v5576 = vpop.f32.mrf.mxu0
        %v5577 = vpop.f32.mrf.mxu0
        %v5578 = vadd.f32 0.0, %v5577
        %v5579 = vpop.f32.mrf.mxu0
        %5580 = vmatprep.mubr.bf16.mxu0 %v5367
        %5581 = vmatmul.mubr.bf16.gmra.mxu0 %v5366
        %v5582 = vpop.f32.mrf.mxu0
        %v5583 = vadd.f32 0.0, %v5582
        %v5584 = vpop.f32.mrf.mxu0
        %v5585 = vpop.f32.mrf.mxu0
        %v5586 = vadd.f32 0.0, %v5585
        %v5587 = vpop.f32.mrf.mxu0
        %5588 = vmatprep.mubr.bf16.mxu0 %v5369
        %5589 = vmatmul.mubr.bf16.gmra.mxu0 %v5368
        %v5590 = vpop.f32.mrf.mxu0
        %v5591 = vadd.f32 0.0, %v5590
        %v5592 = vpop.f32.mrf.mxu0
        %v5593 = vpop.f32.mrf.mxu0
        %v5594 = vadd.f32 0.0, %v5593
        %v5595 = vpop.f32.mrf.mxu0
        %5596 = vmatprep.mubr.bf16.mxu0 %v5371
        %5597 = vmatmul.mubr.bf16.gmra.mxu0 %v5370
        %v5598 = vpop.f32.mrf.mxu0
        %v5599 = vadd.f32 0.0, %v5598
        %v5600 = vpop.f32.mrf.mxu0
        %v5601 = vpop.f32.mrf.mxu0
        %v5602 = vadd.f32 0.0, %v5601
        %v5603 = vpop.f32.mrf.mxu0
        %5604 = vmatprep.mubr.bf16.mxu0 %v5373
        %5605 = vmatmul.mubr.bf16.gmra.mxu0 %v5372
        %v5606 = vpop.f32.mrf.mxu0
        %v5607 = vadd.f32 0.0, %v5606
        %v5608 = vpop.f32.mrf.mxu0
        %v5609 = vpop.f32.mrf.mxu0
        %v5610 = vadd.f32 0.0, %v5609
        %v5611 = vpop.f32.mrf.mxu0
        %5612 = vmatprep.mubr.bf16.mxu0 %v5375
        %5613 = vmatmul.mubr.bf16.gmra.mxu0 %v5374
        %v5614 = vpop.f32.mrf.mxu0
        %v5615 = vadd.f32 0.0, %v5614
        %v5616 = vpop.f32.mrf.mxu0
        %v5617 = vpop.f32.mrf.mxu0
        %v5618 = vadd.f32 0.0, %v5617
        %v5619 = vpop.f32.mrf.mxu0
        %5620 = vmatprep.mubr.bf16.mxu0 %v5377
        %5621 = vmatmul.mubr.bf16.gmra.mxu0 %v5376
        %v5622 = vpop.f32.mrf.mxu0
        %v5623 = vadd.f32 0.0, %v5622
        %v5624 = vpop.f32.mrf.mxu0
        %v5625 = vpop.f32.mrf.mxu0
        %v5626 = vadd.f32 0.0, %v5625
        %v5627 = vpop.f32.mrf.mxu0
        %5628 = vmatprep.mubr.bf16.mxu0 %v5379
        %5629 = vmatmul.mubr.bf16.gmra.mxu0 %v5378
        %v5630 = vpop.f32.mrf.mxu0
        %v5631 = vadd.f32 0.0, %v5630
        %v5632 = vpop.f32.mrf.mxu0
        %v5633 = vpop.f32.mrf.mxu0
        %v5634 = vadd.f32 0.0, %v5633
        %v5635 = vpop.f32.mrf.mxu0
        %5636 = vmatprep.mubr.bf16.mxu0 %v5381
        %5637 = vmatmul.mubr.bf16.gmra.mxu0 %v5380
        %v5638 = vpop.f32.mrf.mxu0
        %v5639 = vadd.f32 0.0, %v5638
        %v5640 = vpop.f32.mrf.mxu0
        %v5641 = vpop.f32.mrf.mxu0
        %v5642 = vadd.f32 0.0, %v5641
        %v5643 = vpop.f32.mrf.mxu0
        %5644 = vmatprep.mubr.bf16.mxu0 %v5383
        %5645 = vmatmul.mubr.bf16.gmra.mxu0 %v5382
        %v5646 = vpop.f32.mrf.mxu0
        %v5647 = vadd.f32 0.0, %v5646
        %v5648 = vpop.f32.mrf.mxu0
        %v5649 = vpop.f32.mrf.mxu0
        %v5650 = vadd.f32 0.0, %v5649
        %v5651 = vpop.f32.mrf.mxu0
        %5652 = vdwg.mxu0
        %v5653 = vadd.f32 %v5183, %v5543
        %v5654 = vadd.f32 %v5184, %v5546
        %v5655 = vadd.f32 %v5185, %v5551
        %v5656 = vadd.f32 %v5186, %v5554
        %v5657 = vadd.f32 %v5187, %v5559
        %v5658 = vadd.f32 %v5188, %v5562
        %v5659 = vadd.f32 %v5189, %v5567
        %v5660 = vadd.f32 %v5190, %v5570
        %v5661 = vadd.f32 %v5191, %v5575
        %v5662 = vadd.f32 %v5192, %v5578
        %v5663 = vadd.f32 %v5193, %v5583
        %v5664 = vadd.f32 %v5194, %v5586
        %v5665 = vadd.f32 %v5195, %v5591
        %v5666 = vadd.f32 %v5196, %v5594
        %v5667 = vadd.f32 %v5197, %v5599
        %v5668 = vadd.f32 %v5198, %v5602
        %v5669 = vadd.f32 %v5199, %v5607
        %v5670 = vadd.f32 %v5200, %v5610
        %v5671 = vadd.f32 %v5201, %v5615
        %v5672 = vadd.f32 %v5202, %v5618
        %v5673 = vadd.f32 %v5203, %v5623
        %v5674 = vadd.f32 %v5204, %v5626
        %v5675 = vadd.f32 %v5205, %v5631
        %v5676 = vadd.f32 %v5206, %v5634
        %v5677 = vadd.f32 %v5207, %v5639
        %v5678 = vadd.f32 %v5208, %v5642
        %v5679 = vadd.f32 %v5209, %v5647
        %v5680 = vadd.f32 %v5210, %v5650
        %v5681 = vld [vmem:[#allocation4 + $0x20] sm:$0xff]
        %v5682 = vld [vmem:[#allocation4 + $0x28] sm:$0xff]
        %v5683 = vld [vmem:[#allocation4 + $0x30] sm:$0xff]
        %v5684 = vld [vmem:[#allocation4 + $0x38] sm:$0xff]
        %v5685 = vld [vmem:[#allocation4 + $0x40] sm:$0xff]
        %v5686 = vld [vmem:[#allocation4 + $0x48] sm:$0xff]
        %v5687 = vld [vmem:[#allocation4 + $0x50] sm:$0xff]
        %v5688 = vld [vmem:[#allocation4 + $0x58] sm:$0xff]
        %v5689 = vld [vmem:[#allocation4 + $0x60] sm:$0xff]
        %v5690 = vld [vmem:[#allocation4 + $0x68] sm:$0xff]
        %v5691 = vld [vmem:[#allocation4 + $0x70] sm:$0xff]
        %v5692 = vld [vmem:[#allocation4 + $0x78] sm:$0xff]
        %v5693 = vld [vmem:[#allocation4 + $0x80] sm:$0xff]
        %v5694 = vld [vmem:[#allocation4 + $0x88] sm:$0xff]
        %v5695 = vld [vmem:[#allocation4 + $0x90] sm:$0xff]
        %v5696 = vld [vmem:[#allocation4 + $0x98] sm:$0xff]
        %v5697 = vld [vmem:[#allocation4 + $0xa0] sm:$0xff]
        %v5698 = vld [vmem:[#allocation4 + $0xa8] sm:$0xff]
        %v5699 = vld [vmem:[#allocation4 + $0xb0] sm:$0xff]
        %v5700 = vld [vmem:[#allocation4 + $0xb8] sm:$0xff]
        %v5701 = vld [vmem:[#allocation4 + $0xc0] sm:$0xff]
        %v5702 = vld [vmem:[#allocation4 + $0xc8] sm:$0xff]
        %v5703 = vld [vmem:[#allocation4 + $0xd0] sm:$0xff]
        %v5704 = vld [vmem:[#allocation4 + $0xd8] sm:$0xff]
        %v5705 = vld [vmem:[#allocation4 + $0xe0] sm:$0xff]
        %v5706 = vld [vmem:[#allocation4 + $0xe8] sm:$0xff]
        %v5707 = vld [vmem:[#allocation4 + $0xf0] sm:$0xff]
        %v5708 = vld [vmem:[#allocation4 + $0xf8] sm:$0xff]
        %s5709 = scalar_lea.vmem [#allocation13], 2048
        %v5710 = vld [vmem:[%s5709] sm:$0xf]
        %v5711 = vld [vmem:[%s5709 + $0x8] sm:$0xf]
        %v5712 = vld [vmem:[%s5709 + $0x10] sm:$0xf]
        %v5713 = vld [vmem:[%s5709 + $0x18] sm:$0xf]
        %v5714 = vld [vmem:[%s5709 + $0x20] sm:$0xf]
        %v5715 = vld [vmem:[%s5709 + $0x28] sm:$0xf]
        %v5716 = vld [vmem:[%s5709 + $0x30] sm:$0xf]
        %v5717 = vld [vmem:[%s5709 + $0x38] sm:$0xf]
        %v5718 = vld [vmem:[%s5709 + $0x40] sm:$0xf]
        %v5719 = vld [vmem:[%s5709 + $0x48] sm:$0xf]
        %v5720 = vld [vmem:[%s5709 + $0x50] sm:$0xf]
        %v5721 = vld [vmem:[%s5709 + $0x58] sm:$0xf]
        %v5722 = vld [vmem:[%s5709 + $0x60] sm:$0xf]
        %v5723 = vld [vmem:[%s5709 + $0x68] sm:$0xf]
        %v5724 = vld [vmem:[%s5709 + $0x70] sm:$0xf]
        %v5725 = vld [vmem:[%s5709 + $0x78] sm:$0xf]
        %v5726 = vld [vmem:[%s5709 + $0x80] sm:$0xf]
        %v5727 = vld [vmem:[%s5709 + $0x88] sm:$0xf]
        %v5728 = vld [vmem:[%s5709 + $0x90] sm:$0xf]
        %v5729 = vld [vmem:[%s5709 + $0x98] sm:$0xf]
        %v5730 = vld [vmem:[%s5709 + $0xa0] sm:$0xf]
        %v5731 = vld [vmem:[%s5709 + $0xa8] sm:$0xf]
        %v5732 = vld [vmem:[%s5709 + $0xb0] sm:$0xf]
        %v5733 = vld [vmem:[%s5709 + $0xb8] sm:$0xf]
        %v5734 = vld [vmem:[%s5709 + $0xc0] sm:$0xf]
        %v5735 = vld [vmem:[%s5709 + $0xc8] sm:$0xf]
        %v5736 = vld [vmem:[%s5709 + $0xd0] sm:$0xf]
        %v5737 = vld [vmem:[%s5709 + $0xd8] sm:$0xf]
        %v5738 = vld [vmem:[%s5709 + $0xe0] sm:$0xf]
        %v5739 = vld [vmem:[%s5709 + $0xe8] sm:$0xf]
        %v5740 = vld [vmem:[%s5709 + $0xf0] sm:$0xf]
        %v5741 = vld [vmem:[%s5709 + $0xf8] sm:$0xf]
        %v5770 = vunpack.c.l.b16 %v5681
        %v5771 = vunpack.c.h.b16 %v5681
        %v5772 = vunpack.c.l.b16 %v5682
        %v5773 = vunpack.c.h.b16 %v5682
        %v5774 = vunpack.c.l.b16 %v5683
        %v5775 = vunpack.c.h.b16 %v5683
        %v5776 = vunpack.c.l.b16 %v5684
        %v5777 = vunpack.c.h.b16 %v5684
        %v5778 = vunpack.c.l.b16 %v5685
        %v5779 = vunpack.c.h.b16 %v5685
        %v5780 = vunpack.c.l.b16 %v5686
        %v5781 = vunpack.c.h.b16 %v5686
        %v5782 = vunpack.c.l.b16 %v5687
        %v5783 = vunpack.c.h.b16 %v5687
        %v5784 = vunpack.c.l.b16 %v5688
        %v5785 = vunpack.c.h.b16 %v5688
        %v5786 = vunpack.c.l.b16 %v5689
        %v5787 = vunpack.c.h.b16 %v5689
        %v5788 = vunpack.c.l.b16 %v5690
        %v5789 = vunpack.c.h.b16 %v5690
        %v5790 = vunpack.c.l.b16 %v5691
        %v5791 = vunpack.c.h.b16 %v5691
        %v5792 = vunpack.c.l.b16 %v5692
        %v5793 = vunpack.c.h.b16 %v5692
        %v5794 = vunpack.c.l.b16 %v5693
        %v5795 = vunpack.c.h.b16 %v5693
        %v5796 = vunpack.c.l.b16 %v5694
        %v5797 = vunpack.c.h.b16 %v5694
        %v5798 = vunpack.c.l.b16 %v5695
        %v5799 = vunpack.c.h.b16 %v5695
        %v5800 = vunpack.c.l.b16 %v5696
        %v5801 = vunpack.c.h.b16 %v5696
        %v5802 = vunpack.c.l.b16 %v5697
        %v5803 = vunpack.c.h.b16 %v5697
        %v5804 = vunpack.c.l.b16 %v5698
        %v5805 = vunpack.c.h.b16 %v5698
        %v5806 = vunpack.c.l.b16 %v5699
        %v5807 = vunpack.c.h.b16 %v5699
        %v5808 = vunpack.c.l.b16 %v5700
        %v5809 = vunpack.c.h.b16 %v5700
        %v5810 = vunpack.c.l.b16 %v5701
        %v5811 = vunpack.c.h.b16 %v5701
        %v5812 = vunpack.c.l.b16 %v5702
        %v5813 = vunpack.c.h.b16 %v5702
        %v5814 = vunpack.c.l.b16 %v5703
        %v5815 = vunpack.c.h.b16 %v5703
        %v5816 = vunpack.c.l.b16 %v5704
        %v5817 = vunpack.c.h.b16 %v5704
        %v5818 = vunpack.c.l.b16 %v5705
        %v5819 = vunpack.c.h.b16 %v5705
        %v5820 = vunpack.c.l.b16 %v5706
        %v5821 = vunpack.c.h.b16 %v5706
        %v5822 = vunpack.c.l.b16 %v5707
        %v5823 = vunpack.c.h.b16 %v5707
        %v5824 = vunpack.c.l.b16 %v5708
        %v5825 = vunpack.c.h.b16 %v5708
        %v5826 = vpack.c.b16 %v5772, %v5770
        %v5827 = vpack.c.b16 %v5773, %v5771
        %v5828 = vpack.c.b16 %v5776, %v5774
        %v5829 = vpack.c.b16 %v5777, %v5775
        %v5830 = vpack.c.b16 %v5780, %v5778
        %v5831 = vpack.c.b16 %v5781, %v5779
        %v5832 = vpack.c.b16 %v5784, %v5782
        %v5833 = vpack.c.b16 %v5785, %v5783
        %v5834 = vpack.c.b16 %v5788, %v5786
        %v5835 = vpack.c.b16 %v5789, %v5787
        %v5836 = vpack.c.b16 %v5792, %v5790
        %v5837 = vpack.c.b16 %v5793, %v5791
        %v5838 = vpack.c.b16 %v5796, %v5794
        %v5839 = vpack.c.b16 %v5797, %v5795
        %v5840 = vpack.c.b16 %v5800, %v5798
        %v5841 = vpack.c.b16 %v5801, %v5799
        %v5842 = vpack.c.b16 %v5804, %v5802
        %v5843 = vpack.c.b16 %v5805, %v5803
        %v5844 = vpack.c.b16 %v5808, %v5806
        %v5845 = vpack.c.b16 %v5809, %v5807
        %v5846 = vpack.c.b16 %v5812, %v5810
        %v5847 = vpack.c.b16 %v5813, %v5811
        %v5848 = vpack.c.b16 %v5816, %v5814
        %v5849 = vpack.c.b16 %v5817, %v5815
        %v5850 = vpack.c.b16 %v5820, %v5818
        %v5851 = vpack.c.b16 %v5821, %v5819
        %v5852 = vpack.c.b16 %v5824, %v5822
        %v5853 = vpack.c.b16 %v5825, %v5823
        %v5914 = vunpack.c.l.b16 %v5710
        %v5915 = vunpack.c.l.b16 %v5711
        %v5916 = vunpack.c.l.b16 %v5712
        %v5917 = vunpack.c.l.b16 %v5713
        %v5918 = vunpack.c.l.b16 %v5714
        %v5919 = vunpack.c.l.b16 %v5715
        %v5920 = vunpack.c.l.b16 %v5716
        %v5921 = vunpack.c.l.b16 %v5717
        %v5922 = vunpack.c.l.b16 %v5718
        %v5923 = vunpack.c.l.b16 %v5719
        %v5924 = vunpack.c.l.b16 %v5720
        %v5925 = vunpack.c.l.b16 %v5721
        %v5926 = vunpack.c.l.b16 %v5722
        %v5927 = vunpack.c.l.b16 %v5723
        %v5928 = vunpack.c.l.b16 %v5724
        %v5929 = vunpack.c.l.b16 %v5725
        %v5930 = vunpack.c.l.b16 %v5726
        %v5931 = vunpack.c.l.b16 %v5727
        %v5932 = vunpack.c.l.b16 %v5728
        %v5933 = vunpack.c.l.b16 %v5729
        %v5934 = vunpack.c.l.b16 %v5730
        %v5935 = vunpack.c.l.b16 %v5731
        %v5936 = vunpack.c.l.b16 %v5732
        %v5937 = vunpack.c.l.b16 %v5733
        %v5938 = vunpack.c.l.b16 %v5734
        %v5939 = vunpack.c.l.b16 %v5735
        %v5940 = vunpack.c.l.b16 %v5736
        %v5941 = vunpack.c.l.b16 %v5737
        %v5942 = vunpack.c.l.b16 %v5738
        %v5943 = vunpack.c.l.b16 %v5739
        %v5944 = vunpack.c.l.b16 %v5740
        %v5945 = vunpack.c.l.b16 %v5741
        %v5946 = vpack.c.b16 %v5915, %v5914
        %v5947 = vpack.c.b16 %v5917, %v5916
        %v5948 = vpack.c.b16 %v5919, %v5918
        %v5949 = vpack.c.b16 %v5921, %v5920
        %v5950 = vpack.c.b16 %v5923, %v5922
        %v5951 = vpack.c.b16 %v5925, %v5924
        %v5952 = vpack.c.b16 %v5927, %v5926
        %v5953 = vpack.c.b16 %v5929, %v5928
        %v5954 = vpack.c.b16 %v5931, %v5930
        %v5955 = vpack.c.b16 %v5933, %v5932
        %v5956 = vpack.c.b16 %v5935, %v5934
        %v5957 = vpack.c.b16 %v5937, %v5936
        %v5958 = vpack.c.b16 %v5939, %v5938
        %v5959 = vpack.c.b16 %v5941, %v5940
        %v5960 = vpack.c.b16 %v5943, %v5942
        %v5961 = vpack.c.b16 %v5945, %v5944
        %5978 = vmatprep.subr.bf16.mxu0 0
        %5979 = vmatpush1.bf16.msra.mxu0 %v5953
        %5980 = vmatprep.subr.bf16.mxu0 0
        %5981 = vmatpush1.bf16.msra.mxu0 %v5952
        %5982 = vmatprep.subr.bf16.mxu0 0
        %5983 = vmatpush1.bf16.msra.mxu0 %v5951
        %5984 = vmatprep.subr.bf16.mxu0 0
        %5985 = vmatpush1.bf16.msra.mxu0 %v5950
        %5986 = vmatprep.subr.bf16.mxu0 0
        %5987 = vmatpush1.bf16.msra.mxu0 %v5949
        %5988 = vmatprep.subr.bf16.mxu0 0
        %5989 = vmatpush1.bf16.msra.mxu0 %v5948
        %5990 = vmatprep.subr.bf16.mxu0 0
        %5991 = vmatpush1.bf16.msra.mxu0 %v5947
        %5992 = vmatprep.subr.bf16.mxu0 0
        %5993 = vmatpush1.bf16.msra.mxu0 %v5946
        %5994 = vmatprep.subr.bf16.mxu0 0
        %5995 = vmatpush2.bf16.msra.mxu0 %v5961
        %5996 = vmatprep.subr.bf16.mxu0 0
        %5997 = vmatpush2.bf16.msra.mxu0 %v5960
        %5998 = vmatprep.subr.bf16.mxu0 0
        %5999 = vmatpush2.bf16.msra.mxu0 %v5959
        %6000 = vmatprep.subr.bf16.mxu0 0
        %6001 = vmatpush2.bf16.msra.mxu0 %v5958
        %6002 = vmatprep.subr.bf16.mxu0 0
        %6003 = vmatpush2.bf16.msra.mxu0 %v5957
        %6004 = vmatprep.subr.bf16.mxu0 0
        %6005 = vmatpush2.bf16.msra.mxu0 %v5956
        %6006 = vmatprep.subr.bf16.mxu0 0
        %6007 = vmatpush2.bf16.msra.mxu0 %v5955
        %6008 = vmatprep.subr.bf16.mxu0 0
        %6009 = vmatpush2.bf16.msra.mxu0 %v5954
        %6010 = vmatprep.mubr.bf16.mxu0 %v5827
        %6011 = vmatmul.mubr.bf16.gmra.mxu0 %v5826
        %v6012 = vpop.f32.mrf.mxu0
        %v6013 = vadd.f32 0.0, %v6012
        %v6014 = vpop.f32.mrf.mxu0
        %v6015 = vpop.f32.mrf.mxu0
        %v6016 = vadd.f32 0.0, %v6015
        %v6017 = vpop.f32.mrf.mxu0
        %6018 = vmatprep.mubr.bf16.mxu0 %v5829
        %6019 = vmatmul.mubr.bf16.gmra.mxu0 %v5828
        %v6020 = vpop.f32.mrf.mxu0
        %v6021 = vadd.f32 0.0, %v6020
        %v6022 = vpop.f32.mrf.mxu0
        %v6023 = vpop.f32.mrf.mxu0
        %v6024 = vadd.f32 0.0, %v6023
        %v6025 = vpop.f32.mrf.mxu0
        %6026 = vmatprep.mubr.bf16.mxu0 %v5831
        %6027 = vmatmul.mubr.bf16.gmra.mxu0 %v5830
        %v6028 = vpop.f32.mrf.mxu0
        %v6029 = vadd.f32 0.0, %v6028
        %v6030 = vpop.f32.mrf.mxu0
        %v6031 = vpop.f32.mrf.mxu0
        %v6032 = vadd.f32 0.0, %v6031
        %v6033 = vpop.f32.mrf.mxu0
        %6034 = vmatprep.mubr.bf16.mxu0 %v5833
        %6035 = vmatmul.mubr.bf16.gmra.mxu0 %v5832
        %v6036 = vpop.f32.mrf.mxu0
        %v6037 = vadd.f32 0.0, %v6036
        %v6038 = vpop.f32.mrf.mxu0
        %v6039 = vpop.f32.mrf.mxu0
        %v6040 = vadd.f32 0.0, %v6039
        %v6041 = vpop.f32.mrf.mxu0
        %6042 = vmatprep.mubr.bf16.mxu0 %v5835
        %6043 = vmatmul.mubr.bf16.gmra.mxu0 %v5834
        %v6044 = vpop.f32.mrf.mxu0
        %v6045 = vadd.f32 0.0, %v6044
        %v6046 = vpop.f32.mrf.mxu0
        %v6047 = vpop.f32.mrf.mxu0
        %v6048 = vadd.f32 0.0, %v6047
        %v6049 = vpop.f32.mrf.mxu0
        %6050 = vmatprep.mubr.bf16.mxu0 %v5837
        %6051 = vmatmul.mubr.bf16.gmra.mxu0 %v5836
        %v6052 = vpop.f32.mrf.mxu0
        %v6053 = vadd.f32 0.0, %v6052
        %v6054 = vpop.f32.mrf.mxu0
        %v6055 = vpop.f32.mrf.mxu0
        %v6056 = vadd.f32 0.0, %v6055
        %v6057 = vpop.f32.mrf.mxu0
        %6058 = vmatprep.mubr.bf16.mxu0 %v5839
        %6059 = vmatmul.mubr.bf16.gmra.mxu0 %v5838
        %v6060 = vpop.f32.mrf.mxu0
        %v6061 = vadd.f32 0.0, %v6060
        %v6062 = vpop.f32.mrf.mxu0
        %v6063 = vpop.f32.mrf.mxu0
        %v6064 = vadd.f32 0.0, %v6063
        %v6065 = vpop.f32.mrf.mxu0
        %6066 = vmatprep.mubr.bf16.mxu0 %v5841
        %6067 = vmatmul.mubr.bf16.gmra.mxu0 %v5840
        %v6068 = vpop.f32.mrf.mxu0
        %v6069 = vadd.f32 0.0, %v6068
        %v6070 = vpop.f32.mrf.mxu0
        %v6071 = vpop.f32.mrf.mxu0
        %v6072 = vadd.f32 0.0, %v6071
        %v6073 = vpop.f32.mrf.mxu0
        %6074 = vmatprep.mubr.bf16.mxu0 %v5843
        %6075 = vmatmul.mubr.bf16.gmra.mxu0 %v5842
        %v6076 = vpop.f32.mrf.mxu0
        %v6077 = vadd.f32 0.0, %v6076
        %v6078 = vpop.f32.mrf.mxu0
        %v6079 = vpop.f32.mrf.mxu0
        %v6080 = vadd.f32 0.0, %v6079
        %v6081 = vpop.f32.mrf.mxu0
        %6082 = vmatprep.mubr.bf16.mxu0 %v5845
        %6083 = vmatmul.mubr.bf16.gmra.mxu0 %v5844
        %v6084 = vpop.f32.mrf.mxu0
        %v6085 = vadd.f32 0.0, %v6084
        %v6086 = vpop.f32.mrf.mxu0
        %v6087 = vpop.f32.mrf.mxu0
        %v6088 = vadd.f32 0.0, %v6087
        %v6089 = vpop.f32.mrf.mxu0
        %6090 = vmatprep.mubr.bf16.mxu0 %v5847
        %6091 = vmatmul.mubr.bf16.gmra.mxu0 %v5846
        %v6092 = vpop.f32.mrf.mxu0
        %v6093 = vadd.f32 0.0, %v6092
        %v6094 = vpop.f32.mrf.mxu0
        %v6095 = vpop.f32.mrf.mxu0
        %v6096 = vadd.f32 0.0, %v6095
        %v6097 = vpop.f32.mrf.mxu0
        %6098 = vmatprep.mubr.bf16.mxu0 %v5849
        %6099 = vmatmul.mubr.bf16.gmra.mxu0 %v5848
        %v6100 = vpop.f32.mrf.mxu0
        %v6101 = vadd.f32 0.0, %v6100
        %v6102 = vpop.f32.mrf.mxu0
        %v6103 = vpop.f32.mrf.mxu0
        %v6104 = vadd.f32 0.0, %v6103
        %v6105 = vpop.f32.mrf.mxu0
        %6106 = vmatprep.mubr.bf16.mxu0 %v5851
        %6107 = vmatmul.mubr.bf16.gmra.mxu0 %v5850
        %v6108 = vpop.f32.mrf.mxu0
        %v6109 = vadd.f32 0.0, %v6108
        %v6110 = vpop.f32.mrf.mxu0
        %v6111 = vpop.f32.mrf.mxu0
        %v6112 = vadd.f32 0.0, %v6111
        %v6113 = vpop.f32.mrf.mxu0
        %6114 = vmatprep.mubr.bf16.mxu0 %v5853
        %6115 = vmatmul.mubr.bf16.gmra.mxu0 %v5852
        %v6116 = vpop.f32.mrf.mxu0
        %v6117 = vadd.f32 0.0, %v6116
        %v6118 = vpop.f32.mrf.mxu0
        %v6119 = vpop.f32.mrf.mxu0
        %v6120 = vadd.f32 0.0, %v6119
        %v6121 = vpop.f32.mrf.mxu0
        %6122 = vdwg.mxu0
        %v6123 = vadd.f32 %v5653, %v6013
        %v6124 = vadd.f32 %v5654, %v6016
        %v6125 = vadd.f32 %v5655, %v6021
        %v6126 = vadd.f32 %v5656, %v6024
        %v6127 = vadd.f32 %v5657, %v6029
        %v6128 = vadd.f32 %v5658, %v6032
        %v6129 = vadd.f32 %v5659, %v6037
        %v6130 = vadd.f32 %v5660, %v6040
        %v6131 = vadd.f32 %v5661, %v6045
        %v6132 = vadd.f32 %v5662, %v6048
        %v6133 = vadd.f32 %v5663, %v6053
        %v6134 = vadd.f32 %v5664, %v6056
        %v6135 = vadd.f32 %v5665, %v6061
        %v6136 = vadd.f32 %v5666, %v6064
        %v6137 = vadd.f32 %v5667, %v6069
        %v6138 = vadd.f32 %v5668, %v6072
        %v6139 = vadd.f32 %v5669, %v6077
        %v6140 = vadd.f32 %v5670, %v6080
        %v6141 = vadd.f32 %v5671, %v6085
        %v6142 = vadd.f32 %v5672, %v6088
        %v6143 = vadd.f32 %v5673, %v6093
        %v6144 = vadd.f32 %v5674, %v6096
        %v6145 = vadd.f32 %v5675, %v6101
        %v6146 = vadd.f32 %v5676, %v6104
        %v6147 = vadd.f32 %v5677, %v6109
        %v6148 = vadd.f32 %v5678, %v6112
        %v6149 = vadd.f32 %v5679, %v6117
        %v6150 = vadd.f32 %v5680, %v6120
        %v6151 = vld [vmem:[#allocation15] sm:$0x1]
        %v6153 = vlaneseq
        %v6154 = vshrl.u32 %v6153, 7
        %v6155 = vsub.s32 0, %v6154
        %v6156 = vrot.slane %v6151, %v6155
        %v6158 = vadd.f32 %v6123, %v6156
        %v6159 = vadd.f32 %v6124, %v6156
        %v6160 = vadd.f32 %v6125, %v6156
        %v6161 = vadd.f32 %v6126, %v6156
        %v6162 = vadd.f32 %v6127, %v6156
        %v6163 = vadd.f32 %v6128, %v6156
        %v6164 = vadd.f32 %v6129, %v6156
        %v6165 = vadd.f32 %v6130, %v6156
        %v6166 = vadd.f32 %v6131, %v6156
        %v6167 = vadd.f32 %v6132, %v6156
        %v6168 = vadd.f32 %v6133, %v6156
        %v6169 = vadd.f32 %v6134, %v6156
        %v6170 = vadd.f32 %v6135, %v6156
        %v6171 = vadd.f32 %v6136, %v6156
        %v6172 = vadd.f32 %v6137, %v6156
        %v6173 = vadd.f32 %v6138, %v6156
        %v6174 = vadd.f32 %v6139, %v6156
        %v6175 = vadd.f32 %v6140, %v6156
        %v6176 = vadd.f32 %v6141, %v6156
        %v6177 = vadd.f32 %v6142, %v6156
        %v6178 = vadd.f32 %v6143, %v6156
        %v6179 = vadd.f32 %v6144, %v6156
        %v6180 = vadd.f32 %v6145, %v6156
        %v6181 = vadd.f32 %v6146, %v6156
        %v6182 = vadd.f32 %v6147, %v6156
        %v6183 = vadd.f32 %v6148, %v6156
        %v6184 = vadd.f32 %v6149, %v6156
        %v6185 = vadd.f32 %v6150, %v6156
        %v6186 = vmax.f32 %v6158, 0.0
        %v6187 = vmax.f32 %v6159, 0.0
        %v6188 = vmax.f32 %v6160, 0.0
        %v6189 = vmax.f32 %v6161, 0.0
        %v6190 = vmax.f32 %v6162, 0.0
        %v6191 = vmax.f32 %v6163, 0.0
        %v6192 = vmax.f32 %v6164, 0.0
        %v6193 = vmax.f32 %v6165, 0.0
        %v6194 = vmax.f32 %v6166, 0.0
        %v6195 = vmax.f32 %v6167, 0.0
        %v6196 = vmax.f32 %v6168, 0.0
        %v6197 = vmax.f32 %v6169, 0.0
        %v6198 = vmax.f32 %v6170, 0.0
        %v6199 = vmax.f32 %v6171, 0.0
        %v6200 = vmax.f32 %v6172, 0.0
        %v6201 = vmax.f32 %v6173, 0.0
        %v6202 = vmax.f32 %v6174, 0.0
        %v6203 = vmax.f32 %v6175, 0.0
        %v6204 = vmax.f32 %v6176, 0.0
        %v6205 = vmax.f32 %v6177, 0.0
        %v6206 = vmax.f32 %v6178, 0.0
        %v6207 = vmax.f32 %v6179, 0.0
        %v6208 = vmax.f32 %v6180, 0.0
        %v6209 = vmax.f32 %v6181, 0.0
        %v6210 = vmax.f32 %v6182, 0.0
        %v6211 = vmax.f32 %v6183, 0.0
        %v6212 = vmax.f32 %v6184, 0.0
        %v6213 = vmax.f32 %v6185, 0.0
        %6214 = vst [vmem:[%s403] sm:$0xff] %v6186
        %6215 = vst [vmem:[%s403 + $0x10] sm:$0xff] %v6187
        %6216 = vst [vmem:[%s403 + $0x20] sm:$0xff] %v6188
        %6217 = vst [vmem:[%s403 + $0x30] sm:$0xff] %v6189
        %6218 = vst [vmem:[%s403 + $0x40] sm:$0xff] %v6190
        %6219 = vst [vmem:[%s403 + $0x50] sm:$0xff] %v6191
        %6220 = vst [vmem:[%s403 + $0x60] sm:$0xff] %v6192
        %6221 = vst [vmem:[%s403 + $0x70] sm:$0xff] %v6193
        %6222 = vst [vmem:[%s403 + $0x80] sm:$0xff] %v6194
        %6223 = vst [vmem:[%s403 + $0x90] sm:$0xff] %v6195
        %6224 = vst [vmem:[%s403 + $0xa0] sm:$0xff] %v6196
        %6225 = vst [vmem:[%s403 + $0xb0] sm:$0xff] %v6197
        %6226 = vst [vmem:[%s403 + $0xc0] sm:$0xff] %v6198
        %6227 = vst [vmem:[%s403 + $0xd0] sm:$0xff] %v6199
        %6228 = vst [vmem:[%s403 + $0xe0] sm:$0xff] %v6200
        %6229 = vst [vmem:[%s403 + $0xf0] sm:$0xff] %v6201
        %6230 = vst [vmem:[%s403 + $0x100] sm:$0xff] %v6202
        %6231 = vst [vmem:[%s403 + $0x110] sm:$0xff] %v6203
        %6232 = vst [vmem:[%s403 + $0x120] sm:$0xff] %v6204
        %6233 = vst [vmem:[%s403 + $0x130] sm:$0xff] %v6205
        %6234 = vst [vmem:[%s403 + $0x140] sm:$0xff] %v6206
        %6235 = vst [vmem:[%s403 + $0x150] sm:$0xff] %v6207
        %6236 = vst [vmem:[%s403 + $0x160] sm:$0xff] %v6208
        %6237 = vst [vmem:[%s403 + $0x170] sm:$0xff] %v6209
        %6238 = vst [vmem:[%s403 + $0x180] sm:$0xff] %v6210
        %6239 = vst [vmem:[%s403 + $0x190] sm:$0xff] %v6211
        %6240 = vst [vmem:[%s403 + $0x1a0] sm:$0xff] %v6212
        %6241 = vst [vmem:[%s403 + $0x1b0] sm:$0xff] %v6213
        %v6242 = vld [vmem:[#allocation2] sm:$0xff]
        %v6243 = vld [vmem:[#allocation2 + $0x8] sm:$0xff]
        %v6244 = vld [vmem:[#allocation2 + $0x10] sm:$0xff]
        %v6245 = vld [vmem:[#allocation2 + $0x18] sm:$0xff]
        %v6246 = vld [vmem:[#allocation2 + $0x20] sm:$0xff]
        %v6247 = vld [vmem:[#allocation2 + $0x28] sm:$0xff]
        %v6248 = vld [vmem:[#allocation2 + $0x30] sm:$0xff]
        %v6249 = vld [vmem:[#allocation2 + $0x38] sm:$0xff]
        %v6250 = vld [vmem:[#allocation2 + $0x40] sm:$0xff]
        %v6251 = vld [vmem:[#allocation2 + $0x48] sm:$0xff]
        %v6252 = vld [vmem:[#allocation2 + $0x50] sm:$0xff]
        %v6253 = vld [vmem:[#allocation2 + $0x58] sm:$0xff]
        %v6254 = vld [vmem:[#allocation2 + $0x60] sm:$0xff]
        %v6255 = vld [vmem:[#allocation2 + $0x68] sm:$0xff]
        %v6256 = vld [vmem:[#allocation2 + $0x70] sm:$0xff]
        %v6257 = vld [vmem:[#allocation2 + $0x78] sm:$0xff]
        %v6258 = vld [vmem:[#allocation2 + $0x80] sm:$0xff]
        %v6259 = vld [vmem:[#allocation2 + $0x88] sm:$0xff]
        %v6260 = vld [vmem:[#allocation2 + $0x90] sm:$0xff]
        %v6261 = vld [vmem:[#allocation2 + $0x98] sm:$0xff]
        %v6262 = vld [vmem:[#allocation2 + $0xa0] sm:$0xff]
        %v6263 = vld [vmem:[#allocation2 + $0xa8] sm:$0xff]
        %v6264 = vld [vmem:[#allocation2 + $0xb0] sm:$0xff]
        %v6265 = vld [vmem:[#allocation2 + $0xb8] sm:$0xff]
        %v6266 = vld [vmem:[#allocation2 + $0xc0] sm:$0xff]
        %v6267 = vld [vmem:[#allocation2 + $0xc8] sm:$0xff]
        %v6268 = vld [vmem:[#allocation2 + $0xd0] sm:$0xff]
        %v6269 = vld [vmem:[#allocation2 + $0xd8] sm:$0xff]
        %v6270 = vld [vmem:[#allocation13 + $0x4] sm:$0xf]
        %v6271 = vld [vmem:[#allocation13 + $0xc] sm:$0xf]
        %v6272 = vld [vmem:[#allocation13 + $0x14] sm:$0xf]
        %v6273 = vld [vmem:[#allocation13 + $0x1c] sm:$0xf]
        %v6274 = vld [vmem:[#allocation13 + $0x24] sm:$0xf]
        %v6275 = vld [vmem:[#allocation13 + $0x2c] sm:$0xf]
        %v6276 = vld [vmem:[#allocation13 + $0x34] sm:$0xf]
        %v6277 = vld [vmem:[#allocation13 + $0x3c] sm:$0xf]
        %v6278 = vld [vmem:[#allocation13 + $0x44] sm:$0xf]
        %v6279 = vld [vmem:[#allocation13 + $0x4c] sm:$0xf]
        %v6280 = vld [vmem:[#allocation13 + $0x54] sm:$0xf]
        %v6281 = vld [vmem:[#allocation13 + $0x5c] sm:$0xf]
        %v6282 = vld [vmem:[#allocation13 + $0x64] sm:$0xf]
        %v6283 = vld [vmem:[#allocation13 + $0x6c] sm:$0xf]
        %v6284 = vld [vmem:[#allocation13 + $0x74] sm:$0xf]
        %v6285 = vld [vmem:[#allocation13 + $0x7c] sm:$0xf]
        %v6286 = vld [vmem:[#allocation13 + $0x84] sm:$0xf]
        %v6287 = vld [vmem:[#allocation13 + $0x8c] sm:$0xf]
        %v6288 = vld [vmem:[#allocation13 + $0x94] sm:$0xf]
        %v6289 = vld [vmem:[#allocation13 + $0x9c] sm:$0xf]
        %v6290 = vld [vmem:[#allocation13 + $0xa4] sm:$0xf]
        %v6291 = vld [vmem:[#allocation13 + $0xac] sm:$0xf]
        %v6292 = vld [vmem:[#allocation13 + $0xb4] sm:$0xf]
        %v6293 = vld [vmem:[#allocation13 + $0xbc] sm:$0xf]
        %v6294 = vld [vmem:[#allocation13 + $0xc4] sm:$0xf]
        %v6295 = vld [vmem:[#allocation13 + $0xcc] sm:$0xf]
        %v6296 = vld [vmem:[#allocation13 + $0xd4] sm:$0xf]
        %v6297 = vld [vmem:[#allocation13 + $0xdc] sm:$0xf]
        %v6298 = vld [vmem:[#allocation13 + $0xe4] sm:$0xf]
        %v6299 = vld [vmem:[#allocation13 + $0xec] sm:$0xf]
        %v6300 = vld [vmem:[#allocation13 + $0xf4] sm:$0xf]
        %v6301 = vld [vmem:[#allocation13 + $0xfc] sm:$0xf]
        %v6302 = vld [vmem:[#allocation3] sm:$0xff]
        %v6303 = vld [vmem:[#allocation3 + $0x8] sm:$0xff]
        %v6304 = vld [vmem:[#allocation3 + $0x10] sm:$0xff]
        %v6305 = vld [vmem:[#allocation3 + $0x18] sm:$0xff]
        %v6306 = vld [vmem:[#allocation3 + $0x20] sm:$0xff]
        %v6307 = vld [vmem:[#allocation3 + $0x28] sm:$0xff]
        %v6308 = vld [vmem:[#allocation3 + $0x30] sm:$0xff]
        %v6309 = vld [vmem:[#allocation3 + $0x38] sm:$0xff]
        %v6310 = vld [vmem:[#allocation3 + $0x40] sm:$0xff]
        %v6311 = vld [vmem:[#allocation3 + $0x48] sm:$0xff]
        %v6312 = vld [vmem:[#allocation3 + $0x50] sm:$0xff]
        %v6313 = vld [vmem:[#allocation3 + $0x58] sm:$0xff]
        %v6314 = vld [vmem:[#allocation3 + $0x60] sm:$0xff]
        %v6315 = vld [vmem:[#allocation3 + $0x68] sm:$0xff]
        %v6316 = vld [vmem:[#allocation3 + $0x70] sm:$0xff]
        %v6317 = vld [vmem:[#allocation3 + $0x78] sm:$0xff]
        %v6318 = vld [vmem:[#allocation3 + $0x80] sm:$0xff]
        %v6319 = vld [vmem:[#allocation3 + $0x88] sm:$0xff]
        %v6320 = vld [vmem:[#allocation3 + $0x90] sm:$0xff]
        %v6321 = vld [vmem:[#allocation3 + $0x98] sm:$0xff]
        %v6322 = vld [vmem:[#allocation3 + $0xa0] sm:$0xff]
        %v6323 = vld [vmem:[#allocation3 + $0xa8] sm:$0xff]
        %v6324 = vld [vmem:[#allocation3 + $0xb0] sm:$0xff]
        %v6325 = vld [vmem:[#allocation3 + $0xb8] sm:$0xff]
        %v6326 = vld [vmem:[#allocation3 + $0xc0] sm:$0xff]
        %v6327 = vld [vmem:[#allocation3 + $0xc8] sm:$0xff]
        %v6328 = vld [vmem:[#allocation3 + $0xd0] sm:$0xff]
        %v6329 = vld [vmem:[#allocation3 + $0xd8] sm:$0xff]
        %v6330 = vld [vmem:[%s2066 + $0x4] sm:$0xf]
        %v6331 = vld [vmem:[%s2066 + $0xc] sm:$0xf]
        %v6332 = vld [vmem:[%s2066 + $0x14] sm:$0xf]
        %v6333 = vld [vmem:[%s2066 + $0x1c] sm:$0xf]
        %v6334 = vld [vmem:[%s2066 + $0x24] sm:$0xf]
        %v6335 = vld [vmem:[%s2066 + $0x2c] sm:$0xf]
        %v6336 = vld [vmem:[%s2066 + $0x34] sm:$0xf]
        %v6337 = vld [vmem:[%s2066 + $0x3c] sm:$0xf]
        %v6338 = vld [vmem:[%s2066 + $0x44] sm:$0xf]
        %v6339 = vld [vmem:[%s2066 + $0x4c] sm:$0xf]
        %v6340 = vld [vmem:[%s2066 + $0x54] sm:$0xf]
        %v6341 = vld [vmem:[%s2066 + $0x5c] sm:$0xf]
        %v6342 = vld [vmem:[%s2066 + $0x64] sm:$0xf]
        %v6343 = vld [vmem:[%s2066 + $0x6c] sm:$0xf]
        %v6344 = vld [vmem:[%s2066 + $0x74] sm:$0xf]
        %v6345 = vld [vmem:[%s2066 + $0x7c] sm:$0xf]
        %v6346 = vld [vmem:[%s2066 + $0x84] sm:$0xf]
        %v6347 = vld [vmem:[%s2066 + $0x8c] sm:$0xf]
        %v6348 = vld [vmem:[%s2066 + $0x94] sm:$0xf]
        %v6349 = vld [vmem:[%s2066 + $0x9c] sm:$0xf]
        %v6350 = vld [vmem:[%s2066 + $0xa4] sm:$0xf]
        %v6351 = vld [vmem:[%s2066 + $0xac] sm:$0xf]
        %v6352 = vld [vmem:[%s2066 + $0xb4] sm:$0xf]
        %v6353 = vld [vmem:[%s2066 + $0xbc] sm:$0xf]
        %v6354 = vld [vmem:[%s2066 + $0xc4] sm:$0xf]
        %v6355 = vld [vmem:[%s2066 + $0xcc] sm:$0xf]
        %v6356 = vld [vmem:[%s2066 + $0xd4] sm:$0xf]
        %v6357 = vld [vmem:[%s2066 + $0xdc] sm:$0xf]
        %v6358 = vld [vmem:[%s2066 + $0xe4] sm:$0xf]
        %v6359 = vld [vmem:[%s2066 + $0xec] sm:$0xf]
        %v6360 = vld [vmem:[%s2066 + $0xf4] sm:$0xf]
        %v6361 = vld [vmem:[%s2066 + $0xfc] sm:$0xf]
        %v6390 = vunpack.c.l.b16 %v6302
        %v6391 = vunpack.c.h.b16 %v6302
        %v6392 = vunpack.c.l.b16 %v6303
        %v6393 = vunpack.c.h.b16 %v6303
        %v6394 = vunpack.c.l.b16 %v6304
        %v6395 = vunpack.c.h.b16 %v6304
        %v6396 = vunpack.c.l.b16 %v6305
        %v6397 = vunpack.c.h.b16 %v6305
        %v6398 = vunpack.c.l.b16 %v6306
        %v6399 = vunpack.c.h.b16 %v6306
        %v6400 = vunpack.c.l.b16 %v6307
        %v6401 = vunpack.c.h.b16 %v6307
        %v6402 = vunpack.c.l.b16 %v6308
        %v6403 = vunpack.c.h.b16 %v6308
        %v6404 = vunpack.c.l.b16 %v6309
        %v6405 = vunpack.c.h.b16 %v6309
        %v6406 = vunpack.c.l.b16 %v6310
        %v6407 = vunpack.c.h.b16 %v6310
        %v6408 = vunpack.c.l.b16 %v6311
        %v6409 = vunpack.c.h.b16 %v6311
        %v6410 = vunpack.c.l.b16 %v6312
        %v6411 = vunpack.c.h.b16 %v6312
        %v6412 = vunpack.c.l.b16 %v6313
        %v6413 = vunpack.c.h.b16 %v6313
        %v6414 = vunpack.c.l.b16 %v6314
        %v6415 = vunpack.c.h.b16 %v6314
        %v6416 = vunpack.c.l.b16 %v6315
        %v6417 = vunpack.c.h.b16 %v6315
        %v6418 = vunpack.c.l.b16 %v6316
        %v6419 = vunpack.c.h.b16 %v6316
        %v6420 = vunpack.c.l.b16 %v6317
        %v6421 = vunpack.c.h.b16 %v6317
        %v6422 = vunpack.c.l.b16 %v6318
        %v6423 = vunpack.c.h.b16 %v6318
        %v6424 = vunpack.c.l.b16 %v6319
        %v6425 = vunpack.c.h.b16 %v6319
        %v6426 = vunpack.c.l.b16 %v6320
        %v6427 = vunpack.c.h.b16 %v6320
        %v6428 = vunpack.c.l.b16 %v6321
        %v6429 = vunpack.c.h.b16 %v6321
        %v6430 = vunpack.c.l.b16 %v6322
        %v6431 = vunpack.c.h.b16 %v6322
        %v6432 = vunpack.c.l.b16 %v6323
        %v6433 = vunpack.c.h.b16 %v6323
        %v6434 = vunpack.c.l.b16 %v6324
        %v6435 = vunpack.c.h.b16 %v6324
        %v6436 = vunpack.c.l.b16 %v6325
        %v6437 = vunpack.c.h.b16 %v6325
        %v6438 = vunpack.c.l.b16 %v6326
        %v6439 = vunpack.c.h.b16 %v6326
        %v6440 = vunpack.c.l.b16 %v6327
        %v6441 = vunpack.c.h.b16 %v6327
        %v6442 = vunpack.c.l.b16 %v6328
        %v6443 = vunpack.c.h.b16 %v6328
        %v6444 = vunpack.c.l.b16 %v6329
        %v6445 = vunpack.c.h.b16 %v6329
        %v6446 = vpack.c.b16 %v6392, %v6390
        %v6447 = vpack.c.b16 %v6393, %v6391
        %v6448 = vpack.c.b16 %v6396, %v6394
        %v6449 = vpack.c.b16 %v6397, %v6395
        %v6450 = vpack.c.b16 %v6400, %v6398
        %v6451 = vpack.c.b16 %v6401, %v6399
        %v6452 = vpack.c.b16 %v6404, %v6402
        %v6453 = vpack.c.b16 %v6405, %v6403
        %v6454 = vpack.c.b16 %v6408, %v6406
        %v6455 = vpack.c.b16 %v6409, %v6407
        %v6456 = vpack.c.b16 %v6412, %v6410
        %v6457 = vpack.c.b16 %v6413, %v6411
        %v6458 = vpack.c.b16 %v6416, %v6414
        %v6459 = vpack.c.b16 %v6417, %v6415
        %v6460 = vpack.c.b16 %v6420, %v6418
        %v6461 = vpack.c.b16 %v6421, %v6419
        %v6462 = vpack.c.b16 %v6424, %v6422
        %v6463 = vpack.c.b16 %v6425, %v6423
        %v6464 = vpack.c.b16 %v6428, %v6426
        %v6465 = vpack.c.b16 %v6429, %v6427
        %v6466 = vpack.c.b16 %v6432, %v6430
        %v6467 = vpack.c.b16 %v6433, %v6431
        %v6468 = vpack.c.b16 %v6436, %v6434
        %v6469 = vpack.c.b16 %v6437, %v6435
        %v6470 = vpack.c.b16 %v6440, %v6438
        %v6471 = vpack.c.b16 %v6441, %v6439
        %v6472 = vpack.c.b16 %v6444, %v6442
        %v6473 = vpack.c.b16 %v6445, %v6443
        %v6534 = vunpack.c.l.b16 %v6330
        %v6535 = vunpack.c.l.b16 %v6331
        %v6536 = vunpack.c.l.b16 %v6332
        %v6537 = vunpack.c.l.b16 %v6333
        %v6538 = vunpack.c.l.b16 %v6334
        %v6539 = vunpack.c.l.b16 %v6335
        %v6540 = vunpack.c.l.b16 %v6336
        %v6541 = vunpack.c.l.b16 %v6337
        %v6542 = vunpack.c.l.b16 %v6338
        %v6543 = vunpack.c.l.b16 %v6339
        %v6544 = vunpack.c.l.b16 %v6340
        %v6545 = vunpack.c.l.b16 %v6341
        %v6546 = vunpack.c.l.b16 %v6342
        %v6547 = vunpack.c.l.b16 %v6343
        %v6548 = vunpack.c.l.b16 %v6344
        %v6549 = vunpack.c.l.b16 %v6345
        %v6550 = vunpack.c.l.b16 %v6346
        %v6551 = vunpack.c.l.b16 %v6347
        %v6552 = vunpack.c.l.b16 %v6348
        %v6553 = vunpack.c.l.b16 %v6349
        %v6554 = vunpack.c.l.b16 %v6350
        %v6555 = vunpack.c.l.b16 %v6351
        %v6556 = vunpack.c.l.b16 %v6352
        %v6557 = vunpack.c.l.b16 %v6353
        %v6558 = vunpack.c.l.b16 %v6354
        %v6559 = vunpack.c.l.b16 %v6355
        %v6560 = vunpack.c.l.b16 %v6356
        %v6561 = vunpack.c.l.b16 %v6357
        %v6562 = vunpack.c.l.b16 %v6358
        %v6563 = vunpack.c.l.b16 %v6359
        %v6564 = vunpack.c.l.b16 %v6360
        %v6565 = vunpack.c.l.b16 %v6361
        %v6566 = vpack.c.b16 %v6535, %v6534
        %v6567 = vpack.c.b16 %v6537, %v6536
        %v6568 = vpack.c.b16 %v6539, %v6538
        %v6569 = vpack.c.b16 %v6541, %v6540
        %v6570 = vpack.c.b16 %v6543, %v6542
        %v6571 = vpack.c.b16 %v6545, %v6544
        %v6572 = vpack.c.b16 %v6547, %v6546
        %v6573 = vpack.c.b16 %v6549, %v6548
        %v6574 = vpack.c.b16 %v6551, %v6550
        %v6575 = vpack.c.b16 %v6553, %v6552
        %v6576 = vpack.c.b16 %v6555, %v6554
        %v6577 = vpack.c.b16 %v6557, %v6556
        %v6578 = vpack.c.b16 %v6559, %v6558
        %v6579 = vpack.c.b16 %v6561, %v6560
        %v6580 = vpack.c.b16 %v6563, %v6562
        %v6581 = vpack.c.b16 %v6565, %v6564
        %6598 = vmatprep.subr.bf16.mxu0 0
        %6599 = vmatpush1.bf16.msra.mxu0 %v6573
        %6600 = vmatprep.subr.bf16.mxu0 0
        %6601 = vmatpush1.bf16.msra.mxu0 %v6572
        %6602 = vmatprep.subr.bf16.mxu0 0
        %6603 = vmatpush1.bf16.msra.mxu0 %v6571
        %6604 = vmatprep.subr.bf16.mxu0 0
        %6605 = vmatpush1.bf16.msra.mxu0 %v6570
        %6606 = vmatprep.subr.bf16.mxu0 0
        %6607 = vmatpush1.bf16.msra.mxu0 %v6569
        %6608 = vmatprep.subr.bf16.mxu0 0
        %6609 = vmatpush1.bf16.msra.mxu0 %v6568
        %6610 = vmatprep.subr.bf16.mxu0 0
        %6611 = vmatpush1.bf16.msra.mxu0 %v6567
        %6612 = vmatprep.subr.bf16.mxu0 0
        %6613 = vmatpush1.bf16.msra.mxu0 %v6566
        %6614 = vmatprep.subr.bf16.mxu0 0
        %6615 = vmatpush2.bf16.msra.mxu0 %v6581
        %6616 = vmatprep.subr.bf16.mxu0 0
        %6617 = vmatpush2.bf16.msra.mxu0 %v6580
        %6618 = vmatprep.subr.bf16.mxu0 0
        %6619 = vmatpush2.bf16.msra.mxu0 %v6579
        %6620 = vmatprep.subr.bf16.mxu0 0
        %6621 = vmatpush2.bf16.msra.mxu0 %v6578
        %6622 = vmatprep.subr.bf16.mxu0 0
        %6623 = vmatpush2.bf16.msra.mxu0 %v6577
        %6624 = vmatprep.subr.bf16.mxu0 0
        %6625 = vmatpush2.bf16.msra.mxu0 %v6576
        %6626 = vmatprep.subr.bf16.mxu0 0
        %6627 = vmatpush2.bf16.msra.mxu0 %v6575
        %6628 = vmatprep.subr.bf16.mxu0 0
        %6629 = vmatpush2.bf16.msra.mxu0 %v6574
        %6630 = vmatprep.mubr.bf16.mxu0 %v6447
        %6631 = vmatmul.mubr.bf16.gmra.mxu0 %v6446
        %v6632 = vpop.f32.mrf.mxu0
        %v6633 = vadd.f32 0.0, %v6632
        %v6634 = vpop.f32.mrf.mxu0
        %v6635 = vpop.f32.mrf.mxu0
        %v6636 = vadd.f32 0.0, %v6635
        %v6637 = vpop.f32.mrf.mxu0
        %6638 = vmatprep.mubr.bf16.mxu0 %v6449
        %6639 = vmatmul.mubr.bf16.gmra.mxu0 %v6448
        %v6640 = vpop.f32.mrf.mxu0
        %v6641 = vadd.f32 0.0, %v6640
        %v6642 = vpop.f32.mrf.mxu0
        %v6643 = vpop.f32.mrf.mxu0
        %v6644 = vadd.f32 0.0, %v6643
        %v6645 = vpop.f32.mrf.mxu0
        %6646 = vmatprep.mubr.bf16.mxu0 %v6451
        %6647 = vmatmul.mubr.bf16.gmra.mxu0 %v6450
        %v6648 = vpop.f32.mrf.mxu0
        %v6649 = vadd.f32 0.0, %v6648
        %v6650 = vpop.f32.mrf.mxu0
        %v6651 = vpop.f32.mrf.mxu0
        %v6652 = vadd.f32 0.0, %v6651
        %v6653 = vpop.f32.mrf.mxu0
        %6654 = vmatprep.mubr.bf16.mxu0 %v6453
        %6655 = vmatmul.mubr.bf16.gmra.mxu0 %v6452
        %v6656 = vpop.f32.mrf.mxu0
        %v6657 = vadd.f32 0.0, %v6656
        %v6658 = vpop.f32.mrf.mxu0
        %v6659 = vpop.f32.mrf.mxu0
        %v6660 = vadd.f32 0.0, %v6659
        %v6661 = vpop.f32.mrf.mxu0
        %6662 = vmatprep.mubr.bf16.mxu0 %v6455
        %6663 = vmatmul.mubr.bf16.gmra.mxu0 %v6454
        %v6664 = vpop.f32.mrf.mxu0
        %v6665 = vadd.f32 0.0, %v6664
        %v6666 = vpop.f32.mrf.mxu0
        %v6667 = vpop.f32.mrf.mxu0
        %v6668 = vadd.f32 0.0, %v6667
        %v6669 = vpop.f32.mrf.mxu0
        %6670 = vmatprep.mubr.bf16.mxu0 %v6457
        %6671 = vmatmul.mubr.bf16.gmra.mxu0 %v6456
        %v6672 = vpop.f32.mrf.mxu0
        %v6673 = vadd.f32 0.0, %v6672
        %v6674 = vpop.f32.mrf.mxu0
        %v6675 = vpop.f32.mrf.mxu0
        %v6676 = vadd.f32 0.0, %v6675
        %v6677 = vpop.f32.mrf.mxu0
        %6678 = vmatprep.mubr.bf16.mxu0 %v6459
        %6679 = vmatmul.mubr.bf16.gmra.mxu0 %v6458
        %v6680 = vpop.f32.mrf.mxu0
        %v6681 = vadd.f32 0.0, %v6680
        %v6682 = vpop.f32.mrf.mxu0
        %v6683 = vpop.f32.mrf.mxu0
        %v6684 = vadd.f32 0.0, %v6683
        %v6685 = vpop.f32.mrf.mxu0
        %6686 = vmatprep.mubr.bf16.mxu0 %v6461
        %6687 = vmatmul.mubr.bf16.gmra.mxu0 %v6460
        %v6688 = vpop.f32.mrf.mxu0
        %v6689 = vadd.f32 0.0, %v6688
        %v6690 = vpop.f32.mrf.mxu0
        %v6691 = vpop.f32.mrf.mxu0
        %v6692 = vadd.f32 0.0, %v6691
        %v6693 = vpop.f32.mrf.mxu0
        %6694 = vmatprep.mubr.bf16.mxu0 %v6463
        %6695 = vmatmul.mubr.bf16.gmra.mxu0 %v6462
        %v6696 = vpop.f32.mrf.mxu0
        %v6697 = vadd.f32 0.0, %v6696
        %v6698 = vpop.f32.mrf.mxu0
        %v6699 = vpop.f32.mrf.mxu0
        %v6700 = vadd.f32 0.0, %v6699
        %v6701 = vpop.f32.mrf.mxu0
        %6702 = vmatprep.mubr.bf16.mxu0 %v6465
        %6703 = vmatmul.mubr.bf16.gmra.mxu0 %v6464
        %v6704 = vpop.f32.mrf.mxu0
        %v6705 = vadd.f32 0.0, %v6704
        %v6706 = vpop.f32.mrf.mxu0
        %v6707 = vpop.f32.mrf.mxu0
        %v6708 = vadd.f32 0.0, %v6707
        %v6709 = vpop.f32.mrf.mxu0
        %6710 = vmatprep.mubr.bf16.mxu0 %v6467
        %6711 = vmatmul.mubr.bf16.gmra.mxu0 %v6466
        %v6712 = vpop.f32.mrf.mxu0
        %v6713 = vadd.f32 0.0, %v6712
        %v6714 = vpop.f32.mrf.mxu0
        %v6715 = vpop.f32.mrf.mxu0
        %v6716 = vadd.f32 0.0, %v6715
        %v6717 = vpop.f32.mrf.mxu0
        %6718 = vmatprep.mubr.bf16.mxu0 %v6469
        %6719 = vmatmul.mubr.bf16.gmra.mxu0 %v6468
        %v6720 = vpop.f32.mrf.mxu0
        %v6721 = vadd.f32 0.0, %v6720
        %v6722 = vpop.f32.mrf.mxu0
        %v6723 = vpop.f32.mrf.mxu0
        %v6724 = vadd.f32 0.0, %v6723
        %v6725 = vpop.f32.mrf.mxu0
        %6726 = vmatprep.mubr.bf16.mxu0 %v6471
        %6727 = vmatmul.mubr.bf16.gmra.mxu0 %v6470
        %v6728 = vpop.f32.mrf.mxu0
        %v6729 = vadd.f32 0.0, %v6728
        %v6730 = vpop.f32.mrf.mxu0
        %v6731 = vpop.f32.mrf.mxu0
        %v6732 = vadd.f32 0.0, %v6731
        %v6733 = vpop.f32.mrf.mxu0
        %6734 = vmatprep.mubr.bf16.mxu0 %v6473
        %6735 = vmatmul.mubr.bf16.gmra.mxu0 %v6472
        %v6736 = vpop.f32.mrf.mxu0
        %v6737 = vadd.f32 0.0, %v6736
        %v6738 = vpop.f32.mrf.mxu0
        %v6739 = vpop.f32.mrf.mxu0
        %v6740 = vadd.f32 0.0, %v6739
        %v6741 = vpop.f32.mrf.mxu0
        %6742 = vdwg.mxu0
        %v6771 = vunpack.c.l.b16 %v6242
        %v6772 = vunpack.c.h.b16 %v6242
        %v6773 = vunpack.c.l.b16 %v6243
        %v6774 = vunpack.c.h.b16 %v6243
        %v6775 = vunpack.c.l.b16 %v6244
        %v6776 = vunpack.c.h.b16 %v6244
        %v6777 = vunpack.c.l.b16 %v6245
        %v6778 = vunpack.c.h.b16 %v6245
        %v6779 = vunpack.c.l.b16 %v6246
        %v6780 = vunpack.c.h.b16 %v6246
        %v6781 = vunpack.c.l.b16 %v6247
        %v6782 = vunpack.c.h.b16 %v6247
        %v6783 = vunpack.c.l.b16 %v6248
        %v6784 = vunpack.c.h.b16 %v6248
        %v6785 = vunpack.c.l.b16 %v6249
        %v6786 = vunpack.c.h.b16 %v6249
        %v6787 = vunpack.c.l.b16 %v6250
        %v6788 = vunpack.c.h.b16 %v6250
        %v6789 = vunpack.c.l.b16 %v6251
        %v6790 = vunpack.c.h.b16 %v6251
        %v6791 = vunpack.c.l.b16 %v6252
        %v6792 = vunpack.c.h.b16 %v6252
        %v6793 = vunpack.c.l.b16 %v6253
        %v6794 = vunpack.c.h.b16 %v6253
        %v6795 = vunpack.c.l.b16 %v6254
        %v6796 = vunpack.c.h.b16 %v6254
        %v6797 = vunpack.c.l.b16 %v6255
        %v6798 = vunpack.c.h.b16 %v6255
        %v6799 = vunpack.c.l.b16 %v6256
        %v6800 = vunpack.c.h.b16 %v6256
        %v6801 = vunpack.c.l.b16 %v6257
        %v6802 = vunpack.c.h.b16 %v6257
        %v6803 = vunpack.c.l.b16 %v6258
        %v6804 = vunpack.c.h.b16 %v6258
        %v6805 = vunpack.c.l.b16 %v6259
        %v6806 = vunpack.c.h.b16 %v6259
        %v6807 = vunpack.c.l.b16 %v6260
        %v6808 = vunpack.c.h.b16 %v6260
        %v6809 = vunpack.c.l.b16 %v6261
        %v6810 = vunpack.c.h.b16 %v6261
        %v6811 = vunpack.c.l.b16 %v6262
        %v6812 = vunpack.c.h.b16 %v6262
        %v6813 = vunpack.c.l.b16 %v6263
        %v6814 = vunpack.c.h.b16 %v6263
        %v6815 = vunpack.c.l.b16 %v6264
        %v6816 = vunpack.c.h.b16 %v6264
        %v6817 = vunpack.c.l.b16 %v6265
        %v6818 = vunpack.c.h.b16 %v6265
        %v6819 = vunpack.c.l.b16 %v6266
        %v6820 = vunpack.c.h.b16 %v6266
        %v6821 = vunpack.c.l.b16 %v6267
        %v6822 = vunpack.c.h.b16 %v6267
        %v6823 = vunpack.c.l.b16 %v6268
        %v6824 = vunpack.c.h.b16 %v6268
        %v6825 = vunpack.c.l.b16 %v6269
        %v6826 = vunpack.c.h.b16 %v6269
        %v6827 = vpack.c.b16 %v6773, %v6771
        %v6828 = vpack.c.b16 %v6774, %v6772
        %v6829 = vpack.c.b16 %v6777, %v6775
        %v6830 = vpack.c.b16 %v6778, %v6776
        %v6831 = vpack.c.b16 %v6781, %v6779
        %v6832 = vpack.c.b16 %v6782, %v6780
        %v6833 = vpack.c.b16 %v6785, %v6783
        %v6834 = vpack.c.b16 %v6786, %v6784
        %v6835 = vpack.c.b16 %v6789, %v6787
        %v6836 = vpack.c.b16 %v6790, %v6788
        %v6837 = vpack.c.b16 %v6793, %v6791
        %v6838 = vpack.c.b16 %v6794, %v6792
        %v6839 = vpack.c.b16 %v6797, %v6795
        %v6840 = vpack.c.b16 %v6798, %v6796
        %v6841 = vpack.c.b16 %v6801, %v6799
        %v6842 = vpack.c.b16 %v6802, %v6800
        %v6843 = vpack.c.b16 %v6805, %v6803
        %v6844 = vpack.c.b16 %v6806, %v6804
        %v6845 = vpack.c.b16 %v6809, %v6807
        %v6846 = vpack.c.b16 %v6810, %v6808
        %v6847 = vpack.c.b16 %v6813, %v6811
        %v6848 = vpack.c.b16 %v6814, %v6812
        %v6849 = vpack.c.b16 %v6817, %v6815
        %v6850 = vpack.c.b16 %v6818, %v6816
        %v6851 = vpack.c.b16 %v6821, %v6819
        %v6852 = vpack.c.b16 %v6822, %v6820
        %v6853 = vpack.c.b16 %v6825, %v6823
        %v6854 = vpack.c.b16 %v6826, %v6824
        %v6915 = vunpack.c.l.b16 %v6270
        %v6916 = vunpack.c.l.b16 %v6271
        %v6917 = vunpack.c.l.b16 %v6272
        %v6918 = vunpack.c.l.b16 %v6273
        %v6919 = vunpack.c.l.b16 %v6274
        %v6920 = vunpack.c.l.b16 %v6275
        %v6921 = vunpack.c.l.b16 %v6276
        %v6922 = vunpack.c.l.b16 %v6277
        %v6923 = vunpack.c.l.b16 %v6278
        %v6924 = vunpack.c.l.b16 %v6279
        %v6925 = vunpack.c.l.b16 %v6280
        %v6926 = vunpack.c.l.b16 %v6281
        %v6927 = vunpack.c.l.b16 %v6282
        %v6928 = vunpack.c.l.b16 %v6283
        %v6929 = vunpack.c.l.b16 %v6284
        %v6930 = vunpack.c.l.b16 %v6285
        %v6931 = vunpack.c.l.b16 %v6286
        %v6932 = vunpack.c.l.b16 %v6287
        %v6933 = vunpack.c.l.b16 %v6288
        %v6934 = vunpack.c.l.b16 %v6289
        %v6935 = vunpack.c.l.b16 %v6290
        %v6936 = vunpack.c.l.b16 %v6291
        %v6937 = vunpack.c.l.b16 %v6292
        %v6938 = vunpack.c.l.b16 %v6293
        %v6939 = vunpack.c.l.b16 %v6294
        %v6940 = vunpack.c.l.b16 %v6295
        %v6941 = vunpack.c.l.b16 %v6296
        %v6942 = vunpack.c.l.b16 %v6297
        %v6943 = vunpack.c.l.b16 %v6298
        %v6944 = vunpack.c.l.b16 %v6299
        %v6945 = vunpack.c.l.b16 %v6300
        %v6946 = vunpack.c.l.b16 %v6301
        %v6947 = vpack.c.b16 %v6916, %v6915
        %v6948 = vpack.c.b16 %v6918, %v6917
        %v6949 = vpack.c.b16 %v6920, %v6919
        %v6950 = vpack.c.b16 %v6922, %v6921
        %v6951 = vpack.c.b16 %v6924, %v6923
        %v6952 = vpack.c.b16 %v6926, %v6925
        %v6953 = vpack.c.b16 %v6928, %v6927
        %v6954 = vpack.c.b16 %v6930, %v6929
        %v6955 = vpack.c.b16 %v6932, %v6931
        %v6956 = vpack.c.b16 %v6934, %v6933
        %v6957 = vpack.c.b16 %v6936, %v6935
        %v6958 = vpack.c.b16 %v6938, %v6937
        %v6959 = vpack.c.b16 %v6940, %v6939
        %v6960 = vpack.c.b16 %v6942, %v6941
        %v6961 = vpack.c.b16 %v6944, %v6943
        %v6962 = vpack.c.b16 %v6946, %v6945
        %6979 = vmatprep.subr.bf16.mxu0 0
        %6980 = vmatpush1.bf16.msra.mxu0 %v6954
        %6981 = vmatprep.subr.bf16.mxu0 0
        %6982 = vmatpush1.bf16.msra.mxu0 %v6953
        %6983 = vmatprep.subr.bf16.mxu0 0
        %6984 = vmatpush1.bf16.msra.mxu0 %v6952
        %6985 = vmatprep.subr.bf16.mxu0 0
        %6986 = vmatpush1.bf16.msra.mxu0 %v6951
        %6987 = vmatprep.subr.bf16.mxu0 0
        %6988 = vmatpush1.bf16.msra.mxu0 %v6950
        %6989 = vmatprep.subr.bf16.mxu0 0
        %6990 = vmatpush1.bf16.msra.mxu0 %v6949
        %6991 = vmatprep.subr.bf16.mxu0 0
        %6992 = vmatpush1.bf16.msra.mxu0 %v6948
        %6993 = vmatprep.subr.bf16.mxu0 0
        %6994 = vmatpush1.bf16.msra.mxu0 %v6947
        %6995 = vmatprep.subr.bf16.mxu0 0
        %6996 = vmatpush2.bf16.msra.mxu0 %v6962
        %6997 = vmatprep.subr.bf16.mxu0 0
        %6998 = vmatpush2.bf16.msra.mxu0 %v6961
        %6999 = vmatprep.subr.bf16.mxu0 0
        %7000 = vmatpush2.bf16.msra.mxu0 %v6960
        %7001 = vmatprep.subr.bf16.mxu0 0
        %7002 = vmatpush2.bf16.msra.mxu0 %v6959
        %7003 = vmatprep.subr.bf16.mxu0 0
        %7004 = vmatpush2.bf16.msra.mxu0 %v6958
        %7005 = vmatprep.subr.bf16.mxu0 0
        %7006 = vmatpush2.bf16.msra.mxu0 %v6957
        %7007 = vmatprep.subr.bf16.mxu0 0
        %7008 = vmatpush2.bf16.msra.mxu0 %v6956
        %7009 = vmatprep.subr.bf16.mxu0 0
        %7010 = vmatpush2.bf16.msra.mxu0 %v6955
        %7011 = vmatprep.mubr.bf16.mxu0 %v6828
        %7012 = vmatmul.mubr.bf16.gmra.mxu0 %v6827
        %v7013 = vpop.f32.mrf.mxu0
        %v7014 = vadd.f32 %v6633, %v7013
        %v7015 = vpop.f32.mrf.mxu0
        %v7016 = vpop.f32.mrf.mxu0
        %v7017 = vadd.f32 %v6636, %v7016
        %v7018 = vpop.f32.mrf.mxu0
        %7019 = vmatprep.mubr.bf16.mxu0 %v6830
        %7020 = vmatmul.mubr.bf16.gmra.mxu0 %v6829
        %v7021 = vpop.f32.mrf.mxu0
        %v7022 = vadd.f32 %v6641, %v7021
        %v7023 = vpop.f32.mrf.mxu0
        %v7024 = vpop.f32.mrf.mxu0
        %v7025 = vadd.f32 %v6644, %v7024
        %v7026 = vpop.f32.mrf.mxu0
        %7027 = vmatprep.mubr.bf16.mxu0 %v6832
        %7028 = vmatmul.mubr.bf16.gmra.mxu0 %v6831
        %v7029 = vpop.f32.mrf.mxu0
        %v7030 = vadd.f32 %v6649, %v7029
        %v7031 = vpop.f32.mrf.mxu0
        %v7032 = vpop.f32.mrf.mxu0
        %v7033 = vadd.f32 %v6652, %v7032
        %v7034 = vpop.f32.mrf.mxu0
        %7035 = vmatprep.mubr.bf16.mxu0 %v6834
        %7036 = vmatmul.mubr.bf16.gmra.mxu0 %v6833
        %v7037 = vpop.f32.mrf.mxu0
        %v7038 = vadd.f32 %v6657, %v7037
        %v7039 = vpop.f32.mrf.mxu0
        %v7040 = vpop.f32.mrf.mxu0
        %v7041 = vadd.f32 %v6660, %v7040
        %v7042 = vpop.f32.mrf.mxu0
        %7043 = vmatprep.mubr.bf16.mxu0 %v6836
        %7044 = vmatmul.mubr.bf16.gmra.mxu0 %v6835
        %v7045 = vpop.f32.mrf.mxu0
        %v7046 = vadd.f32 %v6665, %v7045
        %v7047 = vpop.f32.mrf.mxu0
        %v7048 = vpop.f32.mrf.mxu0
        %v7049 = vadd.f32 %v6668, %v7048
        %v7050 = vpop.f32.mrf.mxu0
        %7051 = vmatprep.mubr.bf16.mxu0 %v6838
        %7052 = vmatmul.mubr.bf16.gmra.mxu0 %v6837
        %v7053 = vpop.f32.mrf.mxu0
        %v7054 = vadd.f32 %v6673, %v7053
        %v7055 = vpop.f32.mrf.mxu0
        %v7056 = vpop.f32.mrf.mxu0
        %v7057 = vadd.f32 %v6676, %v7056
        %v7058 = vpop.f32.mrf.mxu0
        %7059 = vmatprep.mubr.bf16.mxu0 %v6840
        %7060 = vmatmul.mubr.bf16.gmra.mxu0 %v6839
        %v7061 = vpop.f32.mrf.mxu0
        %v7062 = vadd.f32 %v6681, %v7061
        %v7063 = vpop.f32.mrf.mxu0
        %v7064 = vpop.f32.mrf.mxu0
        %v7065 = vadd.f32 %v6684, %v7064
        %v7066 = vpop.f32.mrf.mxu0
        %7067 = vmatprep.mubr.bf16.mxu0 %v6842
        %7068 = vmatmul.mubr.bf16.gmra.mxu0 %v6841
        %v7069 = vpop.f32.mrf.mxu0
        %v7070 = vadd.f32 %v6689, %v7069
        %v7071 = vpop.f32.mrf.mxu0
        %v7072 = vpop.f32.mrf.mxu0
        %v7073 = vadd.f32 %v6692, %v7072
        %v7074 = vpop.f32.mrf.mxu0
        %7075 = vmatprep.mubr.bf16.mxu0 %v6844
        %7076 = vmatmul.mubr.bf16.gmra.mxu0 %v6843
        %v7077 = vpop.f32.mrf.mxu0
        %v7078 = vadd.f32 %v6697, %v7077
        %v7079 = vpop.f32.mrf.mxu0
        %v7080 = vpop.f32.mrf.mxu0
        %v7081 = vadd.f32 %v6700, %v7080
        %v7082 = vpop.f32.mrf.mxu0
        %7083 = vmatprep.mubr.bf16.mxu0 %v6846
        %7084 = vmatmul.mubr.bf16.gmra.mxu0 %v6845
        %v7085 = vpop.f32.mrf.mxu0
        %v7086 = vadd.f32 %v6705, %v7085
        %v7087 = vpop.f32.mrf.mxu0
        %v7088 = vpop.f32.mrf.mxu0
        %v7089 = vadd.f32 %v6708, %v7088
        %v7090 = vpop.f32.mrf.mxu0
        %7091 = vmatprep.mubr.bf16.mxu0 %v6848
        %7092 = vmatmul.mubr.bf16.gmra.mxu0 %v6847
        %v7093 = vpop.f32.mrf.mxu0
        %v7094 = vadd.f32 %v6713, %v7093
        %v7095 = vpop.f32.mrf.mxu0
        %v7096 = vpop.f32.mrf.mxu0
        %v7097 = vadd.f32 %v6716, %v7096
        %v7098 = vpop.f32.mrf.mxu0
        %7099 = vmatprep.mubr.bf16.mxu0 %v6850
        %7100 = vmatmul.mubr.bf16.gmra.mxu0 %v6849
        %v7101 = vpop.f32.mrf.mxu0
        %v7102 = vadd.f32 %v6721, %v7101
        %v7103 = vpop.f32.mrf.mxu0
        %v7104 = vpop.f32.mrf.mxu0
        %v7105 = vadd.f32 %v6724, %v7104
        %v7106 = vpop.f32.mrf.mxu0
        %7107 = vmatprep.mubr.bf16.mxu0 %v6852
        %7108 = vmatmul.mubr.bf16.gmra.mxu0 %v6851
        %v7109 = vpop.f32.mrf.mxu0
        %v7110 = vadd.f32 %v6729, %v7109
        %v7111 = vpop.f32.mrf.mxu0
        %v7112 = vpop.f32.mrf.mxu0
        %v7113 = vadd.f32 %v6732, %v7112
        %v7114 = vpop.f32.mrf.mxu0
        %7115 = vmatprep.mubr.bf16.mxu0 %v6854
        %7116 = vmatmul.mubr.bf16.gmra.mxu0 %v6853
        %v7117 = vpop.f32.mrf.mxu0
        %v7118 = vadd.f32 %v6737, %v7117
        %v7119 = vpop.f32.mrf.mxu0
        %v7120 = vpop.f32.mrf.mxu0
        %v7121 = vadd.f32 %v6740, %v7120
        %v7122 = vpop.f32.mrf.mxu0
        %7123 = vdwg.mxu0
        %v7124 = vld [vmem:[#allocation4] sm:$0xff]
        %v7125 = vld [vmem:[#allocation4 + $0x8] sm:$0xff]
        %v7126 = vld [vmem:[#allocation4 + $0x10] sm:$0xff]
        %v7127 = vld [vmem:[#allocation4 + $0x18] sm:$0xff]
        %v7128 = vld [vmem:[#allocation4 + $0x20] sm:$0xff]
        %v7129 = vld [vmem:[#allocation4 + $0x28] sm:$0xff]
        %v7130 = vld [vmem:[#allocation4 + $0x30] sm:$0xff]
        %v7131 = vld [vmem:[#allocation4 + $0x38] sm:$0xff]
        %v7132 = vld [vmem:[#allocation4 + $0x40] sm:$0xff]
        %v7133 = vld [vmem:[#allocation4 + $0x48] sm:$0xff]
        %v7134 = vld [vmem:[#allocation4 + $0x50] sm:$0xff]
        %v7135 = vld [vmem:[#allocation4 + $0x58] sm:$0xff]
        %v7136 = vld [vmem:[#allocation4 + $0x60] sm:$0xff]
        %v7137 = vld [vmem:[#allocation4 + $0x68] sm:$0xff]
        %v7138 = vld [vmem:[#allocation4 + $0x70] sm:$0xff]
        %v7139 = vld [vmem:[#allocation4 + $0x78] sm:$0xff]
        %v7140 = vld [vmem:[#allocation4 + $0x80] sm:$0xff]
        %v7141 = vld [vmem:[#allocation4 + $0x88] sm:$0xff]
        %v7142 = vld [vmem:[#allocation4 + $0x90] sm:$0xff]
        %v7143 = vld [vmem:[#allocation4 + $0x98] sm:$0xff]
        %v7144 = vld [vmem:[#allocation4 + $0xa0] sm:$0xff]
        %v7145 = vld [vmem:[#allocation4 + $0xa8] sm:$0xff]
        %v7146 = vld [vmem:[#allocation4 + $0xb0] sm:$0xff]
        %v7147 = vld [vmem:[#allocation4 + $0xb8] sm:$0xff]
        %v7148 = vld [vmem:[#allocation4 + $0xc0] sm:$0xff]
        %v7149 = vld [vmem:[#allocation4 + $0xc8] sm:$0xff]
        %v7150 = vld [vmem:[#allocation4 + $0xd0] sm:$0xff]
        %v7151 = vld [vmem:[#allocation4 + $0xd8] sm:$0xff]
        %v7152 = vld [vmem:[%s2889 + $0x4] sm:$0xf]
        %v7153 = vld [vmem:[%s2889 + $0xc] sm:$0xf]
        %v7154 = vld [vmem:[%s2889 + $0x14] sm:$0xf]
        %v7155 = vld [vmem:[%s2889 + $0x1c] sm:$0xf]
        %v7156 = vld [vmem:[%s2889 + $0x24] sm:$0xf]
        %v7157 = vld [vmem:[%s2889 + $0x2c] sm:$0xf]
        %v7158 = vld [vmem:[%s2889 + $0x34] sm:$0xf]
        %v7159 = vld [vmem:[%s2889 + $0x3c] sm:$0xf]
        %v7160 = vld [vmem:[%s2889 + $0x44] sm:$0xf]
        %v7161 = vld [vmem:[%s2889 + $0x4c] sm:$0xf]
        %v7162 = vld [vmem:[%s2889 + $0x54] sm:$0xf]
        %v7163 = vld [vmem:[%s2889 + $0x5c] sm:$0xf]
        %v7164 = vld [vmem:[%s2889 + $0x64] sm:$0xf]
        %v7165 = vld [vmem:[%s2889 + $0x6c] sm:$0xf]
        %v7166 = vld [vmem:[%s2889 + $0x74] sm:$0xf]
        %v7167 = vld [vmem:[%s2889 + $0x7c] sm:$0xf]
        %v7168 = vld [vmem:[%s2889 + $0x84] sm:$0xf]
        %v7169 = vld [vmem:[%s2889 + $0x8c] sm:$0xf]
        %v7170 = vld [vmem:[%s2889 + $0x94] sm:$0xf]
        %v7171 = vld [vmem:[%s2889 + $0x9c] sm:$0xf]
        %v7172 = vld [vmem:[%s2889 + $0xa4] sm:$0xf]
        %v7173 = vld [vmem:[%s2889 + $0xac] sm:$0xf]
        %v7174 = vld [vmem:[%s2889 + $0xb4] sm:$0xf]
        %v7175 = vld [vmem:[%s2889 + $0xbc] sm:$0xf]
        %v7176 = vld [vmem:[%s2889 + $0xc4] sm:$0xf]
        %v7177 = vld [vmem:[%s2889 + $0xcc] sm:$0xf]
        %v7178 = vld [vmem:[%s2889 + $0xd4] sm:$0xf]
        %v7179 = vld [vmem:[%s2889 + $0xdc] sm:$0xf]
        %v7180 = vld [vmem:[%s2889 + $0xe4] sm:$0xf]
        %v7181 = vld [vmem:[%s2889 + $0xec] sm:$0xf]
        %v7182 = vld [vmem:[%s2889 + $0xf4] sm:$0xf]
        %v7183 = vld [vmem:[%s2889 + $0xfc] sm:$0xf]
        %v7212 = vunpack.c.l.b16 %v7124
        %v7213 = vunpack.c.h.b16 %v7124
        %v7214 = vunpack.c.l.b16 %v7125
        %v7215 = vunpack.c.h.b16 %v7125
        %v7216 = vunpack.c.l.b16 %v7126
        %v7217 = vunpack.c.h.b16 %v7126
        %v7218 = vunpack.c.l.b16 %v7127
        %v7219 = vunpack.c.h.b16 %v7127
        %v7220 = vunpack.c.l.b16 %v7128
        %v7221 = vunpack.c.h.b16 %v7128
        %v7222 = vunpack.c.l.b16 %v7129
        %v7223 = vunpack.c.h.b16 %v7129
        %v7224 = vunpack.c.l.b16 %v7130
        %v7225 = vunpack.c.h.b16 %v7130
        %v7226 = vunpack.c.l.b16 %v7131
        %v7227 = vunpack.c.h.b16 %v7131
        %v7228 = vunpack.c.l.b16 %v7132
        %v7229 = vunpack.c.h.b16 %v7132
        %v7230 = vunpack.c.l.b16 %v7133
        %v7231 = vunpack.c.h.b16 %v7133
        %v7232 = vunpack.c.l.b16 %v7134
        %v7233 = vunpack.c.h.b16 %v7134
        %v7234 = vunpack.c.l.b16 %v7135
        %v7235 = vunpack.c.h.b16 %v7135
        %v7236 = vunpack.c.l.b16 %v7136
        %v7237 = vunpack.c.h.b16 %v7136
        %v7238 = vunpack.c.l.b16 %v7137
        %v7239 = vunpack.c.h.b16 %v7137
        %v7240 = vunpack.c.l.b16 %v7138
        %v7241 = vunpack.c.h.b16 %v7138
        %v7242 = vunpack.c.l.b16 %v7139
        %v7243 = vunpack.c.h.b16 %v7139
        %v7244 = vunpack.c.l.b16 %v7140
        %v7245 = vunpack.c.h.b16 %v7140
        %v7246 = vunpack.c.l.b16 %v7141
        %v7247 = vunpack.c.h.b16 %v7141
        %v7248 = vunpack.c.l.b16 %v7142
        %v7249 = vunpack.c.h.b16 %v7142
        %v7250 = vunpack.c.l.b16 %v7143
        %v7251 = vunpack.c.h.b16 %v7143
        %v7252 = vunpack.c.l.b16 %v7144
        %v7253 = vunpack.c.h.b16 %v7144
        %v7254 = vunpack.c.l.b16 %v7145
        %v7255 = vunpack.c.h.b16 %v7145
        %v7256 = vunpack.c.l.b16 %v7146
        %v7257 = vunpack.c.h.b16 %v7146
        %v7258 = vunpack.c.l.b16 %v7147
        %v7259 = vunpack.c.h.b16 %v7147
        %v7260 = vunpack.c.l.b16 %v7148
        %v7261 = vunpack.c.h.b16 %v7148
        %v7262 = vunpack.c.l.b16 %v7149
        %v7263 = vunpack.c.h.b16 %v7149
        %v7264 = vunpack.c.l.b16 %v7150
        %v7265 = vunpack.c.h.b16 %v7150
        %v7266 = vunpack.c.l.b16 %v7151
        %v7267 = vunpack.c.h.b16 %v7151
        %v7268 = vpack.c.b16 %v7214, %v7212
        %v7269 = vpack.c.b16 %v7215, %v7213
        %v7270 = vpack.c.b16 %v7218, %v7216
        %v7271 = vpack.c.b16 %v7219, %v7217
        %v7272 = vpack.c.b16 %v7222, %v7220
        %v7273 = vpack.c.b16 %v7223, %v7221
        %v7274 = vpack.c.b16 %v7226, %v7224
        %v7275 = vpack.c.b16 %v7227, %v7225
        %v7276 = vpack.c.b16 %v7230, %v7228
        %v7277 = vpack.c.b16 %v7231, %v7229
        %v7278 = vpack.c.b16 %v7234, %v7232
        %v7279 = vpack.c.b16 %v7235, %v7233
        %v7280 = vpack.c.b16 %v7238, %v7236
        %v7281 = vpack.c.b16 %v7239, %v7237
        %v7282 = vpack.c.b16 %v7242, %v7240
        %v7283 = vpack.c.b16 %v7243, %v7241
        %v7284 = vpack.c.b16 %v7246, %v7244
        %v7285 = vpack.c.b16 %v7247, %v7245
        %v7286 = vpack.c.b16 %v7250, %v7248
        %v7287 = vpack.c.b16 %v7251, %v7249
        %v7288 = vpack.c.b16 %v7254, %v7252
        %v7289 = vpack.c.b16 %v7255, %v7253
        %v7290 = vpack.c.b16 %v7258, %v7256
        %v7291 = vpack.c.b16 %v7259, %v7257
        %v7292 = vpack.c.b16 %v7262, %v7260
        %v7293 = vpack.c.b16 %v7263, %v7261
        %v7294 = vpack.c.b16 %v7266, %v7264
        %v7295 = vpack.c.b16 %v7267, %v7265
        %v7356 = vunpack.c.l.b16 %v7152
        %v7357 = vunpack.c.l.b16 %v7153
        %v7358 = vunpack.c.l.b16 %v7154
        %v7359 = vunpack.c.l.b16 %v7155
        %v7360 = vunpack.c.l.b16 %v7156
        %v7361 = vunpack.c.l.b16 %v7157
        %v7362 = vunpack.c.l.b16 %v7158
        %v7363 = vunpack.c.l.b16 %v7159
        %v7364 = vunpack.c.l.b16 %v7160
        %v7365 = vunpack.c.l.b16 %v7161
        %v7366 = vunpack.c.l.b16 %v7162
        %v7367 = vunpack.c.l.b16 %v7163
        %v7368 = vunpack.c.l.b16 %v7164
        %v7369 = vunpack.c.l.b16 %v7165
        %v7370 = vunpack.c.l.b16 %v7166
        %v7371 = vunpack.c.l.b16 %v7167
        %v7372 = vunpack.c.l.b16 %v7168
        %v7373 = vunpack.c.l.b16 %v7169
        %v7374 = vunpack.c.l.b16 %v7170
        %v7375 = vunpack.c.l.b16 %v7171
        %v7376 = vunpack.c.l.b16 %v7172
        %v7377 = vunpack.c.l.b16 %v7173
        %v7378 = vunpack.c.l.b16 %v7174
        %v7379 = vunpack.c.l.b16 %v7175
        %v7380 = vunpack.c.l.b16 %v7176
        %v7381 = vunpack.c.l.b16 %v7177
        %v7382 = vunpack.c.l.b16 %v7178
        %v7383 = vunpack.c.l.b16 %v7179
        %v7384 = vunpack.c.l.b16 %v7180
        %v7385 = vunpack.c.l.b16 %v7181
        %v7386 = vunpack.c.l.b16 %v7182
        %v7387 = vunpack.c.l.b16 %v7183
        %v7388 = vpack.c.b16 %v7357, %v7356
        %v7389 = vpack.c.b16 %v7359, %v7358
        %v7390 = vpack.c.b16 %v7361, %v7360
        %v7391 = vpack.c.b16 %v7363, %v7362
        %v7392 = vpack.c.b16 %v7365, %v7364
        %v7393 = vpack.c.b16 %v7367, %v7366
        %v7394 = vpack.c.b16 %v7369, %v7368
        %v7395 = vpack.c.b16 %v7371, %v7370
        %v7396 = vpack.c.b16 %v7373, %v7372
        %v7397 = vpack.c.b16 %v7375, %v7374
        %v7398 = vpack.c.b16 %v7377, %v7376
        %v7399 = vpack.c.b16 %v7379, %v7378
        %v7400 = vpack.c.b16 %v7381, %v7380
        %v7401 = vpack.c.b16 %v7383, %v7382
        %v7402 = vpack.c.b16 %v7385, %v7384
        %v7403 = vpack.c.b16 %v7387, %v7386
        %7420 = vmatprep.subr.bf16.mxu0 0
        %7421 = vmatpush1.bf16.msra.mxu0 %v7395
        %7422 = vmatprep.subr.bf16.mxu0 0
        %7423 = vmatpush1.bf16.msra.mxu0 %v7394
        %7424 = vmatprep.subr.bf16.mxu0 0
        %7425 = vmatpush1.bf16.msra.mxu0 %v7393
        %7426 = vmatprep.subr.bf16.mxu0 0
        %7427 = vmatpush1.bf16.msra.mxu0 %v7392
        %7428 = vmatprep.subr.bf16.mxu0 0
        %7429 = vmatpush1.bf16.msra.mxu0 %v7391
        %7430 = vmatprep.subr.bf16.mxu0 0
        %7431 = vmatpush1.bf16.msra.mxu0 %v7390
        %7432 = vmatprep.subr.bf16.mxu0 0
        %7433 = vmatpush1.bf16.msra.mxu0 %v7389
        %7434 = vmatprep.subr.bf16.mxu0 0
        %7435 = vmatpush1.bf16.msra.mxu0 %v7388
        %7436 = vmatprep.subr.bf16.mxu0 0
        %7437 = vmatpush2.bf16.msra.mxu0 %v7403
        %7438 = vmatprep.subr.bf16.mxu0 0
        %7439 = vmatpush2.bf16.msra.mxu0 %v7402
        %7440 = vmatprep.subr.bf16.mxu0 0
        %7441 = vmatpush2.bf16.msra.mxu0 %v7401
        %7442 = vmatprep.subr.bf16.mxu0 0
        %7443 = vmatpush2.bf16.msra.mxu0 %v7400
        %7444 = vmatprep.subr.bf16.mxu0 0
        %7445 = vmatpush2.bf16.msra.mxu0 %v7399
        %7446 = vmatprep.subr.bf16.mxu0 0
        %7447 = vmatpush2.bf16.msra.mxu0 %v7398
        %7448 = vmatprep.subr.bf16.mxu0 0
        %7449 = vmatpush2.bf16.msra.mxu0 %v7397
        %7450 = vmatprep.subr.bf16.mxu0 0
        %7451 = vmatpush2.bf16.msra.mxu0 %v7396
        %7452 = vmatprep.mubr.bf16.mxu0 %v7269
        %7453 = vmatmul.mubr.bf16.gmra.mxu0 %v7268
        %v7454 = vpop.f32.mrf.mxu0
        %v7455 = vadd.f32 0.0, %v7454
        %v7456 = vpop.f32.mrf.mxu0
        %v7457 = vpop.f32.mrf.mxu0
        %v7458 = vadd.f32 0.0, %v7457
        %v7459 = vpop.f32.mrf.mxu0
        %7460 = vmatprep.mubr.bf16.mxu0 %v7271
        %7461 = vmatmul.mubr.bf16.gmra.mxu0 %v7270
        %v7462 = vpop.f32.mrf.mxu0
        %v7463 = vadd.f32 0.0, %v7462
        %v7464 = vpop.f32.mrf.mxu0
        %v7465 = vpop.f32.mrf.mxu0
        %v7466 = vadd.f32 0.0, %v7465
        %v7467 = vpop.f32.mrf.mxu0
        %7468 = vmatprep.mubr.bf16.mxu0 %v7273
        %7469 = vmatmul.mubr.bf16.gmra.mxu0 %v7272
        %v7470 = vpop.f32.mrf.mxu0
        %v7471 = vadd.f32 0.0, %v7470
        %v7472 = vpop.f32.mrf.mxu0
        %v7473 = vpop.f32.mrf.mxu0
        %v7474 = vadd.f32 0.0, %v7473
        %v7475 = vpop.f32.mrf.mxu0
        %7476 = vmatprep.mubr.bf16.mxu0 %v7275
        %7477 = vmatmul.mubr.bf16.gmra.mxu0 %v7274
        %v7478 = vpop.f32.mrf.mxu0
        %v7479 = vadd.f32 0.0, %v7478
        %v7480 = vpop.f32.mrf.mxu0
        %v7481 = vpop.f32.mrf.mxu0
        %v7482 = vadd.f32 0.0, %v7481
        %v7483 = vpop.f32.mrf.mxu0
        %7484 = vmatprep.mubr.bf16.mxu0 %v7277
        %7485 = vmatmul.mubr.bf16.gmra.mxu0 %v7276
        %v7486 = vpop.f32.mrf.mxu0
        %v7487 = vadd.f32 0.0, %v7486
        %v7488 = vpop.f32.mrf.mxu0
        %v7489 = vpop.f32.mrf.mxu0
        %v7490 = vadd.f32 0.0, %v7489
        %v7491 = vpop.f32.mrf.mxu0
        %7492 = vmatprep.mubr.bf16.mxu0 %v7279
        %7493 = vmatmul.mubr.bf16.gmra.mxu0 %v7278
        %v7494 = vpop.f32.mrf.mxu0
        %v7495 = vadd.f32 0.0, %v7494
        %v7496 = vpop.f32.mrf.mxu0
        %v7497 = vpop.f32.mrf.mxu0
        %v7498 = vadd.f32 0.0, %v7497
        %v7499 = vpop.f32.mrf.mxu0
        %7500 = vmatprep.mubr.bf16.mxu0 %v7281
        %7501 = vmatmul.mubr.bf16.gmra.mxu0 %v7280
        %v7502 = vpop.f32.mrf.mxu0
        %v7503 = vadd.f32 0.0, %v7502
        %v7504 = vpop.f32.mrf.mxu0
        %v7505 = vpop.f32.mrf.mxu0
        %v7506 = vadd.f32 0.0, %v7505
        %v7507 = vpop.f32.mrf.mxu0
        %7508 = vmatprep.mubr.bf16.mxu0 %v7283
        %7509 = vmatmul.mubr.bf16.gmra.mxu0 %v7282
        %v7510 = vpop.f32.mrf.mxu0
        %v7511 = vadd.f32 0.0, %v7510
        %v7512 = vpop.f32.mrf.mxu0
        %v7513 = vpop.f32.mrf.mxu0
        %v7514 = vadd.f32 0.0, %v7513
        %v7515 = vpop.f32.mrf.mxu0
        %7516 = vmatprep.mubr.bf16.mxu0 %v7285
        %7517 = vmatmul.mubr.bf16.gmra.mxu0 %v7284
        %v7518 = vpop.f32.mrf.mxu0
        %v7519 = vadd.f32 0.0, %v7518
        %v7520 = vpop.f32.mrf.mxu0
        %v7521 = vpop.f32.mrf.mxu0
        %v7522 = vadd.f32 0.0, %v7521
        %v7523 = vpop.f32.mrf.mxu0
        %7524 = vmatprep.mubr.bf16.mxu0 %v7287
        %7525 = vmatmul.mubr.bf16.gmra.mxu0 %v7286
        %v7526 = vpop.f32.mrf.mxu0
        %v7527 = vadd.f32 0.0, %v7526
        %v7528 = vpop.f32.mrf.mxu0
        %v7529 = vpop.f32.mrf.mxu0
        %v7530 = vadd.f32 0.0, %v7529
        %v7531 = vpop.f32.mrf.mxu0
        %7532 = vmatprep.mubr.bf16.mxu0 %v7289
        %7533 = vmatmul.mubr.bf16.gmra.mxu0 %v7288
        %v7534 = vpop.f32.mrf.mxu0
        %v7535 = vadd.f32 0.0, %v7534
        %v7536 = vpop.f32.mrf.mxu0
        %v7537 = vpop.f32.mrf.mxu0
        %v7538 = vadd.f32 0.0, %v7537
        %v7539 = vpop.f32.mrf.mxu0
        %7540 = vmatprep.mubr.bf16.mxu0 %v7291
        %7541 = vmatmul.mubr.bf16.gmra.mxu0 %v7290
        %v7542 = vpop.f32.mrf.mxu0
        %v7543 = vadd.f32 0.0, %v7542
        %v7544 = vpop.f32.mrf.mxu0
        %v7545 = vpop.f32.mrf.mxu0
        %v7546 = vadd.f32 0.0, %v7545
        %v7547 = vpop.f32.mrf.mxu0
        %7548 = vmatprep.mubr.bf16.mxu0 %v7293
        %7549 = vmatmul.mubr.bf16.gmra.mxu0 %v7292
        %v7550 = vpop.f32.mrf.mxu0
        %v7551 = vadd.f32 0.0, %v7550
        %v7552 = vpop.f32.mrf.mxu0
        %v7553 = vpop.f32.mrf.mxu0
        %v7554 = vadd.f32 0.0, %v7553
        %v7555 = vpop.f32.mrf.mxu0
        %7556 = vmatprep.mubr.bf16.mxu0 %v7295
        %7557 = vmatmul.mubr.bf16.gmra.mxu0 %v7294
        %v7558 = vpop.f32.mrf.mxu0
        %v7559 = vadd.f32 0.0, %v7558
        %v7560 = vpop.f32.mrf.mxu0
        %v7561 = vpop.f32.mrf.mxu0
        %v7562 = vadd.f32 0.0, %v7561
        %v7563 = vpop.f32.mrf.mxu0
        %7564 = vdwg.mxu0
        %v7565 = vadd.f32 %v7014, %v7455
        %v7566 = vadd.f32 %v7017, %v7458
        %v7567 = vadd.f32 %v7022, %v7463
        %v7568 = vadd.f32 %v7025, %v7466
        %v7569 = vadd.f32 %v7030, %v7471
        %v7570 = vadd.f32 %v7033, %v7474
        %v7571 = vadd.f32 %v7038, %v7479
        %v7572 = vadd.f32 %v7041, %v7482
        %v7573 = vadd.f32 %v7046, %v7487
        %v7574 = vadd.f32 %v7049, %v7490
        %v7575 = vadd.f32 %v7054, %v7495
        %v7576 = vadd.f32 %v7057, %v7498
        %v7577 = vadd.f32 %v7062, %v7503
        %v7578 = vadd.f32 %v7065, %v7506
        %v7579 = vadd.f32 %v7070, %v7511
        %v7580 = vadd.f32 %v7073, %v7514
        %v7581 = vadd.f32 %v7078, %v7519
        %v7582 = vadd.f32 %v7081, %v7522
        %v7583 = vadd.f32 %v7086, %v7527
        %v7584 = vadd.f32 %v7089, %v7530
        %v7585 = vadd.f32 %v7094, %v7535
        %v7586 = vadd.f32 %v7097, %v7538
        %v7587 = vadd.f32 %v7102, %v7543
        %v7588 = vadd.f32 %v7105, %v7546
        %v7589 = vadd.f32 %v7110, %v7551
        %v7590 = vadd.f32 %v7113, %v7554
        %v7591 = vadd.f32 %v7118, %v7559
        %v7592 = vadd.f32 %v7121, %v7562
        %v7593 = vld [vmem:[#allocation2 + $0x10] sm:$0xff]
        %v7594 = vld [vmem:[#allocation2 + $0x18] sm:$0xff]
        %v7595 = vld [vmem:[#allocation2 + $0x20] sm:$0xff]
        %v7596 = vld [vmem:[#allocation2 + $0x28] sm:$0xff]
        %v7597 = vld [vmem:[#allocation2 + $0x30] sm:$0xff]
        %v7598 = vld [vmem:[#allocation2 + $0x38] sm:$0xff]
        %v7599 = vld [vmem:[#allocation2 + $0x40] sm:$0xff]
        %v7600 = vld [vmem:[#allocation2 + $0x48] sm:$0xff]
        %v7601 = vld [vmem:[#allocation2 + $0x50] sm:$0xff]
        %v7602 = vld [vmem:[#allocation2 + $0x58] sm:$0xff]
        %v7603 = vld [vmem:[#allocation2 + $0x60] sm:$0xff]
        %v7604 = vld [vmem:[#allocation2 + $0x68] sm:$0xff]
        %v7605 = vld [vmem:[#allocation2 + $0x70] sm:$0xff]
        %v7606 = vld [vmem:[#allocation2 + $0x78] sm:$0xff]
        %v7607 = vld [vmem:[#allocation2 + $0x80] sm:$0xff]
        %v7608 = vld [vmem:[#allocation2 + $0x88] sm:$0xff]
        %v7609 = vld [vmem:[#allocation2 + $0x90] sm:$0xff]
        %v7610 = vld [vmem:[#allocation2 + $0x98] sm:$0xff]
        %v7611 = vld [vmem:[#allocation2 + $0xa0] sm:$0xff]
        %v7612 = vld [vmem:[#allocation2 + $0xa8] sm:$0xff]
        %v7613 = vld [vmem:[#allocation2 + $0xb0] sm:$0xff]
        %v7614 = vld [vmem:[#allocation2 + $0xb8] sm:$0xff]
        %v7615 = vld [vmem:[#allocation2 + $0xc0] sm:$0xff]
        %v7616 = vld [vmem:[#allocation2 + $0xc8] sm:$0xff]
        %v7617 = vld [vmem:[#allocation2 + $0xd0] sm:$0xff]
        %v7618 = vld [vmem:[#allocation2 + $0xd8] sm:$0xff]
        %v7619 = vld [vmem:[#allocation2 + $0xe0] sm:$0xff]
        %v7620 = vld [vmem:[#allocation2 + $0xe8] sm:$0xff]
        %v7621 = vld [vmem:[%s3359 + $0x4] sm:$0xf]
        %v7622 = vld [vmem:[%s3359 + $0xc] sm:$0xf]
        %v7623 = vld [vmem:[%s3359 + $0x14] sm:$0xf]
        %v7624 = vld [vmem:[%s3359 + $0x1c] sm:$0xf]
        %v7625 = vld [vmem:[%s3359 + $0x24] sm:$0xf]
        %v7626 = vld [vmem:[%s3359 + $0x2c] sm:$0xf]
        %v7627 = vld [vmem:[%s3359 + $0x34] sm:$0xf]
        %v7628 = vld [vmem:[%s3359 + $0x3c] sm:$0xf]
        %v7629 = vld [vmem:[%s3359 + $0x44] sm:$0xf]
        %v7630 = vld [vmem:[%s3359 + $0x4c] sm:$0xf]
        %v7631 = vld [vmem:[%s3359 + $0x54] sm:$0xf]
        %v7632 = vld [vmem:[%s3359 + $0x5c] sm:$0xf]
        %v7633 = vld [vmem:[%s3359 + $0x64] sm:$0xf]
        %v7634 = vld [vmem:[%s3359 + $0x6c] sm:$0xf]
        %v7635 = vld [vmem:[%s3359 + $0x74] sm:$0xf]
        %v7636 = vld [vmem:[%s3359 + $0x7c] sm:$0xf]
        %v7637 = vld [vmem:[%s3359 + $0x84] sm:$0xf]
        %v7638 = vld [vmem:[%s3359 + $0x8c] sm:$0xf]
        %v7639 = vld [vmem:[%s3359 + $0x94] sm:$0xf]
        %v7640 = vld [vmem:[%s3359 + $0x9c] sm:$0xf]
        %v7641 = vld [vmem:[%s3359 + $0xa4] sm:$0xf]
        %v7642 = vld [vmem:[%s3359 + $0xac] sm:$0xf]
        %v7643 = vld [vmem:[%s3359 + $0xb4] sm:$0xf]
        %v7644 = vld [vmem:[%s3359 + $0xbc] sm:$0xf]
        %v7645 = vld [vmem:[%s3359 + $0xc4] sm:$0xf]
        %v7646 = vld [vmem:[%s3359 + $0xcc] sm:$0xf]
        %v7647 = vld [vmem:[%s3359 + $0xd4] sm:$0xf]
        %v7648 = vld [vmem:[%s3359 + $0xdc] sm:$0xf]
        %v7649 = vld [vmem:[%s3359 + $0xe4] sm:$0xf]
        %v7650 = vld [vmem:[%s3359 + $0xec] sm:$0xf]
        %v7651 = vld [vmem:[%s3359 + $0xf4] sm:$0xf]
        %v7652 = vld [vmem:[%s3359 + $0xfc] sm:$0xf]
        %v7681 = vunpack.c.l.b16 %v7593
        %v7682 = vunpack.c.h.b16 %v7593
        %v7683 = vunpack.c.l.b16 %v7594
        %v7684 = vunpack.c.h.b16 %v7594
        %v7685 = vunpack.c.l.b16 %v7595
        %v7686 = vunpack.c.h.b16 %v7595
        %v7687 = vunpack.c.l.b16 %v7596
        %v7688 = vunpack.c.h.b16 %v7596
        %v7689 = vunpack.c.l.b16 %v7597
        %v7690 = vunpack.c.h.b16 %v7597
        %v7691 = vunpack.c.l.b16 %v7598
        %v7692 = vunpack.c.h.b16 %v7598
        %v7693 = vunpack.c.l.b16 %v7599
        %v7694 = vunpack.c.h.b16 %v7599
        %v7695 = vunpack.c.l.b16 %v7600
        %v7696 = vunpack.c.h.b16 %v7600
        %v7697 = vunpack.c.l.b16 %v7601
        %v7698 = vunpack.c.h.b16 %v7601
        %v7699 = vunpack.c.l.b16 %v7602
        %v7700 = vunpack.c.h.b16 %v7602
        %v7701 = vunpack.c.l.b16 %v7603
        %v7702 = vunpack.c.h.b16 %v7603
        %v7703 = vunpack.c.l.b16 %v7604
        %v7704 = vunpack.c.h.b16 %v7604
        %v7705 = vunpack.c.l.b16 %v7605
        %v7706 = vunpack.c.h.b16 %v7605
        %v7707 = vunpack.c.l.b16 %v7606
        %v7708 = vunpack.c.h.b16 %v7606
        %v7709 = vunpack.c.l.b16 %v7607
        %v7710 = vunpack.c.h.b16 %v7607
        %v7711 = vunpack.c.l.b16 %v7608
        %v7712 = vunpack.c.h.b16 %v7608
        %v7713 = vunpack.c.l.b16 %v7609
        %v7714 = vunpack.c.h.b16 %v7609
        %v7715 = vunpack.c.l.b16 %v7610
        %v7716 = vunpack.c.h.b16 %v7610
        %v7717 = vunpack.c.l.b16 %v7611
        %v7718 = vunpack.c.h.b16 %v7611
        %v7719 = vunpack.c.l.b16 %v7612
        %v7720 = vunpack.c.h.b16 %v7612
        %v7721 = vunpack.c.l.b16 %v7613
        %v7722 = vunpack.c.h.b16 %v7613
        %v7723 = vunpack.c.l.b16 %v7614
        %v7724 = vunpack.c.h.b16 %v7614
        %v7725 = vunpack.c.l.b16 %v7615
        %v7726 = vunpack.c.h.b16 %v7615
        %v7727 = vunpack.c.l.b16 %v7616
        %v7728 = vunpack.c.h.b16 %v7616
        %v7729 = vunpack.c.l.b16 %v7617
        %v7730 = vunpack.c.h.b16 %v7617
        %v7731 = vunpack.c.l.b16 %v7618
        %v7732 = vunpack.c.h.b16 %v7618
        %v7733 = vunpack.c.l.b16 %v7619
        %v7734 = vunpack.c.h.b16 %v7619
        %v7735 = vunpack.c.l.b16 %v7620
        %v7736 = vunpack.c.h.b16 %v7620
        %v7737 = vpack.c.b16 %v7683, %v7681
        %v7738 = vpack.c.b16 %v7684, %v7682
        %v7739 = vpack.c.b16 %v7687, %v7685
        %v7740 = vpack.c.b16 %v7688, %v7686
        %v7741 = vpack.c.b16 %v7691, %v7689
        %v7742 = vpack.c.b16 %v7692, %v7690
        %v7743 = vpack.c.b16 %v7695, %v7693
        %v7744 = vpack.c.b16 %v7696, %v7694
        %v7745 = vpack.c.b16 %v7699, %v7697
        %v7746 = vpack.c.b16 %v7700, %v7698
        %v7747 = vpack.c.b16 %v7703, %v7701
        %v7748 = vpack.c.b16 %v7704, %v7702
        %v7749 = vpack.c.b16 %v7707, %v7705
        %v7750 = vpack.c.b16 %v7708, %v7706
        %v7751 = vpack.c.b16 %v7711, %v7709
        %v7752 = vpack.c.b16 %v7712, %v7710
        %v7753 = vpack.c.b16 %v7715, %v7713
        %v7754 = vpack.c.b16 %v7716, %v7714
        %v7755 = vpack.c.b16 %v7719, %v7717
        %v7756 = vpack.c.b16 %v7720, %v7718
        %v7757 = vpack.c.b16 %v7723, %v7721
        %v7758 = vpack.c.b16 %v7724, %v7722
        %v7759 = vpack.c.b16 %v7727, %v7725
        %v7760 = vpack.c.b16 %v7728, %v7726
        %v7761 = vpack.c.b16 %v7731, %v7729
        %v7762 = vpack.c.b16 %v7732, %v7730
        %v7763 = vpack.c.b16 %v7735, %v7733
        %v7764 = vpack.c.b16 %v7736, %v7734
        %v7825 = vunpack.c.l.b16 %v7621
        %v7826 = vunpack.c.l.b16 %v7622
        %v7827 = vunpack.c.l.b16 %v7623
        %v7828 = vunpack.c.l.b16 %v7624
        %v7829 = vunpack.c.l.b16 %v7625
        %v7830 = vunpack.c.l.b16 %v7626
        %v7831 = vunpack.c.l.b16 %v7627
        %v7832 = vunpack.c.l.b16 %v7628
        %v7833 = vunpack.c.l.b16 %v7629
        %v7834 = vunpack.c.l.b16 %v7630
        %v7835 = vunpack.c.l.b16 %v7631
        %v7836 = vunpack.c.l.b16 %v7632
        %v7837 = vunpack.c.l.b16 %v7633
        %v7838 = vunpack.c.l.b16 %v7634
        %v7839 = vunpack.c.l.b16 %v7635
        %v7840 = vunpack.c.l.b16 %v7636
        %v7841 = vunpack.c.l.b16 %v7637
        %v7842 = vunpack.c.l.b16 %v7638
        %v7843 = vunpack.c.l.b16 %v7639
        %v7844 = vunpack.c.l.b16 %v7640
        %v7845 = vunpack.c.l.b16 %v7641
        %v7846 = vunpack.c.l.b16 %v7642
        %v7847 = vunpack.c.l.b16 %v7643
        %v7848 = vunpack.c.l.b16 %v7644
        %v7849 = vunpack.c.l.b16 %v7645
        %v7850 = vunpack.c.l.b16 %v7646
        %v7851 = vunpack.c.l.b16 %v7647
        %v7852 = vunpack.c.l.b16 %v7648
        %v7853 = vunpack.c.l.b16 %v7649
        %v7854 = vunpack.c.l.b16 %v7650
        %v7855 = vunpack.c.l.b16 %v7651
        %v7856 = vunpack.c.l.b16 %v7652
        %v7857 = vpack.c.b16 %v7826, %v7825
        %v7858 = vpack.c.b16 %v7828, %v7827
        %v7859 = vpack.c.b16 %v7830, %v7829
        %v7860 = vpack.c.b16 %v7832, %v7831
        %v7861 = vpack.c.b16 %v7834, %v7833
        %v7862 = vpack.c.b16 %v7836, %v7835
        %v7863 = vpack.c.b16 %v7838, %v7837
        %v7864 = vpack.c.b16 %v7840, %v7839
        %v7865 = vpack.c.b16 %v7842, %v7841
        %v7866 = vpack.c.b16 %v7844, %v7843
        %v7867 = vpack.c.b16 %v7846, %v7845
        %v7868 = vpack.c.b16 %v7848, %v7847
        %v7869 = vpack.c.b16 %v7850, %v7849
        %v7870 = vpack.c.b16 %v7852, %v7851
        %v7871 = vpack.c.b16 %v7854, %v7853
        %v7872 = vpack.c.b16 %v7856, %v7855
        %7889 = vmatprep.subr.bf16.mxu0 0
        %7890 = vmatpush1.bf16.msra.mxu0 %v7864
        %7891 = vmatprep.subr.bf16.mxu0 0
        %7892 = vmatpush1.bf16.msra.mxu0 %v7863
        %7893 = vmatprep.subr.bf16.mxu0 0
        %7894 = vmatpush1.bf16.msra.mxu0 %v7862
        %7895 = vmatprep.subr.bf16.mxu0 0
        %7896 = vmatpush1.bf16.msra.mxu0 %v7861
        %7897 = vmatprep.subr.bf16.mxu0 0
        %7898 = vmatpush1.bf16.msra.mxu0 %v7860
        %7899 = vmatprep.subr.bf16.mxu0 0
        %7900 = vmatpush1.bf16.msra.mxu0 %v7859
        %7901 = vmatprep.subr.bf16.mxu0 0
        %7902 = vmatpush1.bf16.msra.mxu0 %v7858
        %7903 = vmatprep.subr.bf16.mxu0 0
        %7904 = vmatpush1.bf16.msra.mxu0 %v7857
        %7905 = vmatprep.subr.bf16.mxu0 0
        %7906 = vmatpush2.bf16.msra.mxu0 %v7872
        %7907 = vmatprep.subr.bf16.mxu0 0
        %7908 = vmatpush2.bf16.msra.mxu0 %v7871
        %7909 = vmatprep.subr.bf16.mxu0 0
        %7910 = vmatpush2.bf16.msra.mxu0 %v7870
        %7911 = vmatprep.subr.bf16.mxu0 0
        %7912 = vmatpush2.bf16.msra.mxu0 %v7869
        %7913 = vmatprep.subr.bf16.mxu0 0
        %7914 = vmatpush2.bf16.msra.mxu0 %v7868
        %7915 = vmatprep.subr.bf16.mxu0 0
        %7916 = vmatpush2.bf16.msra.mxu0 %v7867
        %7917 = vmatprep.subr.bf16.mxu0 0
        %7918 = vmatpush2.bf16.msra.mxu0 %v7866
        %7919 = vmatprep.subr.bf16.mxu0 0
        %7920 = vmatpush2.bf16.msra.mxu0 %v7865
        %7921 = vmatprep.mubr.bf16.mxu0 %v7738
        %7922 = vmatmul.mubr.bf16.gmra.mxu0 %v7737
        %v7923 = vpop.f32.mrf.mxu0
        %v7924 = vadd.f32 0.0, %v7923
        %v7925 = vpop.f32.mrf.mxu0
        %v7926 = vpop.f32.mrf.mxu0
        %v7927 = vadd.f32 0.0, %v7926
        %v7928 = vpop.f32.mrf.mxu0
        %7929 = vmatprep.mubr.bf16.mxu0 %v7740
        %7930 = vmatmul.mubr.bf16.gmra.mxu0 %v7739
        %v7931 = vpop.f32.mrf.mxu0
        %v7932 = vadd.f32 0.0, %v7931
        %v7933 = vpop.f32.mrf.mxu0
        %v7934 = vpop.f32.mrf.mxu0
        %v7935 = vadd.f32 0.0, %v7934
        %v7936 = vpop.f32.mrf.mxu0
        %7937 = vmatprep.mubr.bf16.mxu0 %v7742
        %7938 = vmatmul.mubr.bf16.gmra.mxu0 %v7741
        %v7939 = vpop.f32.mrf.mxu0
        %v7940 = vadd.f32 0.0, %v7939
        %v7941 = vpop.f32.mrf.mxu0
        %v7942 = vpop.f32.mrf.mxu0
        %v7943 = vadd.f32 0.0, %v7942
        %v7944 = vpop.f32.mrf.mxu0
        %7945 = vmatprep.mubr.bf16.mxu0 %v7744
        %7946 = vmatmul.mubr.bf16.gmra.mxu0 %v7743
        %v7947 = vpop.f32.mrf.mxu0
        %v7948 = vadd.f32 0.0, %v7947
        %v7949 = vpop.f32.mrf.mxu0
        %v7950 = vpop.f32.mrf.mxu0
        %v7951 = vadd.f32 0.0, %v7950
        %v7952 = vpop.f32.mrf.mxu0
        %7953 = vmatprep.mubr.bf16.mxu0 %v7746
        %7954 = vmatmul.mubr.bf16.gmra.mxu0 %v7745
        %v7955 = vpop.f32.mrf.mxu0
        %v7956 = vadd.f32 0.0, %v7955
        %v7957 = vpop.f32.mrf.mxu0
        %v7958 = vpop.f32.mrf.mxu0
        %v7959 = vadd.f32 0.0, %v7958
        %v7960 = vpop.f32.mrf.mxu0
        %7961 = vmatprep.mubr.bf16.mxu0 %v7748
        %7962 = vmatmul.mubr.bf16.gmra.mxu0 %v7747
        %v7963 = vpop.f32.mrf.mxu0
        %v7964 = vadd.f32 0.0, %v7963
        %v7965 = vpop.f32.mrf.mxu0
        %v7966 = vpop.f32.mrf.mxu0
        %v7967 = vadd.f32 0.0, %v7966
        %v7968 = vpop.f32.mrf.mxu0
        %7969 = vmatprep.mubr.bf16.mxu0 %v7750
        %7970 = vmatmul.mubr.bf16.gmra.mxu0 %v7749
        %v7971 = vpop.f32.mrf.mxu0
        %v7972 = vadd.f32 0.0, %v7971
        %v7973 = vpop.f32.mrf.mxu0
        %v7974 = vpop.f32.mrf.mxu0
        %v7975 = vadd.f32 0.0, %v7974
        %v7976 = vpop.f32.mrf.mxu0
        %7977 = vmatprep.mubr.bf16.mxu0 %v7752
        %7978 = vmatmul.mubr.bf16.gmra.mxu0 %v7751
        %v7979 = vpop.f32.mrf.mxu0
        %v7980 = vadd.f32 0.0, %v7979
        %v7981 = vpop.f32.mrf.mxu0
        %v7982 = vpop.f32.mrf.mxu0
        %v7983 = vadd.f32 0.0, %v7982
        %v7984 = vpop.f32.mrf.mxu0
        %7985 = vmatprep.mubr.bf16.mxu0 %v7754
        %7986 = vmatmul.mubr.bf16.gmra.mxu0 %v7753
        %v7987 = vpop.f32.mrf.mxu0
        %v7988 = vadd.f32 0.0, %v7987
        %v7989 = vpop.f32.mrf.mxu0
        %v7990 = vpop.f32.mrf.mxu0
        %v7991 = vadd.f32 0.0, %v7990
        %v7992 = vpop.f32.mrf.mxu0
        %7993 = vmatprep.mubr.bf16.mxu0 %v7756
        %7994 = vmatmul.mubr.bf16.gmra.mxu0 %v7755
        %v7995 = vpop.f32.mrf.mxu0
        %v7996 = vadd.f32 0.0, %v7995
        %v7997 = vpop.f32.mrf.mxu0
        %v7998 = vpop.f32.mrf.mxu0
        %v7999 = vadd.f32 0.0, %v7998
        %v8000 = vpop.f32.mrf.mxu0
        %8001 = vmatprep.mubr.bf16.mxu0 %v7758
        %8002 = vmatmul.mubr.bf16.gmra.mxu0 %v7757
        %v8003 = vpop.f32.mrf.mxu0
        %v8004 = vadd.f32 0.0, %v8003
        %v8005 = vpop.f32.mrf.mxu0
        %v8006 = vpop.f32.mrf.mxu0
        %v8007 = vadd.f32 0.0, %v8006
        %v8008 = vpop.f32.mrf.mxu0
        %8009 = vmatprep.mubr.bf16.mxu0 %v7760
        %8010 = vmatmul.mubr.bf16.gmra.mxu0 %v7759
        %v8011 = vpop.f32.mrf.mxu0
        %v8012 = vadd.f32 0.0, %v8011
        %v8013 = vpop.f32.mrf.mxu0
        %v8014 = vpop.f32.mrf.mxu0
        %v8015 = vadd.f32 0.0, %v8014
        %v8016 = vpop.f32.mrf.mxu0
        %8017 = vmatprep.mubr.bf16.mxu0 %v7762
        %8018 = vmatmul.mubr.bf16.gmra.mxu0 %v7761
        %v8019 = vpop.f32.mrf.mxu0
        %v8020 = vadd.f32 0.0, %v8019
        %v8021 = vpop.f32.mrf.mxu0
        %v8022 = vpop.f32.mrf.mxu0
        %v8023 = vadd.f32 0.0, %v8022
        %v8024 = vpop.f32.mrf.mxu0
        %8025 = vmatprep.mubr.bf16.mxu0 %v7764
        %8026 = vmatmul.mubr.bf16.gmra.mxu0 %v7763
        %v8027 = vpop.f32.mrf.mxu0
        %v8028 = vadd.f32 0.0, %v8027
        %v8029 = vpop.f32.mrf.mxu0
        %v8030 = vpop.f32.mrf.mxu0
        %v8031 = vadd.f32 0.0, %v8030
        %v8032 = vpop.f32.mrf.mxu0
        %8033 = vdwg.mxu0
        %v8034 = vadd.f32 %v7565, %v7924
        %v8035 = vadd.f32 %v7566, %v7927
        %v8036 = vadd.f32 %v7567, %v7932
        %v8037 = vadd.f32 %v7568, %v7935
        %v8038 = vadd.f32 %v7569, %v7940
        %v8039 = vadd.f32 %v7570, %v7943
        %v8040 = vadd.f32 %v7571, %v7948
        %v8041 = vadd.f32 %v7572, %v7951
        %v8042 = vadd.f32 %v7573, %v7956
        %v8043 = vadd.f32 %v7574, %v7959
        %v8044 = vadd.f32 %v7575, %v7964
        %v8045 = vadd.f32 %v7576, %v7967
        %v8046 = vadd.f32 %v7577, %v7972
        %v8047 = vadd.f32 %v7578, %v7975
        %v8048 = vadd.f32 %v7579, %v7980
        %v8049 = vadd.f32 %v7580, %v7983
        %v8050 = vadd.f32 %v7581, %v7988
        %v8051 = vadd.f32 %v7582, %v7991
        %v8052 = vadd.f32 %v7583, %v7996
        %v8053 = vadd.f32 %v7584, %v7999
        %v8054 = vadd.f32 %v7585, %v8004
        %v8055 = vadd.f32 %v7586, %v8007
        %v8056 = vadd.f32 %v7587, %v8012
        %v8057 = vadd.f32 %v7588, %v8015
        %v8058 = vadd.f32 %v7589, %v8020
        %v8059 = vadd.f32 %v7590, %v8023
        %v8060 = vadd.f32 %v7591, %v8028
        %v8061 = vadd.f32 %v7592, %v8031
        %v8062 = vld [vmem:[#allocation3 + $0x10] sm:$0xff]
        %v8063 = vld [vmem:[#allocation3 + $0x18] sm:$0xff]
        %v8064 = vld [vmem:[#allocation3 + $0x20] sm:$0xff]
        %v8065 = vld [vmem:[#allocation3 + $0x28] sm:$0xff]
        %v8066 = vld [vmem:[#allocation3 + $0x30] sm:$0xff]
        %v8067 = vld [vmem:[#allocation3 + $0x38] sm:$0xff]
        %v8068 = vld [vmem:[#allocation3 + $0x40] sm:$0xff]
        %v8069 = vld [vmem:[#allocation3 + $0x48] sm:$0xff]
        %v8070 = vld [vmem:[#allocation3 + $0x50] sm:$0xff]
        %v8071 = vld [vmem:[#allocation3 + $0x58] sm:$0xff]
        %v8072 = vld [vmem:[#allocation3 + $0x60] sm:$0xff]
        %v8073 = vld [vmem:[#allocation3 + $0x68] sm:$0xff]
        %v8074 = vld [vmem:[#allocation3 + $0x70] sm:$0xff]
        %v8075 = vld [vmem:[#allocation3 + $0x78] sm:$0xff]
        %v8076 = vld [vmem:[#allocation3 + $0x80] sm:$0xff]
        %v8077 = vld [vmem:[#allocation3 + $0x88] sm:$0xff]
        %v8078 = vld [vmem:[#allocation3 + $0x90] sm:$0xff]
        %v8079 = vld [vmem:[#allocation3 + $0x98] sm:$0xff]
        %v8080 = vld [vmem:[#allocation3 + $0xa0] sm:$0xff]
        %v8081 = vld [vmem:[#allocation3 + $0xa8] sm:$0xff]
        %v8082 = vld [vmem:[#allocation3 + $0xb0] sm:$0xff]
        %v8083 = vld [vmem:[#allocation3 + $0xb8] sm:$0xff]
        %v8084 = vld [vmem:[#allocation3 + $0xc0] sm:$0xff]
        %v8085 = vld [vmem:[#allocation3 + $0xc8] sm:$0xff]
        %v8086 = vld [vmem:[#allocation3 + $0xd0] sm:$0xff]
        %v8087 = vld [vmem:[#allocation3 + $0xd8] sm:$0xff]
        %v8088 = vld [vmem:[#allocation3 + $0xe0] sm:$0xff]
        %v8089 = vld [vmem:[#allocation3 + $0xe8] sm:$0xff]
        %v8090 = vld [vmem:[%s3829 + $0x4] sm:$0xf]
        %v8091 = vld [vmem:[%s3829 + $0xc] sm:$0xf]
        %v8092 = vld [vmem:[%s3829 + $0x14] sm:$0xf]
        %v8093 = vld [vmem:[%s3829 + $0x1c] sm:$0xf]
        %v8094 = vld [vmem:[%s3829 + $0x24] sm:$0xf]
        %v8095 = vld [vmem:[%s3829 + $0x2c] sm:$0xf]
        %v8096 = vld [vmem:[%s3829 + $0x34] sm:$0xf]
        %v8097 = vld [vmem:[%s3829 + $0x3c] sm:$0xf]
        %v8098 = vld [vmem:[%s3829 + $0x44] sm:$0xf]
        %v8099 = vld [vmem:[%s3829 + $0x4c] sm:$0xf]
        %v8100 = vld [vmem:[%s3829 + $0x54] sm:$0xf]
        %v8101 = vld [vmem:[%s3829 + $0x5c] sm:$0xf]
        %v8102 = vld [vmem:[%s3829 + $0x64] sm:$0xf]
        %v8103 = vld [vmem:[%s3829 + $0x6c] sm:$0xf]
        %v8104 = vld [vmem:[%s3829 + $0x74] sm:$0xf]
        %v8105 = vld [vmem:[%s3829 + $0x7c] sm:$0xf]
        %v8106 = vld [vmem:[%s3829 + $0x84] sm:$0xf]
        %v8107 = vld [vmem:[%s3829 + $0x8c] sm:$0xf]
        %v8108 = vld [vmem:[%s3829 + $0x94] sm:$0xf]
        %v8109 = vld [vmem:[%s3829 + $0x9c] sm:$0xf]
        %v8110 = vld [vmem:[%s3829 + $0xa4] sm:$0xf]
        %v8111 = vld [vmem:[%s3829 + $0xac] sm:$0xf]
        %v8112 = vld [vmem:[%s3829 + $0xb4] sm:$0xf]
        %v8113 = vld [vmem:[%s3829 + $0xbc] sm:$0xf]
        %v8114 = vld [vmem:[%s3829 + $0xc4] sm:$0xf]
        %v8115 = vld [vmem:[%s3829 + $0xcc] sm:$0xf]
        %v8116 = vld [vmem:[%s3829 + $0xd4] sm:$0xf]
        %v8117 = vld [vmem:[%s3829 + $0xdc] sm:$0xf]
        %v8118 = vld [vmem:[%s3829 + $0xe4] sm:$0xf]
        %v8119 = vld [vmem:[%s3829 + $0xec] sm:$0xf]
        %v8120 = vld [vmem:[%s3829 + $0xf4] sm:$0xf]
        %v8121 = vld [vmem:[%s3829 + $0xfc] sm:$0xf]
        %v8150 = vunpack.c.l.b16 %v8062
        %v8151 = vunpack.c.h.b16 %v8062
        %v8152 = vunpack.c.l.b16 %v8063
        %v8153 = vunpack.c.h.b16 %v8063
        %v8154 = vunpack.c.l.b16 %v8064
        %v8155 = vunpack.c.h.b16 %v8064
        %v8156 = vunpack.c.l.b16 %v8065
        %v8157 = vunpack.c.h.b16 %v8065
        %v8158 = vunpack.c.l.b16 %v8066
        %v8159 = vunpack.c.h.b16 %v8066
        %v8160 = vunpack.c.l.b16 %v8067
        %v8161 = vunpack.c.h.b16 %v8067
        %v8162 = vunpack.c.l.b16 %v8068
        %v8163 = vunpack.c.h.b16 %v8068
        %v8164 = vunpack.c.l.b16 %v8069
        %v8165 = vunpack.c.h.b16 %v8069
        %v8166 = vunpack.c.l.b16 %v8070
        %v8167 = vunpack.c.h.b16 %v8070
        %v8168 = vunpack.c.l.b16 %v8071
        %v8169 = vunpack.c.h.b16 %v8071
        %v8170 = vunpack.c.l.b16 %v8072
        %v8171 = vunpack.c.h.b16 %v8072
        %v8172 = vunpack.c.l.b16 %v8073
        %v8173 = vunpack.c.h.b16 %v8073
        %v8174 = vunpack.c.l.b16 %v8074
        %v8175 = vunpack.c.h.b16 %v8074
        %v8176 = vunpack.c.l.b16 %v8075
        %v8177 = vunpack.c.h.b16 %v8075
        %v8178 = vunpack.c.l.b16 %v8076
        %v8179 = vunpack.c.h.b16 %v8076
        %v8180 = vunpack.c.l.b16 %v8077
        %v8181 = vunpack.c.h.b16 %v8077
        %v8182 = vunpack.c.l.b16 %v8078
        %v8183 = vunpack.c.h.b16 %v8078
        %v8184 = vunpack.c.l.b16 %v8079
        %v8185 = vunpack.c.h.b16 %v8079
        %v8186 = vunpack.c.l.b16 %v8080
        %v8187 = vunpack.c.h.b16 %v8080
        %v8188 = vunpack.c.l.b16 %v8081
        %v8189 = vunpack.c.h.b16 %v8081
        %v8190 = vunpack.c.l.b16 %v8082
        %v8191 = vunpack.c.h.b16 %v8082
        %v8192 = vunpack.c.l.b16 %v8083
        %v8193 = vunpack.c.h.b16 %v8083
        %v8194 = vunpack.c.l.b16 %v8084
        %v8195 = vunpack.c.h.b16 %v8084
        %v8196 = vunpack.c.l.b16 %v8085
        %v8197 = vunpack.c.h.b16 %v8085
        %v8198 = vunpack.c.l.b16 %v8086
        %v8199 = vunpack.c.h.b16 %v8086
        %v8200 = vunpack.c.l.b16 %v8087
        %v8201 = vunpack.c.h.b16 %v8087
        %v8202 = vunpack.c.l.b16 %v8088
        %v8203 = vunpack.c.h.b16 %v8088
        %v8204 = vunpack.c.l.b16 %v8089
        %v8205 = vunpack.c.h.b16 %v8089
        %v8206 = vpack.c.b16 %v8152, %v8150
        %v8207 = vpack.c.b16 %v8153, %v8151
        %v8208 = vpack.c.b16 %v8156, %v8154
        %v8209 = vpack.c.b16 %v8157, %v8155
        %v8210 = vpack.c.b16 %v8160, %v8158
        %v8211 = vpack.c.b16 %v8161, %v8159
        %v8212 = vpack.c.b16 %v8164, %v8162
        %v8213 = vpack.c.b16 %v8165, %v8163
        %v8214 = vpack.c.b16 %v8168, %v8166
        %v8215 = vpack.c.b16 %v8169, %v8167
        %v8216 = vpack.c.b16 %v8172, %v8170
        %v8217 = vpack.c.b16 %v8173, %v8171
        %v8218 = vpack.c.b16 %v8176, %v8174
        %v8219 = vpack.c.b16 %v8177, %v8175
        %v8220 = vpack.c.b16 %v8180, %v8178
        %v8221 = vpack.c.b16 %v8181, %v8179
        %v8222 = vpack.c.b16 %v8184, %v8182
        %v8223 = vpack.c.b16 %v8185, %v8183
        %v8224 = vpack.c.b16 %v8188, %v8186
        %v8225 = vpack.c.b16 %v8189, %v8187
        %v8226 = vpack.c.b16 %v8192, %v8190
        %v8227 = vpack.c.b16 %v8193, %v8191
        %v8228 = vpack.c.b16 %v8196, %v8194
        %v8229 = vpack.c.b16 %v8197, %v8195
        %v8230 = vpack.c.b16 %v8200, %v8198
        %v8231 = vpack.c.b16 %v8201, %v8199
        %v8232 = vpack.c.b16 %v8204, %v8202
        %v8233 = vpack.c.b16 %v8205, %v8203
        %v8294 = vunpack.c.l.b16 %v8090
        %v8295 = vunpack.c.l.b16 %v8091
        %v8296 = vunpack.c.l.b16 %v8092
        %v8297 = vunpack.c.l.b16 %v8093
        %v8298 = vunpack.c.l.b16 %v8094
        %v8299 = vunpack.c.l.b16 %v8095
        %v8300 = vunpack.c.l.b16 %v8096
        %v8301 = vunpack.c.l.b16 %v8097
        %v8302 = vunpack.c.l.b16 %v8098
        %v8303 = vunpack.c.l.b16 %v8099
        %v8304 = vunpack.c.l.b16 %v8100
        %v8305 = vunpack.c.l.b16 %v8101
        %v8306 = vunpack.c.l.b16 %v8102
        %v8307 = vunpack.c.l.b16 %v8103
        %v8308 = vunpack.c.l.b16 %v8104
        %v8309 = vunpack.c.l.b16 %v8105
        %v8310 = vunpack.c.l.b16 %v8106
        %v8311 = vunpack.c.l.b16 %v8107
        %v8312 = vunpack.c.l.b16 %v8108
        %v8313 = vunpack.c.l.b16 %v8109
        %v8314 = vunpack.c.l.b16 %v8110
        %v8315 = vunpack.c.l.b16 %v8111
        %v8316 = vunpack.c.l.b16 %v8112
        %v8317 = vunpack.c.l.b16 %v8113
        %v8318 = vunpack.c.l.b16 %v8114
        %v8319 = vunpack.c.l.b16 %v8115
        %v8320 = vunpack.c.l.b16 %v8116
        %v8321 = vunpack.c.l.b16 %v8117
        %v8322 = vunpack.c.l.b16 %v8118
        %v8323 = vunpack.c.l.b16 %v8119
        %v8324 = vunpack.c.l.b16 %v8120
        %v8325 = vunpack.c.l.b16 %v8121
        %v8326 = vpack.c.b16 %v8295, %v8294
        %v8327 = vpack.c.b16 %v8297, %v8296
        %v8328 = vpack.c.b16 %v8299, %v8298
        %v8329 = vpack.c.b16 %v8301, %v8300
        %v8330 = vpack.c.b16 %v8303, %v8302
        %v8331 = vpack.c.b16 %v8305, %v8304
        %v8332 = vpack.c.b16 %v8307, %v8306
        %v8333 = vpack.c.b16 %v8309, %v8308
        %v8334 = vpack.c.b16 %v8311, %v8310
        %v8335 = vpack.c.b16 %v8313, %v8312
        %v8336 = vpack.c.b16 %v8315, %v8314
        %v8337 = vpack.c.b16 %v8317, %v8316
        %v8338 = vpack.c.b16 %v8319, %v8318
        %v8339 = vpack.c.b16 %v8321, %v8320
        %v8340 = vpack.c.b16 %v8323, %v8322
        %v8341 = vpack.c.b16 %v8325, %v8324
        %8358 = vmatprep.subr.bf16.mxu0 0
        %8359 = vmatpush1.bf16.msra.mxu0 %v8333
        %8360 = vmatprep.subr.bf16.mxu0 0
        %8361 = vmatpush1.bf16.msra.mxu0 %v8332
        %8362 = vmatprep.subr.bf16.mxu0 0
        %8363 = vmatpush1.bf16.msra.mxu0 %v8331
        %8364 = vmatprep.subr.bf16.mxu0 0
        %8365 = vmatpush1.bf16.msra.mxu0 %v8330
        %8366 = vmatprep.subr.bf16.mxu0 0
        %8367 = vmatpush1.bf16.msra.mxu0 %v8329
        %8368 = vmatprep.subr.bf16.mxu0 0
        %8369 = vmatpush1.bf16.msra.mxu0 %v8328
        %8370 = vmatprep.subr.bf16.mxu0 0
        %8371 = vmatpush1.bf16.msra.mxu0 %v8327
        %8372 = vmatprep.subr.bf16.mxu0 0
        %8373 = vmatpush1.bf16.msra.mxu0 %v8326
        %8374 = vmatprep.subr.bf16.mxu0 0
        %8375 = vmatpush2.bf16.msra.mxu0 %v8341
        %8376 = vmatprep.subr.bf16.mxu0 0
        %8377 = vmatpush2.bf16.msra.mxu0 %v8340
        %8378 = vmatprep.subr.bf16.mxu0 0
        %8379 = vmatpush2.bf16.msra.mxu0 %v8339
        %8380 = vmatprep.subr.bf16.mxu0 0
        %8381 = vmatpush2.bf16.msra.mxu0 %v8338
        %8382 = vmatprep.subr.bf16.mxu0 0
        %8383 = vmatpush2.bf16.msra.mxu0 %v8337
        %8384 = vmatprep.subr.bf16.mxu0 0
        %8385 = vmatpush2.bf16.msra.mxu0 %v8336
        %8386 = vmatprep.subr.bf16.mxu0 0
        %8387 = vmatpush2.bf16.msra.mxu0 %v8335
        %8388 = vmatprep.subr.bf16.mxu0 0
        %8389 = vmatpush2.bf16.msra.mxu0 %v8334
        %8390 = vmatprep.mubr.bf16.mxu0 %v8207
        %8391 = vmatmul.mubr.bf16.gmra.mxu0 %v8206
        %v8392 = vpop.f32.mrf.mxu0
        %v8393 = vadd.f32 0.0, %v8392
        %v8394 = vpop.f32.mrf.mxu0
        %v8395 = vpop.f32.mrf.mxu0
        %v8396 = vadd.f32 0.0, %v8395
        %v8397 = vpop.f32.mrf.mxu0
        %8398 = vmatprep.mubr.bf16.mxu0 %v8209
        %8399 = vmatmul.mubr.bf16.gmra.mxu0 %v8208
        %v8400 = vpop.f32.mrf.mxu0
        %v8401 = vadd.f32 0.0, %v8400
        %v8402 = vpop.f32.mrf.mxu0
        %v8403 = vpop.f32.mrf.mxu0
        %v8404 = vadd.f32 0.0, %v8403
        %v8405 = vpop.f32.mrf.mxu0
        %8406 = vmatprep.mubr.bf16.mxu0 %v8211
        %8407 = vmatmul.mubr.bf16.gmra.mxu0 %v8210
        %v8408 = vpop.f32.mrf.mxu0
        %v8409 = vadd.f32 0.0, %v8408
        %v8410 = vpop.f32.mrf.mxu0
        %v8411 = vpop.f32.mrf.mxu0
        %v8412 = vadd.f32 0.0, %v8411
        %v8413 = vpop.f32.mrf.mxu0
        %8414 = vmatprep.mubr.bf16.mxu0 %v8213
        %8415 = vmatmul.mubr.bf16.gmra.mxu0 %v8212
        %v8416 = vpop.f32.mrf.mxu0
        %v8417 = vadd.f32 0.0, %v8416
        %v8418 = vpop.f32.mrf.mxu0
        %v8419 = vpop.f32.mrf.mxu0
        %v8420 = vadd.f32 0.0, %v8419
        %v8421 = vpop.f32.mrf.mxu0
        %8422 = vmatprep.mubr.bf16.mxu0 %v8215
        %8423 = vmatmul.mubr.bf16.gmra.mxu0 %v8214
        %v8424 = vpop.f32.mrf.mxu0
        %v8425 = vadd.f32 0.0, %v8424
        %v8426 = vpop.f32.mrf.mxu0
        %v8427 = vpop.f32.mrf.mxu0
        %v8428 = vadd.f32 0.0, %v8427
        %v8429 = vpop.f32.mrf.mxu0
        %8430 = vmatprep.mubr.bf16.mxu0 %v8217
        %8431 = vmatmul.mubr.bf16.gmra.mxu0 %v8216
        %v8432 = vpop.f32.mrf.mxu0
        %v8433 = vadd.f32 0.0, %v8432
        %v8434 = vpop.f32.mrf.mxu0
        %v8435 = vpop.f32.mrf.mxu0
        %v8436 = vadd.f32 0.0, %v8435
        %v8437 = vpop.f32.mrf.mxu0
        %8438 = vmatprep.mubr.bf16.mxu0 %v8219
        %8439 = vmatmul.mubr.bf16.gmra.mxu0 %v8218
        %v8440 = vpop.f32.mrf.mxu0
        %v8441 = vadd.f32 0.0, %v8440
        %v8442 = vpop.f32.mrf.mxu0
        %v8443 = vpop.f32.mrf.mxu0
        %v8444 = vadd.f32 0.0, %v8443
        %v8445 = vpop.f32.mrf.mxu0
        %8446 = vmatprep.mubr.bf16.mxu0 %v8221
        %8447 = vmatmul.mubr.bf16.gmra.mxu0 %v8220
        %v8448 = vpop.f32.mrf.mxu0
        %v8449 = vadd.f32 0.0, %v8448
        %v8450 = vpop.f32.mrf.mxu0
        %v8451 = vpop.f32.mrf.mxu0
        %v8452 = vadd.f32 0.0, %v8451
        %v8453 = vpop.f32.mrf.mxu0
        %8454 = vmatprep.mubr.bf16.mxu0 %v8223
        %8455 = vmatmul.mubr.bf16.gmra.mxu0 %v8222
        %v8456 = vpop.f32.mrf.mxu0
        %v8457 = vadd.f32 0.0, %v8456
        %v8458 = vpop.f32.mrf.mxu0
        %v8459 = vpop.f32.mrf.mxu0
        %v8460 = vadd.f32 0.0, %v8459
        %v8461 = vpop.f32.mrf.mxu0
        %8462 = vmatprep.mubr.bf16.mxu0 %v8225
        %8463 = vmatmul.mubr.bf16.gmra.mxu0 %v8224
        %v8464 = vpop.f32.mrf.mxu0
        %v8465 = vadd.f32 0.0, %v8464
        %v8466 = vpop.f32.mrf.mxu0
        %v8467 = vpop.f32.mrf.mxu0
        %v8468 = vadd.f32 0.0, %v8467
        %v8469 = vpop.f32.mrf.mxu0
        %8470 = vmatprep.mubr.bf16.mxu0 %v8227
        %8471 = vmatmul.mubr.bf16.gmra.mxu0 %v8226
        %v8472 = vpop.f32.mrf.mxu0
        %v8473 = vadd.f32 0.0, %v8472
        %v8474 = vpop.f32.mrf.mxu0
        %v8475 = vpop.f32.mrf.mxu0
        %v8476 = vadd.f32 0.0, %v8475
        %v8477 = vpop.f32.mrf.mxu0
        %8478 = vmatprep.mubr.bf16.mxu0 %v8229
        %8479 = vmatmul.mubr.bf16.gmra.mxu0 %v8228
        %v8480 = vpop.f32.mrf.mxu0
        %v8481 = vadd.f32 0.0, %v8480
        %v8482 = vpop.f32.mrf.mxu0
        %v8483 = vpop.f32.mrf.mxu0
        %v8484 = vadd.f32 0.0, %v8483
        %v8485 = vpop.f32.mrf.mxu0
        %8486 = vmatprep.mubr.bf16.mxu0 %v8231
        %8487 = vmatmul.mubr.bf16.gmra.mxu0 %v8230
        %v8488 = vpop.f32.mrf.mxu0
        %v8489 = vadd.f32 0.0, %v8488
        %v8490 = vpop.f32.mrf.mxu0
        %v8491 = vpop.f32.mrf.mxu0
        %v8492 = vadd.f32 0.0, %v8491
        %v8493 = vpop.f32.mrf.mxu0
        %8494 = vmatprep.mubr.bf16.mxu0 %v8233
        %8495 = vmatmul.mubr.bf16.gmra.mxu0 %v8232
        %v8496 = vpop.f32.mrf.mxu0
        %v8497 = vadd.f32 0.0, %v8496
        %v8498 = vpop.f32.mrf.mxu0
        %v8499 = vpop.f32.mrf.mxu0
        %v8500 = vadd.f32 0.0, %v8499
        %v8501 = vpop.f32.mrf.mxu0
        %8502 = vdwg.mxu0
        %v8503 = vadd.f32 %v8034, %v8393
        %v8504 = vadd.f32 %v8035, %v8396
        %v8505 = vadd.f32 %v8036, %v8401
        %v8506 = vadd.f32 %v8037, %v8404
        %v8507 = vadd.f32 %v8038, %v8409
        %v8508 = vadd.f32 %v8039, %v8412
        %v8509 = vadd.f32 %v8040, %v8417
        %v8510 = vadd.f32 %v8041, %v8420
        %v8511 = vadd.f32 %v8042, %v8425
        %v8512 = vadd.f32 %v8043, %v8428
        %v8513 = vadd.f32 %v8044, %v8433
        %v8514 = vadd.f32 %v8045, %v8436
        %v8515 = vadd.f32 %v8046, %v8441
        %v8516 = vadd.f32 %v8047, %v8444
        %v8517 = vadd.f32 %v8048, %v8449
        %v8518 = vadd.f32 %v8049, %v8452
        %v8519 = vadd.f32 %v8050, %v8457
        %v8520 = vadd.f32 %v8051, %v8460
        %v8521 = vadd.f32 %v8052, %v8465
        %v8522 = vadd.f32 %v8053, %v8468
        %v8523 = vadd.f32 %v8054, %v8473
        %v8524 = vadd.f32 %v8055, %v8476
        %v8525 = vadd.f32 %v8056, %v8481
        %v8526 = vadd.f32 %v8057, %v8484
        %v8527 = vadd.f32 %v8058, %v8489
        %v8528 = vadd.f32 %v8059, %v8492
        %v8529 = vadd.f32 %v8060, %v8497
        %v8530 = vadd.f32 %v8061, %v8500
        %v8531 = vld [vmem:[#allocation4 + $0x10] sm:$0xff]
        %v8532 = vld [vmem:[#allocation4 + $0x18] sm:$0xff]
        %v8533 = vld [vmem:[#allocation4 + $0x20] sm:$0xff]
        %v8534 = vld [vmem:[#allocation4 + $0x28] sm:$0xff]
        %v8535 = vld [vmem:[#allocation4 + $0x30] sm:$0xff]
        %v8536 = vld [vmem:[#allocation4 + $0x38] sm:$0xff]
        %v8537 = vld [vmem:[#allocation4 + $0x40] sm:$0xff]
        %v8538 = vld [vmem:[#allocation4 + $0x48] sm:$0xff]
        %v8539 = vld [vmem:[#allocation4 + $0x50] sm:$0xff]
        %v8540 = vld [vmem:[#allocation4 + $0x58] sm:$0xff]
        %v8541 = vld [vmem:[#allocation4 + $0x60] sm:$0xff]
        %v8542 = vld [vmem:[#allocation4 + $0x68] sm:$0xff]
        %v8543 = vld [vmem:[#allocation4 + $0x70] sm:$0xff]
        %v8544 = vld [vmem:[#allocation4 + $0x78] sm:$0xff]
        %v8545 = vld [vmem:[#allocation4 + $0x80] sm:$0xff]
        %v8546 = vld [vmem:[#allocation4 + $0x88] sm:$0xff]
        %v8547 = vld [vmem:[#allocation4 + $0x90] sm:$0xff]
        %v8548 = vld [vmem:[#allocation4 + $0x98] sm:$0xff]
        %v8549 = vld [vmem:[#allocation4 + $0xa0] sm:$0xff]
        %v8550 = vld [vmem:[#allocation4 + $0xa8] sm:$0xff]
        %v8551 = vld [vmem:[#allocation4 + $0xb0] sm:$0xff]
        %v8552 = vld [vmem:[#allocation4 + $0xb8] sm:$0xff]
        %v8553 = vld [vmem:[#allocation4 + $0xc0] sm:$0xff]
        %v8554 = vld [vmem:[#allocation4 + $0xc8] sm:$0xff]
        %v8555 = vld [vmem:[#allocation4 + $0xd0] sm:$0xff]
        %v8556 = vld [vmem:[#allocation4 + $0xd8] sm:$0xff]
        %v8557 = vld [vmem:[#allocation4 + $0xe0] sm:$0xff]
        %v8558 = vld [vmem:[#allocation4 + $0xe8] sm:$0xff]
        %v8559 = vld [vmem:[%s4299 + $0x4] sm:$0xf]
        %v8560 = vld [vmem:[%s4299 + $0xc] sm:$0xf]
        %v8561 = vld [vmem:[%s4299 + $0x14] sm:$0xf]
        %v8562 = vld [vmem:[%s4299 + $0x1c] sm:$0xf]
        %v8563 = vld [vmem:[%s4299 + $0x24] sm:$0xf]
        %v8564 = vld [vmem:[%s4299 + $0x2c] sm:$0xf]
        %v8565 = vld [vmem:[%s4299 + $0x34] sm:$0xf]
        %v8566 = vld [vmem:[%s4299 + $0x3c] sm:$0xf]
        %v8567 = vld [vmem:[%s4299 + $0x44] sm:$0xf]
        %v8568 = vld [vmem:[%s4299 + $0x4c] sm:$0xf]
        %v8569 = vld [vmem:[%s4299 + $0x54] sm:$0xf]
        %v8570 = vld [vmem:[%s4299 + $0x5c] sm:$0xf]
        %v8571 = vld [vmem:[%s4299 + $0x64] sm:$0xf]
        %v8572 = vld [vmem:[%s4299 + $0x6c] sm:$0xf]
        %v8573 = vld [vmem:[%s4299 + $0x74] sm:$0xf]
        %v8574 = vld [vmem:[%s4299 + $0x7c] sm:$0xf]
        %v8575 = vld [vmem:[%s4299 + $0x84] sm:$0xf]
        %v8576 = vld [vmem:[%s4299 + $0x8c] sm:$0xf]
        %v8577 = vld [vmem:[%s4299 + $0x94] sm:$0xf]
        %v8578 = vld [vmem:[%s4299 + $0x9c] sm:$0xf]
        %v8579 = vld [vmem:[%s4299 + $0xa4] sm:$0xf]
        %v8580 = vld [vmem:[%s4299 + $0xac] sm:$0xf]
        %v8581 = vld [vmem:[%s4299 + $0xb4] sm:$0xf]
        %v8582 = vld [vmem:[%s4299 + $0xbc] sm:$0xf]
        %v8583 = vld [vmem:[%s4299 + $0xc4] sm:$0xf]
        %v8584 = vld [vmem:[%s4299 + $0xcc] sm:$0xf]
        %v8585 = vld [vmem:[%s4299 + $0xd4] sm:$0xf]
        %v8586 = vld [vmem:[%s4299 + $0xdc] sm:$0xf]
        %v8587 = vld [vmem:[%s4299 + $0xe4] sm:$0xf]
        %v8588 = vld [vmem:[%s4299 + $0xec] sm:$0xf]
        %v8589 = vld [vmem:[%s4299 + $0xf4] sm:$0xf]
        %v8590 = vld [vmem:[%s4299 + $0xfc] sm:$0xf]
        %v8619 = vunpack.c.l.b16 %v8531
        %v8620 = vunpack.c.h.b16 %v8531
        %v8621 = vunpack.c.l.b16 %v8532
        %v8622 = vunpack.c.h.b16 %v8532
        %v8623 = vunpack.c.l.b16 %v8533
        %v8624 = vunpack.c.h.b16 %v8533
        %v8625 = vunpack.c.l.b16 %v8534
        %v8626 = vunpack.c.h.b16 %v8534
        %v8627 = vunpack.c.l.b16 %v8535
        %v8628 = vunpack.c.h.b16 %v8535
        %v8629 = vunpack.c.l.b16 %v8536
        %v8630 = vunpack.c.h.b16 %v8536
        %v8631 = vunpack.c.l.b16 %v8537
        %v8632 = vunpack.c.h.b16 %v8537
        %v8633 = vunpack.c.l.b16 %v8538
        %v8634 = vunpack.c.h.b16 %v8538
        %v8635 = vunpack.c.l.b16 %v8539
        %v8636 = vunpack.c.h.b16 %v8539
        %v8637 = vunpack.c.l.b16 %v8540
        %v8638 = vunpack.c.h.b16 %v8540
        %v8639 = vunpack.c.l.b16 %v8541
        %v8640 = vunpack.c.h.b16 %v8541
        %v8641 = vunpack.c.l.b16 %v8542
        %v8642 = vunpack.c.h.b16 %v8542
        %v8643 = vunpack.c.l.b16 %v8543
        %v8644 = vunpack.c.h.b16 %v8543
        %v8645 = vunpack.c.l.b16 %v8544
        %v8646 = vunpack.c.h.b16 %v8544
        %v8647 = vunpack.c.l.b16 %v8545
        %v8648 = vunpack.c.h.b16 %v8545
        %v8649 = vunpack.c.l.b16 %v8546
        %v8650 = vunpack.c.h.b16 %v8546
        %v8651 = vunpack.c.l.b16 %v8547
        %v8652 = vunpack.c.h.b16 %v8547
        %v8653 = vunpack.c.l.b16 %v8548
        %v8654 = vunpack.c.h.b16 %v8548
        %v8655 = vunpack.c.l.b16 %v8549
        %v8656 = vunpack.c.h.b16 %v8549
        %v8657 = vunpack.c.l.b16 %v8550
        %v8658 = vunpack.c.h.b16 %v8550
        %v8659 = vunpack.c.l.b16 %v8551
        %v8660 = vunpack.c.h.b16 %v8551
        %v8661 = vunpack.c.l.b16 %v8552
        %v8662 = vunpack.c.h.b16 %v8552
        %v8663 = vunpack.c.l.b16 %v8553
        %v8664 = vunpack.c.h.b16 %v8553
        %v8665 = vunpack.c.l.b16 %v8554
        %v8666 = vunpack.c.h.b16 %v8554
        %v8667 = vunpack.c.l.b16 %v8555
        %v8668 = vunpack.c.h.b16 %v8555
        %v8669 = vunpack.c.l.b16 %v8556
        %v8670 = vunpack.c.h.b16 %v8556
        %v8671 = vunpack.c.l.b16 %v8557
        %v8672 = vunpack.c.h.b16 %v8557
        %v8673 = vunpack.c.l.b16 %v8558
        %v8674 = vunpack.c.h.b16 %v8558
        %v8675 = vpack.c.b16 %v8621, %v8619
        %v8676 = vpack.c.b16 %v8622, %v8620
        %v8677 = vpack.c.b16 %v8625, %v8623
        %v8678 = vpack.c.b16 %v8626, %v8624
        %v8679 = vpack.c.b16 %v8629, %v8627
        %v8680 = vpack.c.b16 %v8630, %v8628
        %v8681 = vpack.c.b16 %v8633, %v8631
        %v8682 = vpack.c.b16 %v8634, %v8632
        %v8683 = vpack.c.b16 %v8637, %v8635
        %v8684 = vpack.c.b16 %v8638, %v8636
        %v8685 = vpack.c.b16 %v8641, %v8639
        %v8686 = vpack.c.b16 %v8642, %v8640
        %v8687 = vpack.c.b16 %v8645, %v8643
        %v8688 = vpack.c.b16 %v8646, %v8644
        %v8689 = vpack.c.b16 %v8649, %v8647
        %v8690 = vpack.c.b16 %v8650, %v8648
        %v8691 = vpack.c.b16 %v8653, %v8651
        %v8692 = vpack.c.b16 %v8654, %v8652
        %v8693 = vpack.c.b16 %v8657, %v8655
        %v8694 = vpack.c.b16 %v8658, %v8656
        %v8695 = vpack.c.b16 %v8661, %v8659
        %v8696 = vpack.c.b16 %v8662, %v8660
        %v8697 = vpack.c.b16 %v8665, %v8663
        %v8698 = vpack.c.b16 %v8666, %v8664
        %v8699 = vpack.c.b16 %v8669, %v8667
        %v8700 = vpack.c.b16 %v8670, %v8668
        %v8701 = vpack.c.b16 %v8673, %v8671
        %v8702 = vpack.c.b16 %v8674, %v8672
        %v8763 = vunpack.c.l.b16 %v8559
        %v8764 = vunpack.c.l.b16 %v8560
        %v8765 = vunpack.c.l.b16 %v8561
        %v8766 = vunpack.c.l.b16 %v8562
        %v8767 = vunpack.c.l.b16 %v8563
        %v8768 = vunpack.c.l.b16 %v8564
        %v8769 = vunpack.c.l.b16 %v8565
        %v8770 = vunpack.c.l.b16 %v8566
        %v8771 = vunpack.c.l.b16 %v8567
        %v8772 = vunpack.c.l.b16 %v8568
        %v8773 = vunpack.c.l.b16 %v8569
        %v8774 = vunpack.c.l.b16 %v8570
        %v8775 = vunpack.c.l.b16 %v8571
        %v8776 = vunpack.c.l.b16 %v8572
        %v8777 = vunpack.c.l.b16 %v8573
        %v8778 = vunpack.c.l.b16 %v8574
        %v8779 = vunpack.c.l.b16 %v8575
        %v8780 = vunpack.c.l.b16 %v8576
        %v8781 = vunpack.c.l.b16 %v8577
        %v8782 = vunpack.c.l.b16 %v8578
        %v8783 = vunpack.c.l.b16 %v8579
        %v8784 = vunpack.c.l.b16 %v8580
        %v8785 = vunpack.c.l.b16 %v8581
        %v8786 = vunpack.c.l.b16 %v8582
        %v8787 = vunpack.c.l.b16 %v8583
        %v8788 = vunpack.c.l.b16 %v8584
        %v8789 = vunpack.c.l.b16 %v8585
        %v8790 = vunpack.c.l.b16 %v8586
        %v8791 = vunpack.c.l.b16 %v8587
        %v8792 = vunpack.c.l.b16 %v8588
        %v8793 = vunpack.c.l.b16 %v8589
        %v8794 = vunpack.c.l.b16 %v8590
        %v8795 = vpack.c.b16 %v8764, %v8763
        %v8796 = vpack.c.b16 %v8766, %v8765
        %v8797 = vpack.c.b16 %v8768, %v8767
        %v8798 = vpack.c.b16 %v8770, %v8769
        %v8799 = vpack.c.b16 %v8772, %v8771
        %v8800 = vpack.c.b16 %v8774, %v8773
        %v8801 = vpack.c.b16 %v8776, %v8775
        %v8802 = vpack.c.b16 %v8778, %v8777
        %v8803 = vpack.c.b16 %v8780, %v8779
        %v8804 = vpack.c.b16 %v8782, %v8781
        %v8805 = vpack.c.b16 %v8784, %v8783
        %v8806 = vpack.c.b16 %v8786, %v8785
        %v8807 = vpack.c.b16 %v8788, %v8787
        %v8808 = vpack.c.b16 %v8790, %v8789
        %v8809 = vpack.c.b16 %v8792, %v8791
        %v8810 = vpack.c.b16 %v8794, %v8793
        %8827 = vmatprep.subr.bf16.mxu0 0
        %8828 = vmatpush1.bf16.msra.mxu0 %v8802
        %8829 = vmatprep.subr.bf16.mxu0 0
        %8830 = vmatpush1.bf16.msra.mxu0 %v8801
        %8831 = vmatprep.subr.bf16.mxu0 0
        %8832 = vmatpush1.bf16.msra.mxu0 %v8800
        %8833 = vmatprep.subr.bf16.mxu0 0
        %8834 = vmatpush1.bf16.msra.mxu0 %v8799
        %8835 = vmatprep.subr.bf16.mxu0 0
        %8836 = vmatpush1.bf16.msra.mxu0 %v8798
        %8837 = vmatprep.subr.bf16.mxu0 0
        %8838 = vmatpush1.bf16.msra.mxu0 %v8797
        %8839 = vmatprep.subr.bf16.mxu0 0
        %8840 = vmatpush1.bf16.msra.mxu0 %v8796
        %8841 = vmatprep.subr.bf16.mxu0 0
        %8842 = vmatpush1.bf16.msra.mxu0 %v8795
        %8843 = vmatprep.subr.bf16.mxu0 0
        %8844 = vmatpush2.bf16.msra.mxu0 %v8810
        %8845 = vmatprep.subr.bf16.mxu0 0
        %8846 = vmatpush2.bf16.msra.mxu0 %v8809
        %8847 = vmatprep.subr.bf16.mxu0 0
        %8848 = vmatpush2.bf16.msra.mxu0 %v8808
        %8849 = vmatprep.subr.bf16.mxu0 0
        %8850 = vmatpush2.bf16.msra.mxu0 %v8807
        %8851 = vmatprep.subr.bf16.mxu0 0
        %8852 = vmatpush2.bf16.msra.mxu0 %v8806
        %8853 = vmatprep.subr.bf16.mxu0 0
        %8854 = vmatpush2.bf16.msra.mxu0 %v8805
        %8855 = vmatprep.subr.bf16.mxu0 0
        %8856 = vmatpush2.bf16.msra.mxu0 %v8804
        %8857 = vmatprep.subr.bf16.mxu0 0
        %8858 = vmatpush2.bf16.msra.mxu0 %v8803
        %8859 = vmatprep.mubr.bf16.mxu0 %v8676
        %8860 = vmatmul.mubr.bf16.gmra.mxu0 %v8675
        %v8861 = vpop.f32.mrf.mxu0
        %v8862 = vadd.f32 0.0, %v8861
        %v8863 = vpop.f32.mrf.mxu0
        %v8864 = vpop.f32.mrf.mxu0
        %v8865 = vadd.f32 0.0, %v8864
        %v8866 = vpop.f32.mrf.mxu0
        %8867 = vmatprep.mubr.bf16.mxu0 %v8678
        %8868 = vmatmul.mubr.bf16.gmra.mxu0 %v8677
        %v8869 = vpop.f32.mrf.mxu0
        %v8870 = vadd.f32 0.0, %v8869
        %v8871 = vpop.f32.mrf.mxu0
        %v8872 = vpop.f32.mrf.mxu0
        %v8873 = vadd.f32 0.0, %v8872
        %v8874 = vpop.f32.mrf.mxu0
        %8875 = vmatprep.mubr.bf16.mxu0 %v8680
        %8876 = vmatmul.mubr.bf16.gmra.mxu0 %v8679
        %v8877 = vpop.f32.mrf.mxu0
        %v8878 = vadd.f32 0.0, %v8877
        %v8879 = vpop.f32.mrf.mxu0
        %v8880 = vpop.f32.mrf.mxu0
        %v8881 = vadd.f32 0.0, %v8880
        %v8882 = vpop.f32.mrf.mxu0
        %8883 = vmatprep.mubr.bf16.mxu0 %v8682
        %8884 = vmatmul.mubr.bf16.gmra.mxu0 %v8681
        %v8885 = vpop.f32.mrf.mxu0
        %v8886 = vadd.f32 0.0, %v8885
        %v8887 = vpop.f32.mrf.mxu0
        %v8888 = vpop.f32.mrf.mxu0
        %v8889 = vadd.f32 0.0, %v8888
        %v8890 = vpop.f32.mrf.mxu0
        %8891 = vmatprep.mubr.bf16.mxu0 %v8684
        %8892 = vmatmul.mubr.bf16.gmra.mxu0 %v8683
        %v8893 = vpop.f32.mrf.mxu0
        %v8894 = vadd.f32 0.0, %v8893
        %v8895 = vpop.f32.mrf.mxu0
        %v8896 = vpop.f32.mrf.mxu0
        %v8897 = vadd.f32 0.0, %v8896
        %v8898 = vpop.f32.mrf.mxu0
        %8899 = vmatprep.mubr.bf16.mxu0 %v8686
        %8900 = vmatmul.mubr.bf16.gmra.mxu0 %v8685
        %v8901 = vpop.f32.mrf.mxu0
        %v8902 = vadd.f32 0.0, %v8901
        %v8903 = vpop.f32.mrf.mxu0
        %v8904 = vpop.f32.mrf.mxu0
        %v8905 = vadd.f32 0.0, %v8904
        %v8906 = vpop.f32.mrf.mxu0
        %8907 = vmatprep.mubr.bf16.mxu0 %v8688
        %8908 = vmatmul.mubr.bf16.gmra.mxu0 %v8687
        %v8909 = vpop.f32.mrf.mxu0
        %v8910 = vadd.f32 0.0, %v8909
        %v8911 = vpop.f32.mrf.mxu0
        %v8912 = vpop.f32.mrf.mxu0
        %v8913 = vadd.f32 0.0, %v8912
        %v8914 = vpop.f32.mrf.mxu0
        %8915 = vmatprep.mubr.bf16.mxu0 %v8690
        %8916 = vmatmul.mubr.bf16.gmra.mxu0 %v8689
        %v8917 = vpop.f32.mrf.mxu0
        %v8918 = vadd.f32 0.0, %v8917
        %v8919 = vpop.f32.mrf.mxu0
        %v8920 = vpop.f32.mrf.mxu0
        %v8921 = vadd.f32 0.0, %v8920
        %v8922 = vpop.f32.mrf.mxu0
        %8923 = vmatprep.mubr.bf16.mxu0 %v8692
        %8924 = vmatmul.mubr.bf16.gmra.mxu0 %v8691
        %v8925 = vpop.f32.mrf.mxu0
        %v8926 = vadd.f32 0.0, %v8925
        %v8927 = vpop.f32.mrf.mxu0
        %v8928 = vpop.f32.mrf.mxu0
        %v8929 = vadd.f32 0.0, %v8928
        %v8930 = vpop.f32.mrf.mxu0
        %8931 = vmatprep.mubr.bf16.mxu0 %v8694
        %8932 = vmatmul.mubr.bf16.gmra.mxu0 %v8693
        %v8933 = vpop.f32.mrf.mxu0
        %v8934 = vadd.f32 0.0, %v8933
        %v8935 = vpop.f32.mrf.mxu0
        %v8936 = vpop.f32.mrf.mxu0
        %v8937 = vadd.f32 0.0, %v8936
        %v8938 = vpop.f32.mrf.mxu0
        %8939 = vmatprep.mubr.bf16.mxu0 %v8696
        %8940 = vmatmul.mubr.bf16.gmra.mxu0 %v8695
        %v8941 = vpop.f32.mrf.mxu0
        %v8942 = vadd.f32 0.0, %v8941
        %v8943 = vpop.f32.mrf.mxu0
        %v8944 = vpop.f32.mrf.mxu0
        %v8945 = vadd.f32 0.0, %v8944
        %v8946 = vpop.f32.mrf.mxu0
        %8947 = vmatprep.mubr.bf16.mxu0 %v8698
        %8948 = vmatmul.mubr.bf16.gmra.mxu0 %v8697
        %v8949 = vpop.f32.mrf.mxu0
        %v8950 = vadd.f32 0.0, %v8949
        %v8951 = vpop.f32.mrf.mxu0
        %v8952 = vpop.f32.mrf.mxu0
        %v8953 = vadd.f32 0.0, %v8952
        %v8954 = vpop.f32.mrf.mxu0
        %8955 = vmatprep.mubr.bf16.mxu0 %v8700
        %8956 = vmatmul.mubr.bf16.gmra.mxu0 %v8699
        %v8957 = vpop.f32.mrf.mxu0
        %v8958 = vadd.f32 0.0, %v8957
        %v8959 = vpop.f32.mrf.mxu0
        %v8960 = vpop.f32.mrf.mxu0
        %v8961 = vadd.f32 0.0, %v8960
        %v8962 = vpop.f32.mrf.mxu0
        %8963 = vmatprep.mubr.bf16.mxu0 %v8702
        %8964 = vmatmul.mubr.bf16.gmra.mxu0 %v8701
        %v8965 = vpop.f32.mrf.mxu0
        %v8966 = vadd.f32 0.0, %v8965
        %v8967 = vpop.f32.mrf.mxu0
        %v8968 = vpop.f32.mrf.mxu0
        %v8969 = vadd.f32 0.0, %v8968
        %v8970 = vpop.f32.mrf.mxu0
        %8971 = vdwg.mxu0
        %v8972 = vadd.f32 %v8503, %v8862
        %v8973 = vadd.f32 %v8504, %v8865
        %v8974 = vadd.f32 %v8505, %v8870
        %v8975 = vadd.f32 %v8506, %v8873
        %v8976 = vadd.f32 %v8507, %v8878
        %v8977 = vadd.f32 %v8508, %v8881
        %v8978 = vadd.f32 %v8509, %v8886
        %v8979 = vadd.f32 %v8510, %v8889
        %v8980 = vadd.f32 %v8511, %v8894
        %v8981 = vadd.f32 %v8512, %v8897
        %v8982 = vadd.f32 %v8513, %v8902
        %v8983 = vadd.f32 %v8514, %v8905
        %v8984 = vadd.f32 %v8515, %v8910
        %v8985 = vadd.f32 %v8516, %v8913
        %v8986 = vadd.f32 %v8517, %v8918
        %v8987 = vadd.f32 %v8518, %v8921
        %v8988 = vadd.f32 %v8519, %v8926
        %v8989 = vadd.f32 %v8520, %v8929
        %v8990 = vadd.f32 %v8521, %v8934
        %v8991 = vadd.f32 %v8522, %v8937
        %v8992 = vadd.f32 %v8523, %v8942
        %v8993 = vadd.f32 %v8524, %v8945
        %v8994 = vadd.f32 %v8525, %v8950
        %v8995 = vadd.f32 %v8526, %v8953
        %v8996 = vadd.f32 %v8527, %v8958
        %v8997 = vadd.f32 %v8528, %v8961
        %v8998 = vadd.f32 %v8529, %v8966
        %v8999 = vadd.f32 %v8530, %v8969
        %v9000 = vld [vmem:[#allocation2 + $0x20] sm:$0xff]
        %v9001 = vld [vmem:[#allocation2 + $0x28] sm:$0xff]
        %v9002 = vld [vmem:[#allocation2 + $0x30] sm:$0xff]
        %v9003 = vld [vmem:[#allocation2 + $0x38] sm:$0xff]
        %v9004 = vld [vmem:[#allocation2 + $0x40] sm:$0xff]
        %v9005 = vld [vmem:[#allocation2 + $0x48] sm:$0xff]
        %v9006 = vld [vmem:[#allocation2 + $0x50] sm:$0xff]
        %v9007 = vld [vmem:[#allocation2 + $0x58] sm:$0xff]
        %v9008 = vld [vmem:[#allocation2 + $0x60] sm:$0xff]
        %v9009 = vld [vmem:[#allocation2 + $0x68] sm:$0xff]
        %v9010 = vld [vmem:[#allocation2 + $0x70] sm:$0xff]
        %v9011 = vld [vmem:[#allocation2 + $0x78] sm:$0xff]
        %v9012 = vld [vmem:[#allocation2 + $0x80] sm:$0xff]
        %v9013 = vld [vmem:[#allocation2 + $0x88] sm:$0xff]
        %v9014 = vld [vmem:[#allocation2 + $0x90] sm:$0xff]
        %v9015 = vld [vmem:[#allocation2 + $0x98] sm:$0xff]
        %v9016 = vld [vmem:[#allocation2 + $0xa0] sm:$0xff]
        %v9017 = vld [vmem:[#allocation2 + $0xa8] sm:$0xff]
        %v9018 = vld [vmem:[#allocation2 + $0xb0] sm:$0xff]
        %v9019 = vld [vmem:[#allocation2 + $0xb8] sm:$0xff]
        %v9020 = vld [vmem:[#allocation2 + $0xc0] sm:$0xff]
        %v9021 = vld [vmem:[#allocation2 + $0xc8] sm:$0xff]
        %v9022 = vld [vmem:[#allocation2 + $0xd0] sm:$0xff]
        %v9023 = vld [vmem:[#allocation2 + $0xd8] sm:$0xff]
        %v9024 = vld [vmem:[#allocation2 + $0xe0] sm:$0xff]
        %v9025 = vld [vmem:[#allocation2 + $0xe8] sm:$0xff]
        %v9026 = vld [vmem:[#allocation2 + $0xf0] sm:$0xff]
        %v9027 = vld [vmem:[#allocation2 + $0xf8] sm:$0xff]
        %v9028 = vld [vmem:[%s4769 + $0x4] sm:$0xf]
        %v9029 = vld [vmem:[%s4769 + $0xc] sm:$0xf]
        %v9030 = vld [vmem:[%s4769 + $0x14] sm:$0xf]
        %v9031 = vld [vmem:[%s4769 + $0x1c] sm:$0xf]
        %v9032 = vld [vmem:[%s4769 + $0x24] sm:$0xf]
        %v9033 = vld [vmem:[%s4769 + $0x2c] sm:$0xf]
        %v9034 = vld [vmem:[%s4769 + $0x34] sm:$0xf]
        %v9035 = vld [vmem:[%s4769 + $0x3c] sm:$0xf]
        %v9036 = vld [vmem:[%s4769 + $0x44] sm:$0xf]
        %v9037 = vld [vmem:[%s4769 + $0x4c] sm:$0xf]
        %v9038 = vld [vmem:[%s4769 + $0x54] sm:$0xf]
        %v9039 = vld [vmem:[%s4769 + $0x5c] sm:$0xf]
        %v9040 = vld [vmem:[%s4769 + $0x64] sm:$0xf]
        %v9041 = vld [vmem:[%s4769 + $0x6c] sm:$0xf]
        %v9042 = vld [vmem:[%s4769 + $0x74] sm:$0xf]
        %v9043 = vld [vmem:[%s4769 + $0x7c] sm:$0xf]
        %v9044 = vld [vmem:[%s4769 + $0x84] sm:$0xf]
        %v9045 = vld [vmem:[%s4769 + $0x8c] sm:$0xf]
        %v9046 = vld [vmem:[%s4769 + $0x94] sm:$0xf]
        %v9047 = vld [vmem:[%s4769 + $0x9c] sm:$0xf]
        %v9048 = vld [vmem:[%s4769 + $0xa4] sm:$0xf]
        %v9049 = vld [vmem:[%s4769 + $0xac] sm:$0xf]
        %v9050 = vld [vmem:[%s4769 + $0xb4] sm:$0xf]
        %v9051 = vld [vmem:[%s4769 + $0xbc] sm:$0xf]
        %v9052 = vld [vmem:[%s4769 + $0xc4] sm:$0xf]
        %v9053 = vld [vmem:[%s4769 + $0xcc] sm:$0xf]
        %v9054 = vld [vmem:[%s4769 + $0xd4] sm:$0xf]
        %v9055 = vld [vmem:[%s4769 + $0xdc] sm:$0xf]
        %v9056 = vld [vmem:[%s4769 + $0xe4] sm:$0xf]
        %v9057 = vld [vmem:[%s4769 + $0xec] sm:$0xf]
        %v9058 = vld [vmem:[%s4769 + $0xf4] sm:$0xf]
        %v9059 = vld [vmem:[%s4769 + $0xfc] sm:$0xf]
        %v9088 = vunpack.c.l.b16 %v9000
        %v9089 = vunpack.c.h.b16 %v9000
        %v9090 = vunpack.c.l.b16 %v9001
        %v9091 = vunpack.c.h.b16 %v9001
        %v9092 = vunpack.c.l.b16 %v9002
        %v9093 = vunpack.c.h.b16 %v9002
        %v9094 = vunpack.c.l.b16 %v9003
        %v9095 = vunpack.c.h.b16 %v9003
        %v9096 = vunpack.c.l.b16 %v9004
        %v9097 = vunpack.c.h.b16 %v9004
        %v9098 = vunpack.c.l.b16 %v9005
        %v9099 = vunpack.c.h.b16 %v9005
        %v9100 = vunpack.c.l.b16 %v9006
        %v9101 = vunpack.c.h.b16 %v9006
        %v9102 = vunpack.c.l.b16 %v9007
        %v9103 = vunpack.c.h.b16 %v9007
        %v9104 = vunpack.c.l.b16 %v9008
        %v9105 = vunpack.c.h.b16 %v9008
        %v9106 = vunpack.c.l.b16 %v9009
        %v9107 = vunpack.c.h.b16 %v9009
        %v9108 = vunpack.c.l.b16 %v9010
        %v9109 = vunpack.c.h.b16 %v9010
        %v9110 = vunpack.c.l.b16 %v9011
        %v9111 = vunpack.c.h.b16 %v9011
        %v9112 = vunpack.c.l.b16 %v9012
        %v9113 = vunpack.c.h.b16 %v9012
        %v9114 = vunpack.c.l.b16 %v9013
        %v9115 = vunpack.c.h.b16 %v9013
        %v9116 = vunpack.c.l.b16 %v9014
        %v9117 = vunpack.c.h.b16 %v9014
        %v9118 = vunpack.c.l.b16 %v9015
        %v9119 = vunpack.c.h.b16 %v9015
        %v9120 = vunpack.c.l.b16 %v9016
        %v9121 = vunpack.c.h.b16 %v9016
        %v9122 = vunpack.c.l.b16 %v9017
        %v9123 = vunpack.c.h.b16 %v9017
        %v9124 = vunpack.c.l.b16 %v9018
        %v9125 = vunpack.c.h.b16 %v9018
        %v9126 = vunpack.c.l.b16 %v9019
        %v9127 = vunpack.c.h.b16 %v9019
        %v9128 = vunpack.c.l.b16 %v9020
        %v9129 = vunpack.c.h.b16 %v9020
        %v9130 = vunpack.c.l.b16 %v9021
        %v9131 = vunpack.c.h.b16 %v9021
        %v9132 = vunpack.c.l.b16 %v9022
        %v9133 = vunpack.c.h.b16 %v9022
        %v9134 = vunpack.c.l.b16 %v9023
        %v9135 = vunpack.c.h.b16 %v9023
        %v9136 = vunpack.c.l.b16 %v9024
        %v9137 = vunpack.c.h.b16 %v9024
        %v9138 = vunpack.c.l.b16 %v9025
        %v9139 = vunpack.c.h.b16 %v9025
        %v9140 = vunpack.c.l.b16 %v9026
        %v9141 = vunpack.c.h.b16 %v9026
        %v9142 = vunpack.c.l.b16 %v9027
        %v9143 = vunpack.c.h.b16 %v9027
        %v9144 = vpack.c.b16 %v9090, %v9088
        %v9145 = vpack.c.b16 %v9091, %v9089
        %v9146 = vpack.c.b16 %v9094, %v9092
        %v9147 = vpack.c.b16 %v9095, %v9093
        %v9148 = vpack.c.b16 %v9098, %v9096
        %v9149 = vpack.c.b16 %v9099, %v9097
        %v9150 = vpack.c.b16 %v9102, %v9100
        %v9151 = vpack.c.b16 %v9103, %v9101
        %v9152 = vpack.c.b16 %v9106, %v9104
        %v9153 = vpack.c.b16 %v9107, %v9105
        %v9154 = vpack.c.b16 %v9110, %v9108
        %v9155 = vpack.c.b16 %v9111, %v9109
        %v9156 = vpack.c.b16 %v9114, %v9112
        %v9157 = vpack.c.b16 %v9115, %v9113
        %v9158 = vpack.c.b16 %v9118, %v9116
        %v9159 = vpack.c.b16 %v9119, %v9117
        %v9160 = vpack.c.b16 %v9122, %v9120
        %v9161 = vpack.c.b16 %v9123, %v9121
        %v9162 = vpack.c.b16 %v9126, %v9124
        %v9163 = vpack.c.b16 %v9127, %v9125
        %v9164 = vpack.c.b16 %v9130, %v9128
        %v9165 = vpack.c.b16 %v9131, %v9129
        %v9166 = vpack.c.b16 %v9134, %v9132
        %v9167 = vpack.c.b16 %v9135, %v9133
        %v9168 = vpack.c.b16 %v9138, %v9136
        %v9169 = vpack.c.b16 %v9139, %v9137
        %v9170 = vpack.c.b16 %v9142, %v9140
        %v9171 = vpack.c.b16 %v9143, %v9141
        %v9232 = vunpack.c.l.b16 %v9028
        %v9233 = vunpack.c.l.b16 %v9029
        %v9234 = vunpack.c.l.b16 %v9030
        %v9235 = vunpack.c.l.b16 %v9031
        %v9236 = vunpack.c.l.b16 %v9032
        %v9237 = vunpack.c.l.b16 %v9033
        %v9238 = vunpack.c.l.b16 %v9034
        %v9239 = vunpack.c.l.b16 %v9035
        %v9240 = vunpack.c.l.b16 %v9036
        %v9241 = vunpack.c.l.b16 %v9037
        %v9242 = vunpack.c.l.b16 %v9038
        %v9243 = vunpack.c.l.b16 %v9039
        %v9244 = vunpack.c.l.b16 %v9040
        %v9245 = vunpack.c.l.b16 %v9041
        %v9246 = vunpack.c.l.b16 %v9042
        %v9247 = vunpack.c.l.b16 %v9043
        %v9248 = vunpack.c.l.b16 %v9044
        %v9249 = vunpack.c.l.b16 %v9045
        %v9250 = vunpack.c.l.b16 %v9046
        %v9251 = vunpack.c.l.b16 %v9047
        %v9252 = vunpack.c.l.b16 %v9048
        %v9253 = vunpack.c.l.b16 %v9049
        %v9254 = vunpack.c.l.b16 %v9050
        %v9255 = vunpack.c.l.b16 %v9051
        %v9256 = vunpack.c.l.b16 %v9052
        %v9257 = vunpack.c.l.b16 %v9053
        %v9258 = vunpack.c.l.b16 %v9054
        %v9259 = vunpack.c.l.b16 %v9055
        %v9260 = vunpack.c.l.b16 %v9056
        %v9261 = vunpack.c.l.b16 %v9057
        %v9262 = vunpack.c.l.b16 %v9058
        %v9263 = vunpack.c.l.b16 %v9059
        %v9264 = vpack.c.b16 %v9233, %v9232
        %v9265 = vpack.c.b16 %v9235, %v9234
        %v9266 = vpack.c.b16 %v9237, %v9236
        %v9267 = vpack.c.b16 %v9239, %v9238
        %v9268 = vpack.c.b16 %v9241, %v9240
        %v9269 = vpack.c.b16 %v9243, %v9242
        %v9270 = vpack.c.b16 %v9245, %v9244
        %v9271 = vpack.c.b16 %v9247, %v9246
        %v9272 = vpack.c.b16 %v9249, %v9248
        %v9273 = vpack.c.b16 %v9251, %v9250
        %v9274 = vpack.c.b16 %v9253, %v9252
        %v9275 = vpack.c.b16 %v9255, %v9254
        %v9276 = vpack.c.b16 %v9257, %v9256
        %v9277 = vpack.c.b16 %v9259, %v9258
        %v9278 = vpack.c.b16 %v9261, %v9260
        %v9279 = vpack.c.b16 %v9263, %v9262
        %9296 = vmatprep.subr.bf16.mxu0 0
        %9297 = vmatpush1.bf16.msra.mxu0 %v9271
        %9298 = vmatprep.subr.bf16.mxu0 0
        %9299 = vmatpush1.bf16.msra.mxu0 %v9270
        %9300 = vmatprep.subr.bf16.mxu0 0
        %9301 = vmatpush1.bf16.msra.mxu0 %v9269
        %9302 = vmatprep.subr.bf16.mxu0 0
        %9303 = vmatpush1.bf16.msra.mxu0 %v9268
        %9304 = vmatprep.subr.bf16.mxu0 0
        %9305 = vmatpush1.bf16.msra.mxu0 %v9267
        %9306 = vmatprep.subr.bf16.mxu0 0
        %9307 = vmatpush1.bf16.msra.mxu0 %v9266
        %9308 = vmatprep.subr.bf16.mxu0 0
        %9309 = vmatpush1.bf16.msra.mxu0 %v9265
        %9310 = vmatprep.subr.bf16.mxu0 0
        %9311 = vmatpush1.bf16.msra.mxu0 %v9264
        %9312 = vmatprep.subr.bf16.mxu0 0
        %9313 = vmatpush2.bf16.msra.mxu0 %v9279
        %9314 = vmatprep.subr.bf16.mxu0 0
        %9315 = vmatpush2.bf16.msra.mxu0 %v9278
        %9316 = vmatprep.subr.bf16.mxu0 0
        %9317 = vmatpush2.bf16.msra.mxu0 %v9277
        %9318 = vmatprep.subr.bf16.mxu0 0
        %9319 = vmatpush2.bf16.msra.mxu0 %v9276
        %9320 = vmatprep.subr.bf16.mxu0 0
        %9321 = vmatpush2.bf16.msra.mxu0 %v9275
        %9322 = vmatprep.subr.bf16.mxu0 0
        %9323 = vmatpush2.bf16.msra.mxu0 %v9274
        %9324 = vmatprep.subr.bf16.mxu0 0
        %9325 = vmatpush2.bf16.msra.mxu0 %v9273
        %9326 = vmatprep.subr.bf16.mxu0 0
        %9327 = vmatpush2.bf16.msra.mxu0 %v9272
        %9328 = vmatprep.mubr.bf16.mxu0 %v9145
        %9329 = vmatmul.mubr.bf16.gmra.mxu0 %v9144
        %v9330 = vpop.f32.mrf.mxu0
        %v9331 = vadd.f32 0.0, %v9330
        %v9332 = vpop.f32.mrf.mxu0
        %v9333 = vpop.f32.mrf.mxu0
        %v9334 = vadd.f32 0.0, %v9333
        %v9335 = vpop.f32.mrf.mxu0
        %9336 = vmatprep.mubr.bf16.mxu0 %v9147
        %9337 = vmatmul.mubr.bf16.gmra.mxu0 %v9146
        %v9338 = vpop.f32.mrf.mxu0
        %v9339 = vadd.f32 0.0, %v9338
        %v9340 = vpop.f32.mrf.mxu0
        %v9341 = vpop.f32.mrf.mxu0
        %v9342 = vadd.f32 0.0, %v9341
        %v9343 = vpop.f32.mrf.mxu0
        %9344 = vmatprep.mubr.bf16.mxu0 %v9149
        %9345 = vmatmul.mubr.bf16.gmra.mxu0 %v9148
        %v9346 = vpop.f32.mrf.mxu0
        %v9347 = vadd.f32 0.0, %v9346
        %v9348 = vpop.f32.mrf.mxu0
        %v9349 = vpop.f32.mrf.mxu0
        %v9350 = vadd.f32 0.0, %v9349
        %v9351 = vpop.f32.mrf.mxu0
        %9352 = vmatprep.mubr.bf16.mxu0 %v9151
        %9353 = vmatmul.mubr.bf16.gmra.mxu0 %v9150
        %v9354 = vpop.f32.mrf.mxu0
        %v9355 = vadd.f32 0.0, %v9354
        %v9356 = vpop.f32.mrf.mxu0
        %v9357 = vpop.f32.mrf.mxu0
        %v9358 = vadd.f32 0.0, %v9357
        %v9359 = vpop.f32.mrf.mxu0
        %9360 = vmatprep.mubr.bf16.mxu0 %v9153
        %9361 = vmatmul.mubr.bf16.gmra.mxu0 %v9152
        %v9362 = vpop.f32.mrf.mxu0
        %v9363 = vadd.f32 0.0, %v9362
        %v9364 = vpop.f32.mrf.mxu0
        %v9365 = vpop.f32.mrf.mxu0
        %v9366 = vadd.f32 0.0, %v9365
        %v9367 = vpop.f32.mrf.mxu0
        %9368 = vmatprep.mubr.bf16.mxu0 %v9155
        %9369 = vmatmul.mubr.bf16.gmra.mxu0 %v9154
        %v9370 = vpop.f32.mrf.mxu0
        %v9371 = vadd.f32 0.0, %v9370
        %v9372 = vpop.f32.mrf.mxu0
        %v9373 = vpop.f32.mrf.mxu0
        %v9374 = vadd.f32 0.0, %v9373
        %v9375 = vpop.f32.mrf.mxu0
        %9376 = vmatprep.mubr.bf16.mxu0 %v9157
        %9377 = vmatmul.mubr.bf16.gmra.mxu0 %v9156
        %v9378 = vpop.f32.mrf.mxu0
        %v9379 = vadd.f32 0.0, %v9378
        %v9380 = vpop.f32.mrf.mxu0
        %v9381 = vpop.f32.mrf.mxu0
        %v9382 = vadd.f32 0.0, %v9381
        %v9383 = vpop.f32.mrf.mxu0
        %9384 = vmatprep.mubr.bf16.mxu0 %v9159
        %9385 = vmatmul.mubr.bf16.gmra.mxu0 %v9158
        %v9386 = vpop.f32.mrf.mxu0
        %v9387 = vadd.f32 0.0, %v9386
        %v9388 = vpop.f32.mrf.mxu0
        %v9389 = vpop.f32.mrf.mxu0
        %v9390 = vadd.f32 0.0, %v9389
        %v9391 = vpop.f32.mrf.mxu0
        %9392 = vmatprep.mubr.bf16.mxu0 %v9161
        %9393 = vmatmul.mubr.bf16.gmra.mxu0 %v9160
        %v9394 = vpop.f32.mrf.mxu0
        %v9395 = vadd.f32 0.0, %v9394
        %v9396 = vpop.f32.mrf.mxu0
        %v9397 = vpop.f32.mrf.mxu0
        %v9398 = vadd.f32 0.0, %v9397
        %v9399 = vpop.f32.mrf.mxu0
        %9400 = vmatprep.mubr.bf16.mxu0 %v9163
        %9401 = vmatmul.mubr.bf16.gmra.mxu0 %v9162
        %v9402 = vpop.f32.mrf.mxu0
        %v9403 = vadd.f32 0.0, %v9402
        %v9404 = vpop.f32.mrf.mxu0
        %v9405 = vpop.f32.mrf.mxu0
        %v9406 = vadd.f32 0.0, %v9405
        %v9407 = vpop.f32.mrf.mxu0
        %9408 = vmatprep.mubr.bf16.mxu0 %v9165
        %9409 = vmatmul.mubr.bf16.gmra.mxu0 %v9164
        %v9410 = vpop.f32.mrf.mxu0
        %v9411 = vadd.f32 0.0, %v9410
        %v9412 = vpop.f32.mrf.mxu0
        %v9413 = vpop.f32.mrf.mxu0
        %v9414 = vadd.f32 0.0, %v9413
        %v9415 = vpop.f32.mrf.mxu0
        %9416 = vmatprep.mubr.bf16.mxu0 %v9167
        %9417 = vmatmul.mubr.bf16.gmra.mxu0 %v9166
        %v9418 = vpop.f32.mrf.mxu0
        %v9419 = vadd.f32 0.0, %v9418
        %v9420 = vpop.f32.mrf.mxu0
        %v9421 = vpop.f32.mrf.mxu0
        %v9422 = vadd.f32 0.0, %v9421
        %v9423 = vpop.f32.mrf.mxu0
        %9424 = vmatprep.mubr.bf16.mxu0 %v9169
        %9425 = vmatmul.mubr.bf16.gmra.mxu0 %v9168
        %v9426 = vpop.f32.mrf.mxu0
        %v9427 = vadd.f32 0.0, %v9426
        %v9428 = vpop.f32.mrf.mxu0
        %v9429 = vpop.f32.mrf.mxu0
        %v9430 = vadd.f32 0.0, %v9429
        %v9431 = vpop.f32.mrf.mxu0
        %9432 = vmatprep.mubr.bf16.mxu0 %v9171
        %9433 = vmatmul.mubr.bf16.gmra.mxu0 %v9170
        %v9434 = vpop.f32.mrf.mxu0
        %v9435 = vadd.f32 0.0, %v9434
        %v9436 = vpop.f32.mrf.mxu0
        %v9437 = vpop.f32.mrf.mxu0
        %v9438 = vadd.f32 0.0, %v9437
        %v9439 = vpop.f32.mrf.mxu0
        %9440 = vdwg.mxu0
        %v9441 = vadd.f32 %v8972, %v9331
        %v9442 = vadd.f32 %v8973, %v9334
        %v9443 = vadd.f32 %v8974, %v9339
        %v9444 = vadd.f32 %v8975, %v9342
        %v9445 = vadd.f32 %v8976, %v9347
        %v9446 = vadd.f32 %v8977, %v9350
        %v9447 = vadd.f32 %v8978, %v9355
        %v9448 = vadd.f32 %v8979, %v9358
        %v9449 = vadd.f32 %v8980, %v9363
        %v9450 = vadd.f32 %v8981, %v9366
        %v9451 = vadd.f32 %v8982, %v9371
        %v9452 = vadd.f32 %v8983, %v9374
        %v9453 = vadd.f32 %v8984, %v9379
        %v9454 = vadd.f32 %v8985, %v9382
        %v9455 = vadd.f32 %v8986, %v9387
        %v9456 = vadd.f32 %v8987, %v9390
        %v9457 = vadd.f32 %v8988, %v9395
        %v9458 = vadd.f32 %v8989, %v9398
        %v9459 = vadd.f32 %v8990, %v9403
        %v9460 = vadd.f32 %v8991, %v9406
        %v9461 = vadd.f32 %v8992, %v9411
        %v9462 = vadd.f32 %v8993, %v9414
        %v9463 = vadd.f32 %v8994, %v9419
        %v9464 = vadd.f32 %v8995, %v9422
        %v9465 = vadd.f32 %v8996, %v9427
        %v9466 = vadd.f32 %v8997, %v9430
        %v9467 = vadd.f32 %v8998, %v9435
        %v9468 = vadd.f32 %v8999, %v9438
        %v9469 = vld [vmem:[#allocation3 + $0x20] sm:$0xff]
        %v9470 = vld [vmem:[#allocation3 + $0x28] sm:$0xff]
        %v9471 = vld [vmem:[#allocation3 + $0x30] sm:$0xff]
        %v9472 = vld [vmem:[#allocation3 + $0x38] sm:$0xff]
        %v9473 = vld [vmem:[#allocation3 + $0x40] sm:$0xff]
        %v9474 = vld [vmem:[#allocation3 + $0x48] sm:$0xff]
        %v9475 = vld [vmem:[#allocation3 + $0x50] sm:$0xff]
        %v9476 = vld [vmem:[#allocation3 + $0x58] sm:$0xff]
        %v9477 = vld [vmem:[#allocation3 + $0x60] sm:$0xff]
        %v9478 = vld [vmem:[#allocation3 + $0x68] sm:$0xff]
        %v9479 = vld [vmem:[#allocation3 + $0x70] sm:$0xff]
        %v9480 = vld [vmem:[#allocation3 + $0x78] sm:$0xff]
        %v9481 = vld [vmem:[#allocation3 + $0x80] sm:$0xff]
        %v9482 = vld [vmem:[#allocation3 + $0x88] sm:$0xff]
        %v9483 = vld [vmem:[#allocation3 + $0x90] sm:$0xff]
        %v9484 = vld [vmem:[#allocation3 + $0x98] sm:$0xff]
        %v9485 = vld [vmem:[#allocation3 + $0xa0] sm:$0xff]
        %v9486 = vld [vmem:[#allocation3 + $0xa8] sm:$0xff]
        %v9487 = vld [vmem:[#allocation3 + $0xb0] sm:$0xff]
        %v9488 = vld [vmem:[#allocation3 + $0xb8] sm:$0xff]
        %v9489 = vld [vmem:[#allocation3 + $0xc0] sm:$0xff]
        %v9490 = vld [vmem:[#allocation3 + $0xc8] sm:$0xff]
        %v9491 = vld [vmem:[#allocation3 + $0xd0] sm:$0xff]
        %v9492 = vld [vmem:[#allocation3 + $0xd8] sm:$0xff]
        %v9493 = vld [vmem:[#allocation3 + $0xe0] sm:$0xff]
        %v9494 = vld [vmem:[#allocation3 + $0xe8] sm:$0xff]
        %v9495 = vld [vmem:[#allocation3 + $0xf0] sm:$0xff]
        %v9496 = vld [vmem:[#allocation3 + $0xf8] sm:$0xff]
        %v9497 = vld [vmem:[%s5239 + $0x4] sm:$0xf]
        %v9498 = vld [vmem:[%s5239 + $0xc] sm:$0xf]
        %v9499 = vld [vmem:[%s5239 + $0x14] sm:$0xf]
        %v9500 = vld [vmem:[%s5239 + $0x1c] sm:$0xf]
        %v9501 = vld [vmem:[%s5239 + $0x24] sm:$0xf]
        %v9502 = vld [vmem:[%s5239 + $0x2c] sm:$0xf]
        %v9503 = vld [vmem:[%s5239 + $0x34] sm:$0xf]
        %v9504 = vld [vmem:[%s5239 + $0x3c] sm:$0xf]
        %v9505 = vld [vmem:[%s5239 + $0x44] sm:$0xf]
        %v9506 = vld [vmem:[%s5239 + $0x4c] sm:$0xf]
        %v9507 = vld [vmem:[%s5239 + $0x54] sm:$0xf]
        %v9508 = vld [vmem:[%s5239 + $0x5c] sm:$0xf]
        %v9509 = vld [vmem:[%s5239 + $0x64] sm:$0xf]
        %v9510 = vld [vmem:[%s5239 + $0x6c] sm:$0xf]
        %v9511 = vld [vmem:[%s5239 + $0x74] sm:$0xf]
        %v9512 = vld [vmem:[%s5239 + $0x7c] sm:$0xf]
        %v9513 = vld [vmem:[%s5239 + $0x84] sm:$0xf]
        %v9514 = vld [vmem:[%s5239 + $0x8c] sm:$0xf]
        %v9515 = vld [vmem:[%s5239 + $0x94] sm:$0xf]
        %v9516 = vld [vmem:[%s5239 + $0x9c] sm:$0xf]
        %v9517 = vld [vmem:[%s5239 + $0xa4] sm:$0xf]
        %v9518 = vld [vmem:[%s5239 + $0xac] sm:$0xf]
        %v9519 = vld [vmem:[%s5239 + $0xb4] sm:$0xf]
        %v9520 = vld [vmem:[%s5239 + $0xbc] sm:$0xf]
        %v9521 = vld [vmem:[%s5239 + $0xc4] sm:$0xf]
        %v9522 = vld [vmem:[%s5239 + $0xcc] sm:$0xf]
        %v9523 = vld [vmem:[%s5239 + $0xd4] sm:$0xf]
        %v9524 = vld [vmem:[%s5239 + $0xdc] sm:$0xf]
        %v9525 = vld [vmem:[%s5239 + $0xe4] sm:$0xf]
        %v9526 = vld [vmem:[%s5239 + $0xec] sm:$0xf]
        %v9527 = vld [vmem:[%s5239 + $0xf4] sm:$0xf]
        %v9528 = vld [vmem:[%s5239 + $0xfc] sm:$0xf]
        %v9557 = vunpack.c.l.b16 %v9469
        %v9558 = vunpack.c.h.b16 %v9469
        %v9559 = vunpack.c.l.b16 %v9470
        %v9560 = vunpack.c.h.b16 %v9470
        %v9561 = vunpack.c.l.b16 %v9471
        %v9562 = vunpack.c.h.b16 %v9471
        %v9563 = vunpack.c.l.b16 %v9472
        %v9564 = vunpack.c.h.b16 %v9472
        %v9565 = vunpack.c.l.b16 %v9473
        %v9566 = vunpack.c.h.b16 %v9473
        %v9567 = vunpack.c.l.b16 %v9474
        %v9568 = vunpack.c.h.b16 %v9474
        %v9569 = vunpack.c.l.b16 %v9475
        %v9570 = vunpack.c.h.b16 %v9475
        %v9571 = vunpack.c.l.b16 %v9476
        %v9572 = vunpack.c.h.b16 %v9476
        %v9573 = vunpack.c.l.b16 %v9477
        %v9574 = vunpack.c.h.b16 %v9477
        %v9575 = vunpack.c.l.b16 %v9478
        %v9576 = vunpack.c.h.b16 %v9478
        %v9577 = vunpack.c.l.b16 %v9479
        %v9578 = vunpack.c.h.b16 %v9479
        %v9579 = vunpack.c.l.b16 %v9480
        %v9580 = vunpack.c.h.b16 %v9480
        %v9581 = vunpack.c.l.b16 %v9481
        %v9582 = vunpack.c.h.b16 %v9481
        %v9583 = vunpack.c.l.b16 %v9482
        %v9584 = vunpack.c.h.b16 %v9482
        %v9585 = vunpack.c.l.b16 %v9483
        %v9586 = vunpack.c.h.b16 %v9483
        %v9587 = vunpack.c.l.b16 %v9484
        %v9588 = vunpack.c.h.b16 %v9484
        %v9589 = vunpack.c.l.b16 %v9485
        %v9590 = vunpack.c.h.b16 %v9485
        %v9591 = vunpack.c.l.b16 %v9486
        %v9592 = vunpack.c.h.b16 %v9486
        %v9593 = vunpack.c.l.b16 %v9487
        %v9594 = vunpack.c.h.b16 %v9487
        %v9595 = vunpack.c.l.b16 %v9488
        %v9596 = vunpack.c.h.b16 %v9488
        %v9597 = vunpack.c.l.b16 %v9489
        %v9598 = vunpack.c.h.b16 %v9489
        %v9599 = vunpack.c.l.b16 %v9490
        %v9600 = vunpack.c.h.b16 %v9490
        %v9601 = vunpack.c.l.b16 %v9491
        %v9602 = vunpack.c.h.b16 %v9491
        %v9603 = vunpack.c.l.b16 %v9492
        %v9604 = vunpack.c.h.b16 %v9492
        %v9605 = vunpack.c.l.b16 %v9493
        %v9606 = vunpack.c.h.b16 %v9493
        %v9607 = vunpack.c.l.b16 %v9494
        %v9608 = vunpack.c.h.b16 %v9494
        %v9609 = vunpack.c.l.b16 %v9495
        %v9610 = vunpack.c.h.b16 %v9495
        %v9611 = vunpack.c.l.b16 %v9496
        %v9612 = vunpack.c.h.b16 %v9496
        %v9613 = vpack.c.b16 %v9559, %v9557
        %v9614 = vpack.c.b16 %v9560, %v9558
        %v9615 = vpack.c.b16 %v9563, %v9561
        %v9616 = vpack.c.b16 %v9564, %v9562
        %v9617 = vpack.c.b16 %v9567, %v9565
        %v9618 = vpack.c.b16 %v9568, %v9566
        %v9619 = vpack.c.b16 %v9571, %v9569
        %v9620 = vpack.c.b16 %v9572, %v9570
        %v9621 = vpack.c.b16 %v9575, %v9573
        %v9622 = vpack.c.b16 %v9576, %v9574
        %v9623 = vpack.c.b16 %v9579, %v9577
        %v9624 = vpack.c.b16 %v9580, %v9578
        %v9625 = vpack.c.b16 %v9583, %v9581
        %v9626 = vpack.c.b16 %v9584, %v9582
        %v9627 = vpack.c.b16 %v9587, %v9585
        %v9628 = vpack.c.b16 %v9588, %v9586
        %v9629 = vpack.c.b16 %v9591, %v9589
        %v9630 = vpack.c.b16 %v9592, %v9590
        %v9631 = vpack.c.b16 %v9595, %v9593
        %v9632 = vpack.c.b16 %v9596, %v9594
        %v9633 = vpack.c.b16 %v9599, %v9597
        %v9634 = vpack.c.b16 %v9600, %v9598
        %v9635 = vpack.c.b16 %v9603, %v9601
        %v9636 = vpack.c.b16 %v9604, %v9602
        %v9637 = vpack.c.b16 %v9607, %v9605
        %v9638 = vpack.c.b16 %v9608, %v9606
        %v9639 = vpack.c.b16 %v9611, %v9609
        %v9640 = vpack.c.b16 %v9612, %v9610
        %v9701 = vunpack.c.l.b16 %v9497
        %v9702 = vunpack.c.l.b16 %v9498
        %v9703 = vunpack.c.l.b16 %v9499
        %v9704 = vunpack.c.l.b16 %v9500
        %v9705 = vunpack.c.l.b16 %v9501
        %v9706 = vunpack.c.l.b16 %v9502
        %v9707 = vunpack.c.l.b16 %v9503
        %v9708 = vunpack.c.l.b16 %v9504
        %v9709 = vunpack.c.l.b16 %v9505
        %v9710 = vunpack.c.l.b16 %v9506
        %v9711 = vunpack.c.l.b16 %v9507
        %v9712 = vunpack.c.l.b16 %v9508
        %v9713 = vunpack.c.l.b16 %v9509
        %v9714 = vunpack.c.l.b16 %v9510
        %v9715 = vunpack.c.l.b16 %v9511
        %v9716 = vunpack.c.l.b16 %v9512
        %v9717 = vunpack.c.l.b16 %v9513
        %v9718 = vunpack.c.l.b16 %v9514
        %v9719 = vunpack.c.l.b16 %v9515
        %v9720 = vunpack.c.l.b16 %v9516
        %v9721 = vunpack.c.l.b16 %v9517
        %v9722 = vunpack.c.l.b16 %v9518
        %v9723 = vunpack.c.l.b16 %v9519
        %v9724 = vunpack.c.l.b16 %v9520
        %v9725 = vunpack.c.l.b16 %v9521
        %v9726 = vunpack.c.l.b16 %v9522
        %v9727 = vunpack.c.l.b16 %v9523
        %v9728 = vunpack.c.l.b16 %v9524
        %v9729 = vunpack.c.l.b16 %v9525
        %v9730 = vunpack.c.l.b16 %v9526
        %v9731 = vunpack.c.l.b16 %v9527
        %v9732 = vunpack.c.l.b16 %v9528
        %v9733 = vpack.c.b16 %v9702, %v9701
        %v9734 = vpack.c.b16 %v9704, %v9703
        %v9735 = vpack.c.b16 %v9706, %v9705
        %v9736 = vpack.c.b16 %v9708, %v9707
        %v9737 = vpack.c.b16 %v9710, %v9709
        %v9738 = vpack.c.b16 %v9712, %v9711
        %v9739 = vpack.c.b16 %v9714, %v9713
        %v9740 = vpack.c.b16 %v9716, %v9715
        %v9741 = vpack.c.b16 %v9718, %v9717
        %v9742 = vpack.c.b16 %v9720, %v9719
        %v9743 = vpack.c.b16 %v9722, %v9721
        %v9744 = vpack.c.b16 %v9724, %v9723
        %v9745 = vpack.c.b16 %v9726, %v9725
        %v9746 = vpack.c.b16 %v9728, %v9727
        %v9747 = vpack.c.b16 %v9730, %v9729
        %v9748 = vpack.c.b16 %v9732, %v9731
        %9765 = vmatprep.subr.bf16.mxu0 0
        %9766 = vmatpush1.bf16.msra.mxu0 %v9740
        %9767 = vmatprep.subr.bf16.mxu0 0
        %9768 = vmatpush1.bf16.msra.mxu0 %v9739
        %9769 = vmatprep.subr.bf16.mxu0 0
        %9770 = vmatpush1.bf16.msra.mxu0 %v9738
        %9771 = vmatprep.subr.bf16.mxu0 0
        %9772 = vmatpush1.bf16.msra.mxu0 %v9737
        %9773 = vmatprep.subr.bf16.mxu0 0
        %9774 = vmatpush1.bf16.msra.mxu0 %v9736
        %9775 = vmatprep.subr.bf16.mxu0 0
        %9776 = vmatpush1.bf16.msra.mxu0 %v9735
        %9777 = vmatprep.subr.bf16.mxu0 0
        %9778 = vmatpush1.bf16.msra.mxu0 %v9734
        %9779 = vmatprep.subr.bf16.mxu0 0
        %9780 = vmatpush1.bf16.msra.mxu0 %v9733
        %9781 = vmatprep.subr.bf16.mxu0 0
        %9782 = vmatpush2.bf16.msra.mxu0 %v9748
        %9783 = vmatprep.subr.bf16.mxu0 0
        %9784 = vmatpush2.bf16.msra.mxu0 %v9747
        %9785 = vmatprep.subr.bf16.mxu0 0
        %9786 = vmatpush2.bf16.msra.mxu0 %v9746
        %9787 = vmatprep.subr.bf16.mxu0 0
        %9788 = vmatpush2.bf16.msra.mxu0 %v9745
        %9789 = vmatprep.subr.bf16.mxu0 0
        %9790 = vmatpush2.bf16.msra.mxu0 %v9744
        %9791 = vmatprep.subr.bf16.mxu0 0
        %9792 = vmatpush2.bf16.msra.mxu0 %v9743
        %9793 = vmatprep.subr.bf16.mxu0 0
        %9794 = vmatpush2.bf16.msra.mxu0 %v9742
        %9795 = vmatprep.subr.bf16.mxu0 0
        %9796 = vmatpush2.bf16.msra.mxu0 %v9741
        %9797 = vmatprep.mubr.bf16.mxu0 %v9614
        %9798 = vmatmul.mubr.bf16.gmra.mxu0 %v9613
        %v9799 = vpop.f32.mrf.mxu0
        %v9800 = vadd.f32 0.0, %v9799
        %v9801 = vpop.f32.mrf.mxu0
        %v9802 = vpop.f32.mrf.mxu0
        %v9803 = vadd.f32 0.0, %v9802
        %v9804 = vpop.f32.mrf.mxu0
        %9805 = vmatprep.mubr.bf16.mxu0 %v9616
        %9806 = vmatmul.mubr.bf16.gmra.mxu0 %v9615
        %v9807 = vpop.f32.mrf.mxu0
        %v9808 = vadd.f32 0.0, %v9807
        %v9809 = vpop.f32.mrf.mxu0
        %v9810 = vpop.f32.mrf.mxu0
        %v9811 = vadd.f32 0.0, %v9810
        %v9812 = vpop.f32.mrf.mxu0
        %9813 = vmatprep.mubr.bf16.mxu0 %v9618
        %9814 = vmatmul.mubr.bf16.gmra.mxu0 %v9617
        %v9815 = vpop.f32.mrf.mxu0
        %v9816 = vadd.f32 0.0, %v9815
        %v9817 = vpop.f32.mrf.mxu0
        %v9818 = vpop.f32.mrf.mxu0
        %v9819 = vadd.f32 0.0, %v9818
        %v9820 = vpop.f32.mrf.mxu0
        %9821 = vmatprep.mubr.bf16.mxu0 %v9620
        %9822 = vmatmul.mubr.bf16.gmra.mxu0 %v9619
        %v9823 = vpop.f32.mrf.mxu0
        %v9824 = vadd.f32 0.0, %v9823
        %v9825 = vpop.f32.mrf.mxu0
        %v9826 = vpop.f32.mrf.mxu0
        %v9827 = vadd.f32 0.0, %v9826
        %v9828 = vpop.f32.mrf.mxu0
        %9829 = vmatprep.mubr.bf16.mxu0 %v9622
        %9830 = vmatmul.mubr.bf16.gmra.mxu0 %v9621
        %v9831 = vpop.f32.mrf.mxu0
        %v9832 = vadd.f32 0.0, %v9831
        %v9833 = vpop.f32.mrf.mxu0
        %v9834 = vpop.f32.mrf.mxu0
        %v9835 = vadd.f32 0.0, %v9834
        %v9836 = vpop.f32.mrf.mxu0
        %9837 = vmatprep.mubr.bf16.mxu0 %v9624
        %9838 = vmatmul.mubr.bf16.gmra.mxu0 %v9623
        %v9839 = vpop.f32.mrf.mxu0
        %v9840 = vadd.f32 0.0, %v9839
        %v9841 = vpop.f32.mrf.mxu0
        %v9842 = vpop.f32.mrf.mxu0
        %v9843 = vadd.f32 0.0, %v9842
        %v9844 = vpop.f32.mrf.mxu0
        %9845 = vmatprep.mubr.bf16.mxu0 %v9626
        %9846 = vmatmul.mubr.bf16.gmra.mxu0 %v9625
        %v9847 = vpop.f32.mrf.mxu0
        %v9848 = vadd.f32 0.0, %v9847
        %v9849 = vpop.f32.mrf.mxu0
        %v9850 = vpop.f32.mrf.mxu0
        %v9851 = vadd.f32 0.0, %v9850
        %v9852 = vpop.f32.mrf.mxu0
        %9853 = vmatprep.mubr.bf16.mxu0 %v9628
        %9854 = vmatmul.mubr.bf16.gmra.mxu0 %v9627
        %v9855 = vpop.f32.mrf.mxu0
        %v9856 = vadd.f32 0.0, %v9855
        %v9857 = vpop.f32.mrf.mxu0
        %v9858 = vpop.f32.mrf.mxu0
        %v9859 = vadd.f32 0.0, %v9858
        %v9860 = vpop.f32.mrf.mxu0
        %9861 = vmatprep.mubr.bf16.mxu0 %v9630
        %9862 = vmatmul.mubr.bf16.gmra.mxu0 %v9629
        %v9863 = vpop.f32.mrf.mxu0
        %v9864 = vadd.f32 0.0, %v9863
        %v9865 = vpop.f32.mrf.mxu0
        %v9866 = vpop.f32.mrf.mxu0
        %v9867 = vadd.f32 0.0, %v9866
        %v9868 = vpop.f32.mrf.mxu0
        %9869 = vmatprep.mubr.bf16.mxu0 %v9632
        %9870 = vmatmul.mubr.bf16.gmra.mxu0 %v9631
        %v9871 = vpop.f32.mrf.mxu0
        %v9872 = vadd.f32 0.0, %v9871
        %v9873 = vpop.f32.mrf.mxu0
        %v9874 = vpop.f32.mrf.mxu0
        %v9875 = vadd.f32 0.0, %v9874
        %v9876 = vpop.f32.mrf.mxu0
        %9877 = vmatprep.mubr.bf16.mxu0 %v9634
        %9878 = vmatmul.mubr.bf16.gmra.mxu0 %v9633
        %v9879 = vpop.f32.mrf.mxu0
        %v9880 = vadd.f32 0.0, %v9879
        %v9881 = vpop.f32.mrf.mxu0
        %v9882 = vpop.f32.mrf.mxu0
        %v9883 = vadd.f32 0.0, %v9882
        %v9884 = vpop.f32.mrf.mxu0
        %9885 = vmatprep.mubr.bf16.mxu0 %v9636
        %9886 = vmatmul.mubr.bf16.gmra.mxu0 %v9635
        %v9887 = vpop.f32.mrf.mxu0
        %v9888 = vadd.f32 0.0, %v9887
        %v9889 = vpop.f32.mrf.mxu0
        %v9890 = vpop.f32.mrf.mxu0
        %v9891 = vadd.f32 0.0, %v9890
        %v9892 = vpop.f32.mrf.mxu0
        %9893 = vmatprep.mubr.bf16.mxu0 %v9638
        %9894 = vmatmul.mubr.bf16.gmra.mxu0 %v9637
        %v9895 = vpop.f32.mrf.mxu0
        %v9896 = vadd.f32 0.0, %v9895
        %v9897 = vpop.f32.mrf.mxu0
        %v9898 = vpop.f32.mrf.mxu0
        %v9899 = vadd.f32 0.0, %v9898
        %v9900 = vpop.f32.mrf.mxu0
        %9901 = vmatprep.mubr.bf16.mxu0 %v9640
        %9902 = vmatmul.mubr.bf16.gmra.mxu0 %v9639
        %v9903 = vpop.f32.mrf.mxu0
        %v9904 = vadd.f32 0.0, %v9903
        %v9905 = vpop.f32.mrf.mxu0
        %v9906 = vpop.f32.mrf.mxu0
        %v9907 = vadd.f32 0.0, %v9906
        %v9908 = vpop.f32.mrf.mxu0
        %9909 = vdwg.mxu0
        %v9910 = vadd.f32 %v9441, %v9800
        %v9911 = vadd.f32 %v9442, %v9803
        %v9912 = vadd.f32 %v9443, %v9808
        %v9913 = vadd.f32 %v9444, %v9811
        %v9914 = vadd.f32 %v9445, %v9816
        %v9915 = vadd.f32 %v9446, %v9819
        %v9916 = vadd.f32 %v9447, %v9824
        %v9917 = vadd.f32 %v9448, %v9827
        %v9918 = vadd.f32 %v9449, %v9832
        %v9919 = vadd.f32 %v9450, %v9835
        %v9920 = vadd.f32 %v9451, %v9840
        %v9921 = vadd.f32 %v9452, %v9843
        %v9922 = vadd.f32 %v9453, %v9848
        %v9923 = vadd.f32 %v9454, %v9851
        %v9924 = vadd.f32 %v9455, %v9856
        %v9925 = vadd.f32 %v9456, %v9859
        %v9926 = vadd.f32 %v9457, %v9864
        %v9927 = vadd.f32 %v9458, %v9867
        %v9928 = vadd.f32 %v9459, %v9872
        %v9929 = vadd.f32 %v9460, %v9875
        %v9930 = vadd.f32 %v9461, %v9880
        %v9931 = vadd.f32 %v9462, %v9883
        %v9932 = vadd.f32 %v9463, %v9888
        %v9933 = vadd.f32 %v9464, %v9891
        %v9934 = vadd.f32 %v9465, %v9896
        %v9935 = vadd.f32 %v9466, %v9899
        %v9936 = vadd.f32 %v9467, %v9904
        %v9937 = vadd.f32 %v9468, %v9907
        %v9938 = vld [vmem:[#allocation4 + $0x20] sm:$0xff]
        %v9939 = vld [vmem:[#allocation4 + $0x28] sm:$0xff]
        %v9940 = vld [vmem:[#allocation4 + $0x30] sm:$0xff]
        %v9941 = vld [vmem:[#allocation4 + $0x38] sm:$0xff]
        %v9942 = vld [vmem:[#allocation4 + $0x40] sm:$0xff]
        %v9943 = vld [vmem:[#allocation4 + $0x48] sm:$0xff]
        %v9944 = vld [vmem:[#allocation4 + $0x50] sm:$0xff]
        %v9945 = vld [vmem:[#allocation4 + $0x58] sm:$0xff]
        %v9946 = vld [vmem:[#allocation4 + $0x60] sm:$0xff]
        %v9947 = vld [vmem:[#allocation4 + $0x68] sm:$0xff]
        %v9948 = vld [vmem:[#allocation4 + $0x70] sm:$0xff]
        %v9949 = vld [vmem:[#allocation4 + $0x78] sm:$0xff]
        %v9950 = vld [vmem:[#allocation4 + $0x80] sm:$0xff]
        %v9951 = vld [vmem:[#allocation4 + $0x88] sm:$0xff]
        %v9952 = vld [vmem:[#allocation4 + $0x90] sm:$0xff]
        %v9953 = vld [vmem:[#allocation4 + $0x98] sm:$0xff]
        %v9954 = vld [vmem:[#allocation4 + $0xa0] sm:$0xff]
        %v9955 = vld [vmem:[#allocation4 + $0xa8] sm:$0xff]
        %v9956 = vld [vmem:[#allocation4 + $0xb0] sm:$0xff]
        %v9957 = vld [vmem:[#allocation4 + $0xb8] sm:$0xff]
        %v9958 = vld [vmem:[#allocation4 + $0xc0] sm:$0xff]
        %v9959 = vld [vmem:[#allocation4 + $0xc8] sm:$0xff]
        %v9960 = vld [vmem:[#allocation4 + $0xd0] sm:$0xff]
        %v9961 = vld [vmem:[#allocation4 + $0xd8] sm:$0xff]
        %v9962 = vld [vmem:[#allocation4 + $0xe0] sm:$0xff]
        %v9963 = vld [vmem:[#allocation4 + $0xe8] sm:$0xff]
        %v9964 = vld [vmem:[#allocation4 + $0xf0] sm:$0xff]
        %v9965 = vld [vmem:[#allocation4 + $0xf8] sm:$0xff]
        %v9966 = vld [vmem:[%s5709 + $0x4] sm:$0xf]
        %v9967 = vld [vmem:[%s5709 + $0xc] sm:$0xf]
        %v9968 = vld [vmem:[%s5709 + $0x14] sm:$0xf]
        %v9969 = vld [vmem:[%s5709 + $0x1c] sm:$0xf]
        %v9970 = vld [vmem:[%s5709 + $0x24] sm:$0xf]
        %v9971 = vld [vmem:[%s5709 + $0x2c] sm:$0xf]
        %v9972 = vld [vmem:[%s5709 + $0x34] sm:$0xf]
        %v9973 = vld [vmem:[%s5709 + $0x3c] sm:$0xf]
        %v9974 = vld [vmem:[%s5709 + $0x44] sm:$0xf]
        %v9975 = vld [vmem:[%s5709 + $0x4c] sm:$0xf]
        %v9976 = vld [vmem:[%s5709 + $0x54] sm:$0xf]
        %v9977 = vld [vmem:[%s5709 + $0x5c] sm:$0xf]
        %v9978 = vld [vmem:[%s5709 + $0x64] sm:$0xf]
        %v9979 = vld [vmem:[%s5709 + $0x6c] sm:$0xf]
        %v9980 = vld [vmem:[%s5709 + $0x74] sm:$0xf]
        %v9981 = vld [vmem:[%s5709 + $0x7c] sm:$0xf]
        %v9982 = vld [vmem:[%s5709 + $0x84] sm:$0xf]
        %v9983 = vld [vmem:[%s5709 + $0x8c] sm:$0xf]
        %v9984 = vld [vmem:[%s5709 + $0x94] sm:$0xf]
        %v9985 = vld [vmem:[%s5709 + $0x9c] sm:$0xf]
        %v9986 = vld [vmem:[%s5709 + $0xa4] sm:$0xf]
        %v9987 = vld [vmem:[%s5709 + $0xac] sm:$0xf]
        %v9988 = vld [vmem:[%s5709 + $0xb4] sm:$0xf]
        %v9989 = vld [vmem:[%s5709 + $0xbc] sm:$0xf]
        %v9990 = vld [vmem:[%s5709 + $0xc4] sm:$0xf]
        %v9991 = vld [vmem:[%s5709 + $0xcc] sm:$0xf]
        %v9992 = vld [vmem:[%s5709 + $0xd4] sm:$0xf]
        %v9993 = vld [vmem:[%s5709 + $0xdc] sm:$0xf]
        %v9994 = vld [vmem:[%s5709 + $0xe4] sm:$0xf]
        %v9995 = vld [vmem:[%s5709 + $0xec] sm:$0xf]
        %v9996 = vld [vmem:[%s5709 + $0xf4] sm:$0xf]
        %v9997 = vld [vmem:[%s5709 + $0xfc] sm:$0xf]
        %v10026 = vunpack.c.l.b16 %v9938
        %v10027 = vunpack.c.h.b16 %v9938
        %v10028 = vunpack.c.l.b16 %v9939
        %v10029 = vunpack.c.h.b16 %v9939
        %v10030 = vunpack.c.l.b16 %v9940
        %v10031 = vunpack.c.h.b16 %v9940
        %v10032 = vunpack.c.l.b16 %v9941
        %v10033 = vunpack.c.h.b16 %v9941
        %v10034 = vunpack.c.l.b16 %v9942
        %v10035 = vunpack.c.h.b16 %v9942
        %v10036 = vunpack.c.l.b16 %v9943
        %v10037 = vunpack.c.h.b16 %v9943
        %v10038 = vunpack.c.l.b16 %v9944
        %v10039 = vunpack.c.h.b16 %v9944
        %v10040 = vunpack.c.l.b16 %v9945
        %v10041 = vunpack.c.h.b16 %v9945
        %v10042 = vunpack.c.l.b16 %v9946
        %v10043 = vunpack.c.h.b16 %v9946
        %v10044 = vunpack.c.l.b16 %v9947
        %v10045 = vunpack.c.h.b16 %v9947
        %v10046 = vunpack.c.l.b16 %v9948
        %v10047 = vunpack.c.h.b16 %v9948
        %v10048 = vunpack.c.l.b16 %v9949
        %v10049 = vunpack.c.h.b16 %v9949
        %v10050 = vunpack.c.l.b16 %v9950
        %v10051 = vunpack.c.h.b16 %v9950
        %v10052 = vunpack.c.l.b16 %v9951
        %v10053 = vunpack.c.h.b16 %v9951
        %v10054 = vunpack.c.l.b16 %v9952
        %v10055 = vunpack.c.h.b16 %v9952
        %v10056 = vunpack.c.l.b16 %v9953
        %v10057 = vunpack.c.h.b16 %v9953
        %v10058 = vunpack.c.l.b16 %v9954
        %v10059 = vunpack.c.h.b16 %v9954
        %v10060 = vunpack.c.l.b16 %v9955
        %v10061 = vunpack.c.h.b16 %v9955
        %v10062 = vunpack.c.l.b16 %v9956
        %v10063 = vunpack.c.h.b16 %v9956
        %v10064 = vunpack.c.l.b16 %v9957
        %v10065 = vunpack.c.h.b16 %v9957
        %v10066 = vunpack.c.l.b16 %v9958
        %v10067 = vunpack.c.h.b16 %v9958
        %v10068 = vunpack.c.l.b16 %v9959
        %v10069 = vunpack.c.h.b16 %v9959
        %v10070 = vunpack.c.l.b16 %v9960
        %v10071 = vunpack.c.h.b16 %v9960
        %v10072 = vunpack.c.l.b16 %v9961
        %v10073 = vunpack.c.h.b16 %v9961
        %v10074 = vunpack.c.l.b16 %v9962
        %v10075 = vunpack.c.h.b16 %v9962
        %v10076 = vunpack.c.l.b16 %v9963
        %v10077 = vunpack.c.h.b16 %v9963
        %v10078 = vunpack.c.l.b16 %v9964
        %v10079 = vunpack.c.h.b16 %v9964
        %v10080 = vunpack.c.l.b16 %v9965
        %v10081 = vunpack.c.h.b16 %v9965
        %v10082 = vpack.c.b16 %v10028, %v10026
        %v10083 = vpack.c.b16 %v10029, %v10027
        %v10084 = vpack.c.b16 %v10032, %v10030
        %v10085 = vpack.c.b16 %v10033, %v10031
        %v10086 = vpack.c.b16 %v10036, %v10034
        %v10087 = vpack.c.b16 %v10037, %v10035
        %v10088 = vpack.c.b16 %v10040, %v10038
        %v10089 = vpack.c.b16 %v10041, %v10039
        %v10090 = vpack.c.b16 %v10044, %v10042
        %v10091 = vpack.c.b16 %v10045, %v10043
        %v10092 = vpack.c.b16 %v10048, %v10046
        %v10093 = vpack.c.b16 %v10049, %v10047
        %v10094 = vpack.c.b16 %v10052, %v10050
        %v10095 = vpack.c.b16 %v10053, %v10051
        %v10096 = vpack.c.b16 %v10056, %v10054
        %v10097 = vpack.c.b16 %v10057, %v10055
        %v10098 = vpack.c.b16 %v10060, %v10058
        %v10099 = vpack.c.b16 %v10061, %v10059
        %v10100 = vpack.c.b16 %v10064, %v10062
        %v10101 = vpack.c.b16 %v10065, %v10063
        %v10102 = vpack.c.b16 %v10068, %v10066
        %v10103 = vpack.c.b16 %v10069, %v10067
        %v10104 = vpack.c.b16 %v10072, %v10070
        %v10105 = vpack.c.b16 %v10073, %v10071
        %v10106 = vpack.c.b16 %v10076, %v10074
        %v10107 = vpack.c.b16 %v10077, %v10075
        %v10108 = vpack.c.b16 %v10080, %v10078
        %v10109 = vpack.c.b16 %v10081, %v10079
        %v10170 = vunpack.c.l.b16 %v9966
        %v10171 = vunpack.c.l.b16 %v9967
        %v10172 = vunpack.c.l.b16 %v9968
        %v10173 = vunpack.c.l.b16 %v9969
        %v10174 = vunpack.c.l.b16 %v9970
        %v10175 = vunpack.c.l.b16 %v9971
        %v10176 = vunpack.c.l.b16 %v9972
        %v10177 = vunpack.c.l.b16 %v9973
        %v10178 = vunpack.c.l.b16 %v9974
        %v10179 = vunpack.c.l.b16 %v9975
        %v10180 = vunpack.c.l.b16 %v9976
        %v10181 = vunpack.c.l.b16 %v9977
        %v10182 = vunpack.c.l.b16 %v9978
        %v10183 = vunpack.c.l.b16 %v9979
        %v10184 = vunpack.c.l.b16 %v9980
        %v10185 = vunpack.c.l.b16 %v9981
        %v10186 = vunpack.c.l.b16 %v9982
        %v10187 = vunpack.c.l.b16 %v9983
        %v10188 = vunpack.c.l.b16 %v9984
        %v10189 = vunpack.c.l.b16 %v9985
        %v10190 = vunpack.c.l.b16 %v9986
        %v10191 = vunpack.c.l.b16 %v9987
        %v10192 = vunpack.c.l.b16 %v9988
        %v10193 = vunpack.c.l.b16 %v9989
        %v10194 = vunpack.c.l.b16 %v9990
        %v10195 = vunpack.c.l.b16 %v9991
        %v10196 = vunpack.c.l.b16 %v9992
        %v10197 = vunpack.c.l.b16 %v9993
        %v10198 = vunpack.c.l.b16 %v9994
        %v10199 = vunpack.c.l.b16 %v9995
        %v10200 = vunpack.c.l.b16 %v9996
        %v10201 = vunpack.c.l.b16 %v9997
        %v10202 = vpack.c.b16 %v10171, %v10170
        %v10203 = vpack.c.b16 %v10173, %v10172
        %v10204 = vpack.c.b16 %v10175, %v10174
        %v10205 = vpack.c.b16 %v10177, %v10176
        %v10206 = vpack.c.b16 %v10179, %v10178
        %v10207 = vpack.c.b16 %v10181, %v10180
        %v10208 = vpack.c.b16 %v10183, %v10182
        %v10209 = vpack.c.b16 %v10185, %v10184
        %v10210 = vpack.c.b16 %v10187, %v10186
        %v10211 = vpack.c.b16 %v10189, %v10188
        %v10212 = vpack.c.b16 %v10191, %v10190
        %v10213 = vpack.c.b16 %v10193, %v10192
        %v10214 = vpack.c.b16 %v10195, %v10194
        %v10215 = vpack.c.b16 %v10197, %v10196
        %v10216 = vpack.c.b16 %v10199, %v10198
        %v10217 = vpack.c.b16 %v10201, %v10200
        %10234 = vmatprep.subr.bf16.mxu0 0
        %10235 = vmatpush1.bf16.msra.mxu0 %v10209
        %10236 = vmatprep.subr.bf16.mxu0 0
        %10237 = vmatpush1.bf16.msra.mxu0 %v10208
        %10238 = vmatprep.subr.bf16.mxu0 0
        %10239 = vmatpush1.bf16.msra.mxu0 %v10207
        %10240 = vmatprep.subr.bf16.mxu0 0
        %10241 = vmatpush1.bf16.msra.mxu0 %v10206
        %10242 = vmatprep.subr.bf16.mxu0 0
        %10243 = vmatpush1.bf16.msra.mxu0 %v10205
        %10244 = vmatprep.subr.bf16.mxu0 0
        %10245 = vmatpush1.bf16.msra.mxu0 %v10204
        %10246 = vmatprep.subr.bf16.mxu0 0
        %10247 = vmatpush1.bf16.msra.mxu0 %v10203
        %10248 = vmatprep.subr.bf16.mxu0 0
        %10249 = vmatpush1.bf16.msra.mxu0 %v10202
        %10250 = vmatprep.subr.bf16.mxu0 0
        %10251 = vmatpush2.bf16.msra.mxu0 %v10217
        %10252 = vmatprep.subr.bf16.mxu0 0
        %10253 = vmatpush2.bf16.msra.mxu0 %v10216
        %10254 = vmatprep.subr.bf16.mxu0 0
        %10255 = vmatpush2.bf16.msra.mxu0 %v10215
        %10256 = vmatprep.subr.bf16.mxu0 0
        %10257 = vmatpush2.bf16.msra.mxu0 %v10214
        %10258 = vmatprep.subr.bf16.mxu0 0
        %10259 = vmatpush2.bf16.msra.mxu0 %v10213
        %10260 = vmatprep.subr.bf16.mxu0 0
        %10261 = vmatpush2.bf16.msra.mxu0 %v10212
        %10262 = vmatprep.subr.bf16.mxu0 0
        %10263 = vmatpush2.bf16.msra.mxu0 %v10211
        %10264 = vmatprep.subr.bf16.mxu0 0
        %10265 = vmatpush2.bf16.msra.mxu0 %v10210
        %10266 = vmatprep.mubr.bf16.mxu0 %v10083
        %10267 = vmatmul.mubr.bf16.gmra.mxu0 %v10082
        %v10268 = vpop.f32.mrf.mxu0
        %v10269 = vadd.f32 0.0, %v10268
        %v10270 = vpop.f32.mrf.mxu0
        %v10271 = vpop.f32.mrf.mxu0
        %v10272 = vadd.f32 0.0, %v10271
        %v10273 = vpop.f32.mrf.mxu0
        %10274 = vmatprep.mubr.bf16.mxu0 %v10085
        %10275 = vmatmul.mubr.bf16.gmra.mxu0 %v10084
        %v10276 = vpop.f32.mrf.mxu0
        %v10277 = vadd.f32 0.0, %v10276
        %v10278 = vpop.f32.mrf.mxu0
        %v10279 = vpop.f32.mrf.mxu0
        %v10280 = vadd.f32 0.0, %v10279
        %v10281 = vpop.f32.mrf.mxu0
        %10282 = vmatprep.mubr.bf16.mxu0 %v10087
        %10283 = vmatmul.mubr.bf16.gmra.mxu0 %v10086
        %v10284 = vpop.f32.mrf.mxu0
        %v10285 = vadd.f32 0.0, %v10284
        %v10286 = vpop.f32.mrf.mxu0
        %v10287 = vpop.f32.mrf.mxu0
        %v10288 = vadd.f32 0.0, %v10287
        %v10289 = vpop.f32.mrf.mxu0
        %10290 = vmatprep.mubr.bf16.mxu0 %v10089
        %10291 = vmatmul.mubr.bf16.gmra.mxu0 %v10088
        %v10292 = vpop.f32.mrf.mxu0
        %v10293 = vadd.f32 0.0, %v10292
        %v10294 = vpop.f32.mrf.mxu0
        %v10295 = vpop.f32.mrf.mxu0
        %v10296 = vadd.f32 0.0, %v10295
        %v10297 = vpop.f32.mrf.mxu0
        %10298 = vmatprep.mubr.bf16.mxu0 %v10091
        %10299 = vmatmul.mubr.bf16.gmra.mxu0 %v10090
        %v10300 = vpop.f32.mrf.mxu0
        %v10301 = vadd.f32 0.0, %v10300
        %v10302 = vpop.f32.mrf.mxu0
        %v10303 = vpop.f32.mrf.mxu0
        %v10304 = vadd.f32 0.0, %v10303
        %v10305 = vpop.f32.mrf.mxu0
        %10306 = vmatprep.mubr.bf16.mxu0 %v10093
        %10307 = vmatmul.mubr.bf16.gmra.mxu0 %v10092
        %v10308 = vpop.f32.mrf.mxu0
        %v10309 = vadd.f32 0.0, %v10308
        %v10310 = vpop.f32.mrf.mxu0
        %v10311 = vpop.f32.mrf.mxu0
        %v10312 = vadd.f32 0.0, %v10311
        %v10313 = vpop.f32.mrf.mxu0
        %10314 = vmatprep.mubr.bf16.mxu0 %v10095
        %10315 = vmatmul.mubr.bf16.gmra.mxu0 %v10094
        %v10316 = vpop.f32.mrf.mxu0
        %v10317 = vadd.f32 0.0, %v10316
        %v10318 = vpop.f32.mrf.mxu0
        %v10319 = vpop.f32.mrf.mxu0
        %v10320 = vadd.f32 0.0, %v10319
        %v10321 = vpop.f32.mrf.mxu0
        %10322 = vmatprep.mubr.bf16.mxu0 %v10097
        %10323 = vmatmul.mubr.bf16.gmra.mxu0 %v10096
        %v10324 = vpop.f32.mrf.mxu0
        %v10325 = vadd.f32 0.0, %v10324
        %v10326 = vpop.f32.mrf.mxu0
        %v10327 = vpop.f32.mrf.mxu0
        %v10328 = vadd.f32 0.0, %v10327
        %v10329 = vpop.f32.mrf.mxu0
        %10330 = vmatprep.mubr.bf16.mxu0 %v10099
        %10331 = vmatmul.mubr.bf16.gmra.mxu0 %v10098
        %v10332 = vpop.f32.mrf.mxu0
        %v10333 = vadd.f32 0.0, %v10332
        %v10334 = vpop.f32.mrf.mxu0
        %v10335 = vpop.f32.mrf.mxu0
        %v10336 = vadd.f32 0.0, %v10335
        %v10337 = vpop.f32.mrf.mxu0
        %10338 = vmatprep.mubr.bf16.mxu0 %v10101
        %10339 = vmatmul.mubr.bf16.gmra.mxu0 %v10100
        %v10340 = vpop.f32.mrf.mxu0
        %v10341 = vadd.f32 0.0, %v10340
        %v10342 = vpop.f32.mrf.mxu0
        %v10343 = vpop.f32.mrf.mxu0
        %v10344 = vadd.f32 0.0, %v10343
        %v10345 = vpop.f32.mrf.mxu0
        %10346 = vmatprep.mubr.bf16.mxu0 %v10103
        %10347 = vmatmul.mubr.bf16.gmra.mxu0 %v10102
        %v10348 = vpop.f32.mrf.mxu0
        %v10349 = vadd.f32 0.0, %v10348
        %v10350 = vpop.f32.mrf.mxu0
        %v10351 = vpop.f32.mrf.mxu0
        %v10352 = vadd.f32 0.0, %v10351
        %v10353 = vpop.f32.mrf.mxu0
        %10354 = vmatprep.mubr.bf16.mxu0 %v10105
        %10355 = vmatmul.mubr.bf16.gmra.mxu0 %v10104
        %v10356 = vpop.f32.mrf.mxu0
        %v10357 = vadd.f32 0.0, %v10356
        %v10358 = vpop.f32.mrf.mxu0
        %v10359 = vpop.f32.mrf.mxu0
        %v10360 = vadd.f32 0.0, %v10359
        %v10361 = vpop.f32.mrf.mxu0
        %10362 = vmatprep.mubr.bf16.mxu0 %v10107
        %10363 = vmatmul.mubr.bf16.gmra.mxu0 %v10106
        %v10364 = vpop.f32.mrf.mxu0
        %v10365 = vadd.f32 0.0, %v10364
        %v10366 = vpop.f32.mrf.mxu0
        %v10367 = vpop.f32.mrf.mxu0
        %v10368 = vadd.f32 0.0, %v10367
        %v10369 = vpop.f32.mrf.mxu0
        %10370 = vmatprep.mubr.bf16.mxu0 %v10109
        %10371 = vmatmul.mubr.bf16.gmra.mxu0 %v10108
        %v10372 = vpop.f32.mrf.mxu0
        %v10373 = vadd.f32 0.0, %v10372
        %v10374 = vpop.f32.mrf.mxu0
        %v10375 = vpop.f32.mrf.mxu0
        %v10376 = vadd.f32 0.0, %v10375
        %v10377 = vpop.f32.mrf.mxu0
        %10378 = vdwg.mxu0
        %v10379 = vadd.f32 %v9910, %v10269
        %v10380 = vadd.f32 %v9911, %v10272
        %v10381 = vadd.f32 %v9912, %v10277
        %v10382 = vadd.f32 %v9913, %v10280
        %v10383 = vadd.f32 %v9914, %v10285
        %v10384 = vadd.f32 %v9915, %v10288
        %v10385 = vadd.f32 %v9916, %v10293
        %v10386 = vadd.f32 %v9917, %v10296
        %v10387 = vadd.f32 %v9918, %v10301
        %v10388 = vadd.f32 %v9919, %v10304
        %v10389 = vadd.f32 %v9920, %v10309
        %v10390 = vadd.f32 %v9921, %v10312
        %v10391 = vadd.f32 %v9922, %v10317
        %v10392 = vadd.f32 %v9923, %v10320
        %v10393 = vadd.f32 %v9924, %v10325
        %v10394 = vadd.f32 %v9925, %v10328
        %v10395 = vadd.f32 %v9926, %v10333
        %v10396 = vadd.f32 %v9927, %v10336
        %v10397 = vadd.f32 %v9928, %v10341
        %v10398 = vadd.f32 %v9929, %v10344
        %v10399 = vadd.f32 %v9930, %v10349
        %v10400 = vadd.f32 %v9931, %v10352
        %v10401 = vadd.f32 %v9932, %v10357
        %v10402 = vadd.f32 %v9933, %v10360
        %v10403 = vadd.f32 %v9934, %v10365
        %v10404 = vadd.f32 %v9935, %v10368
        %v10405 = vadd.f32 %v9936, %v10373
        %v10406 = vadd.f32 %v9937, %v10376
        %v10407 = vld [vmem:[#allocation15 + $0x1] sm:$0x1]
        %v10409 = vlaneseq
        %v10410 = vshrl.u32 %v10409, 7
        %v10411 = vsub.s32 0, %v10410
        %v10412 = vrot.slane %v10407, %v10411
        %v10414 = vadd.f32 %v10379, %v10412
        %v10415 = vadd.f32 %v10380, %v10412
        %v10416 = vadd.f32 %v10381, %v10412
        %v10417 = vadd.f32 %v10382, %v10412
        %v10418 = vadd.f32 %v10383, %v10412
        %v10419 = vadd.f32 %v10384, %v10412
        %v10420 = vadd.f32 %v10385, %v10412
        %v10421 = vadd.f32 %v10386, %v10412
        %v10422 = vadd.f32 %v10387, %v10412
        %v10423 = vadd.f32 %v10388, %v10412
        %v10424 = vadd.f32 %v10389, %v10412
        %v10425 = vadd.f32 %v10390, %v10412
        %v10426 = vadd.f32 %v10391, %v10412
        %v10427 = vadd.f32 %v10392, %v10412
        %v10428 = vadd.f32 %v10393, %v10412
        %v10429 = vadd.f32 %v10394, %v10412
        %v10430 = vadd.f32 %v10395, %v10412
        %v10431 = vadd.f32 %v10396, %v10412
        %v10432 = vadd.f32 %v10397, %v10412
        %v10433 = vadd.f32 %v10398, %v10412
        %v10434 = vadd.f32 %v10399, %v10412
        %v10435 = vadd.f32 %v10400, %v10412
        %v10436 = vadd.f32 %v10401, %v10412
        %v10437 = vadd.f32 %v10402, %v10412
        %v10438 = vadd.f32 %v10403, %v10412
        %v10439 = vadd.f32 %v10404, %v10412
        %v10440 = vadd.f32 %v10405, %v10412
        %v10441 = vadd.f32 %v10406, %v10412
        %v10442 = vmax.f32 %v10414, 0.0
        %v10443 = vmax.f32 %v10415, 0.0
        %v10444 = vmax.f32 %v10416, 0.0
        %v10445 = vmax.f32 %v10417, 0.0
        %v10446 = vmax.f32 %v10418, 0.0
        %v10447 = vmax.f32 %v10419, 0.0
        %v10448 = vmax.f32 %v10420, 0.0
        %v10449 = vmax.f32 %v10421, 0.0
        %v10450 = vmax.f32 %v10422, 0.0
        %v10451 = vmax.f32 %v10423, 0.0
        %v10452 = vmax.f32 %v10424, 0.0
        %v10453 = vmax.f32 %v10425, 0.0
        %v10454 = vmax.f32 %v10426, 0.0
        %v10455 = vmax.f32 %v10427, 0.0
        %v10456 = vmax.f32 %v10428, 0.0
        %v10457 = vmax.f32 %v10429, 0.0
        %v10458 = vmax.f32 %v10430, 0.0
        %v10459 = vmax.f32 %v10431, 0.0
        %v10460 = vmax.f32 %v10432, 0.0
        %v10461 = vmax.f32 %v10433, 0.0
        %v10462 = vmax.f32 %v10434, 0.0
        %v10463 = vmax.f32 %v10435, 0.0
        %v10464 = vmax.f32 %v10436, 0.0
        %v10465 = vmax.f32 %v10437, 0.0
        %v10466 = vmax.f32 %v10438, 0.0
        %v10467 = vmax.f32 %v10439, 0.0
        %v10468 = vmax.f32 %v10440, 0.0
        %v10469 = vmax.f32 %v10441, 0.0
        %10470 = vst [vmem:[%s403 + $0x8] sm:$0xff] %v10442
        %10471 = vst [vmem:[%s403 + $0x18] sm:$0xff] %v10443
        %10472 = vst [vmem:[%s403 + $0x28] sm:$0xff] %v10444
        %10473 = vst [vmem:[%s403 + $0x38] sm:$0xff] %v10445
        %10474 = vst [vmem:[%s403 + $0x48] sm:$0xff] %v10446
        %10475 = vst [vmem:[%s403 + $0x58] sm:$0xff] %v10447
        %10476 = vst [vmem:[%s403 + $0x68] sm:$0xff] %v10448
        %10477 = vst [vmem:[%s403 + $0x78] sm:$0xff] %v10449
        %10478 = vst [vmem:[%s403 + $0x88] sm:$0xff] %v10450
        %10479 = vst [vmem:[%s403 + $0x98] sm:$0xff] %v10451
        %10480 = vst [vmem:[%s403 + $0xa8] sm:$0xff] %v10452
        %10481 = vst [vmem:[%s403 + $0xb8] sm:$0xff] %v10453
        %10482 = vst [vmem:[%s403 + $0xc8] sm:$0xff] %v10454
        %10483 = vst [vmem:[%s403 + $0xd8] sm:$0xff] %v10455
        %10484 = vst [vmem:[%s403 + $0xe8] sm:$0xff] %v10456
        %10485 = vst [vmem:[%s403 + $0xf8] sm:$0xff] %v10457
        %10486 = vst [vmem:[%s403 + $0x108] sm:$0xff] %v10458
        %10487 = vst [vmem:[%s403 + $0x118] sm:$0xff] %v10459
        %10488 = vst [vmem:[%s403 + $0x128] sm:$0xff] %v10460
        %10489 = vst [vmem:[%s403 + $0x138] sm:$0xff] %v10461
        %10490 = vst [vmem:[%s403 + $0x148] sm:$0xff] %v10462
        %10491 = vst [vmem:[%s403 + $0x158] sm:$0xff] %v10463
        %10492 = vst [vmem:[%s403 + $0x168] sm:$0xff] %v10464
        %10493 = vst [vmem:[%s403 + $0x178] sm:$0xff] %v10465
        %10494 = vst [vmem:[%s403 + $0x188] sm:$0xff] %v10466
        %10495 = vst [vmem:[%s403 + $0x198] sm:$0xff] %v10467
        %10496 = vst [vmem:[%s403 + $0x1a8] sm:$0xff] %v10468
        %10497 = vst [vmem:[%s403 + $0x1b8] sm:$0xff] %v10469
        %p10498 = scmp.lt.s32.totalorder %s23, 1
        %s10499 = scalar_select %p10498, %s23, 1
        %s10500 = smul.addr %s10499, 56
        %s10501 = smul.addr %s10500, 8
        %s10502 = scalar_lea.vmem %s8, %s10501
        // Predicated region
        $region81: #{forward.1} parent=51 // pred_check
          %p10503 = pneg %p214
        $region82: #{forward.1} parent=51 // pred_check_branch
          %10505 = sbr.rel (%p10503) target = $region84
        $region83: #{forward.1} parent=51 // pred_region
          _
        $region84: #{forward.1} parent=51 // pred_fallthru
          _
      $region52: #{forward.1} parent=5 // pred_fallthru
        _
      %p10506 = scmp.le.s32.totalorder 2, %s18
      // Predicated region
      $region85: #{forward.1} parent=5 // pred_check
        %p10507 = pneg %p10506
      $region86: #{forward.1} parent=5 // pred_check_branch
        %10509 = sbr.rel (%p10507) target = $region88
      $region87: #{forward.1} parent=5 // pred_region
        %s10510 = ssub.s32 %s18, 2
        // Predicated region
        $region89: #{forward.1} parent=87 // pred_check
          %p10511 = pneg %p220
        $region90: #{forward.1} parent=87 // pred_check_branch
          %10513 = sbr.rel (%p10511) target = $region92
        $region91: #{forward.1} parent=87 // pred_region
          %p10514 = scmp.lt.s32.totalorder %s24, 1
          %s10515 = scalar_select %p10514, %s24, 1
          %s10516 = smul.addr %s10515, 56
          %s10517 = smul.addr %s10516, 8
          %s10518 = scalar_lea.vmem %s8, %s10517
        $region92: #{forward.1} parent=87 // pred_fallthru
          _
      $region88: #{forward.1} parent=5 // pred_fallthru
        _
    $region6: #{forward.1} parent=1 // loop_footer
      %s22 = sadd.s32 1, %s18
    $region7: #{forward.1} parent=1 // loop_footer_branch
      %17 = sbr.rel target = $region3
    $region8: #{forward.1} parent=1 // loop_exit
      _
    %10519 = vsyncpa [#allocation6], 1
    %s10520 = scalar_lea.sflag [#allocation6], 1
    %10521 = vsyncpa %s10520, 1
    %10522 = vsyncpa [#allocation8], 1
    %10523 = vsyncpa [#allocation11], 1
    %10524 = vsyncpa [#allocation14], 1

</llo_original>
